<compile_context>
chip_gen: v7x
topology: tpu7x:2x2x1
jax: 0.10.0
libtpu: 0.0.40
codegen_flags: <defaults>
</compile_context>

<pallas_src>
import functools

import jax
import jax.numpy as jnp
from jax import lax
from jax.experimental import pallas as pl
from jax.experimental.pallas import tpu as pltpu


# ---------------------------------------------------------------------------
# Pallas kernel: fused  out = activation(x @ w + b)   (conv-as-GEMM / linear)
# ---------------------------------------------------------------------------
def _gemm_bias_act_kernel(x_ref, w_ref, b_ref, o_ref, *, activation):
    acc = jnp.dot(x_ref[...], w_ref[...], preferred_element_type=jnp.float32)
    acc = acc + b_ref[...]
    if activation == "relu":
        acc = jnp.maximum(acc, 0.0)
    elif activation == "sigmoid":
        acc = jax.nn.sigmoid(acc)
    o_ref[...] = acc.astype(o_ref.dtype)


def _pick_tile_m(M):
    # Largest row tile that divides M evenly AND gives >=2 grid steps
    # (so the "parallel" grid axis can shard across v7x's 2 TensorCores).
    for t in (256, 128, 64, 32):
        if M % t == 0 and M // t >= 2:
            return t
    return M


def gemm_bias_act(x, w, b, activation="none", out_dtype=jnp.bfloat16):
    """act(x @ w + b).  x: (M, K) bf16, w: (K, N) bf16, b: (1, N) f32."""
    M, K = x.shape
    K2, N = w.shape
    assert K == K2, (K, K2)
    tm = _pick_tile_m(M)
    grid = (M // tm,)

    flops = 2 * M * K * N
    transcendentals = M * N if activation == "sigmoid" else 0
    bytes_accessed = (M * K + K * N) * 2 + N * 4 + M * N * jnp.dtype(out_dtype).itemsize

    kernel = functools.partial(_gemm_bias_act_kernel, activation=activation)
    return pl.pallas_call(
        kernel,
        grid=grid,
        in_specs=[
            pl.BlockSpec((tm, K), lambda i: (i, 0)),   # row tile of patches
            pl.BlockSpec((K, N), lambda i: (0, 0)),    # full weight, VMEM-resident
            pl.BlockSpec((1, N), lambda i: (0, 0)),    # bias
        ],
        out_specs=pl.BlockSpec((tm, N), lambda i: (i, 0)),
        out_shape=jax.ShapeDtypeStruct((M, N), out_dtype),
        compiler_params=pltpu.CompilerParams(
            dimension_semantics=("parallel",)),
        cost_estimate=pl.CostEstimate(
            flops=flops, transcendentals=transcendentals,
            bytes_accessed=bytes_accessed),
    )(x, w, b)


# ---------------------------------------------------------------------------
# Pallas kernel: the whole FC bottleneck in one call
#   flat -> hidden(relu) -> {mean, log_var} -> reparameterize -> d1(relu) -> d2(relu)
# ---------------------------------------------------------------------------
def _fc_chain_kernel(flat_ref, eps_ref,
                     fhw_ref, fhb_ref, fmw_ref, fmb_ref, fvw_ref, fvb_ref,
                     d1w_ref, d1b_ref, d2w_ref, d2b_ref,
                     mean_ref, logvar_ref, feat_ref):
    hid = jnp.dot(flat_ref[...], fhw_ref[...], preferred_element_type=jnp.float32)
    hid = jnp.maximum(hid + fhb_ref[...], 0.0)
    hid_b = hid.astype(jnp.bfloat16)

    mean = jnp.dot(hid_b, fmw_ref[...], preferred_element_type=jnp.float32) + fmb_ref[...]
    log_var = jnp.dot(hid_b, fvw_ref[...], preferred_element_type=jnp.float32) + fvb_ref[...]

    # Training-mode reparameterization (matches torch sample_normal):
    #   z = mean + exp(0.5 * log_var) * eps,  eps supplied deterministically.
    z = mean + jnp.exp(0.5 * log_var) * eps_ref[...]

    d1 = jnp.dot(z.astype(jnp.bfloat16), d1w_ref[...], preferred_element_type=jnp.float32)
    d1 = jnp.maximum(d1 + d1b_ref[...], 0.0)

    feat = jnp.dot(d1.astype(jnp.bfloat16), d2w_ref[...], preferred_element_type=jnp.float32)
    feat = jnp.maximum(feat + d2b_ref[...], 0.0)

    mean_ref[...] = mean
    logvar_ref[...] = log_var
    feat_ref[...] = feat.astype(feat_ref.dtype)


def fc_chain(flat, eps, p):
    N = flat.shape[0]
    in_dim = flat.shape[1]
    hidden = p["fh_w"].shape[1]
    latent = p["fm_w"].shape[1]
    feat_dim = p["d2_w"].shape[1]

    args = (flat, eps,
            p["fh_w"], p["fh_b"], p["fm_w"], p["fm_b"], p["fv_w"], p["fv_b"],
            p["d1_w"], p["d1_b"], p["d2_w"], p["d2_b"])

    in_specs = [pl.BlockSpec(a.shape, lambda i: (0, 0)) for a in args]
    out_specs = (pl.BlockSpec((N, latent), lambda i: (0, 0)),
                 pl.BlockSpec((N, latent), lambda i: (0, 0)),
                 pl.BlockSpec((N, feat_dim), lambda i: (0, 0)))
    out_shape = (jax.ShapeDtypeStruct((N, latent), jnp.float32),
                 jax.ShapeDtypeStruct((N, latent), jnp.float32),
                 jax.ShapeDtypeStruct((N, feat_dim), jnp.bfloat16))

    flops = 2 * N * (in_dim * hidden + 2 * hidden * latent
                     + latent * hidden + hidden * feat_dim)
    bytes_accessed = (sum(int(a.size) * a.dtype.itemsize for a in args)
                      + N * latent * 4 * 2 + N * feat_dim * 2)

    return pl.pallas_call(
        _fc_chain_kernel,
        grid=(1,),
        in_specs=in_specs,
        out_specs=out_specs,
        out_shape=out_shape,
        compiler_params=pltpu.CompilerParams(
            dimension_semantics=("arbitrary",)),
        cost_estimate=pl.CostEstimate(
            flops=flops, transcendentals=N * latent,
            bytes_accessed=bytes_accessed),
    )(*args)


# ---------------------------------------------------------------------------
# Conv / ConvTranspose wrappers (single fused patch-gather op + Pallas GEMM)
# ---------------------------------------------------------------------------
def conv2d_nhwc(x, w_mat, b, *, stride, pad, activation,
                lhs_dilation=None, out_dtype=jnp.bfloat16, ksize=4):
    """x: (N, H, W, C_in) bf16; w_mat: (C_in*kh*kw, C_out) bf16; b: (1, C_out) f32.
    Patch channel ordering of conv_general_dilated_patches is (C_in, kh, kw),
    which matches the PyTorch weight flattening used in prepare_params."""
    N = x.shape[0]
    patches = lax.conv_general_dilated_patches(
        x, (ksize, ksize), (stride, stride),
        padding=((pad, pad), (pad, pad)),
        lhs_dilation=lhs_dilation,
        dimension_numbers=("NHWC", "HWIO", "NHWC"))
    _, Ho, Wo, K = patches.shape
    out = gemm_bias_act(patches.reshape(N * Ho * Wo, K), w_mat, b,
                        activation=activation, out_dtype=out_dtype)
    return out.reshape(N, Ho, Wo, w_mat.shape[1])


def conv_transpose2d_nhwc(x, w_mat, b, *, stride, pad, activation,
                          out_dtype=jnp.bfloat16, ksize=4):
    # PyTorch ConvTranspose2d (output_padding=0, symmetric padding) == regular
    # conv on the stride-dilated input with flipped/swapped weights (weights
    # already converted in prepare_params) and padding (ksize - 1 - pad).
    # TODO(synk): output_padding != 0 / asymmetric padding not supported here.
    return conv2d_nhwc(x, w_mat, b, stride=1, pad=ksize - 1 - pad,
                       activation=activation, lhs_dilation=(stride, stride),
                       out_dtype=out_dtype, ksize=ksize)


# ---------------------------------------------------------------------------
# VAE forward (img_size = (1, 32, 32), latent_dim = 10)
# ---------------------------------------------------------------------------
def vae_forward(params, x, eps):
    N = x.shape[0]
    xh = jnp.transpose(x, (0, 2, 3, 1)).astype(jnp.bfloat16)            # NCHW -> NHWC once

    # Encoder
    f = conv2d_nhwc(xh, params["e1_w"], params["e1_b"], stride=2, pad=1, activation="relu")  # (N,16,16,32)
    f = conv2d_nhwc(f, params["e2_w"], params["e2_b"], stride=2, pad=1, activation="relu")   # (N, 8, 8,64)
    f = conv2d_nhwc(f, params["e3_w"], params["e3_b"], stride=2, pad=1, activation="relu")   # (N, 4, 4,64)
    flat = f.reshape(N, -1)                                              # (N,1024) in (h,w,c) order

    # FC bottleneck: hidden, mean/log_var, reparameterize, latent_to_features (one kernel)
    # TODO(synk): torch.distributions.Normal(mean, softplus(log_var)) is constructed
    # in the reference forward but never used in the returned values; omitted.
    mean, log_var, feat = fc_chain(flat, eps.astype(jnp.float32), params)
    feat = feat.reshape(N, 4, 4, 64)                                     # NHWC features

    # Decoder
    g = conv_transpose2d_nhwc(feat, params["t1_w"], params["t1_b"], stride=2, pad=1, activation="relu")   # (N, 8, 8,32)
    g = conv_transpose2d_nhwc(g, params["t2_w"], params["t2_b"], stride=2, pad=1, activation="relu")      # (N,16,16,32)
    img = conv_transpose2d_nhwc(g, params["t3_w"], params["t3_b"], stride=2, pad=1,
                                activation="sigmoid", out_dtype=jnp.float32)                              # (N,32,32, 1)
    img = jnp.transpose(img, (0, 3, 1, 2))                               # NHWC -> NCHW once
    return img, (mean, log_var)


# ---------------------------------------------------------------------------
# Parameters: PyTorch-layout init, then one-time conversion to kernel layout
# ---------------------------------------------------------------------------
def init_params(key, in_ch=1, latent_dim=10, hidden_dim=256):
    """Deterministic params in PyTorch layouts (Conv2d: (C_out,C_in,kh,kw),
    ConvTranspose2d: (C_in,C_out,kh,kw), Linear: (out,in))."""
    keys = jax.random.split(key, 22)

    def w(k, shape, scale=0.05):
        return jax.random.normal(k, shape, jnp.float32) * scale

    return {
        "e1_w": w(keys[0], (32, in_ch, 4, 4)), "e1_b": w(keys[1], (32,), 0.01),
        "e2_w": w(keys[2], (64, 32, 4, 4)),    "e2_b": w(keys[3], (64,), 0.01),
        "e3_w": w(keys[4], (64, 64, 4, 4)),    "e3_b": w(keys[5], (64,), 0.01),
        "fh_w": w(keys[6], (hidden_dim, 64 * 4 * 4)), "fh_b": w(keys[7], (hidden_dim,), 0.01),
        "fm_w": w(keys[8], (latent_dim, hidden_dim)), "fm_b": w(keys[9], (latent_dim,), 0.01),
        "fv_w": w(keys[10], (latent_dim, hidden_dim)), "fv_b": w(keys[11], (latent_dim,), 0.01),
        "d1_w": w(keys[12], (hidden_dim, latent_dim)), "d1_b": w(keys[13], (hidden_dim,), 0.01),
        "d2_w": w(keys[14], (64 * 4 * 4, hidden_dim)), "d2_b": w(keys[15], (64 * 4 * 4,), 0.01),
        "t1_w": w(keys[16], (64, 32, 4, 4)),   "t1_b": w(keys[17], (32,), 0.01),
        "t2_w": w(keys[18], (32, 32, 4, 4)),   "t2_b": w(keys[19], (32,), 0.01),
        "t3_w": w(keys[20], (32, in_ch, 4, 4)), "t3_b": w(keys[21], (in_ch,), 0.01),
    }


def prepare_params(p, hidden_dim=256):
    """One-time conversion of PyTorch-layout weights into matmul-ready
    bf16 (K, N) matrices + (1, N) f32 biases, in NHWC / (C_in,kh,kw)-patch order."""
    bf16, f32 = jnp.bfloat16, jnp.float32

    def conv_w(w):               # (C_out, C_in, kh, kw) -> (C_in*kh*kw, C_out)
        return w.reshape(w.shape[0], -1).T.astype(bf16)

    def convT_w(w):              # (C_in, C_out, kh, kw) -> equivalent-conv matrix
        w_conv = jnp.flip(w, axis=(2, 3)).transpose(1, 0, 2, 3)
        return conv_w(w_conv)

    def bias(b):
        return b.astype(f32).reshape(1, -1)

    # features_to_hidden: torch input feature order (c,h,w) -> our flatten (h,w,c)
    fh = (p["fh_w"].reshape(hidden_dim, 64, 4, 4)
          .transpose(0, 2, 3, 1).reshape(hidden_dim, 64 * 4 * 4))
    # latent_to_features[1]: torch output feature order (c,h,w) -> our (h,w,c)
    d2 = (p["d2_w"].reshape(64, 4, 4, hidden_dim)
          .transpose(1, 2, 0, 3).reshape(64 * 4 * 4, hidden_dim))
    d2_b = p["d2_b"].reshape(64, 4, 4).transpose(1, 2, 0).reshape(-1)

    return {
        "e1_w": conv_w(p["e1_w"]), "e1_b": bias(p["e1_b"]),
        "e2_w": conv_w(p["e2_w"]), "e2_b": bias(p["e2_b"]),
        "e3_w": conv_w(p["e3_w"]), "e3_b": bias(p["e3_b"]),
        "fh_w": fh.T.astype(bf16), "fh_b": bias(p["fh_b"]),
        "fm_w": p["fm_w"].T.astype(bf16), "fm_b": bias(p["fm_b"]),
        "fv_w": p["fv_w"].T.astype(bf16), "fv_b": bias(p["fv_b"]),
        "d1_w": p["d1_w"].T.astype(bf16), "d1_b": bias(p["d1_b"]),
        "d2_w": d2.T.astype(bf16), "d2_b": bias(d2_b),
        "t1_w": convT_w(p["t1_w"]), "t1_b": bias(p["t1_b"]),
        "t2_w": convT_w(p["t2_w"]), "t2_b": bias(p["t2_b"]),
        "t3_w": convT_w(p["t3_w"]), "t3_b": bias(p["t3_b"]),
    }


if __name__ == "__main__":
    batch, in_ch, H, W = 2, 1, 32, 32
    latent_dim = 10

    kp, kx, keps = jax.random.split(jax.random.PRNGKey(0), 3)
    torch_layout_params = init_params(kp, in_ch=in_ch, latent_dim=latent_dim)
    params = prepare_params(torch_layout_params)          # one-time, outside jit

    x = jax.random.normal(kx, (batch, in_ch, H, W), jnp.float32)
    eps = jax.random.normal(keps, (batch, latent_dim), jnp.float32)

    fwd = jax.jit(vae_forward)
    recon, (mean, log_var) = fwd(params, x, eps)
    jax.block_until_ready((recon, mean, log_var))

    assert recon.shape == (batch, in_ch, H, W), recon.shape
    assert mean.shape == (batch, latent_dim), mean.shape
    assert log_var.shape == (batch, latent_dim), log_var.shape
    assert bool(jnp.all((recon >= 0.0) & (recon <= 1.0)))  # sigmoid output
    assert bool(jnp.all(jnp.isfinite(recon)))
    assert bool(jnp.all(jnp.isfinite(mean))) and bool(jnp.all(jnp.isfinite(log_var)))

    print("KERNEL_OK")
</pallas_src>

<mosaic_0001>
module attributes {stable_mosaic.version = 11 : i64} {
  func.func @_gemm_bias_act_kernel(%arg0: i32, %arg1: memref<256x16xbf16, #tpu.memory_space<vmem>>, %arg2: memref<16x32xbf16, #tpu.memory_space<vmem>>, %arg3: memref<1x32xf32, #tpu.memory_space<vmem>>, %arg4: memref<256x32xbf16, #tpu.memory_space<vmem>>) attributes {dimension_semantics = [#tpu.dimension_semantics<parallel>], iteration_bounds = array<i64: 2>, scalar_prefetch = 0 : i64, scratch_operands = 0 : i64, tpu.core_type = #tpu.core_type<tc>, window_params = [{transform_indices = @transform_0, window_bounds = array<i64: 256, 16>}, {pipeline_mode = #tpu.pipeline_mode<synchronous>, transform_indices = @transform_1, window_bounds = array<i64: 16, 32>}, {pipeline_mode = #tpu.pipeline_mode<synchronous>, transform_indices = @transform_2, window_bounds = array<i64: 1, 32>}, {transform_indices = @transform_3, window_bounds = array<i64: 256, 32>}]} {
    %c0 = arith.constant 0 : index
    %c0_0 = arith.constant 0 : index
    %0 = vector.load %arg1[%c0, %c0_0] : memref<256x16xbf16, #tpu.memory_space<vmem>>, vector<256x16xbf16>
    %c0_1 = arith.constant 0 : index
    %c0_2 = arith.constant 0 : index
    %1 = vector.load %arg2[%c0_1, %c0_2] : memref<16x32xbf16, #tpu.memory_space<vmem>>, vector<16x32xbf16>
    %cst = arith.constant dense<0.000000e+00> : vector<256x32xf32>
    %2 = tpu.matmul %0, %1, %cst {dimension_numbers = #tpu.dot_dimension_numbers<[1], [0], [0], [1], [0, 0, 1, 1], [], []>} : vector<256x16xbf16>, vector<16x32xbf16>, vector<256x32xf32> -> vector<256x32xf32>
    %c0_3 = arith.constant 0 : index
    %c0_4 = arith.constant 0 : index
    %3 = vector.load %arg3[%c0_3, %c0_4] : memref<1x32xf32, #tpu.memory_space<vmem>>, vector<1x32xf32>
    %4 = vector.broadcast %3 : vector<1x32xf32> to vector<256x32xf32>
    %5 = arith.addf %2, %4 : vector<256x32xf32>
    %cst_5 = arith.constant 0.000000e+00 : f32
    %6 = vector.broadcast %cst_5 : f32 to vector<256x32xf32>
    %7 = arith.maximumf %5, %6 : vector<256x32xf32>
    %8 = arith.truncf %7 : vector<256x32xf32> to vector<256x32xbf16>
    %c0_6 = arith.constant 0 : index
    %c0_7 = arith.constant 0 : index
    %9 = vector.load %arg4[%c0_6, %c0_7] : memref<256x32xbf16, #tpu.memory_space<vmem>>, vector<256x32xbf16>
    tpu.vector_store %arg4[%c0_6, %c0_7], %8 {strides = array<i32>} : memref<256x32xbf16, #tpu.memory_space<vmem>>, vector<256x32xbf16>,
    return
  }
  func.func @transform_0(%arg0: i32) -> (i32, i32) {
    %c0_i32 = arith.constant 0 : i32
    %c0_i32_0 = arith.constant 0 : i32
    return %arg0, %c0_i32 : i32, i32
  }
  func.func @transform_1(%arg0: i32) -> (i32, i32) {
    %c0_i32 = arith.constant 0 : i32
    %c0_i32_0 = arith.constant 0 : i32
    %c0_i32_1 = arith.constant 0 : i32
    return %c0_i32, %c0_i32_0 : i32, i32
  }
  func.func @transform_2(%arg0: i32) -> (i32, i32) {
    %c0_i32 = arith.constant 0 : i32
    %c0_i32_0 = arith.constant 0 : i32
    %c0_i32_1 = arith.constant 0 : i32
    return %c0_i32, %c0_i32_0 : i32, i32
  }
  func.func @transform_3(%arg0: i32) -> (i32, i32) {
    %c0_i32 = arith.constant 0 : i32
    %c0_i32_0 = arith.constant 0 : i32
    return %arg0, %c0_i32 : i32, i32
  }
}

module attributes {stable_mosaic.version = 11 : i64} {
  func.func @_gemm_bias_act_kernel(%arg0: i32, %arg1: memref<64x512xbf16, #tpu.memory_space<vmem>>, %arg2: memref<512x64xbf16, #tpu.memory_space<vmem>>, %arg3: memref<1x64xf32, #tpu.memory_space<vmem>>, %arg4: memref<64x64xbf16, #tpu.memory_space<vmem>>) attributes {dimension_semantics = [#tpu.dimension_semantics<parallel>], iteration_bounds = array<i64: 2>, scalar_prefetch = 0 : i64, scratch_operands = 0 : i64, tpu.core_type = #tpu.core_type<tc>, window_params = [{transform_indices = @transform_0, window_bounds = array<i64: 64, 512>}, {pipeline_mode = #tpu.pipeline_mode<synchronous>, transform_indices = @transform_1, window_bounds = array<i64: 512, 64>}, {pipeline_mode = #tpu.pipeline_mode<synchronous>, transform_indices = @transform_2, window_bounds = array<i64: 1, 64>}, {transform_indices = @transform_3, window_bounds = array<i64: 64, 64>}]} {
    %c0 = arith.constant 0 : index
    %c0_0 = arith.constant 0 : index
    %0 = vector.load %arg1[%c0, %c0_0] : memref<64x512xbf16, #tpu.memory_space<vmem>>, vector<64x512xbf16>
    %c0_1 = arith.constant 0 : index
    %c0_2 = arith.constant 0 : index
    %1 = vector.load %arg2[%c0_1, %c0_2] : memref<512x64xbf16, #tpu.memory_space<vmem>>, vector<512x64xbf16>
    %cst = arith.constant dense<0.000000e+00> : vector<64x64xf32>
    %2 = tpu.matmul %0, %1, %cst {dimension_numbers = #tpu.dot_dimension_numbers<[1], [0], [0], [1], [0, 0, 1, 1], [], []>} : vector<64x512xbf16>, vector<512x64xbf16>, vector<64x64xf32> -> vector<64x64xf32>
    %c0_3 = arith.constant 0 : index
    %c0_4 = arith.constant 0 : index
    %3 = vector.load %arg3[%c0_3, %c0_4] : memref<1x64xf32, #tpu.memory_space<vmem>>, vector<1x64xf32>
    %4 = vector.broadcast %3 : vector<1x64xf32> to vector<64x64xf32>
    %5 = arith.addf %2, %4 : vector<64x64xf32>
    %cst_5 = arith.constant 0.000000e+00 : f32
    %6 = vector.broadcast %cst_5 : f32 to vector<64x64xf32>
    %7 = arith.maximumf %5, %6 : vector<64x64xf32>
    %8 = arith.truncf %7 : vector<64x64xf32> to vector<64x64xbf16>
    %c0_6 = arith.constant 0 : index
    %c0_7 = arith.constant 0 : index
    %9 = vector.load %arg4[%c0_6, %c0_7] : memref<64x64xbf16, #tpu.memory_space<vmem>>, vector<64x64xbf16>
    tpu.vector_store %arg4[%c0_6, %c0_7], %8 {strides = array<i32>} : memref<64x64xbf16, #tpu.memory_space<vmem>>, vector<64x64xbf16>,
    return
  }
  func.func @transform_0(%arg0: i32) -> (i32, i32) {
    %c0_i32 = arith.constant 0 : i32
    %c0_i32_0 = arith.constant 0 : i32
    return %arg0, %c0_i32 : i32, i32
  }
  func.func @transform_1(%arg0: i32) -> (i32, i32) {
    %c0_i32 = arith.constant 0 : i32
    %c0_i32_0 = arith.constant 0 : i32
    %c0_i32_1 = arith.constant 0 : i32
    return %c0_i32, %c0_i32_0 : i32, i32
  }
  func.func @transform_2(%arg0: i32) -> (i32, i32) {
    %c0_i32 = arith.constant 0 : i32
    %c0_i32_0 = arith.constant 0 : i32
    %c0_i32_1 = arith.constant 0 : i32
    return %c0_i32, %c0_i32_0 : i32, i32
  }
  func.func @transform_3(%arg0: i32) -> (i32, i32) {
    %c0_i32 = arith.constant 0 : i32
    %c0_i32_0 = arith.constant 0 : i32
    return %arg0, %c0_i32 : i32, i32
  }
}

module attributes {stable_mosaic.version = 11 : i64} {
  func.func @_gemm_bias_act_kernel(%arg0: i32, %arg1: memref<32x1024xbf16, #tpu.memory_space<vmem>>, %arg2: memref<1024x64xbf16, #tpu.memory_space<vmem>>, %arg3: memref<1x64xf32, #tpu.memory_space<vmem>>, %arg4: memref<32x64xbf16, #tpu.memory_space<vmem>>) attributes {dimension_semantics = [#tpu.dimension_semantics<parallel>], iteration_bounds = array<i64: 1>, scalar_prefetch = 0 : i64, scratch_operands = 0 : i64, tpu.core_type = #tpu.core_type<tc>, window_params = [{transform_indices = @transform_0, window_bounds = array<i64: 32, 1024>}, {pipeline_mode = #tpu.pipeline_mode<synchronous>, transform_indices = @transform_1, window_bounds = array<i64: 1024, 64>}, {pipeline_mode = #tpu.pipeline_mode<synchronous>, transform_indices = @transform_2, window_bounds = array<i64: 1, 64>}, {transform_indices = @transform_3, window_bounds = array<i64: 32, 64>}]} {
    %c0 = arith.constant 0 : index
    %c0_0 = arith.constant 0 : index
    %0 = vector.load %arg1[%c0, %c0_0] : memref<32x1024xbf16, #tpu.memory_space<vmem>>, vector<32x1024xbf16>
    %c0_1 = arith.constant 0 : index
    %c0_2 = arith.constant 0 : index
    %1 = vector.load %arg2[%c0_1, %c0_2] : memref<1024x64xbf16, #tpu.memory_space<vmem>>, vector<1024x64xbf16>
    %cst = arith.constant dense<0.000000e+00> : vector<32x64xf32>
    %2 = tpu.matmul %0, %1, %cst {dimension_numbers = #tpu.dot_dimension_numbers<[1], [0], [0], [1], [0, 0, 1, 1], [], []>} : vector<32x1024xbf16>, vector<1024x64xbf16>, vector<32x64xf32> -> vector<32x64xf32>
    %c0_3 = arith.constant 0 : index
    %c0_4 = arith.constant 0 : index
    %3 = vector.load %arg3[%c0_3, %c0_4] : memref<1x64xf32, #tpu.memory_space<vmem>>, vector<1x64xf32>
    %4 = vector.broadcast %3 : vector<1x64xf32> to vector<32x64xf32>
    %5 = arith.addf %2, %4 : vector<32x64xf32>
    %cst_5 = arith.constant 0.000000e+00 : f32
    %6 = vector.broadcast %cst_5 : f32 to vector<32x64xf32>
    %7 = arith.maximumf %5, %6 : vector<32x64xf32>
    %8 = arith.truncf %7 : vector<32x64xf32> to vector<32x64xbf16>
    %c0_6 = arith.constant 0 : index
    %c0_7 = arith.constant 0 : index
    %9 = vector.load %arg4[%c0_6, %c0_7] : memref<32x64xbf16, #tpu.memory_space<vmem>>, vector<32x64xbf16>
    tpu.vector_store %arg4[%c0_6, %c0_7], %8 {strides = array<i32>} : memref<32x64xbf16, #tpu.memory_space<vmem>>, vector<32x64xbf16>,
    return
  }
  func.func @transform_0(%arg0: i32) -> (i32, i32) {
    %c0_i32 = arith.constant 0 : i32
    %c0_i32_0 = arith.constant 0 : i32
    return %arg0, %c0_i32 : i32, i32
  }
  func.func @transform_1(%arg0: i32) -> (i32, i32) {
    %c0_i32 = arith.constant 0 : i32
    %c0_i32_0 = arith.constant 0 : i32
    %c0_i32_1 = arith.constant 0 : i32
    return %c0_i32, %c0_i32_0 : i32, i32
  }
  func.func @transform_2(%arg0: i32) -> (i32, i32) {
    %c0_i32 = arith.constant 0 : i32
    %c0_i32_0 = arith.constant 0 : i32
    %c0_i32_1 = arith.constant 0 : i32
    return %c0_i32, %c0_i32_0 : i32, i32
  }
  func.func @transform_3(%arg0: i32) -> (i32, i32) {
    %c0_i32 = arith.constant 0 : i32
    %c0_i32_0 = arith.constant 0 : i32
    return %arg0, %c0_i32 : i32, i32
  }
}

module attributes {stable_mosaic.version = 11 : i64} {
  func.func @_fc_chain_kernel(%arg0: i32, %arg1: memref<2x1024xbf16, #tpu.memory_space<vmem>>, %arg2: memref<2x10xf32, #tpu.memory_space<vmem>>, %arg3: memref<1024x256xbf16, #tpu.memory_space<vmem>>, %arg4: memref<1x256xf32, #tpu.memory_space<vmem>>, %arg5: memref<256x10xbf16, #tpu.memory_space<vmem>>, %arg6: memref<1x10xf32, #tpu.memory_space<vmem>>, %arg7: memref<256x10xbf16, #tpu.memory_space<vmem>>, %arg8: memref<1x10xf32, #tpu.memory_space<vmem>>, %arg9: memref<10x256xbf16, #tpu.memory_space<vmem>>, %arg10: memref<1x256xf32, #tpu.memory_space<vmem>>, %arg11: memref<256x1024xbf16, #tpu.memory_space<vmem>>, %arg12: memref<1x1024xf32, #tpu.memory_space<vmem>>, %arg13: memref<2x10xf32, #tpu.memory_space<vmem>>, %arg14: memref<2x10xf32, #tpu.memory_space<vmem>>, %arg15: memref<2x1024xbf16, #tpu.memory_space<vmem>>) attributes {dimension_semantics = [#tpu.dimension_semantics<arbitrary>], iteration_bounds = array<i64: 1>, scalar_prefetch = 0 : i64, scratch_operands = 0 : i64, tpu.core_type = #tpu.core_type<tc>, window_params = [{pipeline_mode = #tpu.pipeline_mode<synchronous>, transform_indices = @transform_0, window_bounds = array<i64: 2, 1024>}, {pipeline_mode = #tpu.pipeline_mode<synchronous>, transform_indices = @transform_1, window_bounds = array<i64: 2, 10>}, {pipeline_mode = #tpu.pipeline_mode<synchronous>, transform_indices = @transform_2, window_bounds = array<i64: 1024, 256>}, {pipeline_mode = #tpu.pipeline_mode<synchronous>, transform_indices = @transform_3, window_bounds = array<i64: 1, 256>}, {pipeline_mode = #tpu.pipeline_mode<synchronous>, transform_indices = @transform_4, window_bounds = array<i64: 256, 10>}, {pipeline_mode = #tpu.pipeline_mode<synchronous>, transform_indices = @transform_5, window_bounds = array<i64: 1, 10>}, {pipeline_mode = #tpu.pipeline_mode<synchronous>, transform_indices = @transform_6, window_bounds = array<i64: 256, 10>}, {pipeline_mode = #tpu.pipeline_mode<synchronous>, transform_indices = @transform_7, window_bounds = array<i64: 1, 10>}, {pipeline_mode = #tpu.pipeline_mode<synchronous>, transform_indices = @transform_8, window_bounds = array<i64: 10, 256>}, {pipeline_mode = #tpu.pipeline_mode<synchronous>, transform_indices = @transform_9, window_bounds = array<i64: 1, 256>}, {pipeline_mode = #tpu.pipeline_mode<synchronous>, transform_indices = @transform_10, window_bounds = array<i64: 256, 1024>}, {pipeline_mode = #tpu.pipeline_mode<synchronous>, transform_indices = @transform_11, window_bounds = array<i64: 1, 1024>}, {pipeline_mode = #tpu.pipeline_mode<synchronous>, transform_indices = @transform_12, window_bounds = array<i64: 2, 10>}, {pipeline_mode = #tpu.pipeline_mode<synchronous>, transform_indices = @transform_13, window_bounds = array<i64: 2, 10>}, {pipeline_mode = #tpu.pipeline_mode<synchronous>, transform_indices = @transform_14, window_bounds = array<i64: 2, 1024>}]} {
    %c0 = arith.constant 0 : index
    %c0_0 = arith.constant 0 : index
    %0 = vector.load %arg1[%c0, %c0_0] : memref<2x1024xbf16, #tpu.memory_space<vmem>>, vector<2x1024xbf16>
    %c0_1 = arith.constant 0 : index
    %c0_2 = arith.constant 0 : index
    %1 = vector.load %arg3[%c0_1, %c0_2] : memref<1024x256xbf16, #tpu.memory_space<vmem>>, vector<1024x256xbf16>
    %cst = arith.constant dense<0.000000e+00> : vector<2x256xf32>
    %2 = tpu.matmul %0, %1, %cst {dimension_numbers = #tpu.dot_dimension_numbers<[1], [0], [0], [1], [0, 0, 1, 1], [], []>} : vector<2x1024xbf16>, vector<1024x256xbf16>, vector<2x256xf32> -> vector<2x256xf32>
    %c0_3 = arith.constant 0 : index
    %c0_4 = arith.constant 0 : index
    %3 = vector.load %arg4[%c0_3, %c0_4] : memref<1x256xf32, #tpu.memory_space<vmem>>, vector<1x256xf32>
    %4 = vector.broadcast %3 : vector<1x256xf32> to vector<2x256xf32>
    %5 = arith.addf %2, %4 : vector<2x256xf32>
    %cst_5 = arith.constant 0.000000e+00 : f32
    %6 = vector.broadcast %cst_5 : f32 to vector<2x256xf32>
    %7 = arith.maximumf %5, %6 : vector<2x256xf32>
    %8 = arith.truncf %7 : vector<2x256xf32> to vector<2x256xbf16>
    %c0_6 = arith.constant 0 : index
    %c0_7 = arith.constant 0 : index
    %9 = vector.load %arg5[%c0_6, %c0_7] : memref<256x10xbf16, #tpu.memory_space<vmem>>, vector<256x10xbf16>
    %cst_8 = arith.constant dense<0.000000e+00> : vector<2x10xf32>
    %10 = tpu.matmul %8, %9, %cst_8 {dimension_numbers = #tpu.dot_dimension_numbers<[1], [0], [0], [1], [0, 0, 1, 1], [], []>} : vector<2x256xbf16>, vector<256x10xbf16>, vector<2x10xf32> -> vector<2x10xf32>
    %c0_9 = arith.constant 0 : index
    %c0_10 = arith.constant 0 : index
    %11 = vector.load %arg6[%c0_9, %c0_10] : memref<1x10xf32, #tpu.memory_space<vmem>>, vector<1x10xf32>
    %12 = vector.broadcast %11 : vector<1x10xf32> to vector<2x10xf32>
    %13 = arith.addf %10, %12 : vector<2x10xf32>
    %c0_11 = arith.constant 0 : index
    %c0_12 = arith.constant 0 : index
    %14 = vector.load %arg7[%c0_11, %c0_12] : memref<256x10xbf16, #tpu.memory_space<vmem>>, vector<256x10xbf16>
    %cst_13 = arith.constant dense<0.000000e+00> : vector<2x10xf32>
    %15 = tpu.matmul %8, %14, %cst_13 {dimension_numbers = #tpu.dot_dimension_numbers<[1], [0], [0], [1], [0, 0, 1, 1], [], []>} : vector<2x256xbf16>, vector<256x10xbf16>, vector<2x10xf32> -> vector<2x10xf32>
    %c0_14 = arith.constant 0 : index
    %c0_15 = arith.constant 0 : index
    %16 = vector.load %arg8[%c0_14, %c0_15] : memref<1x10xf32, #tpu.memory_space<vmem>>, vector<1x10xf32>
    %17 = vector.broadcast %16 : vector<1x10xf32> to vector<2x10xf32>
    %18 = arith.addf %15, %17 : vector<2x10xf32>
    %cst_16 = arith.constant 5.000000e-01 : f32
    %19 = vector.broadcast %cst_16 : f32 to vector<2x10xf32>
    %20 = arith.mulf %19, %18 : vector<2x10xf32>
    %21 = math.exp %20 : vector<2x10xf32>
    %c0_17 = arith.constant 0 : index
    %c0_18 = arith.constant 0 : index
    %22 = vector.load %arg2[%c0_17, %c0_18] : memref<2x10xf32, #tpu.memory_space<vmem>>, vector<2x10xf32>
    %23 = arith.mulf %21, %22 : vector<2x10xf32>
    %24 = arith.addf %13, %23 : vector<2x10xf32>
    %25 = arith.truncf %24 : vector<2x10xf32> to vector<2x10xbf16>
    %c0_19 = arith.constant 0 : index
    %c0_20 = arith.constant 0 : index
    %26 = vector.load %arg9[%c0_19, %c0_20] : memref<10x256xbf16, #tpu.memory_space<vmem>>, vector<10x256xbf16>
    %cst_21 = arith.constant dense<0.000000e+00> : vector<2x256xf32>
    %27 = tpu.matmul %25, %26, %cst_21 {dimension_numbers = #tpu.dot_dimension_numbers<[1], [0], [0], [1], [0, 0, 1, 1], [], []>} : vector<2x10xbf16>, vector<10x256xbf16>, vector<2x256xf32> -> vector<2x256xf32>
    %c0_22 = arith.constant 0 : index
    %c0_23 = arith.constant 0 : index
    %28 = vector.load %arg10[%c0_22, %c0_23] : memref<1x256xf32, #tpu.memory_space<vmem>>, vector<1x256xf32>
    %29 = vector.broadcast %28 : vector<1x256xf32> to vector<2x256xf32>
    %30 = arith.addf %27, %29 : vector<2x256xf32>
    %cst_24 = arith.constant 0.000000e+00 : f32
    %31 = vector.broadcast %cst_24 : f32 to vector<2x256xf32>
    %32 = arith.maximumf %30, %31 : vector<2x256xf32>
    %33 = arith.truncf %32 : vector<2x256xf32> to vector<2x256xbf16>
    %c0_25 = arith.constant 0 : index
    %c0_26 = arith.constant 0 : index
    %34 = vector.load %arg11[%c0_25, %c0_26] : memref<256x1024xbf16, #tpu.memory_space<vmem>>, vector<256x1024xbf16>
    %cst_27 = arith.constant dense<0.000000e+00> : vector<2x1024xf32>
    %35 = tpu.matmul %33, %34, %cst_27 {dimension_numbers = #tpu.dot_dimension_numbers<[1], [0], [0], [1], [0, 0, 1, 1], [], []>} : vector<2x256xbf16>, vector<256x1024xbf16>, vector<2x1024xf32> -> vector<2x1024xf32>
    %c0_28 = arith.constant 0 : index
    %c0_29 = arith.constant 0 : index
    %36 = vector.load %arg12[%c0_28, %c0_29] : memref<1x1024xf32, #tpu.memory_space<vmem>>, vector<1x1024xf32>
    %37 = vector.broadcast %36 : vector<1x1024xf32> to vector<2x1024xf32>
    %38 = arith.addf %35, %37 : vector<2x1024xf32>
    %cst_30 = arith.constant 0.000000e+00 : f32
    %39 = vector.broadcast %cst_30 : f32 to vector<2x1024xf32>
    %40 = arith.maximumf %38, %39 : vector<2x1024xf32>
    %c0_31 = arith.constant 0 : index
    %c0_32 = arith.constant 0 : index
    %41 = vector.load %arg13[%c0_31, %c0_32] : memref<2x10xf32, #tpu.memory_space<vmem>>, vector<2x10xf32>
    tpu.vector_store %arg13[%c0_31, %c0_32], %13 {strides = array<i32>} : memref<2x10xf32, #tpu.memory_space<vmem>>, vector<2x10xf32>,
    %c0_33 = arith.constant 0 : index
    %c0_34 = arith.constant 0 : index
    %42 = vector.load %arg14[%c0_33, %c0_34] : memref<2x10xf32, #tpu.memory_space<vmem>>, vector<2x10xf32>
    tpu.vector_store %arg14[%c0_33, %c0_34], %18 {strides = array<i32>} : memref<2x10xf32, #tpu.memory_space<vmem>>, vector<2x10xf32>,
    %43 = arith.truncf %40 : vector<2x1024xf32> to vector<2x1024xbf16>
    %c0_35 = arith.constant 0 : index
    %c0_36 = arith.constant 0 : index
    %44 = vector.load %arg15[%c0_35, %c0_36] : memref<2x1024xbf16, #tpu.memory_space<vmem>>, vector<2x1024xbf16>
    tpu.vector_store %arg15[%c0_35, %c0_36], %43 {strides = array<i32>} : memref<2x1024xbf16, #tpu.memory_space<vmem>>, vector<2x1024xbf16>,
    return
  }
  func.func @transform_0(%arg0: i32) -> (i32, i32) {
    %c0_i32 = arith.constant 0 : i32
    %c0_i32_0 = arith.constant 0 : i32
    %c0_i32_1 = arith.constant 0 : i32
    return %c0_i32, %c0_i32_0 : i32, i32
  }
  func.func @transform_1(%arg0: i32) -> (i32, i32) {
    %c0_i32 = arith.constant 0 : i32
    %c0_i32_0 = arith.constant 0 : i32
    %c0_i32_1 = arith.constant 0 : i32
    return %c0_i32, %c0_i32_0 : i32, i32
  }
  func.func @transform_2(%arg0: i32) -> (i32, i32) {
    %c0_i32 = arith.constant 0 : i32
    %c0_i32_0 = arith.constant 0 : i32
    %c0_i32_1 = arith.constant 0 : i32
    return %c0_i32, %c0_i32_0 : i32, i32
  }
  func.func @transform_3(%arg0: i32) -> (i32, i32) {
    %c0_i32 = arith.constant 0 : i32
    %c0_i32_0 = arith.constant 0 : i32
    %c0_i32_1 = arith.constant 0 : i32
    return %c0_i32, %c0_i32_0 : i32, i32
  }
  func.func @transform_4(%arg0: i32) -> (i32, i32) {
    %c0_i32 = arith.constant 0 : i32
    %c0_i32_0 = arith.constant 0 : i32
    %c0_i32_1 = arith.constant 0 : i32
    return %c0_i32, %c0_i32_0 : i32, i32
  }
  func.func @transform_5(%arg0: i32) -> (i32, i32) {
    %c0_i32 = arith.constant 0 : i32
    %c0_i32_0 = arith.constant 0 : i32
    %c0_i32_1 = arith.constant 0 : i32
    return %c0_i32, %c0_i32_0 : i32, i32
  }
  func.func @transform_6(%arg0: i32) -> (i32, i32) {
    %c0_i32 = arith.constant 0 : i32
    %c0_i32_0 = arith.constant 0 : i32
    %c0_i32_1 = arith.constant 0 : i32
    return %c0_i32, %c0_i32_0 : i32, i32
  }
  func.func @transform_7(%arg0: i32) -> (i32, i32) {
    %c0_i32 = arith.constant 0 : i32
    %c0_i32_0 = arith.constant 0 : i32
    %c0_i32_1 = arith.constant 0 : i32
    return %c0_i32, %c0_i32_0 : i32, i32
  }
  func.func @transform_8(%arg0: i32) -> (i32, i32) {
    %c0_i32 = arith.constant 0 : i32
    %c0_i32_0 = arith.constant 0 : i32
    %c0_i32_1 = arith.constant 0 : i32
    return %c0_i32, %c0_i32_0 : i32, i32
  }
  func.func @transform_9(%arg0: i32) -> (i32, i32) {
    %c0_i32 = arith.constant 0 : i32
    %c0_i32_0 = arith.constant 0 : i32
    %c0_i32_1 = arith.constant 0 : i32
    return %c0_i32, %c0_i32_0 : i32, i32
  }
  func.func @transform_10(%arg0: i32) -> (i32, i32) {
    %c0_i32 = arith.constant 0 : i32
    %c0_i32_0 = arith.constant 0 : i32
    %c0_i32_1 = arith.constant 0 : i32
    return %c0_i32, %c0_i32_0 : i32, i32
  }
  func.func @transform_11(%arg0: i32) -> (i32, i32) {
    %c0_i32 = arith.constant 0 : i32
    %c0_i32_0 = arith.constant 0 : i32
    %c0_i32_1 = arith.constant 0 : i32
    return %c0_i32, %c0_i32_0 : i32, i32
  }
  func.func @transform_12(%arg0: i32) -> (i32, i32) {
    %c0_i32 = arith.constant 0 : i32
    %c0_i32_0 = arith.constant 0 : i32
    %c0_i32_1 = arith.constant 0 : i32
    return %c0_i32, %c0_i32_0 : i32, i32
  }
  func.func @transform_13(%arg0: i32) -> (i32, i32) {
    %c0_i32 = arith.constant 0 : i32
    %c0_i32_0 = arith.constant 0 : i32
    %c0_i32_1 = arith.constant 0 : i32
    return %c0_i32, %c0_i32_0 : i32, i32
  }
  func.func @transform_14(%arg0: i32) -> (i32, i32) {
    %c0_i32 = arith.constant 0 : i32
    %c0_i32_0 = arith.constant 0 : i32
    %c0_i32_1 = arith.constant 0 : i32
    return %c0_i32, %c0_i32_0 : i32, i32
  }
}

module attributes {stable_mosaic.version = 11 : i64} {
  func.func @_gemm_bias_act_kernel(%arg0: i32, %arg1: memref<64x1024xbf16, #tpu.memory_space<vmem>>, %arg2: memref<1024x32xbf16, #tpu.memory_space<vmem>>, %arg3: memref<1x32xf32, #tpu.memory_space<vmem>>, %arg4: memref<64x32xbf16, #tpu.memory_space<vmem>>) attributes {dimension_semantics = [#tpu.dimension_semantics<parallel>], iteration_bounds = array<i64: 2>, scalar_prefetch = 0 : i64, scratch_operands = 0 : i64, tpu.core_type = #tpu.core_type<tc>, window_params = [{transform_indices = @transform_0, window_bounds = array<i64: 64, 1024>}, {pipeline_mode = #tpu.pipeline_mode<synchronous>, transform_indices = @transform_1, window_bounds = array<i64: 1024, 32>}, {pipeline_mode = #tpu.pipeline_mode<synchronous>, transform_indices = @transform_2, window_bounds = array<i64: 1, 32>}, {transform_indices = @transform_3, window_bounds = array<i64: 64, 32>}]} {
    %c0 = arith.constant 0 : index
    %c0_0 = arith.constant 0 : index
    %0 = vector.load %arg1[%c0, %c0_0] : memref<64x1024xbf16, #tpu.memory_space<vmem>>, vector<64x1024xbf16>
    %c0_1 = arith.constant 0 : index
    %c0_2 = arith.constant 0 : index
    %1 = vector.load %arg2[%c0_1, %c0_2] : memref<1024x32xbf16, #tpu.memory_space<vmem>>, vector<1024x32xbf16>
    %cst = arith.constant dense<0.000000e+00> : vector<64x32xf32>
    %2 = tpu.matmul %0, %1, %cst {dimension_numbers = #tpu.dot_dimension_numbers<[1], [0], [0], [1], [0, 0, 1, 1], [], []>} : vector<64x1024xbf16>, vector<1024x32xbf16>, vector<64x32xf32> -> vector<64x32xf32>
    %c0_3 = arith.constant 0 : index
    %c0_4 = arith.constant 0 : index
    %3 = vector.load %arg3[%c0_3, %c0_4] : memref<1x32xf32, #tpu.memory_space<vmem>>, vector<1x32xf32>
    %4 = vector.broadcast %3 : vector<1x32xf32> to vector<64x32xf32>
    %5 = arith.addf %2, %4 : vector<64x32xf32>
    %cst_5 = arith.constant 0.000000e+00 : f32
    %6 = vector.broadcast %cst_5 : f32 to vector<64x32xf32>
    %7 = arith.maximumf %5, %6 : vector<64x32xf32>
    %8 = arith.truncf %7 : vector<64x32xf32> to vector<64x32xbf16>
    %c0_6 = arith.constant 0 : index
    %c0_7 = arith.constant 0 : index
    %9 = vector.load %arg4[%c0_6, %c0_7] : memref<64x32xbf16, #tpu.memory_space<vmem>>, vector<64x32xbf16>
    tpu.vector_store %arg4[%c0_6, %c0_7], %8 {strides = array<i32>} : memref<64x32xbf16, #tpu.memory_space<vmem>>, vector<64x32xbf16>,
    return
  }
  func.func @transform_0(%arg0: i32) -> (i32, i32) {
    %c0_i32 = arith.constant 0 : i32
    %c0_i32_0 = arith.constant 0 : i32
    return %arg0, %c0_i32 : i32, i32
  }
  func.func @transform_1(%arg0: i32) -> (i32, i32) {
    %c0_i32 = arith.constant 0 : i32
    %c0_i32_0 = arith.constant 0 : i32
    %c0_i32_1 = arith.constant 0 : i32
    return %c0_i32, %c0_i32_0 : i32, i32
  }
  func.func @transform_2(%arg0: i32) -> (i32, i32) {
    %c0_i32 = arith.constant 0 : i32
    %c0_i32_0 = arith.constant 0 : i32
    %c0_i32_1 = arith.constant 0 : i32
    return %c0_i32, %c0_i32_0 : i32, i32
  }
  func.func @transform_3(%arg0: i32) -> (i32, i32) {
    %c0_i32 = arith.constant 0 : i32
    %c0_i32_0 = arith.constant 0 : i32
    return %arg0, %c0_i32 : i32, i32
  }
}

module attributes {stable_mosaic.version = 11 : i64} {
  func.func @_gemm_bias_act_kernel(%arg0: i32, %arg1: memref<256x512xbf16, #tpu.memory_space<vmem>>, %arg2: memref<512x32xbf16, #tpu.memory_space<vmem>>, %arg3: memref<1x32xf32, #tpu.memory_space<vmem>>, %arg4: memref<256x32xbf16, #tpu.memory_space<vmem>>) attributes {dimension_semantics = [#tpu.dimension_semantics<parallel>], iteration_bounds = array<i64: 2>, scalar_prefetch = 0 : i64, scratch_operands = 0 : i64, tpu.core_type = #tpu.core_type<tc>, window_params = [{transform_indices = @transform_0, window_bounds = array<i64: 256, 512>}, {pipeline_mode = #tpu.pipeline_mode<synchronous>, transform_indices = @transform_1, window_bounds = array<i64: 512, 32>}, {pipeline_mode = #tpu.pipeline_mode<synchronous>, transform_indices = @transform_2, window_bounds = array<i64: 1, 32>}, {transform_indices = @transform_3, window_bounds = array<i64: 256, 32>}]} {
    %c0 = arith.constant 0 : index
    %c0_0 = arith.constant 0 : index
    %0 = vector.load %arg1[%c0, %c0_0] : memref<256x512xbf16, #tpu.memory_space<vmem>>, vector<256x512xbf16>
    %c0_1 = arith.constant 0 : index
    %c0_2 = arith.constant 0 : index
    %1 = vector.load %arg2[%c0_1, %c0_2] : memref<512x32xbf16, #tpu.memory_space<vmem>>, vector<512x32xbf16>
    %cst = arith.constant dense<0.000000e+00> : vector<256x32xf32>
    %2 = tpu.matmul %0, %1, %cst {dimension_numbers = #tpu.dot_dimension_numbers<[1], [0], [0], [1], [0, 0, 1, 1], [], []>} : vector<256x512xbf16>, vector<512x32xbf16>, vector<256x32xf32> -> vector<256x32xf32>
    %c0_3 = arith.constant 0 : index
    %c0_4 = arith.constant 0 : index
    %3 = vector.load %arg3[%c0_3, %c0_4] : memref<1x32xf32, #tpu.memory_space<vmem>>, vector<1x32xf32>
    %4 = vector.broadcast %3 : vector<1x32xf32> to vector<256x32xf32>
    %5 = arith.addf %2, %4 : vector<256x32xf32>
    %cst_5 = arith.constant 0.000000e+00 : f32
    %6 = vector.broadcast %cst_5 : f32 to vector<256x32xf32>
    %7 = arith.maximumf %5, %6 : vector<256x32xf32>
    %8 = arith.truncf %7 : vector<256x32xf32> to vector<256x32xbf16>
    %c0_6 = arith.constant 0 : index
    %c0_7 = arith.constant 0 : index
    %9 = vector.load %arg4[%c0_6, %c0_7] : memref<256x32xbf16, #tpu.memory_space<vmem>>, vector<256x32xbf16>
    tpu.vector_store %arg4[%c0_6, %c0_7], %8 {strides = array<i32>} : memref<256x32xbf16, #tpu.memory_space<vmem>>, vector<256x32xbf16>,
    return
  }
  func.func @transform_0(%arg0: i32) -> (i32, i32) {
    %c0_i32 = arith.constant 0 : i32
    %c0_i32_0 = arith.constant 0 : i32
    return %arg0, %c0_i32 : i32, i32
  }
  func.func @transform_1(%arg0: i32) -> (i32, i32) {
    %c0_i32 = arith.constant 0 : i32
    %c0_i32_0 = arith.constant 0 : i32
    %c0_i32_1 = arith.constant 0 : i32
    return %c0_i32, %c0_i32_0 : i32, i32
  }
  func.func @transform_2(%arg0: i32) -> (i32, i32) {
    %c0_i32 = arith.constant 0 : i32
    %c0_i32_0 = arith.constant 0 : i32
    %c0_i32_1 = arith.constant 0 : i32
    return %c0_i32, %c0_i32_0 : i32, i32
  }
  func.func @transform_3(%arg0: i32) -> (i32, i32) {
    %c0_i32 = arith.constant 0 : i32
    %c0_i32_0 = arith.constant 0 : i32
    return %arg0, %c0_i32 : i32, i32
  }
}

module attributes {stable_mosaic.version = 11 : i64} {
  func.func @_gemm_bias_act_kernel(%arg0: i32, %arg1: memref<256x512xbf16, #tpu.memory_space<vmem>>, %arg2: memref<512x1xbf16, #tpu.memory_space<vmem>>, %arg3: memref<1x1xf32, #tpu.memory_space<vmem>>, %arg4: memref<256x1xf32, #tpu.memory_space<vmem>>) attributes {dimension_semantics = [#tpu.dimension_semantics<parallel>], iteration_bounds = array<i64: 8>, scalar_prefetch = 0 : i64, scratch_operands = 0 : i64, tpu.core_type = #tpu.core_type<tc>, window_params = [{transform_indices = @transform_0, window_bounds = array<i64: 256, 512>}, {pipeline_mode = #tpu.pipeline_mode<synchronous>, transform_indices = @transform_1, window_bounds = array<i64: 512, 1>}, {pipeline_mode = #tpu.pipeline_mode<synchronous>, transform_indices = @transform_2, window_bounds = array<i64: 1, 1>}, {transform_indices = @transform_3, window_bounds = array<i64: 256, 1>}]} {
    %c0 = arith.constant 0 : index
    %c0_0 = arith.constant 0 : index
    %0 = vector.load %arg1[%c0, %c0_0] : memref<256x512xbf16, #tpu.memory_space<vmem>>, vector<256x512xbf16>
    %c0_1 = arith.constant 0 : index
    %c0_2 = arith.constant 0 : index
    %1 = vector.load %arg2[%c0_1, %c0_2] : memref<512x1xbf16, #tpu.memory_space<vmem>>, vector<512x1xbf16>
    %cst = arith.constant dense<0.000000e+00> : vector<256x1xf32>
    %2 = tpu.matmul %0, %1, %cst {dimension_numbers = #tpu.dot_dimension_numbers<[1], [0], [0], [1], [0, 0, 1, 1], [], []>} : vector<256x512xbf16>, vector<512x1xbf16>, vector<256x1xf32> -> vector<256x1xf32>
    %c0_3 = arith.constant 0 : index
    %c0_4 = arith.constant 0 : index
    %3 = vector.load %arg3[%c0_3, %c0_4] : memref<1x1xf32, #tpu.memory_space<vmem>>, vector<1x1xf32>
    %4 = vector.broadcast %3 : vector<1x1xf32> to vector<256x1xf32>
    %5 = arith.addf %2, %4 : vector<256x1xf32>
    %6 = arith.negf %5 : vector<256x1xf32>
    %7 = math.exp %6 : vector<256x1xf32>
    %cst_5 = arith.constant 1.000000e+00 : f32
    %8 = vector.broadcast %cst_5 : f32 to vector<256x1xf32>
    %9 = arith.addf %8, %7 : vector<256x1xf32>
    %10 = arith.divf %8, %9 : vector<256x1xf32>
    %c0_6 = arith.constant 0 : index
    %c0_7 = arith.constant 0 : index
    %11 = vector.load %arg4[%c0_6, %c0_7] : memref<256x1xf32, #tpu.memory_space<vmem>>, vector<256x1xf32>
    tpu.vector_store %arg4[%c0_6, %c0_7], %10 {strides = array<i32>} : memref<256x1xf32, #tpu.memory_space<vmem>>, vector<256x1xf32>,
    return
  }
  func.func @transform_0(%arg0: i32) -> (i32, i32) {
    %c0_i32 = arith.constant 0 : i32
    %c0_i32_0 = arith.constant 0 : i32
    return %arg0, %c0_i32 : i32, i32
  }
  func.func @transform_1(%arg0: i32) -> (i32, i32) {
    %c0_i32 = arith.constant 0 : i32
    %c0_i32_0 = arith.constant 0 : i32
    %c0_i32_1 = arith.constant 0 : i32
    return %c0_i32, %c0_i32_0 : i32, i32
  }
  func.func @transform_2(%arg0: i32) -> (i32, i32) {
    %c0_i32 = arith.constant 0 : i32
    %c0_i32_0 = arith.constant 0 : i32
    %c0_i32_1 = arith.constant 0 : i32
    return %c0_i32, %c0_i32_0 : i32, i32
  }
  func.func @transform_3(%arg0: i32) -> (i32, i32) {
    %c0_i32 = arith.constant 0 : i32
    %c0_i32_0 = arith.constant 0 : i32
    return %arg0, %c0_i32 : i32, i32
  }
}

</mosaic_0001>

<llo_original>
// kernel: vae_forward.7
$region0: #{vae_forward.7}
  #allocation0 [shape = 'u32[]', space=smem, size = 0x4, offset = 0x4, fixed_abs, tag = 'smem constant byte address 0x4 - core index']
  #allocation1 [shape = 'u32[144,128]{1,0:T(1,128)}', space=vmem, size = 0x12000, scoped, tag = 'internal scratch']
  %s0 = inlined_call_operand.vmem [shape: bf16[512,16], index: 0, kind: input, shape index: {}]
  %s1 = inlined_call_operand.vmem [shape: bf16[16,32], index: 1, kind: input, shape index: {}]
  %s2 = inlined_call_operand.vmem [shape: f32[1,32], index: 2, kind: input, shape index: {}]
  %s3 = inlined_call_operand.vmem [shape: bf16[512,32], index: 3, kind: output, shape index: {}]
  %s4 = sld [smem:[#allocation0]]
  $region45: #{vae_forward.7} parent=0
    _
  %s6 = ssub.s32 1, %s4
  %s7 = scalar_select 0, %s6, %s4
  loop: start=0, step=1, limit=4
  $region2: #{vae_forward.7} parent=0 // loop_pre_header
    _
  $region3: #{vae_forward.7} parent=0 // loop_header
    %s9 = sphi 0, %s13
    %p10 = scmp.ge.s32.totalorder %s9, 4
    %s19 = sphi 0, %s21
    %s22 = sphi 0, %s19
    %s23 = sphi 0, %s22
    %s39 = sphi 0, %s23
    %s43 = sphi 0, %s43
    %s45 = sphi 0, %s43
    %s46 = sphi 0, %s45
    %s60 = sphi 0, %s46
    %s64 = sphi 0, %s64
    %s66 = sphi 0, %s64
    %s67 = sphi 0, %s66
    %s81 = sphi 0, %s67
    %s87 = sphi 0, %s89
    %s90 = sphi 0, %s87
    %s91 = sphi 0, %s90
    %s107 = sphi 0, %s91
  $region4: #{vae_forward.7} parent=0 // loop_header_branch
    %12 = sbr.rel (%p10) target = $region8
  $region5: #{vae_forward.7} parent=0 // loop_body
    %s14 = ssub.s32 %s9, 1
    %s15 = ssub.s32 %s9, 2
    %s16 = sadd.s32 %s9, 1
    %s17 = ssub.s32 %s9, %s16
    %p18 = scmp.eq.s32.totalorder %s17, 0
    %s20 = sadd.s32 %s19, 1
    %s21 = scalar_select %p18, %s19, %s20
    %p24 = pneg %p18
    %p25 = scmp.eq.s32.totalorder %s9, 1
    %p26 = por %p24, %p25
    %p27 = scmp.ne.s32.totalorder %s19, %s22
    %p28 = scmp.eq.s32.totalorder %s9, 0
    %p29 = por %p27, %p28
    %p30 = scmp.ne.s32.totalorder %s19, %s22
    %p31 = scmp.eq.s32.totalorder %s14, 1
    %p32 = por %p30, %p31
    %p33 = scmp.ne.s32.totalorder %s22, %s23
    %p34 = scmp.eq.s32.totalorder %s14, 0
    %p35 = por %p33, %p34
    %p36 = scmp.ne.s32.totalorder %s22, %s23
    %p37 = scmp.eq.s32.totalorder %s15, 1
    %p38 = por %p36, %p37
    %p40 = scmp.ne.s32.totalorder %s23, %s39
    %p41 = scmp.eq.s32.totalorder %s15, 0
    %p42 = por %p40, %p41
    %s44 = sadd.s32 %s43, 1
    %p47 = scmp.eq.s32.totalorder %s9, 1
    %p48 = scmp.ne.s32.totalorder %s43, %s45
    %p49 = scmp.eq.s32.totalorder %s9, 0
    %p50 = por %p48, %p49
    %p51 = scmp.ne.s32.totalorder %s43, %s45
    %p52 = scmp.eq.s32.totalorder %s14, 1
    %p53 = por %p51, %p52
    %p54 = scmp.ne.s32.totalorder %s45, %s46
    %p55 = scmp.eq.s32.totalorder %s14, 0
    %p56 = por %p54, %p55
    %p57 = scmp.ne.s32.totalorder %s45, %s46
    %p58 = scmp.eq.s32.totalorder %s15, 1
    %p59 = por %p57, %p58
    %p61 = scmp.ne.s32.totalorder %s46, %s60
    %p62 = scmp.eq.s32.totalorder %s15, 0
    %p63 = por %p61, %p62
    %s65 = sadd.s32 %s64, 1
    %p68 = scmp.eq.s32.totalorder %s9, 1
    %p69 = scmp.ne.s32.totalorder %s64, %s66
    %p70 = scmp.eq.s32.totalorder %s9, 0
    %p71 = por %p69, %p70
    %p72 = scmp.ne.s32.totalorder %s64, %s66
    %p73 = scmp.eq.s32.totalorder %s14, 1
    %p74 = por %p72, %p73
    %p75 = scmp.ne.s32.totalorder %s66, %s67
    %p76 = scmp.eq.s32.totalorder %s14, 0
    %p77 = por %p75, %p76
    %p78 = scmp.ne.s32.totalorder %s66, %s67
    %p79 = scmp.eq.s32.totalorder %s15, 1
    %p80 = por %p78, %p79
    %p82 = scmp.ne.s32.totalorder %s67, %s81
    %p83 = scmp.eq.s32.totalorder %s15, 0
    %p84 = por %p82, %p83
    %s85 = ssub.s32 %s9, %s16
    %p86 = scmp.eq.s32.totalorder %s85, 0
    %s88 = sadd.s32 %s87, 1
    %s89 = scalar_select %p86, %s87, %s88
    %p92 = pneg %p86
    %p93 = scmp.eq.s32.totalorder %s9, 1
    %p94 = por %p92, %p93
    %p95 = scmp.ne.s32.totalorder %s87, %s90
    %p96 = scmp.eq.s32.totalorder %s9, 0
    %p97 = por %p95, %p96
    %p98 = scmp.ne.s32.totalorder %s87, %s90
    %p99 = scmp.eq.s32.totalorder %s14, 1
    %p100 = por %p98, %p99
    %p101 = scmp.ne.s32.totalorder %s90, %s91
    %p102 = scmp.eq.s32.totalorder %s14, 0
    %p103 = por %p101, %p102
    %p104 = scmp.ne.s32.totalorder %s90, %s91
    %p105 = scmp.eq.s32.totalorder %s15, 1
    %p106 = por %p104, %p105
    %p108 = scmp.ne.s32.totalorder %s91, %s107
    %p109 = scmp.eq.s32.totalorder %s15, 0
    %p110 = por %p108, %p109
    %p111 = scmp.le.s32.totalorder 1, %s9
    %p112 = scmp.lt.s32.totalorder %s9, 3
    %p113 = pnand %p111, %p112
    %p114 = pneg %p113
    // Predicated region
    $region9: #{vae_forward.7} parent=5 // pred_check
      _
    $region10: #{vae_forward.7} parent=5 // pred_check_branch
      %116 = sbr.rel (%p113) target = $region12
    $region11: #{vae_forward.7} parent=5 // pred_region
      %s117 = ssub.s32 %s9, 1
      // Predicated region
      $region13: #{vae_forward.7} parent=11 // pred_check
        %p118 = pneg %p56
      $region14: #{vae_forward.7} parent=11 // pred_check_branch
        %120 = sbr.rel (%p118) target = $region16
      $region15: #{vae_forward.7} parent=11 // pred_region
        _
      $region16: #{vae_forward.7} parent=11 // pred_fallthru
        _
      // Predicated region
      $region17: #{vae_forward.7} parent=11 // pred_check
        %p121 = pneg %p77
      $region18: #{vae_forward.7} parent=11 // pred_check_branch
        %123 = sbr.rel (%p121) target = $region20
      $region19: #{vae_forward.7} parent=11 // pred_region
        _
      $region20: #{vae_forward.7} parent=11 // pred_fallthru
        _
    $region12: #{vae_forward.7} parent=5 // pred_fallthru
      _
    %p124 = scmp.lt.s32.totalorder %s9, 2
    // Predicated region
    $region21: #{vae_forward.7} parent=5 // pred_check
      %p125 = pneg %p124
    $region22: #{vae_forward.7} parent=5 // pred_check_branch
      %127 = sbr.rel (%p125) target = $region24
    $region23: #{vae_forward.7} parent=5 // pred_region
      // Predicated region
      $region25: #{vae_forward.7} parent=23 // pred_check
        %p128 = pneg %p29
      $region26: #{vae_forward.7} parent=23 // pred_check_branch
        %130 = sbr.rel (%p128) target = $region28
      $region27: #{vae_forward.7} parent=23 // pred_region
        %s131 = smul.u32 32, %s9
        %p132 = scmp.lt.s32.totalorder %s131, 63
        %s133 = scalar_select %p132, %s131, 63
        %s134 = smul.addr %s133, 4
        %s135 = scalar_lea.vmem %s0, %s134
        %s136 = smul.u32 32, %s9
      $region28: #{vae_forward.7} parent=23 // pred_fallthru
        _
    $region24: #{vae_forward.7} parent=5 // pred_fallthru
      _
    %p137 = scmp.le.s32.totalorder 1, %s9
    %p138 = scmp.lt.s32.totalorder %s9, 3
    %p139 = pnand %p137, %p138
    %p140 = pneg %p139
    // Predicated region
    $region29: #{vae_forward.7} parent=5 // pred_check
      _
    $region30: #{vae_forward.7} parent=5 // pred_check_branch
      %142 = sbr.rel (%p139) target = $region32
    $region31: #{vae_forward.7} parent=5 // pred_region
      %s143 = ssub.s32 %s9, 1
      %s144 = smul.u32 32, %s14
      %p145 = scmp.lt.s32.totalorder %s144, 63
      %s146 = scalar_select %p145, %s144, 63
      %s147 = smul.addr %s146, 4
      %s148 = scalar_lea.vmem %s0, %s147
      %p149 = pneg %p35
      %p150 = pneg %p32
      %p151 = pneg %p56
      %p152 = pneg %p53
      %p153 = pneg %p77
      %p154 = pneg %p74
      %p155 = pneg %p103
      %p156 = pneg %p100
      %s157 = smul.u32 32, %s14
      %p158 = scmp.lt.s32.totalorder %s157, 63
      %s159 = scalar_select %p158, %s157, 63
      %s160 = smul.addr %s159, 4
      %s161 = scalar_lea.vmem %s3, %s160
      %s162 = smul.u32 32, %s14
      %p163 = scmp.lt.s32.totalorder %s162, 63
      %s164 = scalar_select %p163, %s162, 63
      %s165 = smul.addr %s164, 4
      %s166 = scalar_lea.vmem %s0, %s165
      %s167 = smul.u32 32, %s14
      %s168 = smul.u32 32, %s14
      %p169 = scmp.lt.s32.totalorder %s168, 63
      %s170 = scalar_select %p169, %s168, 63
      %s171 = smul.addr %s170, 4
      %s172 = scalar_lea.vmem %s3, %s171
      %s173 = smul.u32 32, %s14
      %v175 = vld [vmem:[%s166] sm:$0xf]
      %v176 = vld [vmem:[%s166 + $0x4] sm:$0xf]
      %v177 = vld [vmem:[%s166 + $0x8] sm:$0xf]
      %v178 = vld [vmem:[%s166 + $0xc] sm:$0xf]
      %v179 = vld [vmem:[%s166 + $0x10] sm:$0xf]
      %v180 = vld [vmem:[%s166 + $0x14] sm:$0xf]
      %v181 = vld [vmem:[%s166 + $0x18] sm:$0xf]
      %v182 = vld [vmem:[%s166 + $0x1c] sm:$0xf]
      %v183 = vld [vmem:[%s166 + $0x20] sm:$0xf]
      %v184 = vld [vmem:[%s166 + $0x24] sm:$0xf]
      %v185 = vld [vmem:[%s166 + $0x28] sm:$0xf]
      %v186 = vld [vmem:[%s166 + $0x2c] sm:$0xf]
      %v187 = vld [vmem:[%s166 + $0x30] sm:$0xf]
      %v188 = vld [vmem:[%s166 + $0x34] sm:$0xf]
      %v189 = vld [vmem:[%s166 + $0x38] sm:$0xf]
      %v190 = vld [vmem:[%s166 + $0x3c] sm:$0xf]
      %v191 = vld [vmem:[%s166 + $0x40] sm:$0xf]
      %v192 = vld [vmem:[%s166 + $0x44] sm:$0xf]
      %v193 = vld [vmem:[%s166 + $0x48] sm:$0xf]
      %v194 = vld [vmem:[%s166 + $0x4c] sm:$0xf]
      %v195 = vld [vmem:[%s166 + $0x50] sm:$0xf]
      %v196 = vld [vmem:[%s166 + $0x54] sm:$0xf]
      %v197 = vld [vmem:[%s166 + $0x58] sm:$0xf]
      %v198 = vld [vmem:[%s166 + $0x5c] sm:$0xf]
      %v199 = vld [vmem:[%s166 + $0x60] sm:$0xf]
      %v200 = vld [vmem:[%s166 + $0x64] sm:$0xf]
      %v201 = vld [vmem:[%s166 + $0x68] sm:$0xf]
      %v202 = vld [vmem:[%s166 + $0x6c] sm:$0xf]
      %v203 = vld [vmem:[%s166 + $0x70] sm:$0xf]
      %v204 = vld [vmem:[%s166 + $0x74] sm:$0xf]
      %v205 = vld [vmem:[%s166 + $0x78] sm:$0xf]
      %v206 = vld [vmem:[%s166 + $0x7c] sm:$0xf]
      %v207 = vld [vmem:[%s1] sm:$0xf]
      %v208 = vld [vmem:[%s1 + $0x4] sm:$0xf]
      %v209 = vld [vmem:[%s2] sm:$0x1]
      %v211 = vlaneseq
      %v212 = vshrl.u32 %v211, 7
      %v213 = vsub.s32 0, %v212
      %v214 = vrot.slane %v209, %v213
      %v248 = vunpack.c.l.b16 %v175
      %v249 = vunpack.c.l.b16 %v176
      %v250 = vunpack.c.l.b16 %v177
      %v251 = vunpack.c.l.b16 %v178
      %v252 = vunpack.c.l.b16 %v179
      %v253 = vunpack.c.l.b16 %v180
      %v254 = vunpack.c.l.b16 %v181
      %v255 = vunpack.c.l.b16 %v182
      %v256 = vunpack.c.l.b16 %v183
      %v257 = vunpack.c.l.b16 %v184
      %v258 = vunpack.c.l.b16 %v185
      %v259 = vunpack.c.l.b16 %v186
      %v260 = vunpack.c.l.b16 %v187
      %v261 = vunpack.c.l.b16 %v188
      %v262 = vunpack.c.l.b16 %v189
      %v263 = vunpack.c.l.b16 %v190
      %v264 = vunpack.c.l.b16 %v191
      %v265 = vunpack.c.l.b16 %v192
      %v266 = vunpack.c.l.b16 %v193
      %v267 = vunpack.c.l.b16 %v194
      %v268 = vunpack.c.l.b16 %v195
      %v269 = vunpack.c.l.b16 %v196
      %v270 = vunpack.c.l.b16 %v197
      %v271 = vunpack.c.l.b16 %v198
      %v272 = vunpack.c.l.b16 %v199
      %v273 = vunpack.c.l.b16 %v200
      %v274 = vunpack.c.l.b16 %v201
      %v275 = vunpack.c.l.b16 %v202
      %v276 = vunpack.c.l.b16 %v203
      %v277 = vunpack.c.l.b16 %v204
      %v278 = vunpack.c.l.b16 %v205
      %v279 = vunpack.c.l.b16 %v206
      %v280 = vpack.c.b16 %v249, %v248
      %v281 = vpack.c.b16 %v251, %v250
      %v282 = vpack.c.b16 %v253, %v252
      %v283 = vpack.c.b16 %v255, %v254
      %v284 = vpack.c.b16 %v257, %v256
      %v285 = vpack.c.b16 %v259, %v258
      %v286 = vpack.c.b16 %v261, %v260
      %v287 = vpack.c.b16 %v263, %v262
      %v288 = vpack.c.b16 %v265, %v264
      %v289 = vpack.c.b16 %v267, %v266
      %v290 = vpack.c.b16 %v269, %v268
      %v291 = vpack.c.b16 %v271, %v270
      %v292 = vpack.c.b16 %v273, %v272
      %v293 = vpack.c.b16 %v275, %v274
      %v294 = vpack.c.b16 %v277, %v276
      %v295 = vpack.c.b16 %v279, %v278
      %v298 = vunpack.c.l.b16 %v207
      %v299 = vunpack.c.l.b16 %v208
      %v300 = vpack.c.b16 %v299, %v298
      %vm302 = vcmask 130048
      %v304 = vsel %vm302, %v280, 0
      %v307 = vsel %vm302, %v281, 0
      %v310 = vsel %vm302, %v282, 0
      %v313 = vsel %vm302, %v283, 0
      %v316 = vsel %vm302, %v284, 0
      %v319 = vsel %vm302, %v285, 0
      %v322 = vsel %vm302, %v286, 0
      %v325 = vsel %vm302, %v287, 0
      %v328 = vsel %vm302, %v288, 0
      %v331 = vsel %vm302, %v289, 0
      %v334 = vsel %vm302, %v290, 0
      %v337 = vsel %vm302, %v291, 0
      %v340 = vsel %vm302, %v292, 0
      %v343 = vsel %vm302, %v293, 0
      %v346 = vsel %vm302, %v294, 0
      %v349 = vsel %vm302, %v295, 0
      %351 = vmatprep.subr.bf16.mxu0 0
      %352 = vmatpush1.bf16.msra.mxu0 %v300
      %353 = vmatprep.subr.bf16.mxu0 0
      %354 = vmatpush1.bf16.msra.mxu0 0
      %355 = vmatprep.subr.bf16.mxu0 0
      %356 = vmatpush1.bf16.msra.mxu0 0
      %357 = vmatprep.subr.bf16.mxu0 0
      %358 = vmatpush1.bf16.msra.mxu0 0
      %359 = vmatprep.subr.bf16.mxu0 0
      %360 = vmatpush1.bf16.msra.mxu0 0
      %361 = vmatprep.subr.bf16.mxu0 0
      %362 = vmatpush1.bf16.msra.mxu0 0
      %363 = vmatprep.subr.bf16.mxu0 0
      %364 = vmatpush1.bf16.msra.mxu0 0
      %365 = vmatprep.subr.bf16.mxu0 0
      %366 = vmatpush1.bf16.msra.mxu0 0
      %367 = vmatprep.subr.bf16.mxu0 0
      %368 = vmatpush1.bf16.msra.mxu0 0
      %369 = vmatprep.subr.bf16.mxu0 0
      %370 = vmatpush1.bf16.msra.mxu0 0
      %371 = vmatprep.subr.bf16.mxu0 0
      %372 = vmatpush1.bf16.msra.mxu0 0
      %373 = vmatprep.subr.bf16.mxu0 0
      %374 = vmatpush1.bf16.msra.mxu0 0
      %375 = vmatprep.subr.bf16.mxu0 0
      %376 = vmatpush1.bf16.msra.mxu0 0
      %377 = vmatprep.subr.bf16.mxu0 0
      %378 = vmatpush1.bf16.msra.mxu0 0
      %379 = vmatprep.subr.bf16.mxu0 0
      %380 = vmatpush1.bf16.msra.mxu0 0
      %381 = vmatprep.subr.bf16.mxu0 0
      %382 = vmatpush1.bf16.msra.mxu0 0
      %383 = vmatprep.mubr.bf16.mxu0 0
      %384 = vmatmul.mubr.bf16.gmra.mrb[0].mxu0 %v304
      %v385 = vpop.f32.mrb[0].mxu0
      %v386 = vadd.f32 %v214, %v385
      %v387 = vpop.f32.mrb[0].mxu0
      %v388 = vpop.f32.mrb[0].mxu0
      %v389 = vadd.f32 %v214, %v388
      %v390 = vpop.f32.mrb[0].mxu0
      %391 = vmatprep.mubr.bf16.mxu0 0
      %392 = vmatmul.mubr.bf16.gmra.mrb[0].mxu0 %v307
      %v393 = vpop.f32.mrb[0].mxu0
      %v394 = vadd.f32 %v214, %v393
      %v395 = vpop.f32.mrb[0].mxu0
      %v396 = vpop.f32.mrb[0].mxu0
      %v397 = vadd.f32 %v214, %v396
      %v398 = vpop.f32.mrb[0].mxu0
      %399 = vmatprep.mubr.bf16.mxu0 0
      %400 = vmatmul.mubr.bf16.gmra.mrb[0].mxu0 %v310
      %v401 = vpop.f32.mrb[0].mxu0
      %v402 = vadd.f32 %v214, %v401
      %v403 = vpop.f32.mrb[0].mxu0
      %v404 = vpop.f32.mrb[0].mxu0
      %v405 = vadd.f32 %v214, %v404
      %v406 = vpop.f32.mrb[0].mxu0
      %407 = vmatprep.mubr.bf16.mxu0 0
      %408 = vmatmul.mubr.bf16.gmra.mrb[0].mxu0 %v313
      %v409 = vpop.f32.mrb[0].mxu0
      %v410 = vadd.f32 %v214, %v409
      %v411 = vpop.f32.mrb[0].mxu0
      %v412 = vpop.f32.mrb[0].mxu0
      %v413 = vadd.f32 %v214, %v412
      %v414 = vpop.f32.mrb[0].mxu0
      %415 = vmatprep.mubr.bf16.mxu0 0
      %416 = vmatmul.mubr.bf16.gmra.mrb[0].mxu0 %v316
      %v417 = vpop.f32.mrb[0].mxu0
      %v418 = vadd.f32 %v214, %v417
      %v419 = vpop.f32.mrb[0].mxu0
      %v420 = vpop.f32.mrb[0].mxu0
      %v421 = vadd.f32 %v214, %v420
      %v422 = vpop.f32.mrb[0].mxu0
      %423 = vmatprep.mubr.bf16.mxu0 0
      %424 = vmatmul.mubr.bf16.gmra.mrb[0].mxu0 %v319
      %v425 = vpop.f32.mrb[0].mxu0
      %v426 = vadd.f32 %v214, %v425
      %v427 = vpop.f32.mrb[0].mxu0
      %v428 = vpop.f32.mrb[0].mxu0
      %v429 = vadd.f32 %v214, %v428
      %v430 = vpop.f32.mrb[0].mxu0
      %431 = vmatprep.mubr.bf16.mxu0 0
      %432 = vmatmul.mubr.bf16.gmra.mrb[0].mxu0 %v322
      %v433 = vpop.f32.mrb[0].mxu0
      %v434 = vadd.f32 %v214, %v433
      %v435 = vpop.f32.mrb[0].mxu0
      %v436 = vpop.f32.mrb[0].mxu0
      %v437 = vadd.f32 %v214, %v436
      %v438 = vpop.f32.mrb[0].mxu0
      %439 = vmatprep.mubr.bf16.mxu0 0
      %440 = vmatmul.mubr.bf16.gmra.mrb[0].mxu0 %v325
      %v441 = vpop.f32.mrb[0].mxu0
      %v442 = vadd.f32 %v214, %v441
      %v443 = vpop.f32.mrb[0].mxu0
      %v444 = vpop.f32.mrb[0].mxu0
      %v445 = vadd.f32 %v214, %v444
      %v446 = vpop.f32.mrb[0].mxu0
      %447 = vmatprep.mubr.bf16.mxu0 0
      %448 = vmatmul.mubr.bf16.gmra.mrb[0].mxu0 %v328
      %v449 = vpop.f32.mrb[0].mxu0
      %v450 = vadd.f32 %v214, %v449
      %v451 = vpop.f32.mrb[0].mxu0
      %v452 = vpop.f32.mrb[0].mxu0
      %v453 = vadd.f32 %v214, %v452
      %v454 = vpop.f32.mrb[0].mxu0
      %455 = vmatprep.mubr.bf16.mxu0 0
      %456 = vmatmul.mubr.bf16.gmra.mrb[0].mxu0 %v331
      %v457 = vpop.f32.mrb[0].mxu0
      %v458 = vadd.f32 %v214, %v457
      %v459 = vpop.f32.mrb[0].mxu0
      %v460 = vpop.f32.mrb[0].mxu0
      %v461 = vadd.f32 %v214, %v460
      %v462 = vpop.f32.mrb[0].mxu0
      %463 = vmatprep.mubr.bf16.mxu0 0
      %464 = vmatmul.mubr.bf16.gmra.mrb[0].mxu0 %v334
      %v465 = vpop.f32.mrb[0].mxu0
      %v466 = vadd.f32 %v214, %v465
      %v467 = vpop.f32.mrb[0].mxu0
      %v468 = vpop.f32.mrb[0].mxu0
      %v469 = vadd.f32 %v214, %v468
      %v470 = vpop.f32.mrb[0].mxu0
      %471 = vmatprep.mubr.bf16.mxu0 0
      %472 = vmatmul.mubr.bf16.gmra.mrb[0].mxu0 %v337
      %v473 = vpop.f32.mrb[0].mxu0
      %v474 = vadd.f32 %v214, %v473
      %v475 = vpop.f32.mrb[0].mxu0
      %v476 = vpop.f32.mrb[0].mxu0
      %v477 = vadd.f32 %v214, %v476
      %v478 = vpop.f32.mrb[0].mxu0
      %479 = vmatprep.mubr.bf16.mxu0 0
      %480 = vmatmul.mubr.bf16.gmra.mrb[0].mxu0 %v340
      %v481 = vpop.f32.mrb[0].mxu0
      %v482 = vadd.f32 %v214, %v481
      %v483 = vpop.f32.mrb[0].mxu0
      %v484 = vpop.f32.mrb[0].mxu0
      %v485 = vadd.f32 %v214, %v484
      %v486 = vpop.f32.mrb[0].mxu0
      %487 = vmatprep.mubr.bf16.mxu0 0
      %488 = vmatmul.mubr.bf16.gmra.mrb[0].mxu0 %v343
      %v489 = vpop.f32.mrb[0].mxu0
      %v490 = vadd.f32 %v214, %v489
      %v491 = vpop.f32.mrb[0].mxu0
      %v492 = vpop.f32.mrb[0].mxu0
      %v493 = vadd.f32 %v214, %v492
      %v494 = vpop.f32.mrb[0].mxu0
      %495 = vmatprep.mubr.bf16.mxu0 0
      %496 = vmatmul.mubr.bf16.gmra.mrb[0].mxu0 %v346
      %v497 = vpop.f32.mrb[0].mxu0
      %v498 = vadd.f32 %v214, %v497
      %v499 = vpop.f32.mrb[0].mxu0
      %v500 = vpop.f32.mrb[0].mxu0
      %v501 = vadd.f32 %v214, %v500
      %v502 = vpop.f32.mrb[0].mxu0
      %503 = vmatprep.mubr.bf16.mxu0 0
      %504 = vmatmul.mubr.bf16.gmra.mrb[0].mxu0 %v349
      %v505 = vpop.f32.mrb[0].mxu0
      %v506 = vadd.f32 %v214, %v505
      %v507 = vpop.f32.mrb[0].mxu0
      %v508 = vpop.f32.mrb[0].mxu0
      %v509 = vadd.f32 %v214, %v508
      %v510 = vpop.f32.mrb[0].mxu0
      %511 = vdwg.mxu0
      %v512 = vmax.f32 %v386, 0.0
      %v513 = vmax.f32 %v389, 0.0
      %v514 = vmax.f32 %v394, 0.0
      %v515 = vmax.f32 %v397, 0.0
      %v516 = vmax.f32 %v402, 0.0
      %v517 = vmax.f32 %v405, 0.0
      %v518 = vmax.f32 %v410, 0.0
      %v519 = vmax.f32 %v413, 0.0
      %v520 = vmax.f32 %v418, 0.0
      %v521 = vmax.f32 %v421, 0.0
      %v522 = vmax.f32 %v426, 0.0
      %v523 = vmax.f32 %v429, 0.0
      %v524 = vmax.f32 %v434, 0.0
      %v525 = vmax.f32 %v437, 0.0
      %v526 = vmax.f32 %v442, 0.0
      %v527 = vmax.f32 %v445, 0.0
      %v528 = vmax.f32 %v450, 0.0
      %v529 = vmax.f32 %v453, 0.0
      %v530 = vmax.f32 %v458, 0.0
      %v531 = vmax.f32 %v461, 0.0
      %v532 = vmax.f32 %v466, 0.0
      %v533 = vmax.f32 %v469, 0.0
      %v534 = vmax.f32 %v474, 0.0
      %v535 = vmax.f32 %v477, 0.0
      %v536 = vmax.f32 %v482, 0.0
      %v537 = vmax.f32 %v485, 0.0
      %v538 = vmax.f32 %v490, 0.0
      %v539 = vmax.f32 %v493, 0.0
      %v540 = vmax.f32 %v498, 0.0
      %v541 = vmax.f32 %v501, 0.0
      %v542 = vmax.f32 %v506, 0.0
      %v543 = vmax.f32 %v509, 0.0
      %v544 = vpack.c.bf16 %v513, %v512
      %v545 = vpack.c.bf16 %v515, %v514
      %v546 = vpack.c.bf16 %v517, %v516
      %v547 = vpack.c.bf16 %v519, %v518
      %v548 = vpack.c.bf16 %v521, %v520
      %v549 = vpack.c.bf16 %v523, %v522
      %v550 = vpack.c.bf16 %v525, %v524
      %v551 = vpack.c.bf16 %v527, %v526
      %v552 = vpack.c.bf16 %v529, %v528
      %v553 = vpack.c.bf16 %v531, %v530
      %v554 = vpack.c.bf16 %v533, %v532
      %v555 = vpack.c.bf16 %v535, %v534
      %v556 = vpack.c.bf16 %v537, %v536
      %v557 = vpack.c.bf16 %v539, %v538
      %v558 = vpack.c.bf16 %v541, %v540
      %v559 = vpack.c.bf16 %v543, %v542
      %v576 = vunpack.c.l.b16 %v544
      %v577 = vunpack.c.h.b16 %v544
      %v578 = vunpack.c.l.b16 %v545
      %v579 = vunpack.c.h.b16 %v545
      %v580 = vunpack.c.l.b16 %v546
      %v581 = vunpack.c.h.b16 %v546
      %v582 = vunpack.c.l.b16 %v547
      %v583 = vunpack.c.h.b16 %v547
      %v584 = vunpack.c.l.b16 %v548
      %v585 = vunpack.c.h.b16 %v548
      %v586 = vunpack.c.l.b16 %v549
      %v587 = vunpack.c.h.b16 %v549
      %v588 = vunpack.c.l.b16 %v550
      %v589 = vunpack.c.h.b16 %v550
      %v590 = vunpack.c.l.b16 %v551
      %v591 = vunpack.c.h.b16 %v551
      %v592 = vunpack.c.l.b16 %v552
      %v593 = vunpack.c.h.b16 %v552
      %v594 = vunpack.c.l.b16 %v553
      %v595 = vunpack.c.h.b16 %v553
      %v596 = vunpack.c.l.b16 %v554
      %v597 = vunpack.c.h.b16 %v554
      %v598 = vunpack.c.l.b16 %v555
      %v599 = vunpack.c.h.b16 %v555
      %v600 = vunpack.c.l.b16 %v556
      %v601 = vunpack.c.h.b16 %v556
      %v602 = vunpack.c.l.b16 %v557
      %v603 = vunpack.c.h.b16 %v557
      %v604 = vunpack.c.l.b16 %v558
      %v605 = vunpack.c.h.b16 %v558
      %v606 = vunpack.c.l.b16 %v559
      %v607 = vunpack.c.h.b16 %v559
      %v608 = vpack.c.b16 %v576, %v576
      %v609 = vpack.c.b16 %v577, %v577
      %v610 = vpack.c.b16 %v578, %v578
      %v611 = vpack.c.b16 %v579, %v579
      %v612 = vpack.c.b16 %v580, %v580
      %v613 = vpack.c.b16 %v581, %v581
      %v614 = vpack.c.b16 %v582, %v582
      %v615 = vpack.c.b16 %v583, %v583
      %v616 = vpack.c.b16 %v584, %v584
      %v617 = vpack.c.b16 %v585, %v585
      %v618 = vpack.c.b16 %v586, %v586
      %v619 = vpack.c.b16 %v587, %v587
      %v620 = vpack.c.b16 %v588, %v588
      %v621 = vpack.c.b16 %v589, %v589
      %v622 = vpack.c.b16 %v590, %v590
      %v623 = vpack.c.b16 %v591, %v591
      %v624 = vpack.c.b16 %v592, %v592
      %v625 = vpack.c.b16 %v593, %v593
      %v626 = vpack.c.b16 %v594, %v594
      %v627 = vpack.c.b16 %v595, %v595
      %v628 = vpack.c.b16 %v596, %v596
      %v629 = vpack.c.b16 %v597, %v597
      %v630 = vpack.c.b16 %v598, %v598
      %v631 = vpack.c.b16 %v599, %v599
      %v632 = vpack.c.b16 %v600, %v600
      %v633 = vpack.c.b16 %v601, %v601
      %v634 = vpack.c.b16 %v602, %v602
      %v635 = vpack.c.b16 %v603, %v603
      %v636 = vpack.c.b16 %v604, %v604
      %v637 = vpack.c.b16 %v605, %v605
      %v638 = vpack.c.b16 %v606, %v606
      %v639 = vpack.c.b16 %v607, %v607
      %vm672 = vcmask 257024
      %673 = vst.msk [vmem:[%s172] sm:$0xf] %vm672, %v608
      %674 = vst.msk [vmem:[%s172 + $0x4] sm:$0xf] %vm672, %v609
      %675 = vst.msk [vmem:[%s172 + $0x8] sm:$0xf] %vm672, %v610
      %676 = vst.msk [vmem:[%s172 + $0xc] sm:$0xf] %vm672, %v611
      %677 = vst.msk [vmem:[%s172 + $0x10] sm:$0xf] %vm672, %v612
      %678 = vst.msk [vmem:[%s172 + $0x14] sm:$0xf] %vm672, %v613
      %679 = vst.msk [vmem:[%s172 + $0x18] sm:$0xf] %vm672, %v614
      %680 = vst.msk [vmem:[%s172 + $0x1c] sm:$0xf] %vm672, %v615
      %681 = vst.msk [vmem:[%s172 + $0x20] sm:$0xf] %vm672, %v616
      %682 = vst.msk [vmem:[%s172 + $0x24] sm:$0xf] %vm672, %v617
      %683 = vst.msk [vmem:[%s172 + $0x28] sm:$0xf] %vm672, %v618
      %684 = vst.msk [vmem:[%s172 + $0x2c] sm:$0xf] %vm672, %v619
      %685 = vst.msk [vmem:[%s172 + $0x30] sm:$0xf] %vm672, %v620
      %686 = vst.msk [vmem:[%s172 + $0x34] sm:$0xf] %vm672, %v621
      %687 = vst.msk [vmem:[%s172 + $0x38] sm:$0xf] %vm672, %v622
      %688 = vst.msk [vmem:[%s172 + $0x3c] sm:$0xf] %vm672, %v623
      %689 = vst.msk [vmem:[%s172 + $0x40] sm:$0xf] %vm672, %v624
      %690 = vst.msk [vmem:[%s172 + $0x44] sm:$0xf] %vm672, %v625
      %691 = vst.msk [vmem:[%s172 + $0x48] sm:$0xf] %vm672, %v626
      %692 = vst.msk [vmem:[%s172 + $0x4c] sm:$0xf] %vm672, %v627
      %693 = vst.msk [vmem:[%s172 + $0x50] sm:$0xf] %vm672, %v628
      %694 = vst.msk [vmem:[%s172 + $0x54] sm:$0xf] %vm672, %v629
      %695 = vst.msk [vmem:[%s172 + $0x58] sm:$0xf] %vm672, %v630
      %696 = vst.msk [vmem:[%s172 + $0x5c] sm:$0xf] %vm672, %v631
      %697 = vst.msk [vmem:[%s172 + $0x60] sm:$0xf] %vm672, %v632
      %698 = vst.msk [vmem:[%s172 + $0x64] sm:$0xf] %vm672, %v633
      %699 = vst.msk [vmem:[%s172 + $0x68] sm:$0xf] %vm672, %v634
      %700 = vst.msk [vmem:[%s172 + $0x6c] sm:$0xf] %vm672, %v635
      %701 = vst.msk [vmem:[%s172 + $0x70] sm:$0xf] %vm672, %v636
      %702 = vst.msk [vmem:[%s172 + $0x74] sm:$0xf] %vm672, %v637
      %703 = vst.msk [vmem:[%s172 + $0x78] sm:$0xf] %vm672, %v638
      %704 = vst.msk [vmem:[%s172 + $0x7c] sm:$0xf] %vm672, %v639
      %s705 = smul.u32 32, %s14
      %p706 = scmp.lt.s32.totalorder %s705, 63
      %s707 = scalar_select %p706, %s705, 63
      %s708 = smul.addr %s707, 4
      %s709 = scalar_lea.vmem %s3, %s708
      // Predicated region
      $region33: #{vae_forward.7} parent=31 // pred_check
        %p710 = pneg %p100
      $region34: #{vae_forward.7} parent=31 // pred_check_branch
        %712 = sbr.rel (%p710) target = $region36
      $region35: #{vae_forward.7} parent=31 // pred_region
        %s713 = smul.u32 32, %s14
      $region36: #{vae_forward.7} parent=31 // pred_fallthru
        _
    $region32: #{vae_forward.7} parent=5 // pred_fallthru
      _
    %p714 = scmp.le.s32.totalorder 2, %s9
    // Predicated region
    $region37: #{vae_forward.7} parent=5 // pred_check
      %p715 = pneg %p714
    $region38: #{vae_forward.7} parent=5 // pred_check_branch
      %717 = sbr.rel (%p715) target = $region40
    $region39: #{vae_forward.7} parent=5 // pred_region
      %s718 = ssub.s32 %s9, 2
      // Predicated region
      $region41: #{vae_forward.7} parent=39 // pred_check
        %p719 = pneg %p106
      $region42: #{vae_forward.7} parent=39 // pred_check_branch
        %721 = sbr.rel (%p719) target = $region44
      $region43: #{vae_forward.7} parent=39 // pred_region
        %s722 = smul.u32 32, %s15
        %p723 = scmp.lt.s32.totalorder %s722, 63
        %s724 = scalar_select %p723, %s722, 63
        %s725 = smul.addr %s724, 4
        %s726 = scalar_lea.vmem %s3, %s725
      $region44: #{vae_forward.7} parent=39 // pred_fallthru
        _
    $region40: #{vae_forward.7} parent=5 // pred_fallthru
      _
  $region6: #{vae_forward.7} parent=0 // loop_footer
    %s13 = sadd.s32 1, %s9
  $region7: #{vae_forward.7} parent=0 // loop_footer_branch
    %8 = sbr.rel target = $region3
  $region8: #{vae_forward.7} parent=0 // loop_exit
    _

// kernel: vae_forward.8
$region0: #{vae_forward.8}
  #allocation0 [shape = 'u32[]', space=smem, size = 0x4, offset = 0x4, fixed_abs, tag = 'smem constant byte address 0x4 - core index']
  #allocation1 [shape = 'u32[144,128]{1,0:T(1,128)}', space=vmem, size = 0x12000, scoped, tag = 'internal scratch']
  %s0 = inlined_call_operand.vmem [shape: bf16[128,512], index: 0, kind: input, shape index: {}]
  %s1 = inlined_call_operand.vmem [shape: bf16[512,64], index: 1, kind: input, shape index: {}]
  %s2 = inlined_call_operand.vmem [shape: f32[1,64], index: 2, kind: input, shape index: {}]
  %s3 = inlined_call_operand.vmem [shape: bf16[128,64], index: 3, kind: output, shape index: {}]
  %s4 = sld [smem:[#allocation0]]
  $region45: #{vae_forward.8} parent=0
    _
  %s6 = ssub.s32 1, %s4
  %s7 = scalar_select 0, %s6, %s4
  loop: start=0, step=1, limit=4
  $region2: #{vae_forward.8} parent=0 // loop_pre_header
    _
  $region3: #{vae_forward.8} parent=0 // loop_header
    %s9 = sphi 0, %s13
    %p10 = scmp.ge.s32.totalorder %s9, 4
    %s19 = sphi 0, %s21
    %s22 = sphi 0, %s19
    %s23 = sphi 0, %s22
    %s39 = sphi 0, %s23
    %s43 = sphi 0, %s43
    %s45 = sphi 0, %s43
    %s46 = sphi 0, %s45
    %s60 = sphi 0, %s46
    %s64 = sphi 0, %s64
    %s66 = sphi 0, %s64
    %s67 = sphi 0, %s66
    %s81 = sphi 0, %s67
    %s87 = sphi 0, %s89
    %s90 = sphi 0, %s87
    %s91 = sphi 0, %s90
    %s107 = sphi 0, %s91
  $region4: #{vae_forward.8} parent=0 // loop_header_branch
    %12 = sbr.rel (%p10) target = $region8
  $region5: #{vae_forward.8} parent=0 // loop_body
    %s14 = ssub.s32 %s9, 1
    %s15 = ssub.s32 %s9, 2
    %s16 = sadd.s32 %s9, 1
    %s17 = ssub.s32 %s9, %s16
    %p18 = scmp.eq.s32.totalorder %s17, 0
    %s20 = sadd.s32 %s19, 1
    %s21 = scalar_select %p18, %s19, %s20
    %p24 = pneg %p18
    %p25 = scmp.eq.s32.totalorder %s9, 1
    %p26 = por %p24, %p25
    %p27 = scmp.ne.s32.totalorder %s19, %s22
    %p28 = scmp.eq.s32.totalorder %s9, 0
    %p29 = por %p27, %p28
    %p30 = scmp.ne.s32.totalorder %s19, %s22
    %p31 = scmp.eq.s32.totalorder %s14, 1
    %p32 = por %p30, %p31
    %p33 = scmp.ne.s32.totalorder %s22, %s23
    %p34 = scmp.eq.s32.totalorder %s14, 0
    %p35 = por %p33, %p34
    %p36 = scmp.ne.s32.totalorder %s22, %s23
    %p37 = scmp.eq.s32.totalorder %s15, 1
    %p38 = por %p36, %p37
    %p40 = scmp.ne.s32.totalorder %s23, %s39
    %p41 = scmp.eq.s32.totalorder %s15, 0
    %p42 = por %p40, %p41
    %s44 = sadd.s32 %s43, 1
    %p47 = scmp.eq.s32.totalorder %s9, 1
    %p48 = scmp.ne.s32.totalorder %s43, %s45
    %p49 = scmp.eq.s32.totalorder %s9, 0
    %p50 = por %p48, %p49
    %p51 = scmp.ne.s32.totalorder %s43, %s45
    %p52 = scmp.eq.s32.totalorder %s14, 1
    %p53 = por %p51, %p52
    %p54 = scmp.ne.s32.totalorder %s45, %s46
    %p55 = scmp.eq.s32.totalorder %s14, 0
    %p56 = por %p54, %p55
    %p57 = scmp.ne.s32.totalorder %s45, %s46
    %p58 = scmp.eq.s32.totalorder %s15, 1
    %p59 = por %p57, %p58
    %p61 = scmp.ne.s32.totalorder %s46, %s60
    %p62 = scmp.eq.s32.totalorder %s15, 0
    %p63 = por %p61, %p62
    %s65 = sadd.s32 %s64, 1
    %p68 = scmp.eq.s32.totalorder %s9, 1
    %p69 = scmp.ne.s32.totalorder %s64, %s66
    %p70 = scmp.eq.s32.totalorder %s9, 0
    %p71 = por %p69, %p70
    %p72 = scmp.ne.s32.totalorder %s64, %s66
    %p73 = scmp.eq.s32.totalorder %s14, 1
    %p74 = por %p72, %p73
    %p75 = scmp.ne.s32.totalorder %s66, %s67
    %p76 = scmp.eq.s32.totalorder %s14, 0
    %p77 = por %p75, %p76
    %p78 = scmp.ne.s32.totalorder %s66, %s67
    %p79 = scmp.eq.s32.totalorder %s15, 1
    %p80 = por %p78, %p79
    %p82 = scmp.ne.s32.totalorder %s67, %s81
    %p83 = scmp.eq.s32.totalorder %s15, 0
    %p84 = por %p82, %p83
    %s85 = ssub.s32 %s9, %s16
    %p86 = scmp.eq.s32.totalorder %s85, 0
    %s88 = sadd.s32 %s87, 1
    %s89 = scalar_select %p86, %s87, %s88
    %p92 = pneg %p86
    %p93 = scmp.eq.s32.totalorder %s9, 1
    %p94 = por %p92, %p93
    %p95 = scmp.ne.s32.totalorder %s87, %s90
    %p96 = scmp.eq.s32.totalorder %s9, 0
    %p97 = por %p95, %p96
    %p98 = scmp.ne.s32.totalorder %s87, %s90
    %p99 = scmp.eq.s32.totalorder %s14, 1
    %p100 = por %p98, %p99
    %p101 = scmp.ne.s32.totalorder %s90, %s91
    %p102 = scmp.eq.s32.totalorder %s14, 0
    %p103 = por %p101, %p102
    %p104 = scmp.ne.s32.totalorder %s90, %s91
    %p105 = scmp.eq.s32.totalorder %s15, 1
    %p106 = por %p104, %p105
    %p108 = scmp.ne.s32.totalorder %s91, %s107
    %p109 = scmp.eq.s32.totalorder %s15, 0
    %p110 = por %p108, %p109
    %p111 = scmp.le.s32.totalorder 1, %s9
    %p112 = scmp.lt.s32.totalorder %s9, 3
    %p113 = pnand %p111, %p112
    %p114 = pneg %p113
    // Predicated region
    $region9: #{vae_forward.8} parent=5 // pred_check
      _
    $region10: #{vae_forward.8} parent=5 // pred_check_branch
      %116 = sbr.rel (%p113) target = $region12
    $region11: #{vae_forward.8} parent=5 // pred_region
      %s117 = ssub.s32 %s9, 1
      // Predicated region
      $region13: #{vae_forward.8} parent=11 // pred_check
        %p118 = pneg %p56
      $region14: #{vae_forward.8} parent=11 // pred_check_branch
        %120 = sbr.rel (%p118) target = $region16
      $region15: #{vae_forward.8} parent=11 // pred_region
        _
      $region16: #{vae_forward.8} parent=11 // pred_fallthru
        _
      // Predicated region
      $region17: #{vae_forward.8} parent=11 // pred_check
        %p121 = pneg %p77
      $region18: #{vae_forward.8} parent=11 // pred_check_branch
        %123 = sbr.rel (%p121) target = $region20
      $region19: #{vae_forward.8} parent=11 // pred_region
        _
      $region20: #{vae_forward.8} parent=11 // pred_fallthru
        _
    $region12: #{vae_forward.8} parent=5 // pred_fallthru
      _
    %p124 = scmp.lt.s32.totalorder %s9, 2
    // Predicated region
    $region21: #{vae_forward.8} parent=5 // pred_check
      %p125 = pneg %p124
    $region22: #{vae_forward.8} parent=5 // pred_check_branch
      %127 = sbr.rel (%p125) target = $region24
    $region23: #{vae_forward.8} parent=5 // pred_region
      // Predicated region
      $region25: #{vae_forward.8} parent=23 // pred_check
        %p128 = pneg %p29
      $region26: #{vae_forward.8} parent=23 // pred_check_branch
        %130 = sbr.rel (%p128) target = $region28
      $region27: #{vae_forward.8} parent=23 // pred_region
        %s131 = smul.u32 8, %s9
        %p132 = scmp.lt.s32.totalorder %s131, 15
        %s133 = scalar_select %p132, %s131, 15
        %s134 = smul.addr %s133, 4
        %s135 = smul.addr %s134, 4
        %s136 = scalar_lea.vmem %s0, %s135
        %s137 = smul.u32 8, %s9
      $region28: #{vae_forward.8} parent=23 // pred_fallthru
        _
    $region24: #{vae_forward.8} parent=5 // pred_fallthru
      _
    %p138 = scmp.le.s32.totalorder 1, %s9
    %p139 = scmp.lt.s32.totalorder %s9, 3
    %p140 = pnand %p138, %p139
    %p141 = pneg %p140
    // Predicated region
    $region29: #{vae_forward.8} parent=5 // pred_check
      _
    $region30: #{vae_forward.8} parent=5 // pred_check_branch
      %143 = sbr.rel (%p140) target = $region32
    $region31: #{vae_forward.8} parent=5 // pred_region
      %s144 = ssub.s32 %s9, 1
      %s145 = smul.u32 8, %s14
      %p146 = scmp.lt.s32.totalorder %s145, 15
      %s147 = scalar_select %p146, %s145, 15
      %s148 = smul.addr %s147, 4
      %s149 = smul.addr %s148, 4
      %s150 = scalar_lea.vmem %s0, %s149
      %p151 = pneg %p35
      %p152 = pneg %p32
      %p153 = pneg %p56
      %p154 = pneg %p53
      %p155 = pneg %p77
      %p156 = pneg %p74
      %p157 = pneg %p103
      %p158 = pneg %p100
      %s159 = smul.u32 8, %s14
      %p160 = scmp.lt.s32.totalorder %s159, 15
      %s161 = scalar_select %p160, %s159, 15
      %s162 = smul.addr %s161, 4
      %s163 = scalar_lea.vmem %s3, %s162
      %s164 = smul.u32 8, %s14
      %p165 = scmp.lt.s32.totalorder %s164, 15
      %s166 = scalar_select %p165, %s164, 15
      %s167 = smul.addr %s166, 4
      %s168 = smul.addr %s167, 4
      %s169 = scalar_lea.vmem %s0, %s168
      %s170 = smul.u32 8, %s14
      %s171 = smul.u32 8, %s14
      %p172 = scmp.lt.s32.totalorder %s171, 15
      %s173 = scalar_select %p172, %s171, 15
      %s174 = smul.addr %s173, 4
      %s175 = scalar_lea.vmem %s3, %s174
      %s176 = smul.u32 8, %s14
      %v178 = vld [vmem:[%s169] sm:$0xff]
      %v179 = vld [vmem:[%s169 + $0x8] sm:$0xff]
      %v180 = vld [vmem:[%s169 + $0x10] sm:$0xff]
      %v181 = vld [vmem:[%s169 + $0x18] sm:$0xff]
      %v182 = vld [vmem:[%s169 + $0x20] sm:$0xff]
      %v183 = vld [vmem:[%s169 + $0x28] sm:$0xff]
      %v184 = vld [vmem:[%s169 + $0x30] sm:$0xff]
      %v185 = vld [vmem:[%s169 + $0x38] sm:$0xff]
      %v186 = vld [vmem:[%s169 + $0x40] sm:$0xff]
      %v187 = vld [vmem:[%s169 + $0x48] sm:$0xff]
      %v188 = vld [vmem:[%s169 + $0x50] sm:$0xff]
      %v189 = vld [vmem:[%s169 + $0x58] sm:$0xff]
      %v190 = vld [vmem:[%s169 + $0x60] sm:$0xff]
      %v191 = vld [vmem:[%s169 + $0x68] sm:$0xff]
      %v192 = vld [vmem:[%s169 + $0x70] sm:$0xff]
      %v193 = vld [vmem:[%s169 + $0x78] sm:$0xff]
      %v194 = vld [vmem:[%s1] sm:$0xf]
      %v195 = vld [vmem:[%s1 + $0x4] sm:$0xf]
      %v196 = vld [vmem:[%s1 + $0x8] sm:$0xf]
      %v197 = vld [vmem:[%s1 + $0xc] sm:$0xf]
      %v198 = vld [vmem:[%s1 + $0x10] sm:$0xf]
      %v199 = vld [vmem:[%s1 + $0x14] sm:$0xf]
      %v200 = vld [vmem:[%s1 + $0x18] sm:$0xf]
      %v201 = vld [vmem:[%s1 + $0x1c] sm:$0xf]
      %v202 = vld [vmem:[%s1 + $0x20] sm:$0xf]
      %v203 = vld [vmem:[%s1 + $0x24] sm:$0xf]
      %v204 = vld [vmem:[%s1 + $0x28] sm:$0xf]
      %v205 = vld [vmem:[%s1 + $0x2c] sm:$0xf]
      %v206 = vld [vmem:[%s1 + $0x30] sm:$0xf]
      %v207 = vld [vmem:[%s1 + $0x34] sm:$0xf]
      %v208 = vld [vmem:[%s1 + $0x38] sm:$0xf]
      %v209 = vld [vmem:[%s1 + $0x3c] sm:$0xf]
      %v210 = vld [vmem:[%s1 + $0x40] sm:$0xf]
      %v211 = vld [vmem:[%s1 + $0x44] sm:$0xf]
      %v212 = vld [vmem:[%s1 + $0x48] sm:$0xf]
      %v213 = vld [vmem:[%s1 + $0x4c] sm:$0xf]
      %v214 = vld [vmem:[%s1 + $0x50] sm:$0xf]
      %v215 = vld [vmem:[%s1 + $0x54] sm:$0xf]
      %v216 = vld [vmem:[%s1 + $0x58] sm:$0xf]
      %v217 = vld [vmem:[%s1 + $0x5c] sm:$0xf]
      %v218 = vld [vmem:[%s1 + $0x60] sm:$0xf]
      %v219 = vld [vmem:[%s1 + $0x64] sm:$0xf]
      %v220 = vld [vmem:[%s1 + $0x68] sm:$0xf]
      %v221 = vld [vmem:[%s1 + $0x6c] sm:$0xf]
      %v222 = vld [vmem:[%s1 + $0x70] sm:$0xf]
      %v223 = vld [vmem:[%s1 + $0x74] sm:$0xf]
      %v224 = vld [vmem:[%s1 + $0x78] sm:$0xf]
      %v225 = vld [vmem:[%s1 + $0x7c] sm:$0xf]
      %v226 = vld [vmem:[%s1 + $0x80] sm:$0xf]
      %v227 = vld [vmem:[%s1 + $0x84] sm:$0xf]
      %v228 = vld [vmem:[%s1 + $0x88] sm:$0xf]
      %v229 = vld [vmem:[%s1 + $0x8c] sm:$0xf]
      %v230 = vld [vmem:[%s1 + $0x90] sm:$0xf]
      %v231 = vld [vmem:[%s1 + $0x94] sm:$0xf]
      %v232 = vld [vmem:[%s1 + $0x98] sm:$0xf]
      %v233 = vld [vmem:[%s1 + $0x9c] sm:$0xf]
      %v234 = vld [vmem:[%s1 + $0xa0] sm:$0xf]
      %v235 = vld [vmem:[%s1 + $0xa4] sm:$0xf]
      %v236 = vld [vmem:[%s1 + $0xa8] sm:$0xf]
      %v237 = vld [vmem:[%s1 + $0xac] sm:$0xf]
      %v238 = vld [vmem:[%s1 + $0xb0] sm:$0xf]
      %v239 = vld [vmem:[%s1 + $0xb4] sm:$0xf]
      %v240 = vld [vmem:[%s1 + $0xb8] sm:$0xf]
      %v241 = vld [vmem:[%s1 + $0xbc] sm:$0xf]
      %v242 = vld [vmem:[%s1 + $0xc0] sm:$0xf]
      %v243 = vld [vmem:[%s1 + $0xc4] sm:$0xf]
      %v244 = vld [vmem:[%s1 + $0xc8] sm:$0xf]
      %v245 = vld [vmem:[%s1 + $0xcc] sm:$0xf]
      %v246 = vld [vmem:[%s1 + $0xd0] sm:$0xf]
      %v247 = vld [vmem:[%s1 + $0xd4] sm:$0xf]
      %v248 = vld [vmem:[%s1 + $0xd8] sm:$0xf]
      %v249 = vld [vmem:[%s1 + $0xdc] sm:$0xf]
      %v250 = vld [vmem:[%s1 + $0xe0] sm:$0xf]
      %v251 = vld [vmem:[%s1 + $0xe4] sm:$0xf]
      %v252 = vld [vmem:[%s1 + $0xe8] sm:$0xf]
      %v253 = vld [vmem:[%s1 + $0xec] sm:$0xf]
      %v254 = vld [vmem:[%s1 + $0xf0] sm:$0xf]
      %v255 = vld [vmem:[%s1 + $0xf4] sm:$0xf]
      %v256 = vld [vmem:[%s1 + $0xf8] sm:$0xf]
      %v257 = vld [vmem:[%s1 + $0xfc] sm:$0xf]
      %v258 = vld [vmem:[%s2] sm:$0x1]
      %v260 = vlaneseq
      %v261 = vshrl.u32 %v260, 7
      %v262 = vsub.s32 0, %v261
      %v263 = vrot.slane %v258, %v262
      %v281 = vunpack.c.l.b16 %v178
      %v282 = vunpack.c.h.b16 %v178
      %v283 = vunpack.c.l.b16 %v179
      %v284 = vunpack.c.h.b16 %v179
      %v285 = vunpack.c.l.b16 %v180
      %v286 = vunpack.c.h.b16 %v180
      %v287 = vunpack.c.l.b16 %v181
      %v288 = vunpack.c.h.b16 %v181
      %v289 = vunpack.c.l.b16 %v182
      %v290 = vunpack.c.h.b16 %v182
      %v291 = vunpack.c.l.b16 %v183
      %v292 = vunpack.c.h.b16 %v183
      %v293 = vunpack.c.l.b16 %v184
      %v294 = vunpack.c.h.b16 %v184
      %v295 = vunpack.c.l.b16 %v185
      %v296 = vunpack.c.h.b16 %v185
      %v297 = vunpack.c.l.b16 %v186
      %v298 = vunpack.c.h.b16 %v186
      %v299 = vunpack.c.l.b16 %v187
      %v300 = vunpack.c.h.b16 %v187
      %v301 = vunpack.c.l.b16 %v188
      %v302 = vunpack.c.h.b16 %v188
      %v303 = vunpack.c.l.b16 %v189
      %v304 = vunpack.c.h.b16 %v189
      %v305 = vunpack.c.l.b16 %v190
      %v306 = vunpack.c.h.b16 %v190
      %v307 = vunpack.c.l.b16 %v191
      %v308 = vunpack.c.h.b16 %v191
      %v309 = vunpack.c.l.b16 %v192
      %v310 = vunpack.c.h.b16 %v192
      %v311 = vunpack.c.l.b16 %v193
      %v312 = vunpack.c.h.b16 %v193
      %v313 = vpack.c.b16 %v285, %v281
      %v314 = vpack.c.b16 %v286, %v282
      %v315 = vpack.c.b16 %v287, %v283
      %v316 = vpack.c.b16 %v288, %v284
      %v317 = vpack.c.b16 %v293, %v289
      %v318 = vpack.c.b16 %v294, %v290
      %v319 = vpack.c.b16 %v295, %v291
      %v320 = vpack.c.b16 %v296, %v292
      %v321 = vpack.c.b16 %v301, %v297
      %v322 = vpack.c.b16 %v302, %v298
      %v323 = vpack.c.b16 %v303, %v299
      %v324 = vpack.c.b16 %v304, %v300
      %v325 = vpack.c.b16 %v309, %v305
      %v326 = vpack.c.b16 %v310, %v306
      %v327 = vpack.c.b16 %v311, %v307
      %v328 = vpack.c.b16 %v312, %v308
      %v409 = vunpack.c.l.b16 %v194
      %v410 = vunpack.c.l.b16 %v195
      %v411 = vunpack.c.l.b16 %v196
      %v412 = vunpack.c.l.b16 %v197
      %v413 = vunpack.c.l.b16 %v198
      %v414 = vunpack.c.l.b16 %v199
      %v415 = vunpack.c.l.b16 %v200
      %v416 = vunpack.c.l.b16 %v201
      %v417 = vunpack.c.l.b16 %v202
      %v418 = vunpack.c.l.b16 %v203
      %v419 = vunpack.c.l.b16 %v204
      %v420 = vunpack.c.l.b16 %v205
      %v421 = vunpack.c.l.b16 %v206
      %v422 = vunpack.c.l.b16 %v207
      %v423 = vunpack.c.l.b16 %v208
      %v424 = vunpack.c.l.b16 %v209
      %v425 = vunpack.c.l.b16 %v210
      %v426 = vunpack.c.l.b16 %v211
      %v427 = vunpack.c.l.b16 %v212
      %v428 = vunpack.c.l.b16 %v213
      %v429 = vunpack.c.l.b16 %v214
      %v430 = vunpack.c.l.b16 %v215
      %v431 = vunpack.c.l.b16 %v216
      %v432 = vunpack.c.l.b16 %v217
      %v433 = vunpack.c.l.b16 %v218
      %v434 = vunpack.c.l.b16 %v219
      %v435 = vunpack.c.l.b16 %v220
      %v436 = vunpack.c.l.b16 %v221
      %v437 = vunpack.c.l.b16 %v222
      %v438 = vunpack.c.l.b16 %v223
      %v439 = vunpack.c.l.b16 %v224
      %v440 = vunpack.c.l.b16 %v225
      %v441 = vunpack.c.l.b16 %v226
      %v442 = vunpack.c.l.b16 %v227
      %v443 = vunpack.c.l.b16 %v228
      %v444 = vunpack.c.l.b16 %v229
      %v445 = vunpack.c.l.b16 %v230
      %v446 = vunpack.c.l.b16 %v231
      %v447 = vunpack.c.l.b16 %v232
      %v448 = vunpack.c.l.b16 %v233
      %v449 = vunpack.c.l.b16 %v234
      %v450 = vunpack.c.l.b16 %v235
      %v451 = vunpack.c.l.b16 %v236
      %v452 = vunpack.c.l.b16 %v237
      %v453 = vunpack.c.l.b16 %v238
      %v454 = vunpack.c.l.b16 %v239
      %v455 = vunpack.c.l.b16 %v240
      %v456 = vunpack.c.l.b16 %v241
      %v457 = vunpack.c.l.b16 %v242
      %v458 = vunpack.c.l.b16 %v243
      %v459 = vunpack.c.l.b16 %v244
      %v460 = vunpack.c.l.b16 %v245
      %v461 = vunpack.c.l.b16 %v246
      %v462 = vunpack.c.l.b16 %v247
      %v463 = vunpack.c.l.b16 %v248
      %v464 = vunpack.c.l.b16 %v249
      %v465 = vunpack.c.l.b16 %v250
      %v466 = vunpack.c.l.b16 %v251
      %v467 = vunpack.c.l.b16 %v252
      %v468 = vunpack.c.l.b16 %v253
      %v469 = vunpack.c.l.b16 %v254
      %v470 = vunpack.c.l.b16 %v255
      %v471 = vunpack.c.l.b16 %v256
      %v472 = vunpack.c.l.b16 %v257
      %v473 = vpack.c.b16 %v410, %v409
      %v474 = vpack.c.b16 %v412, %v411
      %v475 = vpack.c.b16 %v414, %v413
      %v476 = vpack.c.b16 %v416, %v415
      %v477 = vpack.c.b16 %v418, %v417
      %v478 = vpack.c.b16 %v420, %v419
      %v479 = vpack.c.b16 %v422, %v421
      %v480 = vpack.c.b16 %v424, %v423
      %v481 = vpack.c.b16 %v426, %v425
      %v482 = vpack.c.b16 %v428, %v427
      %v483 = vpack.c.b16 %v430, %v429
      %v484 = vpack.c.b16 %v432, %v431
      %v485 = vpack.c.b16 %v434, %v433
      %v486 = vpack.c.b16 %v436, %v435
      %v487 = vpack.c.b16 %v438, %v437
      %v488 = vpack.c.b16 %v440, %v439
      %v489 = vpack.c.b16 %v442, %v441
      %v490 = vpack.c.b16 %v444, %v443
      %v491 = vpack.c.b16 %v446, %v445
      %v492 = vpack.c.b16 %v448, %v447
      %v493 = vpack.c.b16 %v450, %v449
      %v494 = vpack.c.b16 %v452, %v451
      %v495 = vpack.c.b16 %v454, %v453
      %v496 = vpack.c.b16 %v456, %v455
      %v497 = vpack.c.b16 %v458, %v457
      %v498 = vpack.c.b16 %v460, %v459
      %v499 = vpack.c.b16 %v462, %v461
      %v500 = vpack.c.b16 %v464, %v463
      %v501 = vpack.c.b16 %v466, %v465
      %v502 = vpack.c.b16 %v468, %v467
      %v503 = vpack.c.b16 %v470, %v469
      %v504 = vpack.c.b16 %v472, %v471
      %537 = vmatprep.subr.bf16.mxu0 0
      %538 = vmatpush1.bf16.msra.mxu0 %v473
      %539 = vmatprep.subr.bf16.mxu0 0
      %540 = vmatpush1.bf16.msra.mxu0 %v474
      %541 = vmatprep.subr.bf16.mxu0 0
      %542 = vmatpush1.bf16.msra.mxu0 %v475
      %543 = vmatprep.subr.bf16.mxu0 0
      %544 = vmatpush1.bf16.msra.mxu0 %v476
      %545 = vmatprep.subr.bf16.mxu0 0
      %546 = vmatpush1.bf16.msra.mxu0 %v477
      %547 = vmatprep.subr.bf16.mxu0 0
      %548 = vmatpush1.bf16.msra.mxu0 %v478
      %549 = vmatprep.subr.bf16.mxu0 0
      %550 = vmatpush1.bf16.msra.mxu0 %v479
      %551 = vmatprep.subr.bf16.mxu0 0
      %552 = vmatpush1.bf16.msra.mxu0 %v480
      %553 = vmatprep.subr.bf16.mxu0 0
      %554 = vmatpush1.bf16.msra.mxu0 %v481
      %555 = vmatprep.subr.bf16.mxu0 0
      %556 = vmatpush1.bf16.msra.mxu0 %v482
      %557 = vmatprep.subr.bf16.mxu0 0
      %558 = vmatpush1.bf16.msra.mxu0 %v483
      %559 = vmatprep.subr.bf16.mxu0 0
      %560 = vmatpush1.bf16.msra.mxu0 %v484
      %561 = vmatprep.subr.bf16.mxu0 0
      %562 = vmatpush1.bf16.msra.mxu0 %v485
      %563 = vmatprep.subr.bf16.mxu0 0
      %564 = vmatpush1.bf16.msra.mxu0 %v486
      %565 = vmatprep.subr.bf16.mxu0 0
      %566 = vmatpush1.bf16.msra.mxu0 %v487
      %567 = vmatprep.subr.bf16.mxu0 0
      %568 = vmatpush1.bf16.msra.mxu0 %v488
      %569 = vmatprep.mubr.bf16.mxu0 %v314
      %570 = vmatmul.mubr.bf16.gmra.mrb[0].mxu0 %v313
      %v571 = vpop.f32.mrb[0].mxu0
      %v572 = vadd.f32 %v263, %v571
      %v573 = vpop.f32.mrb[0].mxu0
      %v574 = vpop.f32.mrb[0].mxu0
      %v575 = vadd.f32 %v263, %v574
      %v576 = vpop.f32.mrb[0].mxu0
      %577 = vmatprep.mubr.bf16.mxu0 %v318
      %578 = vmatmul.mubr.bf16.gmra.mrb[0].mxu0 %v317
      %v579 = vpop.f32.mrb[0].mxu0
      %v580 = vadd.f32 %v263, %v579
      %v581 = vpop.f32.mrb[0].mxu0
      %v582 = vpop.f32.mrb[0].mxu0
      %v583 = vadd.f32 %v263, %v582
      %v584 = vpop.f32.mrb[0].mxu0
      %585 = vmatprep.mubr.bf16.mxu0 %v322
      %586 = vmatmul.mubr.bf16.gmra.mrb[0].mxu0 %v321
      %v587 = vpop.f32.mrb[0].mxu0
      %v588 = vadd.f32 %v263, %v587
      %v589 = vpop.f32.mrb[0].mxu0
      %v590 = vpop.f32.mrb[0].mxu0
      %v591 = vadd.f32 %v263, %v590
      %v592 = vpop.f32.mrb[0].mxu0
      %593 = vmatprep.mubr.bf16.mxu0 %v326
      %594 = vmatmul.mubr.bf16.gmra.mrb[0].mxu0 %v325
      %v595 = vpop.f32.mrb[0].mxu0
      %v596 = vadd.f32 %v263, %v595
      %v597 = vpop.f32.mrb[0].mxu0
      %v598 = vpop.f32.mrb[0].mxu0
      %v599 = vadd.f32 %v263, %v598
      %v600 = vpop.f32.mrb[0].mxu0
      %601 = vdwg.mxu0
      %602 = vmatprep.subr.bf16.mxu0 0
      %603 = vmatpush1.bf16.msra.mxu0 %v489
      %604 = vmatprep.subr.bf16.mxu0 0
      %605 = vmatpush1.bf16.msra.mxu0 %v490
      %606 = vmatprep.subr.bf16.mxu0 0
      %607 = vmatpush1.bf16.msra.mxu0 %v491
      %608 = vmatprep.subr.bf16.mxu0 0
      %609 = vmatpush1.bf16.msra.mxu0 %v492
      %610 = vmatprep.subr.bf16.mxu0 0
      %611 = vmatpush1.bf16.msra.mxu0 %v493
      %612 = vmatprep.subr.bf16.mxu0 0
      %613 = vmatpush1.bf16.msra.mxu0 %v494
      %614 = vmatprep.subr.bf16.mxu0 0
      %615 = vmatpush1.bf16.msra.mxu0 %v495
      %616 = vmatprep.subr.bf16.mxu0 0
      %617 = vmatpush1.bf16.msra.mxu0 %v496
      %618 = vmatprep.subr.bf16.mxu0 0
      %619 = vmatpush1.bf16.msra.mxu0 %v497
      %620 = vmatprep.subr.bf16.mxu0 0
      %621 = vmatpush1.bf16.msra.mxu0 %v498
      %622 = vmatprep.subr.bf16.mxu0 0
      %623 = vmatpush1.bf16.msra.mxu0 %v499
      %624 = vmatprep.subr.bf16.mxu0 0
      %625 = vmatpush1.bf16.msra.mxu0 %v500
      %626 = vmatprep.subr.bf16.mxu0 0
      %627 = vmatpush1.bf16.msra.mxu0 %v501
      %628 = vmatprep.subr.bf16.mxu0 0
      %629 = vmatpush1.bf16.msra.mxu0 %v502
      %630 = vmatprep.subr.bf16.mxu0 0
      %631 = vmatpush1.bf16.msra.mxu0 %v503
      %632 = vmatprep.subr.bf16.mxu0 0
      %633 = vmatpush1.bf16.msra.mxu0 %v504
      %634 = vmatprep.mubr.bf16.mxu0 %v316
      %635 = vmatmul.mubr.bf16.gmra.mrb[0].mxu0 %v315
      %v636 = vpop.f32.mrb[0].mxu0
      %v637 = vadd.f32 %v572, %v636
      %v638 = vpop.f32.mrb[0].mxu0
      %v639 = vpop.f32.mrb[0].mxu0
      %v640 = vadd.f32 %v575, %v639
      %v641 = vpop.f32.mrb[0].mxu0
      %642 = vmatprep.mubr.bf16.mxu0 %v320
      %643 = vmatmul.mubr.bf16.gmra.mrb[0].mxu0 %v319
      %v644 = vpop.f32.mrb[0].mxu0
      %v645 = vadd.f32 %v580, %v644
      %v646 = vpop.f32.mrb[0].mxu0
      %v647 = vpop.f32.mrb[0].mxu0
      %v648 = vadd.f32 %v583, %v647
      %v649 = vpop.f32.mrb[0].mxu0
      %650 = vmatprep.mubr.bf16.mxu0 %v324
      %651 = vmatmul.mubr.bf16.gmra.mrb[0].mxu0 %v323
      %v652 = vpop.f32.mrb[0].mxu0
      %v653 = vadd.f32 %v588, %v652
      %v654 = vpop.f32.mrb[0].mxu0
      %v655 = vpop.f32.mrb[0].mxu0
      %v656 = vadd.f32 %v591, %v655
      %v657 = vpop.f32.mrb[0].mxu0
      %658 = vmatprep.mubr.bf16.mxu0 %v328
      %659 = vmatmul.mubr.bf16.gmra.mrb[0].mxu0 %v327
      %v660 = vpop.f32.mrb[0].mxu0
      %v661 = vadd.f32 %v596, %v660
      %v662 = vpop.f32.mrb[0].mxu0
      %v663 = vpop.f32.mrb[0].mxu0
      %v664 = vadd.f32 %v599, %v663
      %v665 = vpop.f32.mrb[0].mxu0
      %666 = vdwg.mxu0
      %v667 = vmax.f32 %v637, 0.0
      %v668 = vmax.f32 %v640, 0.0
      %v669 = vmax.f32 %v645, 0.0
      %v670 = vmax.f32 %v648, 0.0
      %v671 = vmax.f32 %v653, 0.0
      %v672 = vmax.f32 %v656, 0.0
      %v673 = vmax.f32 %v661, 0.0
      %v674 = vmax.f32 %v664, 0.0
      %v675 = vpack.c.bf16 %v668, %v667
      %v676 = vpack.c.bf16 %v670, %v669
      %v677 = vpack.c.bf16 %v672, %v671
      %v678 = vpack.c.bf16 %v674, %v673
      %v683 = vunpack.c.l.b16 %v675
      %v684 = vunpack.c.h.b16 %v675
      %v685 = vunpack.c.l.b16 %v676
      %v686 = vunpack.c.h.b16 %v676
      %v687 = vunpack.c.l.b16 %v677
      %v688 = vunpack.c.h.b16 %v677
      %v689 = vunpack.c.l.b16 %v678
      %v690 = vunpack.c.h.b16 %v678
      %v691 = vpack.c.b16 %v683, %v683
      %v692 = vpack.c.b16 %v684, %v684
      %v693 = vpack.c.b16 %v685, %v685
      %v694 = vpack.c.b16 %v686, %v686
      %v695 = vpack.c.b16 %v687, %v687
      %v696 = vpack.c.b16 %v688, %v688
      %v697 = vpack.c.b16 %v689, %v689
      %v698 = vpack.c.b16 %v690, %v690
      %vm707 = vcmask 519168
      %708 = vst.msk [vmem:[%s175] sm:$0xf] %vm707, %v691
      %709 = vst.msk [vmem:[%s175 + $0x4] sm:$0xf] %vm707, %v692
      %710 = vst.msk [vmem:[%s175 + $0x8] sm:$0xf] %vm707, %v693
      %711 = vst.msk [vmem:[%s175 + $0xc] sm:$0xf] %vm707, %v694
      %712 = vst.msk [vmem:[%s175 + $0x10] sm:$0xf] %vm707, %v695
      %713 = vst.msk [vmem:[%s175 + $0x14] sm:$0xf] %vm707, %v696
      %714 = vst.msk [vmem:[%s175 + $0x18] sm:$0xf] %vm707, %v697
      %715 = vst.msk [vmem:[%s175 + $0x1c] sm:$0xf] %vm707, %v698
      %s716 = smul.u32 8, %s14
      %p717 = scmp.lt.s32.totalorder %s716, 15
      %s718 = scalar_select %p717, %s716, 15
      %s719 = smul.addr %s718, 4
      %s720 = scalar_lea.vmem %s3, %s719
      // Predicated region
      $region33: #{vae_forward.8} parent=31 // pred_check
        %p721 = pneg %p100
      $region34: #{vae_forward.8} parent=31 // pred_check_branch
        %723 = sbr.rel (%p721) target = $region36
      $region35: #{vae_forward.8} parent=31 // pred_region
        %s724 = smul.u32 8, %s14
      $region36: #{vae_forward.8} parent=31 // pred_fallthru
        _
    $region32: #{vae_forward.8} parent=5 // pred_fallthru
      _
    %p725 = scmp.le.s32.totalorder 2, %s9
    // Predicated region
    $region37: #{vae_forward.8} parent=5 // pred_check
      %p726 = pneg %p725
    $region38: #{vae_forward.8} parent=5 // pred_check_branch
      %728 = sbr.rel (%p726) target = $region40
    $region39: #{vae_forward.8} parent=5 // pred_region
      %s729 = ssub.s32 %s9, 2
      // Predicated region
      $region41: #{vae_forward.8} parent=39 // pred_check
        %p730 = pneg %p106
      $region42: #{vae_forward.8} parent=39 // pred_check_branch
        %732 = sbr.rel (%p730) target = $region44
      $region43: #{vae_forward.8} parent=39 // pred_region
        %s733 = smul.u32 8, %s15
        %p734 = scmp.lt.s32.totalorder %s733, 15
        %s735 = scalar_select %p734, %s733, 15
        %s736 = smul.addr %s735, 4
        %s737 = scalar_lea.vmem %s3, %s736
      $region44: #{vae_forward.8} parent=39 // pred_fallthru
        _
    $region40: #{vae_forward.8} parent=5 // pred_fallthru
      _
  $region6: #{vae_forward.8} parent=0 // loop_footer
    %s13 = sadd.s32 1, %s9
  $region7: #{vae_forward.8} parent=0 // loop_footer_branch
    %8 = sbr.rel target = $region3
  $region8: #{vae_forward.8} parent=0 // loop_exit
    _

// kernel: vae_forward.9
$region0: #{vae_forward.9}
  #allocation0 [shape = 'u32[]', space=smem, size = 0x4, offset = 0x4, fixed_abs, tag = 'smem constant byte address 0x4 - core index']
  #allocation1 [shape = 'u32[144,128]{1,0:T(1,128)}', space=vmem, size = 0x12000, scoped, tag = 'internal scratch']
  %s0 = inlined_call_operand.vmem [shape: bf16[32,1024], index: 0, kind: input, shape index: {}]
  %s1 = inlined_call_operand.vmem [shape: bf16[1024,64], index: 1, kind: input, shape index: {}]
  %s2 = inlined_call_operand.vmem [shape: f32[1,64], index: 2, kind: input, shape index: {}]
  %s3 = inlined_call_operand.vmem [shape: bf16[32,64], index: 3, kind: output, shape index: {}]
  %s4 = sld [smem:[#allocation0]]
  $region22: #{vae_forward.9} parent=0
    _
  %s6 = ssub.s32 1, %s4
  %s7 = scalar_select 0, %s6, %s4
  // Predicated region
  $region2: #{vae_forward.9} parent=0 // pred_check
    _
  $region3: #{vae_forward.9} parent=0 // pred_check_branch
    %9 = sbr.rel (0) target = $region5
  $region4: #{vae_forward.9} parent=0 // pred_region
    _
  $region5: #{vae_forward.9} parent=0 // pred_fallthru
    _
  // Predicated region
  $region6: #{vae_forward.9} parent=0 // pred_check
    _
  $region7: #{vae_forward.9} parent=0 // pred_check_branch
    %11 = sbr.rel (0) target = $region9
  $region8: #{vae_forward.9} parent=0 // pred_region
    _
  $region9: #{vae_forward.9} parent=0 // pred_fallthru
    _
  // Predicated region
  $region10: #{vae_forward.9} parent=0 // pred_check
    _
  $region11: #{vae_forward.9} parent=0 // pred_check_branch
    %13 = sbr.rel (0) target = $region13
  $region12: #{vae_forward.9} parent=0 // pred_region
    _
  $region13: #{vae_forward.9} parent=0 // pred_fallthru
    _
  %v15 = vld [vmem:[%s0] sm:$0xff]
  %v16 = vld [vmem:[%s0 + $0x8] sm:$0xff]
  %v17 = vld [vmem:[%s0 + $0x10] sm:$0xff]
  %v18 = vld [vmem:[%s0 + $0x18] sm:$0xff]
  %v19 = vld [vmem:[%s0 + $0x20] sm:$0xff]
  %v20 = vld [vmem:[%s0 + $0x28] sm:$0xff]
  %v21 = vld [vmem:[%s0 + $0x30] sm:$0xff]
  %v22 = vld [vmem:[%s0 + $0x38] sm:$0xff]
  %v23 = vld [vmem:[%s0 + $0x40] sm:$0xff]
  %v24 = vld [vmem:[%s0 + $0x48] sm:$0xff]
  %v25 = vld [vmem:[%s0 + $0x50] sm:$0xff]
  %v26 = vld [vmem:[%s0 + $0x58] sm:$0xff]
  %v27 = vld [vmem:[%s0 + $0x60] sm:$0xff]
  %v28 = vld [vmem:[%s0 + $0x68] sm:$0xff]
  %v29 = vld [vmem:[%s0 + $0x70] sm:$0xff]
  %v30 = vld [vmem:[%s0 + $0x78] sm:$0xff]
  %v31 = vld [vmem:[%s1] sm:$0xf]
  %v32 = vld [vmem:[%s1 + $0x4] sm:$0xf]
  %v33 = vld [vmem:[%s1 + $0x8] sm:$0xf]
  %v34 = vld [vmem:[%s1 + $0xc] sm:$0xf]
  %v35 = vld [vmem:[%s1 + $0x10] sm:$0xf]
  %v36 = vld [vmem:[%s1 + $0x14] sm:$0xf]
  %v37 = vld [vmem:[%s1 + $0x18] sm:$0xf]
  %v38 = vld [vmem:[%s1 + $0x1c] sm:$0xf]
  %v39 = vld [vmem:[%s1 + $0x20] sm:$0xf]
  %v40 = vld [vmem:[%s1 + $0x24] sm:$0xf]
  %v41 = vld [vmem:[%s1 + $0x28] sm:$0xf]
  %v42 = vld [vmem:[%s1 + $0x2c] sm:$0xf]
  %v43 = vld [vmem:[%s1 + $0x30] sm:$0xf]
  %v44 = vld [vmem:[%s1 + $0x34] sm:$0xf]
  %v45 = vld [vmem:[%s1 + $0x38] sm:$0xf]
  %v46 = vld [vmem:[%s1 + $0x3c] sm:$0xf]
  %v47 = vld [vmem:[%s1 + $0x40] sm:$0xf]
  %v48 = vld [vmem:[%s1 + $0x44] sm:$0xf]
  %v49 = vld [vmem:[%s1 + $0x48] sm:$0xf]
  %v50 = vld [vmem:[%s1 + $0x4c] sm:$0xf]
  %v51 = vld [vmem:[%s1 + $0x50] sm:$0xf]
  %v52 = vld [vmem:[%s1 + $0x54] sm:$0xf]
  %v53 = vld [vmem:[%s1 + $0x58] sm:$0xf]
  %v54 = vld [vmem:[%s1 + $0x5c] sm:$0xf]
  %v55 = vld [vmem:[%s1 + $0x60] sm:$0xf]
  %v56 = vld [vmem:[%s1 + $0x64] sm:$0xf]
  %v57 = vld [vmem:[%s1 + $0x68] sm:$0xf]
  %v58 = vld [vmem:[%s1 + $0x6c] sm:$0xf]
  %v59 = vld [vmem:[%s1 + $0x70] sm:$0xf]
  %v60 = vld [vmem:[%s1 + $0x74] sm:$0xf]
  %v61 = vld [vmem:[%s1 + $0x78] sm:$0xf]
  %v62 = vld [vmem:[%s1 + $0x7c] sm:$0xf]
  %v63 = vld [vmem:[%s1 + $0x80] sm:$0xf]
  %v64 = vld [vmem:[%s1 + $0x84] sm:$0xf]
  %v65 = vld [vmem:[%s1 + $0x88] sm:$0xf]
  %v66 = vld [vmem:[%s1 + $0x8c] sm:$0xf]
  %v67 = vld [vmem:[%s1 + $0x90] sm:$0xf]
  %v68 = vld [vmem:[%s1 + $0x94] sm:$0xf]
  %v69 = vld [vmem:[%s1 + $0x98] sm:$0xf]
  %v70 = vld [vmem:[%s1 + $0x9c] sm:$0xf]
  %v71 = vld [vmem:[%s1 + $0xa0] sm:$0xf]
  %v72 = vld [vmem:[%s1 + $0xa4] sm:$0xf]
  %v73 = vld [vmem:[%s1 + $0xa8] sm:$0xf]
  %v74 = vld [vmem:[%s1 + $0xac] sm:$0xf]
  %v75 = vld [vmem:[%s1 + $0xb0] sm:$0xf]
  %v76 = vld [vmem:[%s1 + $0xb4] sm:$0xf]
  %v77 = vld [vmem:[%s1 + $0xb8] sm:$0xf]
  %v78 = vld [vmem:[%s1 + $0xbc] sm:$0xf]
  %v79 = vld [vmem:[%s1 + $0xc0] sm:$0xf]
  %v80 = vld [vmem:[%s1 + $0xc4] sm:$0xf]
  %v81 = vld [vmem:[%s1 + $0xc8] sm:$0xf]
  %v82 = vld [vmem:[%s1 + $0xcc] sm:$0xf]
  %v83 = vld [vmem:[%s1 + $0xd0] sm:$0xf]
  %v84 = vld [vmem:[%s1 + $0xd4] sm:$0xf]
  %v85 = vld [vmem:[%s1 + $0xd8] sm:$0xf]
  %v86 = vld [vmem:[%s1 + $0xdc] sm:$0xf]
  %v87 = vld [vmem:[%s1 + $0xe0] sm:$0xf]
  %v88 = vld [vmem:[%s1 + $0xe4] sm:$0xf]
  %v89 = vld [vmem:[%s1 + $0xe8] sm:$0xf]
  %v90 = vld [vmem:[%s1 + $0xec] sm:$0xf]
  %v91 = vld [vmem:[%s1 + $0xf0] sm:$0xf]
  %v92 = vld [vmem:[%s1 + $0xf4] sm:$0xf]
  %v93 = vld [vmem:[%s1 + $0xf8] sm:$0xf]
  %v94 = vld [vmem:[%s1 + $0xfc] sm:$0xf]
  %v95 = vld [vmem:[%s1 + $0x100] sm:$0xf]
  %v96 = vld [vmem:[%s1 + $0x104] sm:$0xf]
  %v97 = vld [vmem:[%s1 + $0x108] sm:$0xf]
  %v98 = vld [vmem:[%s1 + $0x10c] sm:$0xf]
  %v99 = vld [vmem:[%s1 + $0x110] sm:$0xf]
  %v100 = vld [vmem:[%s1 + $0x114] sm:$0xf]
  %v101 = vld [vmem:[%s1 + $0x118] sm:$0xf]
  %v102 = vld [vmem:[%s1 + $0x11c] sm:$0xf]
  %v103 = vld [vmem:[%s1 + $0x120] sm:$0xf]
  %v104 = vld [vmem:[%s1 + $0x124] sm:$0xf]
  %v105 = vld [vmem:[%s1 + $0x128] sm:$0xf]
  %v106 = vld [vmem:[%s1 + $0x12c] sm:$0xf]
  %v107 = vld [vmem:[%s1 + $0x130] sm:$0xf]
  %v108 = vld [vmem:[%s1 + $0x134] sm:$0xf]
  %v109 = vld [vmem:[%s1 + $0x138] sm:$0xf]
  %v110 = vld [vmem:[%s1 + $0x13c] sm:$0xf]
  %v111 = vld [vmem:[%s1 + $0x140] sm:$0xf]
  %v112 = vld [vmem:[%s1 + $0x144] sm:$0xf]
  %v113 = vld [vmem:[%s1 + $0x148] sm:$0xf]
  %v114 = vld [vmem:[%s1 + $0x14c] sm:$0xf]
  %v115 = vld [vmem:[%s1 + $0x150] sm:$0xf]
  %v116 = vld [vmem:[%s1 + $0x154] sm:$0xf]
  %v117 = vld [vmem:[%s1 + $0x158] sm:$0xf]
  %v118 = vld [vmem:[%s1 + $0x15c] sm:$0xf]
  %v119 = vld [vmem:[%s1 + $0x160] sm:$0xf]
  %v120 = vld [vmem:[%s1 + $0x164] sm:$0xf]
  %v121 = vld [vmem:[%s1 + $0x168] sm:$0xf]
  %v122 = vld [vmem:[%s1 + $0x16c] sm:$0xf]
  %v123 = vld [vmem:[%s1 + $0x170] sm:$0xf]
  %v124 = vld [vmem:[%s1 + $0x174] sm:$0xf]
  %v125 = vld [vmem:[%s1 + $0x178] sm:$0xf]
  %v126 = vld [vmem:[%s1 + $0x17c] sm:$0xf]
  %v127 = vld [vmem:[%s1 + $0x180] sm:$0xf]
  %v128 = vld [vmem:[%s1 + $0x184] sm:$0xf]
  %v129 = vld [vmem:[%s1 + $0x188] sm:$0xf]
  %v130 = vld [vmem:[%s1 + $0x18c] sm:$0xf]
  %v131 = vld [vmem:[%s1 + $0x190] sm:$0xf]
  %v132 = vld [vmem:[%s1 + $0x194] sm:$0xf]
  %v133 = vld [vmem:[%s1 + $0x198] sm:$0xf]
  %v134 = vld [vmem:[%s1 + $0x19c] sm:$0xf]
  %v135 = vld [vmem:[%s1 + $0x1a0] sm:$0xf]
  %v136 = vld [vmem:[%s1 + $0x1a4] sm:$0xf]
  %v137 = vld [vmem:[%s1 + $0x1a8] sm:$0xf]
  %v138 = vld [vmem:[%s1 + $0x1ac] sm:$0xf]
  %v139 = vld [vmem:[%s1 + $0x1b0] sm:$0xf]
  %v140 = vld [vmem:[%s1 + $0x1b4] sm:$0xf]
  %v141 = vld [vmem:[%s1 + $0x1b8] sm:$0xf]
  %v142 = vld [vmem:[%s1 + $0x1bc] sm:$0xf]
  %v143 = vld [vmem:[%s1 + $0x1c0] sm:$0xf]
  %v144 = vld [vmem:[%s1 + $0x1c4] sm:$0xf]
  %v145 = vld [vmem:[%s1 + $0x1c8] sm:$0xf]
  %v146 = vld [vmem:[%s1 + $0x1cc] sm:$0xf]
  %v147 = vld [vmem:[%s1 + $0x1d0] sm:$0xf]
  %v148 = vld [vmem:[%s1 + $0x1d4] sm:$0xf]
  %v149 = vld [vmem:[%s1 + $0x1d8] sm:$0xf]
  %v150 = vld [vmem:[%s1 + $0x1dc] sm:$0xf]
  %v151 = vld [vmem:[%s1 + $0x1e0] sm:$0xf]
  %v152 = vld [vmem:[%s1 + $0x1e4] sm:$0xf]
  %v153 = vld [vmem:[%s1 + $0x1e8] sm:$0xf]
  %v154 = vld [vmem:[%s1 + $0x1ec] sm:$0xf]
  %v155 = vld [vmem:[%s1 + $0x1f0] sm:$0xf]
  %v156 = vld [vmem:[%s1 + $0x1f4] sm:$0xf]
  %v157 = vld [vmem:[%s1 + $0x1f8] sm:$0xf]
  %v158 = vld [vmem:[%s1 + $0x1fc] sm:$0xf]
  %v159 = vld [vmem:[%s2] sm:$0x1]
  %v161 = vlaneseq
  %v162 = vshrl.u32 %v161, 7
  %v163 = vsub.s32 0, %v162
  %v164 = vrot.slane %v159, %v163
  %v182 = vunpack.c.l.b16 %v15
  %v183 = vunpack.c.h.b16 %v15
  %v184 = vunpack.c.l.b16 %v16
  %v185 = vunpack.c.h.b16 %v16
  %v186 = vunpack.c.l.b16 %v17
  %v187 = vunpack.c.h.b16 %v17
  %v188 = vunpack.c.l.b16 %v18
  %v189 = vunpack.c.h.b16 %v18
  %v190 = vunpack.c.l.b16 %v19
  %v191 = vunpack.c.h.b16 %v19
  %v192 = vunpack.c.l.b16 %v20
  %v193 = vunpack.c.h.b16 %v20
  %v194 = vunpack.c.l.b16 %v21
  %v195 = vunpack.c.h.b16 %v21
  %v196 = vunpack.c.l.b16 %v22
  %v197 = vunpack.c.h.b16 %v22
  %v198 = vunpack.c.l.b16 %v23
  %v199 = vunpack.c.h.b16 %v23
  %v200 = vunpack.c.l.b16 %v24
  %v201 = vunpack.c.h.b16 %v24
  %v202 = vunpack.c.l.b16 %v25
  %v203 = vunpack.c.h.b16 %v25
  %v204 = vunpack.c.l.b16 %v26
  %v205 = vunpack.c.h.b16 %v26
  %v206 = vunpack.c.l.b16 %v27
  %v207 = vunpack.c.h.b16 %v27
  %v208 = vunpack.c.l.b16 %v28
  %v209 = vunpack.c.h.b16 %v28
  %v210 = vunpack.c.l.b16 %v29
  %v211 = vunpack.c.h.b16 %v29
  %v212 = vunpack.c.l.b16 %v30
  %v213 = vunpack.c.h.b16 %v30
  %v214 = vpack.c.b16 %v190, %v182
  %v215 = vpack.c.b16 %v191, %v183
  %v216 = vpack.c.b16 %v192, %v184
  %v217 = vpack.c.b16 %v193, %v185
  %v218 = vpack.c.b16 %v194, %v186
  %v219 = vpack.c.b16 %v195, %v187
  %v220 = vpack.c.b16 %v196, %v188
  %v221 = vpack.c.b16 %v197, %v189
  %v222 = vpack.c.b16 %v206, %v198
  %v223 = vpack.c.b16 %v207, %v199
  %v224 = vpack.c.b16 %v208, %v200
  %v225 = vpack.c.b16 %v209, %v201
  %v226 = vpack.c.b16 %v210, %v202
  %v227 = vpack.c.b16 %v211, %v203
  %v228 = vpack.c.b16 %v212, %v204
  %v229 = vpack.c.b16 %v213, %v205
  %v374 = vunpack.c.l.b16 %v31
  %v375 = vunpack.c.l.b16 %v32
  %v376 = vunpack.c.l.b16 %v33
  %v377 = vunpack.c.l.b16 %v34
  %v378 = vunpack.c.l.b16 %v35
  %v379 = vunpack.c.l.b16 %v36
  %v380 = vunpack.c.l.b16 %v37
  %v381 = vunpack.c.l.b16 %v38
  %v382 = vunpack.c.l.b16 %v39
  %v383 = vunpack.c.l.b16 %v40
  %v384 = vunpack.c.l.b16 %v41
  %v385 = vunpack.c.l.b16 %v42
  %v386 = vunpack.c.l.b16 %v43
  %v387 = vunpack.c.l.b16 %v44
  %v388 = vunpack.c.l.b16 %v45
  %v389 = vunpack.c.l.b16 %v46
  %v390 = vunpack.c.l.b16 %v47
  %v391 = vunpack.c.l.b16 %v48
  %v392 = vunpack.c.l.b16 %v49
  %v393 = vunpack.c.l.b16 %v50
  %v394 = vunpack.c.l.b16 %v51
  %v395 = vunpack.c.l.b16 %v52
  %v396 = vunpack.c.l.b16 %v53
  %v397 = vunpack.c.l.b16 %v54
  %v398 = vunpack.c.l.b16 %v55
  %v399 = vunpack.c.l.b16 %v56
  %v400 = vunpack.c.l.b16 %v57
  %v401 = vunpack.c.l.b16 %v58
  %v402 = vunpack.c.l.b16 %v59
  %v403 = vunpack.c.l.b16 %v60
  %v404 = vunpack.c.l.b16 %v61
  %v405 = vunpack.c.l.b16 %v62
  %v406 = vunpack.c.l.b16 %v63
  %v407 = vunpack.c.l.b16 %v64
  %v408 = vunpack.c.l.b16 %v65
  %v409 = vunpack.c.l.b16 %v66
  %v410 = vunpack.c.l.b16 %v67
  %v411 = vunpack.c.l.b16 %v68
  %v412 = vunpack.c.l.b16 %v69
  %v413 = vunpack.c.l.b16 %v70
  %v414 = vunpack.c.l.b16 %v71
  %v415 = vunpack.c.l.b16 %v72
  %v416 = vunpack.c.l.b16 %v73
  %v417 = vunpack.c.l.b16 %v74
  %v418 = vunpack.c.l.b16 %v75
  %v419 = vunpack.c.l.b16 %v76
  %v420 = vunpack.c.l.b16 %v77
  %v421 = vunpack.c.l.b16 %v78
  %v422 = vunpack.c.l.b16 %v79
  %v423 = vunpack.c.l.b16 %v80
  %v424 = vunpack.c.l.b16 %v81
  %v425 = vunpack.c.l.b16 %v82
  %v426 = vunpack.c.l.b16 %v83
  %v427 = vunpack.c.l.b16 %v84
  %v428 = vunpack.c.l.b16 %v85
  %v429 = vunpack.c.l.b16 %v86
  %v430 = vunpack.c.l.b16 %v87
  %v431 = vunpack.c.l.b16 %v88
  %v432 = vunpack.c.l.b16 %v89
  %v433 = vunpack.c.l.b16 %v90
  %v434 = vunpack.c.l.b16 %v91
  %v435 = vunpack.c.l.b16 %v92
  %v436 = vunpack.c.l.b16 %v93
  %v437 = vunpack.c.l.b16 %v94
  %v438 = vunpack.c.l.b16 %v95
  %v439 = vunpack.c.l.b16 %v96
  %v440 = vunpack.c.l.b16 %v97
  %v441 = vunpack.c.l.b16 %v98
  %v442 = vunpack.c.l.b16 %v99
  %v443 = vunpack.c.l.b16 %v100
  %v444 = vunpack.c.l.b16 %v101
  %v445 = vunpack.c.l.b16 %v102
  %v446 = vunpack.c.l.b16 %v103
  %v447 = vunpack.c.l.b16 %v104
  %v448 = vunpack.c.l.b16 %v105
  %v449 = vunpack.c.l.b16 %v106
  %v450 = vunpack.c.l.b16 %v107
  %v451 = vunpack.c.l.b16 %v108
  %v452 = vunpack.c.l.b16 %v109
  %v453 = vunpack.c.l.b16 %v110
  %v454 = vunpack.c.l.b16 %v111
  %v455 = vunpack.c.l.b16 %v112
  %v456 = vunpack.c.l.b16 %v113
  %v457 = vunpack.c.l.b16 %v114
  %v458 = vunpack.c.l.b16 %v115
  %v459 = vunpack.c.l.b16 %v116
  %v460 = vunpack.c.l.b16 %v117
  %v461 = vunpack.c.l.b16 %v118
  %v462 = vunpack.c.l.b16 %v119
  %v463 = vunpack.c.l.b16 %v120
  %v464 = vunpack.c.l.b16 %v121
  %v465 = vunpack.c.l.b16 %v122
  %v466 = vunpack.c.l.b16 %v123
  %v467 = vunpack.c.l.b16 %v124
  %v468 = vunpack.c.l.b16 %v125
  %v469 = vunpack.c.l.b16 %v126
  %v470 = vunpack.c.l.b16 %v127
  %v471 = vunpack.c.l.b16 %v128
  %v472 = vunpack.c.l.b16 %v129
  %v473 = vunpack.c.l.b16 %v130
  %v474 = vunpack.c.l.b16 %v131
  %v475 = vunpack.c.l.b16 %v132
  %v476 = vunpack.c.l.b16 %v133
  %v477 = vunpack.c.l.b16 %v134
  %v478 = vunpack.c.l.b16 %v135
  %v479 = vunpack.c.l.b16 %v136
  %v480 = vunpack.c.l.b16 %v137
  %v481 = vunpack.c.l.b16 %v138
  %v482 = vunpack.c.l.b16 %v139
  %v483 = vunpack.c.l.b16 %v140
  %v484 = vunpack.c.l.b16 %v141
  %v485 = vunpack.c.l.b16 %v142
  %v486 = vunpack.c.l.b16 %v143
  %v487 = vunpack.c.l.b16 %v144
  %v488 = vunpack.c.l.b16 %v145
  %v489 = vunpack.c.l.b16 %v146
  %v490 = vunpack.c.l.b16 %v147
  %v491 = vunpack.c.l.b16 %v148
  %v492 = vunpack.c.l.b16 %v149
  %v493 = vunpack.c.l.b16 %v150
  %v494 = vunpack.c.l.b16 %v151
  %v495 = vunpack.c.l.b16 %v152
  %v496 = vunpack.c.l.b16 %v153
  %v497 = vunpack.c.l.b16 %v154
  %v498 = vunpack.c.l.b16 %v155
  %v499 = vunpack.c.l.b16 %v156
  %v500 = vunpack.c.l.b16 %v157
  %v501 = vunpack.c.l.b16 %v158
  %v502 = vpack.c.b16 %v375, %v374
  %v503 = vpack.c.b16 %v377, %v376
  %v504 = vpack.c.b16 %v379, %v378
  %v505 = vpack.c.b16 %v381, %v380
  %v506 = vpack.c.b16 %v383, %v382
  %v507 = vpack.c.b16 %v385, %v384
  %v508 = vpack.c.b16 %v387, %v386
  %v509 = vpack.c.b16 %v389, %v388
  %v510 = vpack.c.b16 %v391, %v390
  %v511 = vpack.c.b16 %v393, %v392
  %v512 = vpack.c.b16 %v395, %v394
  %v513 = vpack.c.b16 %v397, %v396
  %v514 = vpack.c.b16 %v399, %v398
  %v515 = vpack.c.b16 %v401, %v400
  %v516 = vpack.c.b16 %v403, %v402
  %v517 = vpack.c.b16 %v405, %v404
  %v518 = vpack.c.b16 %v407, %v406
  %v519 = vpack.c.b16 %v409, %v408
  %v520 = vpack.c.b16 %v411, %v410
  %v521 = vpack.c.b16 %v413, %v412
  %v522 = vpack.c.b16 %v415, %v414
  %v523 = vpack.c.b16 %v417, %v416
  %v524 = vpack.c.b16 %v419, %v418
  %v525 = vpack.c.b16 %v421, %v420
  %v526 = vpack.c.b16 %v423, %v422
  %v527 = vpack.c.b16 %v425, %v424
  %v528 = vpack.c.b16 %v427, %v426
  %v529 = vpack.c.b16 %v429, %v428
  %v530 = vpack.c.b16 %v431, %v430
  %v531 = vpack.c.b16 %v433, %v432
  %v532 = vpack.c.b16 %v435, %v434
  %v533 = vpack.c.b16 %v437, %v436
  %v534 = vpack.c.b16 %v439, %v438
  %v535 = vpack.c.b16 %v441, %v440
  %v536 = vpack.c.b16 %v443, %v442
  %v537 = vpack.c.b16 %v445, %v444
  %v538 = vpack.c.b16 %v447, %v446
  %v539 = vpack.c.b16 %v449, %v448
  %v540 = vpack.c.b16 %v451, %v450
  %v541 = vpack.c.b16 %v453, %v452
  %v542 = vpack.c.b16 %v455, %v454
  %v543 = vpack.c.b16 %v457, %v456
  %v544 = vpack.c.b16 %v459, %v458
  %v545 = vpack.c.b16 %v461, %v460
  %v546 = vpack.c.b16 %v463, %v462
  %v547 = vpack.c.b16 %v465, %v464
  %v548 = vpack.c.b16 %v467, %v466
  %v549 = vpack.c.b16 %v469, %v468
  %v550 = vpack.c.b16 %v471, %v470
  %v551 = vpack.c.b16 %v473, %v472
  %v552 = vpack.c.b16 %v475, %v474
  %v553 = vpack.c.b16 %v477, %v476
  %v554 = vpack.c.b16 %v479, %v478
  %v555 = vpack.c.b16 %v481, %v480
  %v556 = vpack.c.b16 %v483, %v482
  %v557 = vpack.c.b16 %v485, %v484
  %v558 = vpack.c.b16 %v487, %v486
  %v559 = vpack.c.b16 %v489, %v488
  %v560 = vpack.c.b16 %v491, %v490
  %v561 = vpack.c.b16 %v493, %v492
  %v562 = vpack.c.b16 %v495, %v494
  %v563 = vpack.c.b16 %v497, %v496
  %v564 = vpack.c.b16 %v499, %v498
  %v565 = vpack.c.b16 %v501, %v500
  %630 = vmatprep.subr.bf16.mxu0 0
  %631 = vmatpush1.bf16.msra.mxu0 %v502
  %632 = vmatprep.subr.bf16.mxu0 0
  %633 = vmatpush1.bf16.msra.mxu0 %v503
  %634 = vmatprep.subr.bf16.mxu0 0
  %635 = vmatpush1.bf16.msra.mxu0 %v504
  %636 = vmatprep.subr.bf16.mxu0 0
  %637 = vmatpush1.bf16.msra.mxu0 %v505
  %638 = vmatprep.subr.bf16.mxu0 0
  %639 = vmatpush1.bf16.msra.mxu0 %v506
  %640 = vmatprep.subr.bf16.mxu0 0
  %641 = vmatpush1.bf16.msra.mxu0 %v507
  %642 = vmatprep.subr.bf16.mxu0 0
  %643 = vmatpush1.bf16.msra.mxu0 %v508
  %644 = vmatprep.subr.bf16.mxu0 0
  %645 = vmatpush1.bf16.msra.mxu0 %v509
  %646 = vmatprep.subr.bf16.mxu0 0
  %647 = vmatpush1.bf16.msra.mxu0 %v510
  %648 = vmatprep.subr.bf16.mxu0 0
  %649 = vmatpush1.bf16.msra.mxu0 %v511
  %650 = vmatprep.subr.bf16.mxu0 0
  %651 = vmatpush1.bf16.msra.mxu0 %v512
  %652 = vmatprep.subr.bf16.mxu0 0
  %653 = vmatpush1.bf16.msra.mxu0 %v513
  %654 = vmatprep.subr.bf16.mxu0 0
  %655 = vmatpush1.bf16.msra.mxu0 %v514
  %656 = vmatprep.subr.bf16.mxu0 0
  %657 = vmatpush1.bf16.msra.mxu0 %v515
  %658 = vmatprep.subr.bf16.mxu0 0
  %659 = vmatpush1.bf16.msra.mxu0 %v516
  %660 = vmatprep.subr.bf16.mxu0 0
  %661 = vmatpush1.bf16.msra.mxu0 %v517
  %662 = vmatprep.mubr.bf16.mxu0 %v215
  %663 = vmatmul.mubr.bf16.gmra.mrb[0].mxu0 %v214
  %v664 = vpop.f32.mrb[0].mxu0
  %v665 = vadd.f32 %v164, %v664
  %v666 = vpop.f32.mrb[0].mxu0
  %v667 = vpop.f32.mrb[0].mxu0
  %v668 = vadd.f32 %v164, %v667
  %v669 = vpop.f32.mrb[0].mxu0
  %670 = vmatprep.mubr.bf16.mxu0 %v223
  %671 = vmatmul.mubr.bf16.gmra.mrb[0].mxu0 %v222
  %v672 = vpop.f32.mrb[0].mxu0
  %v673 = vadd.f32 %v164, %v672
  %v674 = vpop.f32.mrb[0].mxu0
  %v675 = vpop.f32.mrb[0].mxu0
  %v676 = vadd.f32 %v164, %v675
  %v677 = vpop.f32.mrb[0].mxu0
  %678 = vdwg.mxu0
  %679 = vmatprep.subr.bf16.mxu0 0
  %680 = vmatpush1.bf16.msra.mxu0 %v518
  %681 = vmatprep.subr.bf16.mxu0 0
  %682 = vmatpush1.bf16.msra.mxu0 %v519
  %683 = vmatprep.subr.bf16.mxu0 0
  %684 = vmatpush1.bf16.msra.mxu0 %v520
  %685 = vmatprep.subr.bf16.mxu0 0
  %686 = vmatpush1.bf16.msra.mxu0 %v521
  %687 = vmatprep.subr.bf16.mxu0 0
  %688 = vmatpush1.bf16.msra.mxu0 %v522
  %689 = vmatprep.subr.bf16.mxu0 0
  %690 = vmatpush1.bf16.msra.mxu0 %v523
  %691 = vmatprep.subr.bf16.mxu0 0
  %692 = vmatpush1.bf16.msra.mxu0 %v524
  %693 = vmatprep.subr.bf16.mxu0 0
  %694 = vmatpush1.bf16.msra.mxu0 %v525
  %695 = vmatprep.subr.bf16.mxu0 0
  %696 = vmatpush1.bf16.msra.mxu0 %v526
  %697 = vmatprep.subr.bf16.mxu0 0
  %698 = vmatpush1.bf16.msra.mxu0 %v527
  %699 = vmatprep.subr.bf16.mxu0 0
  %700 = vmatpush1.bf16.msra.mxu0 %v528
  %701 = vmatprep.subr.bf16.mxu0 0
  %702 = vmatpush1.bf16.msra.mxu0 %v529
  %703 = vmatprep.subr.bf16.mxu0 0
  %704 = vmatpush1.bf16.msra.mxu0 %v530
  %705 = vmatprep.subr.bf16.mxu0 0
  %706 = vmatpush1.bf16.msra.mxu0 %v531
  %707 = vmatprep.subr.bf16.mxu0 0
  %708 = vmatpush1.bf16.msra.mxu0 %v532
  %709 = vmatprep.subr.bf16.mxu0 0
  %710 = vmatpush1.bf16.msra.mxu0 %v533
  %711 = vmatprep.mubr.bf16.mxu0 %v217
  %712 = vmatmul.mubr.bf16.gmra.mrb[0].mxu0 %v216
  %v713 = vpop.f32.mrb[0].mxu0
  %v714 = vadd.f32 %v665, %v713
  %v715 = vpop.f32.mrb[0].mxu0
  %v716 = vpop.f32.mrb[0].mxu0
  %v717 = vadd.f32 %v668, %v716
  %v718 = vpop.f32.mrb[0].mxu0
  %719 = vmatprep.mubr.bf16.mxu0 %v225
  %720 = vmatmul.mubr.bf16.gmra.mrb[0].mxu0 %v224
  %v721 = vpop.f32.mrb[0].mxu0
  %v722 = vadd.f32 %v673, %v721
  %v723 = vpop.f32.mrb[0].mxu0
  %v724 = vpop.f32.mrb[0].mxu0
  %v725 = vadd.f32 %v676, %v724
  %v726 = vpop.f32.mrb[0].mxu0
  %727 = vdwg.mxu0
  %728 = vmatprep.subr.bf16.mxu0 0
  %729 = vmatpush1.bf16.msra.mxu0 %v534
  %730 = vmatprep.subr.bf16.mxu0 0
  %731 = vmatpush1.bf16.msra.mxu0 %v535
  %732 = vmatprep.subr.bf16.mxu0 0
  %733 = vmatpush1.bf16.msra.mxu0 %v536
  %734 = vmatprep.subr.bf16.mxu0 0
  %735 = vmatpush1.bf16.msra.mxu0 %v537
  %736 = vmatprep.subr.bf16.mxu0 0
  %737 = vmatpush1.bf16.msra.mxu0 %v538
  %738 = vmatprep.subr.bf16.mxu0 0
  %739 = vmatpush1.bf16.msra.mxu0 %v539
  %740 = vmatprep.subr.bf16.mxu0 0
  %741 = vmatpush1.bf16.msra.mxu0 %v540
  %742 = vmatprep.subr.bf16.mxu0 0
  %743 = vmatpush1.bf16.msra.mxu0 %v541
  %744 = vmatprep.subr.bf16.mxu0 0
  %745 = vmatpush1.bf16.msra.mxu0 %v542
  %746 = vmatprep.subr.bf16.mxu0 0
  %747 = vmatpush1.bf16.msra.mxu0 %v543
  %748 = vmatprep.subr.bf16.mxu0 0
  %749 = vmatpush1.bf16.msra.mxu0 %v544
  %750 = vmatprep.subr.bf16.mxu0 0
  %751 = vmatpush1.bf16.msra.mxu0 %v545
  %752 = vmatprep.subr.bf16.mxu0 0
  %753 = vmatpush1.bf16.msra.mxu0 %v546
  %754 = vmatprep.subr.bf16.mxu0 0
  %755 = vmatpush1.bf16.msra.mxu0 %v547
  %756 = vmatprep.subr.bf16.mxu0 0
  %757 = vmatpush1.bf16.msra.mxu0 %v548
  %758 = vmatprep.subr.bf16.mxu0 0
  %759 = vmatpush1.bf16.msra.mxu0 %v549
  %760 = vmatprep.mubr.bf16.mxu0 %v219
  %761 = vmatmul.mubr.bf16.gmra.mrb[0].mxu0 %v218
  %v762 = vpop.f32.mrb[0].mxu0
  %v763 = vadd.f32 %v714, %v762
  %v764 = vpop.f32.mrb[0].mxu0
  %v765 = vpop.f32.mrb[0].mxu0
  %v766 = vadd.f32 %v717, %v765
  %v767 = vpop.f32.mrb[0].mxu0
  %768 = vmatprep.mubr.bf16.mxu0 %v227
  %769 = vmatmul.mubr.bf16.gmra.mrb[0].mxu0 %v226
  %v770 = vpop.f32.mrb[0].mxu0
  %v771 = vadd.f32 %v722, %v770
  %v772 = vpop.f32.mrb[0].mxu0
  %v773 = vpop.f32.mrb[0].mxu0
  %v774 = vadd.f32 %v725, %v773
  %v775 = vpop.f32.mrb[0].mxu0
  %776 = vdwg.mxu0
  %777 = vmatprep.subr.bf16.mxu0 0
  %778 = vmatpush1.bf16.msra.mxu0 %v550
  %779 = vmatprep.subr.bf16.mxu0 0
  %780 = vmatpush1.bf16.msra.mxu0 %v551
  %781 = vmatprep.subr.bf16.mxu0 0
  %782 = vmatpush1.bf16.msra.mxu0 %v552
  %783 = vmatprep.subr.bf16.mxu0 0
  %784 = vmatpush1.bf16.msra.mxu0 %v553
  %785 = vmatprep.subr.bf16.mxu0 0
  %786 = vmatpush1.bf16.msra.mxu0 %v554
  %787 = vmatprep.subr.bf16.mxu0 0
  %788 = vmatpush1.bf16.msra.mxu0 %v555
  %789 = vmatprep.subr.bf16.mxu0 0
  %790 = vmatpush1.bf16.msra.mxu0 %v556
  %791 = vmatprep.subr.bf16.mxu0 0
  %792 = vmatpush1.bf16.msra.mxu0 %v557
  %793 = vmatprep.subr.bf16.mxu0 0
  %794 = vmatpush1.bf16.msra.mxu0 %v558
  %795 = vmatprep.subr.bf16.mxu0 0
  %796 = vmatpush1.bf16.msra.mxu0 %v559
  %797 = vmatprep.subr.bf16.mxu0 0
  %798 = vmatpush1.bf16.msra.mxu0 %v560
  %799 = vmatprep.subr.bf16.mxu0 0
  %800 = vmatpush1.bf16.msra.mxu0 %v561
  %801 = vmatprep.subr.bf16.mxu0 0
  %802 = vmatpush1.bf16.msra.mxu0 %v562
  %803 = vmatprep.subr.bf16.mxu0 0
  %804 = vmatpush1.bf16.msra.mxu0 %v563
  %805 = vmatprep.subr.bf16.mxu0 0
  %806 = vmatpush1.bf16.msra.mxu0 %v564
  %807 = vmatprep.subr.bf16.mxu0 0
  %808 = vmatpush1.bf16.msra.mxu0 %v565
  %809 = vmatprep.mubr.bf16.mxu0 %v221
  %810 = vmatmul.mubr.bf16.gmra.mrb[0].mxu0 %v220
  %v811 = vpop.f32.mrb[0].mxu0
  %v812 = vadd.f32 %v763, %v811
  %v813 = vpop.f32.mrb[0].mxu0
  %v814 = vpop.f32.mrb[0].mxu0
  %v815 = vadd.f32 %v766, %v814
  %v816 = vpop.f32.mrb[0].mxu0
  %817 = vmatprep.mubr.bf16.mxu0 %v229
  %818 = vmatmul.mubr.bf16.gmra.mrb[0].mxu0 %v228
  %v819 = vpop.f32.mrb[0].mxu0
  %v820 = vadd.f32 %v771, %v819
  %v821 = vpop.f32.mrb[0].mxu0
  %v822 = vpop.f32.mrb[0].mxu0
  %v823 = vadd.f32 %v774, %v822
  %v824 = vpop.f32.mrb[0].mxu0
  %825 = vdwg.mxu0
  %v826 = vmax.f32 %v812, 0.0
  %v827 = vmax.f32 %v815, 0.0
  %v828 = vmax.f32 %v820, 0.0
  %v829 = vmax.f32 %v823, 0.0
  %v830 = vpack.c.bf16 %v827, %v826
  %v831 = vpack.c.bf16 %v829, %v828
  %v834 = vunpack.c.l.b16 %v830
  %v835 = vunpack.c.h.b16 %v830
  %v836 = vunpack.c.l.b16 %v831
  %v837 = vunpack.c.h.b16 %v831
  %v838 = vpack.c.b16 %v834, %v834
  %v839 = vpack.c.b16 %v835, %v835
  %v840 = vpack.c.b16 %v836, %v836
  %v841 = vpack.c.b16 %v837, %v837
  %vm846 = vcmask 519168
  %847 = vst.msk [vmem:[%s3] sm:$0xf] %vm846, %v838
  %848 = vst.msk [vmem:[%s3 + $0x4] sm:$0xf] %vm846, %v839
  %849 = vst.msk [vmem:[%s3 + $0x8] sm:$0xf] %vm846, %v840
  %850 = vst.msk [vmem:[%s3 + $0xc] sm:$0xf] %vm846, %v841
  // Predicated region
  $region14: #{vae_forward.9} parent=0 // pred_check
    _
  $region15: #{vae_forward.9} parent=0 // pred_check_branch
    %852 = sbr.rel (0) target = $region17
  $region16: #{vae_forward.9} parent=0 // pred_region
    _
  $region17: #{vae_forward.9} parent=0 // pred_fallthru
    _
  // Predicated region
  $region18: #{vae_forward.9} parent=0 // pred_check
    _
  $region19: #{vae_forward.9} parent=0 // pred_check_branch
    %854 = sbr.rel (0) target = $region21
  $region20: #{vae_forward.9} parent=0 // pred_region
    _
  $region21: #{vae_forward.9} parent=0 // pred_fallthru
    _

// kernel: vae_forward.10
$region0: #{vae_forward.10}
  #allocation0 [shape = 'u32[]', space=smem, size = 0x4, offset = 0x4, fixed_abs, tag = 'smem constant byte address 0x4 - core index']
  #allocation1 [shape = 'u32[144,128]{1,0:T(1,128)}', space=vmem, size = 0x12000, scoped, tag = 'internal scratch']
  %s0 = inlined_call_operand.vmem [shape: bf16[2,1024], index: 0, kind: input, shape index: {}]
  %s1 = inlined_call_operand.vmem [shape: f32[2,10], index: 1, kind: input, shape index: {}]
  %s2 = inlined_call_operand.vmem [shape: bf16[1024,256], index: 2, kind: input, shape index: {}]
  %s3 = inlined_call_operand.vmem [shape: f32[1,256], index: 3, kind: input, shape index: {}]
  %s4 = inlined_call_operand.vmem [shape: bf16[256,10], index: 4, kind: input, shape index: {}]
  %s5 = inlined_call_operand.vmem [shape: f32[1,10], index: 5, kind: input, shape index: {}]
  %s6 = inlined_call_operand.vmem [shape: bf16[256,10], index: 6, kind: input, shape index: {}]
  %s7 = inlined_call_operand.vmem [shape: f32[1,10], index: 7, kind: input, shape index: {}]
  %s8 = inlined_call_operand.vmem [shape: bf16[10,256], index: 8, kind: input, shape index: {}]
  %s9 = inlined_call_operand.vmem [shape: f32[1,256], index: 9, kind: input, shape index: {}]
  %s10 = inlined_call_operand.vmem [shape: bf16[256,1024], index: 10, kind: input, shape index: {}]
  %s11 = inlined_call_operand.vmem [shape: f32[1,1024], index: 11, kind: input, shape index: {}]
  %s12 = inlined_call_operand.hbm [shape: f32[2,10], index: 12, kind: output, shape index: {0}]
  %s13 = inlined_call_operand.hbm [shape: f32[2,10], index: 13, kind: output, shape index: {1}]
  %s14 = inlined_call_operand.vmem [shape: bf16[2,1024], index: 14, kind: output, shape index: {2}]
  %15 = xla_tuple %s12, %s13, %s14
  %s16 = sld [smem:[#allocation0]]
  $region74: #{vae_forward.10} parent=0
    _
  %s18 = ssub.s32 1, %s16
  %s19 = scalar_select 0, %s18, %s16
  $region1: #{vae_forward.10} parent=0
    #allocation2 [shape = 'u8[1024]{0}', space=vmem, size = 0x400, scoped, tag = 'output window, operand 0, single buffered']
    #allocation3 [shape = 's32[1]{0}', space=sflag, size = 0x4, scoped, tag = 'scoped memory for vae_forward.10']
    #allocation4 [shape = 'u8[1024]{0}', space=vmem, size = 0x400, scoped, tag = 'output window, operand 1, single buffered']
    #allocation5 [shape = 's32[1]{0}', space=sflag, size = 0x4, scoped, tag = 'scoped memory for vae_forward.10']
    %20 = vsyncpa [#allocation3], 0
    %21 = vsyncpa [#allocation5], 0
    // Predicated region
    $region2: #{vae_forward.10} parent=1 // pred_check
      _
    $region3: #{vae_forward.10} parent=1 // pred_check_branch
      %23 = sbr.rel (0) target = $region5
    $region4: #{vae_forward.10} parent=1 // pred_region
      _
    $region5: #{vae_forward.10} parent=1 // pred_fallthru
      _
    // Predicated region
    $region6: #{vae_forward.10} parent=1 // pred_check
      _
    $region7: #{vae_forward.10} parent=1 // pred_check_branch
      %25 = sbr.rel (0) target = $region9
    $region8: #{vae_forward.10} parent=1 // pred_region
      _
    $region9: #{vae_forward.10} parent=1 // pred_fallthru
      _
    // Predicated region
    $region10: #{vae_forward.10} parent=1 // pred_check
      _
    $region11: #{vae_forward.10} parent=1 // pred_check_branch
      %27 = sbr.rel (0) target = $region13
    $region12: #{vae_forward.10} parent=1 // pred_region
      _
    $region13: #{vae_forward.10} parent=1 // pred_fallthru
      _
    // Predicated region
    $region14: #{vae_forward.10} parent=1 // pred_check
      _
    $region15: #{vae_forward.10} parent=1 // pred_check_branch
      %29 = sbr.rel (0) target = $region17
    $region16: #{vae_forward.10} parent=1 // pred_region
      _
    $region17: #{vae_forward.10} parent=1 // pred_fallthru
      _
    // Predicated region
    $region18: #{vae_forward.10} parent=1 // pred_check
      _
    $region19: #{vae_forward.10} parent=1 // pred_check_branch
      %31 = sbr.rel (0) target = $region21
    $region20: #{vae_forward.10} parent=1 // pred_region
      _
    $region21: #{vae_forward.10} parent=1 // pred_fallthru
      _
    // Predicated region
    $region22: #{vae_forward.10} parent=1 // pred_check
      _
    $region23: #{vae_forward.10} parent=1 // pred_check_branch
      %33 = sbr.rel (0) target = $region25
    $region24: #{vae_forward.10} parent=1 // pred_region
      _
    $region25: #{vae_forward.10} parent=1 // pred_fallthru
      _
    // Predicated region
    $region26: #{vae_forward.10} parent=1 // pred_check
      _
    $region27: #{vae_forward.10} parent=1 // pred_check_branch
      %35 = sbr.rel (0) target = $region29
    $region28: #{vae_forward.10} parent=1 // pred_region
      _
    $region29: #{vae_forward.10} parent=1 // pred_fallthru
      _
    // Predicated region
    $region30: #{vae_forward.10} parent=1 // pred_check
      _
    $region31: #{vae_forward.10} parent=1 // pred_check_branch
      %37 = sbr.rel (0) target = $region33
    $region32: #{vae_forward.10} parent=1 // pred_region
      _
    $region33: #{vae_forward.10} parent=1 // pred_fallthru
      _
    // Predicated region
    $region34: #{vae_forward.10} parent=1 // pred_check
      _
    $region35: #{vae_forward.10} parent=1 // pred_check_branch
      %39 = sbr.rel (0) target = $region37
    $region36: #{vae_forward.10} parent=1 // pred_region
      _
    $region37: #{vae_forward.10} parent=1 // pred_fallthru
      _
    // Predicated region
    $region38: #{vae_forward.10} parent=1 // pred_check
      _
    $region39: #{vae_forward.10} parent=1 // pred_check_branch
      %41 = sbr.rel (0) target = $region41
    $region40: #{vae_forward.10} parent=1 // pred_region
      _
    $region41: #{vae_forward.10} parent=1 // pred_fallthru
      _
    // Predicated region
    $region42: #{vae_forward.10} parent=1 // pred_check
      _
    $region43: #{vae_forward.10} parent=1 // pred_check_branch
      %43 = sbr.rel (0) target = $region45
    $region44: #{vae_forward.10} parent=1 // pred_region
      _
    $region45: #{vae_forward.10} parent=1 // pred_fallthru
      _
    // Predicated region
    $region46: #{vae_forward.10} parent=1 // pred_check
      _
    $region47: #{vae_forward.10} parent=1 // pred_check_branch
      %45 = sbr.rel (0) target = $region49
    $region48: #{vae_forward.10} parent=1 // pred_region
      _
    $region49: #{vae_forward.10} parent=1 // pred_fallthru
      _
    %v47 = vld [vmem:[%s0] sm:$0xff]
    %v48 = vld [vmem:[%s2] sm:$0xff]
    %v49 = vld [vmem:[%s2 + $0x8] sm:$0xff]
    %v50 = vld [vmem:[%s2 + $0x10] sm:$0xff]
    %v51 = vld [vmem:[%s2 + $0x18] sm:$0xff]
    %v52 = vld [vmem:[%s2 + $0x20] sm:$0xff]
    %v53 = vld [vmem:[%s2 + $0x28] sm:$0xff]
    %v54 = vld [vmem:[%s2 + $0x30] sm:$0xff]
    %v55 = vld [vmem:[%s2 + $0x38] sm:$0xff]
    %v56 = vld [vmem:[%s2 + $0x40] sm:$0xff]
    %v57 = vld [vmem:[%s2 + $0x48] sm:$0xff]
    %v58 = vld [vmem:[%s2 + $0x50] sm:$0xff]
    %v59 = vld [vmem:[%s2 + $0x58] sm:$0xff]
    %v60 = vld [vmem:[%s2 + $0x60] sm:$0xff]
    %v61 = vld [vmem:[%s2 + $0x68] sm:$0xff]
    %v62 = vld [vmem:[%s2 + $0x70] sm:$0xff]
    %v63 = vld [vmem:[%s2 + $0x78] sm:$0xff]
    %v64 = vld [vmem:[%s2 + $0x80] sm:$0xff]
    %v65 = vld [vmem:[%s2 + $0x88] sm:$0xff]
    %v66 = vld [vmem:[%s2 + $0x90] sm:$0xff]
    %v67 = vld [vmem:[%s2 + $0x98] sm:$0xff]
    %v68 = vld [vmem:[%s2 + $0xa0] sm:$0xff]
    %v69 = vld [vmem:[%s2 + $0xa8] sm:$0xff]
    %v70 = vld [vmem:[%s2 + $0xb0] sm:$0xff]
    %v71 = vld [vmem:[%s2 + $0xb8] sm:$0xff]
    %v72 = vld [vmem:[%s2 + $0xc0] sm:$0xff]
    %v73 = vld [vmem:[%s2 + $0xc8] sm:$0xff]
    %v74 = vld [vmem:[%s2 + $0xd0] sm:$0xff]
    %v75 = vld [vmem:[%s2 + $0xd8] sm:$0xff]
    %v76 = vld [vmem:[%s2 + $0xe0] sm:$0xff]
    %v77 = vld [vmem:[%s2 + $0xe8] sm:$0xff]
    %v78 = vld [vmem:[%s2 + $0xf0] sm:$0xff]
    %v79 = vld [vmem:[%s2 + $0xf8] sm:$0xff]
    %v80 = vld [vmem:[%s2 + $0x100] sm:$0xff]
    %v81 = vld [vmem:[%s2 + $0x108] sm:$0xff]
    %v82 = vld [vmem:[%s2 + $0x110] sm:$0xff]
    %v83 = vld [vmem:[%s2 + $0x118] sm:$0xff]
    %v84 = vld [vmem:[%s2 + $0x120] sm:$0xff]
    %v85 = vld [vmem:[%s2 + $0x128] sm:$0xff]
    %v86 = vld [vmem:[%s2 + $0x130] sm:$0xff]
    %v87 = vld [vmem:[%s2 + $0x138] sm:$0xff]
    %v88 = vld [vmem:[%s2 + $0x140] sm:$0xff]
    %v89 = vld [vmem:[%s2 + $0x148] sm:$0xff]
    %v90 = vld [vmem:[%s2 + $0x150] sm:$0xff]
    %v91 = vld [vmem:[%s2 + $0x158] sm:$0xff]
    %v92 = vld [vmem:[%s2 + $0x160] sm:$0xff]
    %v93 = vld [vmem:[%s2 + $0x168] sm:$0xff]
    %v94 = vld [vmem:[%s2 + $0x170] sm:$0xff]
    %v95 = vld [vmem:[%s2 + $0x178] sm:$0xff]
    %v96 = vld [vmem:[%s2 + $0x180] sm:$0xff]
    %v97 = vld [vmem:[%s2 + $0x188] sm:$0xff]
    %v98 = vld [vmem:[%s2 + $0x190] sm:$0xff]
    %v99 = vld [vmem:[%s2 + $0x198] sm:$0xff]
    %v100 = vld [vmem:[%s2 + $0x1a0] sm:$0xff]
    %v101 = vld [vmem:[%s2 + $0x1a8] sm:$0xff]
    %v102 = vld [vmem:[%s2 + $0x1b0] sm:$0xff]
    %v103 = vld [vmem:[%s2 + $0x1b8] sm:$0xff]
    %v104 = vld [vmem:[%s2 + $0x1c0] sm:$0xff]
    %v105 = vld [vmem:[%s2 + $0x1c8] sm:$0xff]
    %v106 = vld [vmem:[%s2 + $0x1d0] sm:$0xff]
    %v107 = vld [vmem:[%s2 + $0x1d8] sm:$0xff]
    %v108 = vld [vmem:[%s2 + $0x1e0] sm:$0xff]
    %v109 = vld [vmem:[%s2 + $0x1e8] sm:$0xff]
    %v110 = vld [vmem:[%s2 + $0x1f0] sm:$0xff]
    %v111 = vld [vmem:[%s2 + $0x1f8] sm:$0xff]
    %v112 = vld [vmem:[%s2 + $0x200] sm:$0xff]
    %v113 = vld [vmem:[%s2 + $0x208] sm:$0xff]
    %v114 = vld [vmem:[%s2 + $0x210] sm:$0xff]
    %v115 = vld [vmem:[%s2 + $0x218] sm:$0xff]
    %v116 = vld [vmem:[%s2 + $0x220] sm:$0xff]
    %v117 = vld [vmem:[%s2 + $0x228] sm:$0xff]
    %v118 = vld [vmem:[%s2 + $0x230] sm:$0xff]
    %v119 = vld [vmem:[%s2 + $0x238] sm:$0xff]
    %v120 = vld [vmem:[%s2 + $0x240] sm:$0xff]
    %v121 = vld [vmem:[%s2 + $0x248] sm:$0xff]
    %v122 = vld [vmem:[%s2 + $0x250] sm:$0xff]
    %v123 = vld [vmem:[%s2 + $0x258] sm:$0xff]
    %v124 = vld [vmem:[%s2 + $0x260] sm:$0xff]
    %v125 = vld [vmem:[%s2 + $0x268] sm:$0xff]
    %v126 = vld [vmem:[%s2 + $0x270] sm:$0xff]
    %v127 = vld [vmem:[%s2 + $0x278] sm:$0xff]
    %v128 = vld [vmem:[%s2 + $0x280] sm:$0xff]
    %v129 = vld [vmem:[%s2 + $0x288] sm:$0xff]
    %v130 = vld [vmem:[%s2 + $0x290] sm:$0xff]
    %v131 = vld [vmem:[%s2 + $0x298] sm:$0xff]
    %v132 = vld [vmem:[%s2 + $0x2a0] sm:$0xff]
    %v133 = vld [vmem:[%s2 + $0x2a8] sm:$0xff]
    %v134 = vld [vmem:[%s2 + $0x2b0] sm:$0xff]
    %v135 = vld [vmem:[%s2 + $0x2b8] sm:$0xff]
    %v136 = vld [vmem:[%s2 + $0x2c0] sm:$0xff]
    %v137 = vld [vmem:[%s2 + $0x2c8] sm:$0xff]
    %v138 = vld [vmem:[%s2 + $0x2d0] sm:$0xff]
    %v139 = vld [vmem:[%s2 + $0x2d8] sm:$0xff]
    %v140 = vld [vmem:[%s2 + $0x2e0] sm:$0xff]
    %v141 = vld [vmem:[%s2 + $0x2e8] sm:$0xff]
    %v142 = vld [vmem:[%s2 + $0x2f0] sm:$0xff]
    %v143 = vld [vmem:[%s2 + $0x2f8] sm:$0xff]
    %v144 = vld [vmem:[%s2 + $0x300] sm:$0xff]
    %v145 = vld [vmem:[%s2 + $0x308] sm:$0xff]
    %v146 = vld [vmem:[%s2 + $0x310] sm:$0xff]
    %v147 = vld [vmem:[%s2 + $0x318] sm:$0xff]
    %v148 = vld [vmem:[%s2 + $0x320] sm:$0xff]
    %v149 = vld [vmem:[%s2 + $0x328] sm:$0xff]
    %v150 = vld [vmem:[%s2 + $0x330] sm:$0xff]
    %v151 = vld [vmem:[%s2 + $0x338] sm:$0xff]
    %v152 = vld [vmem:[%s2 + $0x340] sm:$0xff]
    %v153 = vld [vmem:[%s2 + $0x348] sm:$0xff]
    %v154 = vld [vmem:[%s2 + $0x350] sm:$0xff]
    %v155 = vld [vmem:[%s2 + $0x358] sm:$0xff]
    %v156 = vld [vmem:[%s2 + $0x360] sm:$0xff]
    %v157 = vld [vmem:[%s2 + $0x368] sm:$0xff]
    %v158 = vld [vmem:[%s2 + $0x370] sm:$0xff]
    %v159 = vld [vmem:[%s2 + $0x378] sm:$0xff]
    %v160 = vld [vmem:[%s2 + $0x380] sm:$0xff]
    %v161 = vld [vmem:[%s2 + $0x388] sm:$0xff]
    %v162 = vld [vmem:[%s2 + $0x390] sm:$0xff]
    %v163 = vld [vmem:[%s2 + $0x398] sm:$0xff]
    %v164 = vld [vmem:[%s2 + $0x3a0] sm:$0xff]
    %v165 = vld [vmem:[%s2 + $0x3a8] sm:$0xff]
    %v166 = vld [vmem:[%s2 + $0x3b0] sm:$0xff]
    %v167 = vld [vmem:[%s2 + $0x3b8] sm:$0xff]
    %v168 = vld [vmem:[%s2 + $0x3c0] sm:$0xff]
    %v169 = vld [vmem:[%s2 + $0x3c8] sm:$0xff]
    %v170 = vld [vmem:[%s2 + $0x3d0] sm:$0xff]
    %v171 = vld [vmem:[%s2 + $0x3d8] sm:$0xff]
    %v172 = vld [vmem:[%s2 + $0x3e0] sm:$0xff]
    %v173 = vld [vmem:[%s2 + $0x3e8] sm:$0xff]
    %v174 = vld [vmem:[%s2 + $0x3f0] sm:$0xff]
    %v175 = vld [vmem:[%s2 + $0x3f8] sm:$0xff]
    %v176 = vld [vmem:[%s3] sm:$0x3]
    %v178 = vlaneseq
    %v179 = vshrl.u32 %v178, 7
    %v180 = vsub.s32 0, %v179
    %v181 = vrot.slane %v176, %v180
    %v182 = vlaneseq
    %v183 = vshrl.u32 %v182, 7
    %v184 = vsub.s32 1, %v183
    %v185 = vrot.slane %v176, %v184
    %v189 = vcombine.high %v47, %v47
    %v191 = vunpack.c.l.s4 1966171168
    %v192 = vunpack.c.0.s8 %v191
    %v193 = vlaneseq
    %v194 = vshrl.u32 %v193, 7
    %v195 = vsub.s32 %v192, %v194
    %v196 = vrot.slane %v47, %v195
    %v198 = vunpack.c.l.s4 1966171168
    %v199 = vunpack.c.0.s8 %v198
    %v200 = vlaneseq
    %v201 = vshrl.u32 %v200, 7
    %v202 = vsub.s32 %v199, %v201
    %v203 = vrot.slane %v189, %v202
    %v204 = vcombine.high %v196, %v196
    %v205 = vcombine.high %v203, %v203
    %v207 = vunpack.c.l.s4 1966171168
    %v208 = vunpack.c.0.s8 %v207
    %v209 = vlaneseq
    %v210 = vshrl.u32 %v209, 7
    %v211 = vsub.s32 %v208, %v210
    %v212 = vrot.slane %v196, %v211
    %v214 = vunpack.c.l.s4 1966171168
    %v215 = vunpack.c.0.s8 %v214
    %v216 = vlaneseq
    %v217 = vshrl.u32 %v216, 7
    %v218 = vsub.s32 %v215, %v217
    %v219 = vrot.slane %v203, %v218
    %v221 = vunpack.c.l.s4 1966171168
    %v222 = vunpack.c.0.s8 %v221
    %v223 = vlaneseq
    %v224 = vshrl.u32 %v223, 7
    %v225 = vsub.s32 %v222, %v224
    %v226 = vrot.slane %v204, %v225
    %v228 = vunpack.c.l.s4 1966171168
    %v229 = vunpack.c.0.s8 %v228
    %v230 = vlaneseq
    %v231 = vshrl.u32 %v230, 7
    %v232 = vsub.s32 %v229, %v231
    %v233 = vrot.slane %v205, %v232
    %v234 = vcombine.high %v212, %v212
    %v235 = vcombine.high %v219, %v219
    %v236 = vcombine.high %v226, %v226
    %v237 = vcombine.high %v233, %v233
    %v374 = vunpack.c.l.b16 %v48
    %v375 = vunpack.c.h.b16 %v48
    %v376 = vunpack.c.l.b16 %v49
    %v377 = vunpack.c.h.b16 %v49
    %v378 = vunpack.c.l.b16 %v50
    %v379 = vunpack.c.h.b16 %v50
    %v380 = vunpack.c.l.b16 %v51
    %v381 = vunpack.c.h.b16 %v51
    %v382 = vunpack.c.l.b16 %v52
    %v383 = vunpack.c.h.b16 %v52
    %v384 = vunpack.c.l.b16 %v53
    %v385 = vunpack.c.h.b16 %v53
    %v386 = vunpack.c.l.b16 %v54
    %v387 = vunpack.c.h.b16 %v54
    %v388 = vunpack.c.l.b16 %v55
    %v389 = vunpack.c.h.b16 %v55
    %v390 = vunpack.c.l.b16 %v56
    %v391 = vunpack.c.h.b16 %v56
    %v392 = vunpack.c.l.b16 %v57
    %v393 = vunpack.c.h.b16 %v57
    %v394 = vunpack.c.l.b16 %v58
    %v395 = vunpack.c.h.b16 %v58
    %v396 = vunpack.c.l.b16 %v59
    %v397 = vunpack.c.h.b16 %v59
    %v398 = vunpack.c.l.b16 %v60
    %v399 = vunpack.c.h.b16 %v60
    %v400 = vunpack.c.l.b16 %v61
    %v401 = vunpack.c.h.b16 %v61
    %v402 = vunpack.c.l.b16 %v62
    %v403 = vunpack.c.h.b16 %v62
    %v404 = vunpack.c.l.b16 %v63
    %v405 = vunpack.c.h.b16 %v63
    %v406 = vunpack.c.l.b16 %v64
    %v407 = vunpack.c.h.b16 %v64
    %v408 = vunpack.c.l.b16 %v65
    %v409 = vunpack.c.h.b16 %v65
    %v410 = vunpack.c.l.b16 %v66
    %v411 = vunpack.c.h.b16 %v66
    %v412 = vunpack.c.l.b16 %v67
    %v413 = vunpack.c.h.b16 %v67
    %v414 = vunpack.c.l.b16 %v68
    %v415 = vunpack.c.h.b16 %v68
    %v416 = vunpack.c.l.b16 %v69
    %v417 = vunpack.c.h.b16 %v69
    %v418 = vunpack.c.l.b16 %v70
    %v419 = vunpack.c.h.b16 %v70
    %v420 = vunpack.c.l.b16 %v71
    %v421 = vunpack.c.h.b16 %v71
    %v422 = vunpack.c.l.b16 %v72
    %v423 = vunpack.c.h.b16 %v72
    %v424 = vunpack.c.l.b16 %v73
    %v425 = vunpack.c.h.b16 %v73
    %v426 = vunpack.c.l.b16 %v74
    %v427 = vunpack.c.h.b16 %v74
    %v428 = vunpack.c.l.b16 %v75
    %v429 = vunpack.c.h.b16 %v75
    %v430 = vunpack.c.l.b16 %v76
    %v431 = vunpack.c.h.b16 %v76
    %v432 = vunpack.c.l.b16 %v77
    %v433 = vunpack.c.h.b16 %v77
    %v434 = vunpack.c.l.b16 %v78
    %v435 = vunpack.c.h.b16 %v78
    %v436 = vunpack.c.l.b16 %v79
    %v437 = vunpack.c.h.b16 %v79
    %v438 = vunpack.c.l.b16 %v80
    %v439 = vunpack.c.h.b16 %v80
    %v440 = vunpack.c.l.b16 %v81
    %v441 = vunpack.c.h.b16 %v81
    %v442 = vunpack.c.l.b16 %v82
    %v443 = vunpack.c.h.b16 %v82
    %v444 = vunpack.c.l.b16 %v83
    %v445 = vunpack.c.h.b16 %v83
    %v446 = vunpack.c.l.b16 %v84
    %v447 = vunpack.c.h.b16 %v84
    %v448 = vunpack.c.l.b16 %v85
    %v449 = vunpack.c.h.b16 %v85
    %v450 = vunpack.c.l.b16 %v86
    %v451 = vunpack.c.h.b16 %v86
    %v452 = vunpack.c.l.b16 %v87
    %v453 = vunpack.c.h.b16 %v87
    %v454 = vunpack.c.l.b16 %v88
    %v455 = vunpack.c.h.b16 %v88
    %v456 = vunpack.c.l.b16 %v89
    %v457 = vunpack.c.h.b16 %v89
    %v458 = vunpack.c.l.b16 %v90
    %v459 = vunpack.c.h.b16 %v90
    %v460 = vunpack.c.l.b16 %v91
    %v461 = vunpack.c.h.b16 %v91
    %v462 = vunpack.c.l.b16 %v92
    %v463 = vunpack.c.h.b16 %v92
    %v464 = vunpack.c.l.b16 %v93
    %v465 = vunpack.c.h.b16 %v93
    %v466 = vunpack.c.l.b16 %v94
    %v467 = vunpack.c.h.b16 %v94
    %v468 = vunpack.c.l.b16 %v95
    %v469 = vunpack.c.h.b16 %v95
    %v470 = vunpack.c.l.b16 %v96
    %v471 = vunpack.c.h.b16 %v96
    %v472 = vunpack.c.l.b16 %v97
    %v473 = vunpack.c.h.b16 %v97
    %v474 = vunpack.c.l.b16 %v98
    %v475 = vunpack.c.h.b16 %v98
    %v476 = vunpack.c.l.b16 %v99
    %v477 = vunpack.c.h.b16 %v99
    %v478 = vunpack.c.l.b16 %v100
    %v479 = vunpack.c.h.b16 %v100
    %v480 = vunpack.c.l.b16 %v101
    %v481 = vunpack.c.h.b16 %v101
    %v482 = vunpack.c.l.b16 %v102
    %v483 = vunpack.c.h.b16 %v102
    %v484 = vunpack.c.l.b16 %v103
    %v485 = vunpack.c.h.b16 %v103
    %v486 = vunpack.c.l.b16 %v104
    %v487 = vunpack.c.h.b16 %v104
    %v488 = vunpack.c.l.b16 %v105
    %v489 = vunpack.c.h.b16 %v105
    %v490 = vunpack.c.l.b16 %v106
    %v491 = vunpack.c.h.b16 %v106
    %v492 = vunpack.c.l.b16 %v107
    %v493 = vunpack.c.h.b16 %v107
    %v494 = vunpack.c.l.b16 %v108
    %v495 = vunpack.c.h.b16 %v108
    %v496 = vunpack.c.l.b16 %v109
    %v497 = vunpack.c.h.b16 %v109
    %v498 = vunpack.c.l.b16 %v110
    %v499 = vunpack.c.h.b16 %v110
    %v500 = vunpack.c.l.b16 %v111
    %v501 = vunpack.c.h.b16 %v111
    %v502 = vunpack.c.l.b16 %v112
    %v503 = vunpack.c.h.b16 %v112
    %v504 = vunpack.c.l.b16 %v113
    %v505 = vunpack.c.h.b16 %v113
    %v506 = vunpack.c.l.b16 %v114
    %v507 = vunpack.c.h.b16 %v114
    %v508 = vunpack.c.l.b16 %v115
    %v509 = vunpack.c.h.b16 %v115
    %v510 = vunpack.c.l.b16 %v116
    %v511 = vunpack.c.h.b16 %v116
    %v512 = vunpack.c.l.b16 %v117
    %v513 = vunpack.c.h.b16 %v117
    %v514 = vunpack.c.l.b16 %v118
    %v515 = vunpack.c.h.b16 %v118
    %v516 = vunpack.c.l.b16 %v119
    %v517 = vunpack.c.h.b16 %v119
    %v518 = vunpack.c.l.b16 %v120
    %v519 = vunpack.c.h.b16 %v120
    %v520 = vunpack.c.l.b16 %v121
    %v521 = vunpack.c.h.b16 %v121
    %v522 = vunpack.c.l.b16 %v122
    %v523 = vunpack.c.h.b16 %v122
    %v524 = vunpack.c.l.b16 %v123
    %v525 = vunpack.c.h.b16 %v123
    %v526 = vunpack.c.l.b16 %v124
    %v527 = vunpack.c.h.b16 %v124
    %v528 = vunpack.c.l.b16 %v125
    %v529 = vunpack.c.h.b16 %v125
    %v530 = vunpack.c.l.b16 %v126
    %v531 = vunpack.c.h.b16 %v126
    %v532 = vunpack.c.l.b16 %v127
    %v533 = vunpack.c.h.b16 %v127
    %v534 = vunpack.c.l.b16 %v128
    %v535 = vunpack.c.h.b16 %v128
    %v536 = vunpack.c.l.b16 %v129
    %v537 = vunpack.c.h.b16 %v129
    %v538 = vunpack.c.l.b16 %v130
    %v539 = vunpack.c.h.b16 %v130
    %v540 = vunpack.c.l.b16 %v131
    %v541 = vunpack.c.h.b16 %v131
    %v542 = vunpack.c.l.b16 %v132
    %v543 = vunpack.c.h.b16 %v132
    %v544 = vunpack.c.l.b16 %v133
    %v545 = vunpack.c.h.b16 %v133
    %v546 = vunpack.c.l.b16 %v134
    %v547 = vunpack.c.h.b16 %v134
    %v548 = vunpack.c.l.b16 %v135
    %v549 = vunpack.c.h.b16 %v135
    %v550 = vunpack.c.l.b16 %v136
    %v551 = vunpack.c.h.b16 %v136
    %v552 = vunpack.c.l.b16 %v137
    %v553 = vunpack.c.h.b16 %v137
    %v554 = vunpack.c.l.b16 %v138
    %v555 = vunpack.c.h.b16 %v138
    %v556 = vunpack.c.l.b16 %v139
    %v557 = vunpack.c.h.b16 %v139
    %v558 = vunpack.c.l.b16 %v140
    %v559 = vunpack.c.h.b16 %v140
    %v560 = vunpack.c.l.b16 %v141
    %v561 = vunpack.c.h.b16 %v141
    %v562 = vunpack.c.l.b16 %v142
    %v563 = vunpack.c.h.b16 %v142
    %v564 = vunpack.c.l.b16 %v143
    %v565 = vunpack.c.h.b16 %v143
    %v566 = vunpack.c.l.b16 %v144
    %v567 = vunpack.c.h.b16 %v144
    %v568 = vunpack.c.l.b16 %v145
    %v569 = vunpack.c.h.b16 %v145
    %v570 = vunpack.c.l.b16 %v146
    %v571 = vunpack.c.h.b16 %v146
    %v572 = vunpack.c.l.b16 %v147
    %v573 = vunpack.c.h.b16 %v147
    %v574 = vunpack.c.l.b16 %v148
    %v575 = vunpack.c.h.b16 %v148
    %v576 = vunpack.c.l.b16 %v149
    %v577 = vunpack.c.h.b16 %v149
    %v578 = vunpack.c.l.b16 %v150
    %v579 = vunpack.c.h.b16 %v150
    %v580 = vunpack.c.l.b16 %v151
    %v581 = vunpack.c.h.b16 %v151
    %v582 = vunpack.c.l.b16 %v152
    %v583 = vunpack.c.h.b16 %v152
    %v584 = vunpack.c.l.b16 %v153
    %v585 = vunpack.c.h.b16 %v153
    %v586 = vunpack.c.l.b16 %v154
    %v587 = vunpack.c.h.b16 %v154
    %v588 = vunpack.c.l.b16 %v155
    %v589 = vunpack.c.h.b16 %v155
    %v590 = vunpack.c.l.b16 %v156
    %v591 = vunpack.c.h.b16 %v156
    %v592 = vunpack.c.l.b16 %v157
    %v593 = vunpack.c.h.b16 %v157
    %v594 = vunpack.c.l.b16 %v158
    %v595 = vunpack.c.h.b16 %v158
    %v596 = vunpack.c.l.b16 %v159
    %v597 = vunpack.c.h.b16 %v159
    %v598 = vunpack.c.l.b16 %v160
    %v599 = vunpack.c.h.b16 %v160
    %v600 = vunpack.c.l.b16 %v161
    %v601 = vunpack.c.h.b16 %v161
    %v602 = vunpack.c.l.b16 %v162
    %v603 = vunpack.c.h.b16 %v162
    %v604 = vunpack.c.l.b16 %v163
    %v605 = vunpack.c.h.b16 %v163
    %v606 = vunpack.c.l.b16 %v164
    %v607 = vunpack.c.h.b16 %v164
    %v608 = vunpack.c.l.b16 %v165
    %v609 = vunpack.c.h.b16 %v165
    %v610 = vunpack.c.l.b16 %v166
    %v611 = vunpack.c.h.b16 %v166
    %v612 = vunpack.c.l.b16 %v167
    %v613 = vunpack.c.h.b16 %v167
    %v614 = vunpack.c.l.b16 %v168
    %v615 = vunpack.c.h.b16 %v168
    %v616 = vunpack.c.l.b16 %v169
    %v617 = vunpack.c.h.b16 %v169
    %v618 = vunpack.c.l.b16 %v170
    %v619 = vunpack.c.h.b16 %v170
    %v620 = vunpack.c.l.b16 %v171
    %v621 = vunpack.c.h.b16 %v171
    %v622 = vunpack.c.l.b16 %v172
    %v623 = vunpack.c.h.b16 %v172
    %v624 = vunpack.c.l.b16 %v173
    %v625 = vunpack.c.h.b16 %v173
    %v626 = vunpack.c.l.b16 %v174
    %v627 = vunpack.c.h.b16 %v174
    %v628 = vunpack.c.l.b16 %v175
    %v629 = vunpack.c.h.b16 %v175
    %v630 = vpack.c.b16 %v376, %v374
    %v631 = vpack.c.b16 %v377, %v375
    %v632 = vpack.c.b16 %v380, %v378
    %v633 = vpack.c.b16 %v381, %v379
    %v634 = vpack.c.b16 %v384, %v382
    %v635 = vpack.c.b16 %v385, %v383
    %v636 = vpack.c.b16 %v388, %v386
    %v637 = vpack.c.b16 %v389, %v387
    %v638 = vpack.c.b16 %v392, %v390
    %v639 = vpack.c.b16 %v393, %v391
    %v640 = vpack.c.b16 %v396, %v394
    %v641 = vpack.c.b16 %v397, %v395
    %v642 = vpack.c.b16 %v400, %v398
    %v643 = vpack.c.b16 %v401, %v399
    %v644 = vpack.c.b16 %v404, %v402
    %v645 = vpack.c.b16 %v405, %v403
    %v646 = vpack.c.b16 %v408, %v406
    %v647 = vpack.c.b16 %v409, %v407
    %v648 = vpack.c.b16 %v412, %v410
    %v649 = vpack.c.b16 %v413, %v411
    %v650 = vpack.c.b16 %v416, %v414
    %v651 = vpack.c.b16 %v417, %v415
    %v652 = vpack.c.b16 %v420, %v418
    %v653 = vpack.c.b16 %v421, %v419
    %v654 = vpack.c.b16 %v424, %v422
    %v655 = vpack.c.b16 %v425, %v423
    %v656 = vpack.c.b16 %v428, %v426
    %v657 = vpack.c.b16 %v429, %v427
    %v658 = vpack.c.b16 %v432, %v430
    %v659 = vpack.c.b16 %v433, %v431
    %v660 = vpack.c.b16 %v436, %v434
    %v661 = vpack.c.b16 %v437, %v435
    %v662 = vpack.c.b16 %v440, %v438
    %v663 = vpack.c.b16 %v441, %v439
    %v664 = vpack.c.b16 %v444, %v442
    %v665 = vpack.c.b16 %v445, %v443
    %v666 = vpack.c.b16 %v448, %v446
    %v667 = vpack.c.b16 %v449, %v447
    %v668 = vpack.c.b16 %v452, %v450
    %v669 = vpack.c.b16 %v453, %v451
    %v670 = vpack.c.b16 %v456, %v454
    %v671 = vpack.c.b16 %v457, %v455
    %v672 = vpack.c.b16 %v460, %v458
    %v673 = vpack.c.b16 %v461, %v459
    %v674 = vpack.c.b16 %v464, %v462
    %v675 = vpack.c.b16 %v465, %v463
    %v676 = vpack.c.b16 %v468, %v466
    %v677 = vpack.c.b16 %v469, %v467
    %v678 = vpack.c.b16 %v472, %v470
    %v679 = vpack.c.b16 %v473, %v471
    %v680 = vpack.c.b16 %v476, %v474
    %v681 = vpack.c.b16 %v477, %v475
    %v682 = vpack.c.b16 %v480, %v478
    %v683 = vpack.c.b16 %v481, %v479
    %v684 = vpack.c.b16 %v484, %v482
    %v685 = vpack.c.b16 %v485, %v483
    %v686 = vpack.c.b16 %v488, %v486
    %v687 = vpack.c.b16 %v489, %v487
    %v688 = vpack.c.b16 %v492, %v490
    %v689 = vpack.c.b16 %v493, %v491
    %v690 = vpack.c.b16 %v496, %v494
    %v691 = vpack.c.b16 %v497, %v495
    %v692 = vpack.c.b16 %v500, %v498
    %v693 = vpack.c.b16 %v501, %v499
    %v694 = vpack.c.b16 %v504, %v502
    %v695 = vpack.c.b16 %v505, %v503
    %v696 = vpack.c.b16 %v508, %v506
    %v697 = vpack.c.b16 %v509, %v507
    %v698 = vpack.c.b16 %v512, %v510
    %v699 = vpack.c.b16 %v513, %v511
    %v700 = vpack.c.b16 %v516, %v514
    %v701 = vpack.c.b16 %v517, %v515
    %v702 = vpack.c.b16 %v520, %v518
    %v703 = vpack.c.b16 %v521, %v519
    %v704 = vpack.c.b16 %v524, %v522
    %v705 = vpack.c.b16 %v525, %v523
    %v706 = vpack.c.b16 %v528, %v526
    %v707 = vpack.c.b16 %v529, %v527
    %v708 = vpack.c.b16 %v532, %v530
    %v709 = vpack.c.b16 %v533, %v531
    %v710 = vpack.c.b16 %v536, %v534
    %v711 = vpack.c.b16 %v537, %v535
    %v712 = vpack.c.b16 %v540, %v538
    %v713 = vpack.c.b16 %v541, %v539
    %v714 = vpack.c.b16 %v544, %v542
    %v715 = vpack.c.b16 %v545, %v543
    %v716 = vpack.c.b16 %v548, %v546
    %v717 = vpack.c.b16 %v549, %v547
    %v718 = vpack.c.b16 %v552, %v550
    %v719 = vpack.c.b16 %v553, %v551
    %v720 = vpack.c.b16 %v556, %v554
    %v721 = vpack.c.b16 %v557, %v555
    %v722 = vpack.c.b16 %v560, %v558
    %v723 = vpack.c.b16 %v561, %v559
    %v724 = vpack.c.b16 %v564, %v562
    %v725 = vpack.c.b16 %v565, %v563
    %v726 = vpack.c.b16 %v568, %v566
    %v727 = vpack.c.b16 %v569, %v567
    %v728 = vpack.c.b16 %v572, %v570
    %v729 = vpack.c.b16 %v573, %v571
    %v730 = vpack.c.b16 %v576, %v574
    %v731 = vpack.c.b16 %v577, %v575
    %v732 = vpack.c.b16 %v580, %v578
    %v733 = vpack.c.b16 %v581, %v579
    %v734 = vpack.c.b16 %v584, %v582
    %v735 = vpack.c.b16 %v585, %v583
    %v736 = vpack.c.b16 %v588, %v586
    %v737 = vpack.c.b16 %v589, %v587
    %v738 = vpack.c.b16 %v592, %v590
    %v739 = vpack.c.b16 %v593, %v591
    %v740 = vpack.c.b16 %v596, %v594
    %v741 = vpack.c.b16 %v597, %v595
    %v742 = vpack.c.b16 %v600, %v598
    %v743 = vpack.c.b16 %v601, %v599
    %v744 = vpack.c.b16 %v604, %v602
    %v745 = vpack.c.b16 %v605, %v603
    %v746 = vpack.c.b16 %v608, %v606
    %v747 = vpack.c.b16 %v609, %v607
    %v748 = vpack.c.b16 %v612, %v610
    %v749 = vpack.c.b16 %v613, %v611
    %v750 = vpack.c.b16 %v616, %v614
    %v751 = vpack.c.b16 %v617, %v615
    %v752 = vpack.c.b16 %v620, %v618
    %v753 = vpack.c.b16 %v621, %v619
    %v754 = vpack.c.b16 %v624, %v622
    %v755 = vpack.c.b16 %v625, %v623
    %v756 = vpack.c.b16 %v628, %v626
    %v757 = vpack.c.b16 %v629, %v627
    %886 = vmatprep.subr.bf16.mxu0 %v631
    %887 = vmatpush1.bf16.msra.mxu0 %v630
    %888 = vmatprep.subr.bf16.mxu0 %v633
    %889 = vmatpush1.bf16.msra.mxu0 %v632
    %890 = vmatprep.subr.bf16.mxu0 %v635
    %891 = vmatpush1.bf16.msra.mxu0 %v634
    %892 = vmatprep.subr.bf16.mxu0 %v637
    %893 = vmatpush1.bf16.msra.mxu0 %v636
    %894 = vmatprep.subr.bf16.mxu0 %v639
    %895 = vmatpush1.bf16.msra.mxu0 %v638
    %896 = vmatprep.subr.bf16.mxu0 %v641
    %897 = vmatpush1.bf16.msra.mxu0 %v640
    %898 = vmatprep.subr.bf16.mxu0 %v643
    %899 = vmatpush1.bf16.msra.mxu0 %v642
    %900 = vmatprep.subr.bf16.mxu0 %v645
    %901 = vmatpush1.bf16.msra.mxu0 %v644
    %902 = vmatprep.subr.bf16.mxu0 %v647
    %903 = vmatpush1.bf16.msra.mxu0 %v646
    %904 = vmatprep.subr.bf16.mxu0 %v649
    %905 = vmatpush1.bf16.msra.mxu0 %v648
    %906 = vmatprep.subr.bf16.mxu0 %v651
    %907 = vmatpush1.bf16.msra.mxu0 %v650
    %908 = vmatprep.subr.bf16.mxu0 %v653
    %909 = vmatpush1.bf16.msra.mxu0 %v652
    %910 = vmatprep.subr.bf16.mxu0 %v655
    %911 = vmatpush1.bf16.msra.mxu0 %v654
    %912 = vmatprep.subr.bf16.mxu0 %v657
    %913 = vmatpush1.bf16.msra.mxu0 %v656
    %914 = vmatprep.subr.bf16.mxu0 %v659
    %915 = vmatpush1.bf16.msra.mxu0 %v658
    %916 = vmatprep.subr.bf16.mxu0 %v661
    %917 = vmatpush1.bf16.msra.mxu0 %v660
    %918 = vmatprep.mubr.bf16.mxu0 %v226
    %919 = vmatmul.mubr.bf16.gmra.mrb[0].mxu0 %v212
    %v920 = vpop.f32.mrb[0].mxu0
    %v921 = vadd.f32 %v181, %v920
    %v922 = vpop.f32.mrb[0].mxu0
    %v923 = vadd.f32 %v185, %v922
    %v924 = vpop.f32.mrb[0].mxu0
    %v925 = vpop.f32.mrb[0].mxu0
    %926 = vdwg.mxu0
    %927 = vmatprep.subr.bf16.mxu0 %v663
    %928 = vmatpush1.bf16.msra.mxu0 %v662
    %929 = vmatprep.subr.bf16.mxu0 %v665
    %930 = vmatpush1.bf16.msra.mxu0 %v664
    %931 = vmatprep.subr.bf16.mxu0 %v667
    %932 = vmatpush1.bf16.msra.mxu0 %v666
    %933 = vmatprep.subr.bf16.mxu0 %v669
    %934 = vmatpush1.bf16.msra.mxu0 %v668
    %935 = vmatprep.subr.bf16.mxu0 %v671
    %936 = vmatpush1.bf16.msra.mxu0 %v670
    %937 = vmatprep.subr.bf16.mxu0 %v673
    %938 = vmatpush1.bf16.msra.mxu0 %v672
    %939 = vmatprep.subr.bf16.mxu0 %v675
    %940 = vmatpush1.bf16.msra.mxu0 %v674
    %941 = vmatprep.subr.bf16.mxu0 %v677
    %942 = vmatpush1.bf16.msra.mxu0 %v676
    %943 = vmatprep.subr.bf16.mxu0 %v679
    %944 = vmatpush1.bf16.msra.mxu0 %v678
    %945 = vmatprep.subr.bf16.mxu0 %v681
    %946 = vmatpush1.bf16.msra.mxu0 %v680
    %947 = vmatprep.subr.bf16.mxu0 %v683
    %948 = vmatpush1.bf16.msra.mxu0 %v682
    %949 = vmatprep.subr.bf16.mxu0 %v685
    %950 = vmatpush1.bf16.msra.mxu0 %v684
    %951 = vmatprep.subr.bf16.mxu0 %v687
    %952 = vmatpush1.bf16.msra.mxu0 %v686
    %953 = vmatprep.subr.bf16.mxu0 %v689
    %954 = vmatpush1.bf16.msra.mxu0 %v688
    %955 = vmatprep.subr.bf16.mxu0 %v691
    %956 = vmatpush1.bf16.msra.mxu0 %v690
    %957 = vmatprep.subr.bf16.mxu0 %v693
    %958 = vmatpush1.bf16.msra.mxu0 %v692
    %959 = vmatprep.mubr.bf16.mxu0 %v236
    %960 = vmatmul.mubr.bf16.gmra.mrb[0].mxu0 %v234
    %v961 = vpop.f32.mrb[0].mxu0
    %v962 = vadd.f32 %v921, %v961
    %v963 = vpop.f32.mrb[0].mxu0
    %v964 = vadd.f32 %v923, %v963
    %v965 = vpop.f32.mrb[0].mxu0
    %v966 = vpop.f32.mrb[0].mxu0
    %967 = vdwg.mxu0
    %968 = vmatprep.subr.bf16.mxu0 %v695
    %969 = vmatpush1.bf16.msra.mxu0 %v694
    %970 = vmatprep.subr.bf16.mxu0 %v697
    %971 = vmatpush1.bf16.msra.mxu0 %v696
    %972 = vmatprep.subr.bf16.mxu0 %v699
    %973 = vmatpush1.bf16.msra.mxu0 %v698
    %974 = vmatprep.subr.bf16.mxu0 %v701
    %975 = vmatpush1.bf16.msra.mxu0 %v700
    %976 = vmatprep.subr.bf16.mxu0 %v703
    %977 = vmatpush1.bf16.msra.mxu0 %v702
    %978 = vmatprep.subr.bf16.mxu0 %v705
    %979 = vmatpush1.bf16.msra.mxu0 %v704
    %980 = vmatprep.subr.bf16.mxu0 %v707
    %981 = vmatpush1.bf16.msra.mxu0 %v706
    %982 = vmatprep.subr.bf16.mxu0 %v709
    %983 = vmatpush1.bf16.msra.mxu0 %v708
    %984 = vmatprep.subr.bf16.mxu0 %v711
    %985 = vmatpush1.bf16.msra.mxu0 %v710
    %986 = vmatprep.subr.bf16.mxu0 %v713
    %987 = vmatpush1.bf16.msra.mxu0 %v712
    %988 = vmatprep.subr.bf16.mxu0 %v715
    %989 = vmatpush1.bf16.msra.mxu0 %v714
    %990 = vmatprep.subr.bf16.mxu0 %v717
    %991 = vmatpush1.bf16.msra.mxu0 %v716
    %992 = vmatprep.subr.bf16.mxu0 %v719
    %993 = vmatpush1.bf16.msra.mxu0 %v718
    %994 = vmatprep.subr.bf16.mxu0 %v721
    %995 = vmatpush1.bf16.msra.mxu0 %v720
    %996 = vmatprep.subr.bf16.mxu0 %v723
    %997 = vmatpush1.bf16.msra.mxu0 %v722
    %998 = vmatprep.subr.bf16.mxu0 %v725
    %999 = vmatpush1.bf16.msra.mxu0 %v724
    %1000 = vmatprep.mubr.bf16.mxu0 %v233
    %1001 = vmatmul.mubr.bf16.gmra.mrb[0].mxu0 %v219
    %v1002 = vpop.f32.mrb[0].mxu0
    %v1003 = vadd.f32 %v962, %v1002
    %v1004 = vpop.f32.mrb[0].mxu0
    %v1005 = vadd.f32 %v964, %v1004
    %v1006 = vpop.f32.mrb[0].mxu0
    %v1007 = vpop.f32.mrb[0].mxu0
    %1008 = vdwg.mxu0
    %1009 = vmatprep.subr.bf16.mxu0 %v727
    %1010 = vmatpush1.bf16.msra.mxu0 %v726
    %1011 = vmatprep.subr.bf16.mxu0 %v729
    %1012 = vmatpush1.bf16.msra.mxu0 %v728
    %1013 = vmatprep.subr.bf16.mxu0 %v731
    %1014 = vmatpush1.bf16.msra.mxu0 %v730
    %1015 = vmatprep.subr.bf16.mxu0 %v733
    %1016 = vmatpush1.bf16.msra.mxu0 %v732
    %1017 = vmatprep.subr.bf16.mxu0 %v735
    %1018 = vmatpush1.bf16.msra.mxu0 %v734
    %1019 = vmatprep.subr.bf16.mxu0 %v737
    %1020 = vmatpush1.bf16.msra.mxu0 %v736
    %1021 = vmatprep.subr.bf16.mxu0 %v739
    %1022 = vmatpush1.bf16.msra.mxu0 %v738
    %1023 = vmatprep.subr.bf16.mxu0 %v741
    %1024 = vmatpush1.bf16.msra.mxu0 %v740
    %1025 = vmatprep.subr.bf16.mxu0 %v743
    %1026 = vmatpush1.bf16.msra.mxu0 %v742
    %1027 = vmatprep.subr.bf16.mxu0 %v745
    %1028 = vmatpush1.bf16.msra.mxu0 %v744
    %1029 = vmatprep.subr.bf16.mxu0 %v747
    %1030 = vmatpush1.bf16.msra.mxu0 %v746
    %1031 = vmatprep.subr.bf16.mxu0 %v749
    %1032 = vmatpush1.bf16.msra.mxu0 %v748
    %1033 = vmatprep.subr.bf16.mxu0 %v751
    %1034 = vmatpush1.bf16.msra.mxu0 %v750
    %1035 = vmatprep.subr.bf16.mxu0 %v753
    %1036 = vmatpush1.bf16.msra.mxu0 %v752
    %1037 = vmatprep.subr.bf16.mxu0 %v755
    %1038 = vmatpush1.bf16.msra.mxu0 %v754
    %1039 = vmatprep.subr.bf16.mxu0 %v757
    %1040 = vmatpush1.bf16.msra.mxu0 %v756
    %1041 = vmatprep.mubr.bf16.mxu0 %v237
    %1042 = vmatmul.mubr.bf16.gmra.mrb[0].mxu0 %v235
    %v1043 = vpop.f32.mrb[0].mxu0
    %v1044 = vadd.f32 %v1003, %v1043
    %v1045 = vpop.f32.mrb[0].mxu0
    %v1046 = vadd.f32 %v1005, %v1045
    %v1047 = vpop.f32.mrb[0].mxu0
    %v1048 = vpop.f32.mrb[0].mxu0
    %1049 = vdwg.mxu0
    %v1050 = vmax.f32 %v1044, 0.0
    %v1051 = vmax.f32 %v1046, 0.0
    %v1052 = vpack.c.bf16 %v1050, %v1050
    %v1053 = vpack.c.bf16 %v1051, %v1051
    %v1054 = vld [vmem:[%s4] sm:$0xf]
    %v1055 = vld [vmem:[%s4 + $0x4] sm:$0xf]
    %v1056 = vld [vmem:[%s4 + $0x8] sm:$0xf]
    %v1057 = vld [vmem:[%s4 + $0xc] sm:$0xf]
    %v1058 = vld [vmem:[%s4 + $0x10] sm:$0xf]
    %v1059 = vld [vmem:[%s4 + $0x14] sm:$0xf]
    %v1060 = vld [vmem:[%s4 + $0x18] sm:$0xf]
    %v1061 = vld [vmem:[%s4 + $0x1c] sm:$0xf]
    %v1062 = vld [vmem:[%s4 + $0x20] sm:$0xf]
    %v1063 = vld [vmem:[%s4 + $0x24] sm:$0xf]
    %v1064 = vld [vmem:[%s4 + $0x28] sm:$0xf]
    %v1065 = vld [vmem:[%s4 + $0x2c] sm:$0xf]
    %v1066 = vld [vmem:[%s4 + $0x30] sm:$0xf]
    %v1067 = vld [vmem:[%s4 + $0x34] sm:$0xf]
    %v1068 = vld [vmem:[%s4 + $0x38] sm:$0xf]
    %v1069 = vld [vmem:[%s4 + $0x3c] sm:$0xf]
    %v1070 = vld [vmem:[%s4 + $0x40] sm:$0xf]
    %v1071 = vld [vmem:[%s4 + $0x44] sm:$0xf]
    %v1072 = vld [vmem:[%s4 + $0x48] sm:$0xf]
    %v1073 = vld [vmem:[%s4 + $0x4c] sm:$0xf]
    %v1074 = vld [vmem:[%s4 + $0x50] sm:$0xf]
    %v1075 = vld [vmem:[%s4 + $0x54] sm:$0xf]
    %v1076 = vld [vmem:[%s4 + $0x58] sm:$0xf]
    %v1077 = vld [vmem:[%s4 + $0x5c] sm:$0xf]
    %v1078 = vld [vmem:[%s4 + $0x60] sm:$0xf]
    %v1079 = vld [vmem:[%s4 + $0x64] sm:$0xf]
    %v1080 = vld [vmem:[%s4 + $0x68] sm:$0xf]
    %v1081 = vld [vmem:[%s4 + $0x6c] sm:$0xf]
    %v1082 = vld [vmem:[%s4 + $0x70] sm:$0xf]
    %v1083 = vld [vmem:[%s4 + $0x74] sm:$0xf]
    %v1084 = vld [vmem:[%s4 + $0x78] sm:$0xf]
    %v1085 = vld [vmem:[%s4 + $0x7c] sm:$0xf]
    %v1086 = vld [vmem:[%s5] sm:$0x1]
    %v1088 = vlaneseq
    %v1089 = vshrl.u32 %v1088, 7
    %v1090 = vsub.s32 0, %v1089
    %v1091 = vrot.slane %v1086, %v1090
    %v1125 = vunpack.c.l.b16 %v1054
    %v1126 = vunpack.c.l.b16 %v1055
    %v1127 = vunpack.c.l.b16 %v1056
    %v1128 = vunpack.c.l.b16 %v1057
    %v1129 = vunpack.c.l.b16 %v1058
    %v1130 = vunpack.c.l.b16 %v1059
    %v1131 = vunpack.c.l.b16 %v1060
    %v1132 = vunpack.c.l.b16 %v1061
    %v1133 = vunpack.c.l.b16 %v1062
    %v1134 = vunpack.c.l.b16 %v1063
    %v1135 = vunpack.c.l.b16 %v1064
    %v1136 = vunpack.c.l.b16 %v1065
    %v1137 = vunpack.c.l.b16 %v1066
    %v1138 = vunpack.c.l.b16 %v1067
    %v1139 = vunpack.c.l.b16 %v1068
    %v1140 = vunpack.c.l.b16 %v1069
    %v1141 = vunpack.c.l.b16 %v1070
    %v1142 = vunpack.c.l.b16 %v1071
    %v1143 = vunpack.c.l.b16 %v1072
    %v1144 = vunpack.c.l.b16 %v1073
    %v1145 = vunpack.c.l.b16 %v1074
    %v1146 = vunpack.c.l.b16 %v1075
    %v1147 = vunpack.c.l.b16 %v1076
    %v1148 = vunpack.c.l.b16 %v1077
    %v1149 = vunpack.c.l.b16 %v1078
    %v1150 = vunpack.c.l.b16 %v1079
    %v1151 = vunpack.c.l.b16 %v1080
    %v1152 = vunpack.c.l.b16 %v1081
    %v1153 = vunpack.c.l.b16 %v1082
    %v1154 = vunpack.c.l.b16 %v1083
    %v1155 = vunpack.c.l.b16 %v1084
    %v1156 = vunpack.c.l.b16 %v1085
    %v1157 = vpack.c.b16 %v1126, %v1125
    %v1158 = vpack.c.b16 %v1128, %v1127
    %v1159 = vpack.c.b16 %v1130, %v1129
    %v1160 = vpack.c.b16 %v1132, %v1131
    %v1161 = vpack.c.b16 %v1134, %v1133
    %v1162 = vpack.c.b16 %v1136, %v1135
    %v1163 = vpack.c.b16 %v1138, %v1137
    %v1164 = vpack.c.b16 %v1140, %v1139
    %v1165 = vpack.c.b16 %v1142, %v1141
    %v1166 = vpack.c.b16 %v1144, %v1143
    %v1167 = vpack.c.b16 %v1146, %v1145
    %v1168 = vpack.c.b16 %v1148, %v1147
    %v1169 = vpack.c.b16 %v1150, %v1149
    %v1170 = vpack.c.b16 %v1152, %v1151
    %v1171 = vpack.c.b16 %v1154, %v1153
    %v1172 = vpack.c.b16 %v1156, %v1155
    %1189 = vmatprep.subr.bf16.mxu0 0
    %1190 = vmatpush1.bf16.msra.mxu0 %v1157
    %1191 = vmatprep.subr.bf16.mxu0 0
    %1192 = vmatpush1.bf16.msra.mxu0 %v1158
    %1193 = vmatprep.subr.bf16.mxu0 0
    %1194 = vmatpush1.bf16.msra.mxu0 %v1159
    %1195 = vmatprep.subr.bf16.mxu0 0
    %1196 = vmatpush1.bf16.msra.mxu0 %v1160
    %1197 = vmatprep.subr.bf16.mxu0 0
    %1198 = vmatpush1.bf16.msra.mxu0 %v1161
    %1199 = vmatprep.subr.bf16.mxu0 0
    %1200 = vmatpush1.bf16.msra.mxu0 %v1162
    %1201 = vmatprep.subr.bf16.mxu0 0
    %1202 = vmatpush1.bf16.msra.mxu0 %v1163
    %1203 = vmatprep.subr.bf16.mxu0 0
    %1204 = vmatpush1.bf16.msra.mxu0 %v1164
    %1205 = vmatprep.subr.bf16.mxu0 0
    %1206 = vmatpush1.bf16.msra.mxu0 %v1165
    %1207 = vmatprep.subr.bf16.mxu0 0
    %1208 = vmatpush1.bf16.msra.mxu0 %v1166
    %1209 = vmatprep.subr.bf16.mxu0 0
    %1210 = vmatpush1.bf16.msra.mxu0 %v1167
    %1211 = vmatprep.subr.bf16.mxu0 0
    %1212 = vmatpush1.bf16.msra.mxu0 %v1168
    %1213 = vmatprep.subr.bf16.mxu0 0
    %1214 = vmatpush1.bf16.msra.mxu0 %v1169
    %1215 = vmatprep.subr.bf16.mxu0 0
    %1216 = vmatpush1.bf16.msra.mxu0 %v1170
    %1217 = vmatprep.subr.bf16.mxu0 0
    %1218 = vmatpush1.bf16.msra.mxu0 %v1171
    %1219 = vmatprep.subr.bf16.mxu0 0
    %1220 = vmatpush1.bf16.msra.mxu0 %v1172
    %1221 = vmatprep.mubr.bf16.mxu0 %v1053
    %1222 = vmatmul.mubr.bf16.gmra.mrb[0].mxu0 %v1052
    %v1223 = vpop.f32.mrb[0].mxu0
    %v1224 = vadd.f32 %v1091, %v1223
    %v1225 = vpop.f32.mrb[0].mxu0
    %v1226 = vpop.f32.mrb[0].mxu0
    %v1227 = vpop.f32.mrb[0].mxu0
    %1228 = vdwg.mxu0
    %v1229 = vld [vmem:[%s6] sm:$0xf]
    %v1230 = vld [vmem:[%s6 + $0x4] sm:$0xf]
    %v1231 = vld [vmem:[%s6 + $0x8] sm:$0xf]
    %v1232 = vld [vmem:[%s6 + $0xc] sm:$0xf]
    %v1233 = vld [vmem:[%s6 + $0x10] sm:$0xf]
    %v1234 = vld [vmem:[%s6 + $0x14] sm:$0xf]
    %v1235 = vld [vmem:[%s6 + $0x18] sm:$0xf]
    %v1236 = vld [vmem:[%s6 + $0x1c] sm:$0xf]
    %v1237 = vld [vmem:[%s6 + $0x20] sm:$0xf]
    %v1238 = vld [vmem:[%s6 + $0x24] sm:$0xf]
    %v1239 = vld [vmem:[%s6 + $0x28] sm:$0xf]
    %v1240 = vld [vmem:[%s6 + $0x2c] sm:$0xf]
    %v1241 = vld [vmem:[%s6 + $0x30] sm:$0xf]
    %v1242 = vld [vmem:[%s6 + $0x34] sm:$0xf]
    %v1243 = vld [vmem:[%s6 + $0x38] sm:$0xf]
    %v1244 = vld [vmem:[%s6 + $0x3c] sm:$0xf]
    %v1245 = vld [vmem:[%s6 + $0x40] sm:$0xf]
    %v1246 = vld [vmem:[%s6 + $0x44] sm:$0xf]
    %v1247 = vld [vmem:[%s6 + $0x48] sm:$0xf]
    %v1248 = vld [vmem:[%s6 + $0x4c] sm:$0xf]
    %v1249 = vld [vmem:[%s6 + $0x50] sm:$0xf]
    %v1250 = vld [vmem:[%s6 + $0x54] sm:$0xf]
    %v1251 = vld [vmem:[%s6 + $0x58] sm:$0xf]
    %v1252 = vld [vmem:[%s6 + $0x5c] sm:$0xf]
    %v1253 = vld [vmem:[%s6 + $0x60] sm:$0xf]
    %v1254 = vld [vmem:[%s6 + $0x64] sm:$0xf]
    %v1255 = vld [vmem:[%s6 + $0x68] sm:$0xf]
    %v1256 = vld [vmem:[%s6 + $0x6c] sm:$0xf]
    %v1257 = vld [vmem:[%s6 + $0x70] sm:$0xf]
    %v1258 = vld [vmem:[%s6 + $0x74] sm:$0xf]
    %v1259 = vld [vmem:[%s6 + $0x78] sm:$0xf]
    %v1260 = vld [vmem:[%s6 + $0x7c] sm:$0xf]
    %v1261 = vld [vmem:[%s7] sm:$0x1]
    %v1263 = vlaneseq
    %v1264 = vshrl.u32 %v1263, 7
    %v1265 = vsub.s32 0, %v1264
    %v1266 = vrot.slane %v1261, %v1265
    %v1300 = vunpack.c.l.b16 %v1229
    %v1301 = vunpack.c.l.b16 %v1230
    %v1302 = vunpack.c.l.b16 %v1231
    %v1303 = vunpack.c.l.b16 %v1232
    %v1304 = vunpack.c.l.b16 %v1233
    %v1305 = vunpack.c.l.b16 %v1234
    %v1306 = vunpack.c.l.b16 %v1235
    %v1307 = vunpack.c.l.b16 %v1236
    %v1308 = vunpack.c.l.b16 %v1237
    %v1309 = vunpack.c.l.b16 %v1238
    %v1310 = vunpack.c.l.b16 %v1239
    %v1311 = vunpack.c.l.b16 %v1240
    %v1312 = vunpack.c.l.b16 %v1241
    %v1313 = vunpack.c.l.b16 %v1242
    %v1314 = vunpack.c.l.b16 %v1243
    %v1315 = vunpack.c.l.b16 %v1244
    %v1316 = vunpack.c.l.b16 %v1245
    %v1317 = vunpack.c.l.b16 %v1246
    %v1318 = vunpack.c.l.b16 %v1247
    %v1319 = vunpack.c.l.b16 %v1248
    %v1320 = vunpack.c.l.b16 %v1249
    %v1321 = vunpack.c.l.b16 %v1250
    %v1322 = vunpack.c.l.b16 %v1251
    %v1323 = vunpack.c.l.b16 %v1252
    %v1324 = vunpack.c.l.b16 %v1253
    %v1325 = vunpack.c.l.b16 %v1254
    %v1326 = vunpack.c.l.b16 %v1255
    %v1327 = vunpack.c.l.b16 %v1256
    %v1328 = vunpack.c.l.b16 %v1257
    %v1329 = vunpack.c.l.b16 %v1258
    %v1330 = vunpack.c.l.b16 %v1259
    %v1331 = vunpack.c.l.b16 %v1260
    %v1332 = vpack.c.b16 %v1301, %v1300
    %v1333 = vpack.c.b16 %v1303, %v1302
    %v1334 = vpack.c.b16 %v1305, %v1304
    %v1335 = vpack.c.b16 %v1307, %v1306
    %v1336 = vpack.c.b16 %v1309, %v1308
    %v1337 = vpack.c.b16 %v1311, %v1310
    %v1338 = vpack.c.b16 %v1313, %v1312
    %v1339 = vpack.c.b16 %v1315, %v1314
    %v1340 = vpack.c.b16 %v1317, %v1316
    %v1341 = vpack.c.b16 %v1319, %v1318
    %v1342 = vpack.c.b16 %v1321, %v1320
    %v1343 = vpack.c.b16 %v1323, %v1322
    %v1344 = vpack.c.b16 %v1325, %v1324
    %v1345 = vpack.c.b16 %v1327, %v1326
    %v1346 = vpack.c.b16 %v1329, %v1328
    %v1347 = vpack.c.b16 %v1331, %v1330
    %1364 = vmatprep.subr.bf16.mxu0 0
    %1365 = vmatpush1.bf16.msra.mxu0 %v1332
    %1366 = vmatprep.subr.bf16.mxu0 0
    %1367 = vmatpush1.bf16.msra.mxu0 %v1333
    %1368 = vmatprep.subr.bf16.mxu0 0
    %1369 = vmatpush1.bf16.msra.mxu0 %v1334
    %1370 = vmatprep.subr.bf16.mxu0 0
    %1371 = vmatpush1.bf16.msra.mxu0 %v1335
    %1372 = vmatprep.subr.bf16.mxu0 0
    %1373 = vmatpush1.bf16.msra.mxu0 %v1336
    %1374 = vmatprep.subr.bf16.mxu0 0
    %1375 = vmatpush1.bf16.msra.mxu0 %v1337
    %1376 = vmatprep.subr.bf16.mxu0 0
    %1377 = vmatpush1.bf16.msra.mxu0 %v1338
    %1378 = vmatprep.subr.bf16.mxu0 0
    %1379 = vmatpush1.bf16.msra.mxu0 %v1339
    %1380 = vmatprep.subr.bf16.mxu0 0
    %1381 = vmatpush1.bf16.msra.mxu0 %v1340
    %1382 = vmatprep.subr.bf16.mxu0 0
    %1383 = vmatpush1.bf16.msra.mxu0 %v1341
    %1384 = vmatprep.subr.bf16.mxu0 0
    %1385 = vmatpush1.bf16.msra.mxu0 %v1342
    %1386 = vmatprep.subr.bf16.mxu0 0
    %1387 = vmatpush1.bf16.msra.mxu0 %v1343
    %1388 = vmatprep.subr.bf16.mxu0 0
    %1389 = vmatpush1.bf16.msra.mxu0 %v1344
    %1390 = vmatprep.subr.bf16.mxu0 0
    %1391 = vmatpush1.bf16.msra.mxu0 %v1345
    %1392 = vmatprep.subr.bf16.mxu0 0
    %1393 = vmatpush1.bf16.msra.mxu0 %v1346
    %1394 = vmatprep.subr.bf16.mxu0 0
    %1395 = vmatpush1.bf16.msra.mxu0 %v1347
    %1396 = vmatprep.mubr.bf16.mxu0 %v1053
    %1397 = vmatmul.mubr.bf16.gmra.mrb[0].mxu0 %v1052
    %v1398 = vpop.f32.mrb[0].mxu0
    %v1399 = vadd.f32 %v1266, %v1398
    %v1400 = vpop.f32.mrb[0].mxu0
    %v1401 = vpop.f32.mrb[0].mxu0
    %v1402 = vpop.f32.mrb[0].mxu0
    %1403 = vdwg.mxu0
    %v1404 = vmul.f32 %v1399, 0.5
    %v1405 = vmul.f32 %v1404, 1.442695
    %v1406 = vpow.pop %v1405
    %v1407 = vld [vmem:[%s1] sm:$0x3]
    %v1408 = vmul.f32 %v1406, %v1407
    %v1409 = vadd.f32 %v1224, %v1408
    %v1410 = vpack.c.bf16 %v1409, %v1409
    %v1411 = vld [vmem:[%s8] sm:$0xff]
    %v1412 = vld [vmem:[%s8 + $0x8] sm:$0x11]
    %v1413 = vld [vmem:[%s9] sm:$0x3]
    %v1415 = vlaneseq
    %v1416 = vshrl.u32 %v1415, 7
    %v1417 = vsub.s32 0, %v1416
    %v1418 = vrot.slane %v1413, %v1417
    %v1419 = vlaneseq
    %v1420 = vshrl.u32 %v1419, 7
    %v1421 = vsub.s32 1, %v1420
    %v1422 = vrot.slane %v1413, %v1421
    %v1427 = vunpack.c.l.b16 %v1411
    %v1428 = vunpack.c.h.b16 %v1411
    %v1429 = vunpack.c.l.b16 %v1412
    %v1430 = vunpack.c.h.b16 %v1412
    %v1431 = vpack.c.b16 %v1429, %v1427
    %v1432 = vpack.c.b16 %v1430, %v1428
    %vm1433 = vcmask 80896
    %v1435 = vsel %vm1433, %v1410, 0
    %vm1437 = vcmask 1044480
    %v1439 = vsel %vm1437, %v1431, 0
    %v1442 = vsel %vm1437, %v1432, 0
    %1444 = vmatprep.subr.bf16.mxu0 %v1442
    %1445 = vmatpush1.bf16.msra.mxu0 %v1439
    %1446 = vmatprep.subr.bf16.mxu0 0
    %1447 = vmatpush1.bf16.msra.mxu0 0
    %1448 = vmatprep.subr.bf16.mxu0 0
    %1449 = vmatpush1.bf16.msra.mxu0 0
    %1450 = vmatprep.subr.bf16.mxu0 0
    %1451 = vmatpush1.bf16.msra.mxu0 0
    %1452 = vmatprep.subr.bf16.mxu0 0
    %1453 = vmatpush1.bf16.msra.mxu0 0
    %1454 = vmatprep.subr.bf16.mxu0 0
    %1455 = vmatpush1.bf16.msra.mxu0 0
    %1456 = vmatprep.subr.bf16.mxu0 0
    %1457 = vmatpush1.bf16.msra.mxu0 0
    %1458 = vmatprep.subr.bf16.mxu0 0
    %1459 = vmatpush1.bf16.msra.mxu0 0
    %1460 = vmatprep.subr.bf16.mxu0 0
    %1461 = vmatpush1.bf16.msra.mxu0 0
    %1462 = vmatprep.subr.bf16.mxu0 0
    %1463 = vmatpush1.bf16.msra.mxu0 0
    %1464 = vmatprep.subr.bf16.mxu0 0
    %1465 = vmatpush1.bf16.msra.mxu0 0
    %1466 = vmatprep.subr.bf16.mxu0 0
    %1467 = vmatpush1.bf16.msra.mxu0 0
    %1468 = vmatprep.subr.bf16.mxu0 0
    %1469 = vmatpush1.bf16.msra.mxu0 0
    %1470 = vmatprep.subr.bf16.mxu0 0
    %1471 = vmatpush1.bf16.msra.mxu0 0
    %1472 = vmatprep.subr.bf16.mxu0 0
    %1473 = vmatpush1.bf16.msra.mxu0 0
    %1474 = vmatprep.subr.bf16.mxu0 0
    %1475 = vmatpush1.bf16.msra.mxu0 0
    %1476 = vmatprep.mubr.bf16.mxu0 0
    %1477 = vmatmul.mubr.bf16.gmra.mrb[0].mxu0 %v1435
    %v1478 = vpop.f32.mrb[0].mxu0
    %v1479 = vadd.f32 %v1418, %v1478
    %v1480 = vpop.f32.mrb[0].mxu0
    %v1481 = vadd.f32 %v1422, %v1480
    %v1482 = vpop.f32.mrb[0].mxu0
    %v1483 = vpop.f32.mrb[0].mxu0
    %1484 = vdwg.mxu0
    %v1485 = vmax.f32 %v1479, 0.0
    %v1486 = vmax.f32 %v1481, 0.0
    %v1487 = vpack.c.bf16 %v1485, %v1485
    %v1488 = vpack.c.bf16 %v1486, %v1486
    %v1489 = vld [vmem:[%s10] sm:$0xff]
    %v1490 = vld [vmem:[%s10 + $0x8] sm:$0xff]
    %v1491 = vld [vmem:[%s10 + $0x10] sm:$0xff]
    %v1492 = vld [vmem:[%s10 + $0x18] sm:$0xff]
    %v1493 = vld [vmem:[%s10 + $0x20] sm:$0xff]
    %v1494 = vld [vmem:[%s10 + $0x28] sm:$0xff]
    %v1495 = vld [vmem:[%s10 + $0x30] sm:$0xff]
    %v1496 = vld [vmem:[%s10 + $0x38] sm:$0xff]
    %v1497 = vld [vmem:[%s10 + $0x40] sm:$0xff]
    %v1498 = vld [vmem:[%s10 + $0x48] sm:$0xff]
    %v1499 = vld [vmem:[%s10 + $0x50] sm:$0xff]
    %v1500 = vld [vmem:[%s10 + $0x58] sm:$0xff]
    %v1501 = vld [vmem:[%s10 + $0x60] sm:$0xff]
    %v1502 = vld [vmem:[%s10 + $0x68] sm:$0xff]
    %v1503 = vld [vmem:[%s10 + $0x70] sm:$0xff]
    %v1504 = vld [vmem:[%s10 + $0x78] sm:$0xff]
    %v1505 = vld [vmem:[%s10 + $0x80] sm:$0xff]
    %v1506 = vld [vmem:[%s10 + $0x88] sm:$0xff]
    %v1507 = vld [vmem:[%s10 + $0x90] sm:$0xff]
    %v1508 = vld [vmem:[%s10 + $0x98] sm:$0xff]
    %v1509 = vld [vmem:[%s10 + $0xa0] sm:$0xff]
    %v1510 = vld [vmem:[%s10 + $0xa8] sm:$0xff]
    %v1511 = vld [vmem:[%s10 + $0xb0] sm:$0xff]
    %v1512 = vld [vmem:[%s10 + $0xb8] sm:$0xff]
    %v1513 = vld [vmem:[%s10 + $0xc0] sm:$0xff]
    %v1514 = vld [vmem:[%s10 + $0xc8] sm:$0xff]
    %v1515 = vld [vmem:[%s10 + $0xd0] sm:$0xff]
    %v1516 = vld [vmem:[%s10 + $0xd8] sm:$0xff]
    %v1517 = vld [vmem:[%s10 + $0xe0] sm:$0xff]
    %v1518 = vld [vmem:[%s10 + $0xe8] sm:$0xff]
    %v1519 = vld [vmem:[%s10 + $0xf0] sm:$0xff]
    %v1520 = vld [vmem:[%s10 + $0xf8] sm:$0xff]
    %v1521 = vld [vmem:[%s10 + $0x100] sm:$0xff]
    %v1522 = vld [vmem:[%s10 + $0x108] sm:$0xff]
    %v1523 = vld [vmem:[%s10 + $0x110] sm:$0xff]
    %v1524 = vld [vmem:[%s10 + $0x118] sm:$0xff]
    %v1525 = vld [vmem:[%s10 + $0x120] sm:$0xff]
    %v1526 = vld [vmem:[%s10 + $0x128] sm:$0xff]
    %v1527 = vld [vmem:[%s10 + $0x130] sm:$0xff]
    %v1528 = vld [vmem:[%s10 + $0x138] sm:$0xff]
    %v1529 = vld [vmem:[%s10 + $0x140] sm:$0xff]
    %v1530 = vld [vmem:[%s10 + $0x148] sm:$0xff]
    %v1531 = vld [vmem:[%s10 + $0x150] sm:$0xff]
    %v1532 = vld [vmem:[%s10 + $0x158] sm:$0xff]
    %v1533 = vld [vmem:[%s10 + $0x160] sm:$0xff]
    %v1534 = vld [vmem:[%s10 + $0x168] sm:$0xff]
    %v1535 = vld [vmem:[%s10 + $0x170] sm:$0xff]
    %v1536 = vld [vmem:[%s10 + $0x178] sm:$0xff]
    %v1537 = vld [vmem:[%s10 + $0x180] sm:$0xff]
    %v1538 = vld [vmem:[%s10 + $0x188] sm:$0xff]
    %v1539 = vld [vmem:[%s10 + $0x190] sm:$0xff]
    %v1540 = vld [vmem:[%s10 + $0x198] sm:$0xff]
    %v1541 = vld [vmem:[%s10 + $0x1a0] sm:$0xff]
    %v1542 = vld [vmem:[%s10 + $0x1a8] sm:$0xff]
    %v1543 = vld [vmem:[%s10 + $0x1b0] sm:$0xff]
    %v1544 = vld [vmem:[%s10 + $0x1b8] sm:$0xff]
    %v1545 = vld [vmem:[%s10 + $0x1c0] sm:$0xff]
    %v1546 = vld [vmem:[%s10 + $0x1c8] sm:$0xff]
    %v1547 = vld [vmem:[%s10 + $0x1d0] sm:$0xff]
    %v1548 = vld [vmem:[%s10 + $0x1d8] sm:$0xff]
    %v1549 = vld [vmem:[%s10 + $0x1e0] sm:$0xff]
    %v1550 = vld [vmem:[%s10 + $0x1e8] sm:$0xff]
    %v1551 = vld [vmem:[%s10 + $0x1f0] sm:$0xff]
    %v1552 = vld [vmem:[%s10 + $0x1f8] sm:$0xff]
    %v1553 = vld [vmem:[%s10 + $0x200] sm:$0xff]
    %v1554 = vld [vmem:[%s10 + $0x208] sm:$0xff]
    %v1555 = vld [vmem:[%s10 + $0x210] sm:$0xff]
    %v1556 = vld [vmem:[%s10 + $0x218] sm:$0xff]
    %v1557 = vld [vmem:[%s10 + $0x220] sm:$0xff]
    %v1558 = vld [vmem:[%s10 + $0x228] sm:$0xff]
    %v1559 = vld [vmem:[%s10 + $0x230] sm:$0xff]
    %v1560 = vld [vmem:[%s10 + $0x238] sm:$0xff]
    %v1561 = vld [vmem:[%s10 + $0x240] sm:$0xff]
    %v1562 = vld [vmem:[%s10 + $0x248] sm:$0xff]
    %v1563 = vld [vmem:[%s10 + $0x250] sm:$0xff]
    %v1564 = vld [vmem:[%s10 + $0x258] sm:$0xff]
    %v1565 = vld [vmem:[%s10 + $0x260] sm:$0xff]
    %v1566 = vld [vmem:[%s10 + $0x268] sm:$0xff]
    %v1567 = vld [vmem:[%s10 + $0x270] sm:$0xff]
    %v1568 = vld [vmem:[%s10 + $0x278] sm:$0xff]
    %v1569 = vld [vmem:[%s10 + $0x280] sm:$0xff]
    %v1570 = vld [vmem:[%s10 + $0x288] sm:$0xff]
    %v1571 = vld [vmem:[%s10 + $0x290] sm:$0xff]
    %v1572 = vld [vmem:[%s10 + $0x298] sm:$0xff]
    %v1573 = vld [vmem:[%s10 + $0x2a0] sm:$0xff]
    %v1574 = vld [vmem:[%s10 + $0x2a8] sm:$0xff]
    %v1575 = vld [vmem:[%s10 + $0x2b0] sm:$0xff]
    %v1576 = vld [vmem:[%s10 + $0x2b8] sm:$0xff]
    %v1577 = vld [vmem:[%s10 + $0x2c0] sm:$0xff]
    %v1578 = vld [vmem:[%s10 + $0x2c8] sm:$0xff]
    %v1579 = vld [vmem:[%s10 + $0x2d0] sm:$0xff]
    %v1580 = vld [vmem:[%s10 + $0x2d8] sm:$0xff]
    %v1581 = vld [vmem:[%s10 + $0x2e0] sm:$0xff]
    %v1582 = vld [vmem:[%s10 + $0x2e8] sm:$0xff]
    %v1583 = vld [vmem:[%s10 + $0x2f0] sm:$0xff]
    %v1584 = vld [vmem:[%s10 + $0x2f8] sm:$0xff]
    %v1585 = vld [vmem:[%s10 + $0x300] sm:$0xff]
    %v1586 = vld [vmem:[%s10 + $0x308] sm:$0xff]
    %v1587 = vld [vmem:[%s10 + $0x310] sm:$0xff]
    %v1588 = vld [vmem:[%s10 + $0x318] sm:$0xff]
    %v1589 = vld [vmem:[%s10 + $0x320] sm:$0xff]
    %v1590 = vld [vmem:[%s10 + $0x328] sm:$0xff]
    %v1591 = vld [vmem:[%s10 + $0x330] sm:$0xff]
    %v1592 = vld [vmem:[%s10 + $0x338] sm:$0xff]
    %v1593 = vld [vmem:[%s10 + $0x340] sm:$0xff]
    %v1594 = vld [vmem:[%s10 + $0x348] sm:$0xff]
    %v1595 = vld [vmem:[%s10 + $0x350] sm:$0xff]
    %v1596 = vld [vmem:[%s10 + $0x358] sm:$0xff]
    %v1597 = vld [vmem:[%s10 + $0x360] sm:$0xff]
    %v1598 = vld [vmem:[%s10 + $0x368] sm:$0xff]
    %v1599 = vld [vmem:[%s10 + $0x370] sm:$0xff]
    %v1600 = vld [vmem:[%s10 + $0x378] sm:$0xff]
    %v1601 = vld [vmem:[%s10 + $0x380] sm:$0xff]
    %v1602 = vld [vmem:[%s10 + $0x388] sm:$0xff]
    %v1603 = vld [vmem:[%s10 + $0x390] sm:$0xff]
    %v1604 = vld [vmem:[%s10 + $0x398] sm:$0xff]
    %v1605 = vld [vmem:[%s10 + $0x3a0] sm:$0xff]
    %v1606 = vld [vmem:[%s10 + $0x3a8] sm:$0xff]
    %v1607 = vld [vmem:[%s10 + $0x3b0] sm:$0xff]
    %v1608 = vld [vmem:[%s10 + $0x3b8] sm:$0xff]
    %v1609 = vld [vmem:[%s10 + $0x3c0] sm:$0xff]
    %v1610 = vld [vmem:[%s10 + $0x3c8] sm:$0xff]
    %v1611 = vld [vmem:[%s10 + $0x3d0] sm:$0xff]
    %v1612 = vld [vmem:[%s10 + $0x3d8] sm:$0xff]
    %v1613 = vld [vmem:[%s10 + $0x3e0] sm:$0xff]
    %v1614 = vld [vmem:[%s10 + $0x3e8] sm:$0xff]
    %v1615 = vld [vmem:[%s10 + $0x3f0] sm:$0xff]
    %v1616 = vld [vmem:[%s10 + $0x3f8] sm:$0xff]
    %v1617 = vld [vmem:[%s11] sm:$0xff]
    %v1619 = vlaneseq
    %v1620 = vshrl.u32 %v1619, 7
    %v1621 = vsub.s32 0, %v1620
    %v1622 = vrot.slane %v1617, %v1621
    %v1623 = vlaneseq
    %v1624 = vshrl.u32 %v1623, 7
    %v1625 = vsub.s32 1, %v1624
    %v1626 = vrot.slane %v1617, %v1625
    %v1627 = vlaneseq
    %v1628 = vshrl.u32 %v1627, 7
    %v1629 = vsub.s32 2, %v1628
    %v1630 = vrot.slane %v1617, %v1629
    %v1631 = vlaneseq
    %v1632 = vshrl.u32 %v1631, 7
    %v1633 = vsub.s32 3, %v1632
    %v1634 = vrot.slane %v1617, %v1633
    %v1635 = vlaneseq
    %v1636 = vshrl.u32 %v1635, 7
    %v1637 = vsub.s32 4, %v1636
    %v1638 = vrot.slane %v1617, %v1637
    %v1639 = vlaneseq
    %v1640 = vshrl.u32 %v1639, 7
    %v1641 = vsub.s32 5, %v1640
    %v1642 = vrot.slane %v1617, %v1641
    %v1643 = vlaneseq
    %v1644 = vshrl.u32 %v1643, 7
    %v1645 = vsub.s32 6, %v1644
    %v1646 = vrot.slane %v1617, %v1645
    %v1647 = vlaneseq
    %v1648 = vshrl.u32 %v1647, 7
    %v1649 = vsub.s32 7, %v1648
    %v1650 = vrot.slane %v1617, %v1649
    %v1787 = vunpack.c.l.b16 %v1489
    %v1788 = vunpack.c.h.b16 %v1489
    %v1789 = vunpack.c.l.b16 %v1490
    %v1790 = vunpack.c.h.b16 %v1490
    %v1791 = vunpack.c.l.b16 %v1491
    %v1792 = vunpack.c.h.b16 %v1491
    %v1793 = vunpack.c.l.b16 %v1492
    %v1794 = vunpack.c.h.b16 %v1492
    %v1795 = vunpack.c.l.b16 %v1493
    %v1796 = vunpack.c.h.b16 %v1493
    %v1797 = vunpack.c.l.b16 %v1494
    %v1798 = vunpack.c.h.b16 %v1494
    %v1799 = vunpack.c.l.b16 %v1495
    %v1800 = vunpack.c.h.b16 %v1495
    %v1801 = vunpack.c.l.b16 %v1496
    %v1802 = vunpack.c.h.b16 %v1496
    %v1803 = vunpack.c.l.b16 %v1497
    %v1804 = vunpack.c.h.b16 %v1497
    %v1805 = vunpack.c.l.b16 %v1498
    %v1806 = vunpack.c.h.b16 %v1498
    %v1807 = vunpack.c.l.b16 %v1499
    %v1808 = vunpack.c.h.b16 %v1499
    %v1809 = vunpack.c.l.b16 %v1500
    %v1810 = vunpack.c.h.b16 %v1500
    %v1811 = vunpack.c.l.b16 %v1501
    %v1812 = vunpack.c.h.b16 %v1501
    %v1813 = vunpack.c.l.b16 %v1502
    %v1814 = vunpack.c.h.b16 %v1502
    %v1815 = vunpack.c.l.b16 %v1503
    %v1816 = vunpack.c.h.b16 %v1503
    %v1817 = vunpack.c.l.b16 %v1504
    %v1818 = vunpack.c.h.b16 %v1504
    %v1819 = vunpack.c.l.b16 %v1505
    %v1820 = vunpack.c.h.b16 %v1505
    %v1821 = vunpack.c.l.b16 %v1506
    %v1822 = vunpack.c.h.b16 %v1506
    %v1823 = vunpack.c.l.b16 %v1507
    %v1824 = vunpack.c.h.b16 %v1507
    %v1825 = vunpack.c.l.b16 %v1508
    %v1826 = vunpack.c.h.b16 %v1508
    %v1827 = vunpack.c.l.b16 %v1509
    %v1828 = vunpack.c.h.b16 %v1509
    %v1829 = vunpack.c.l.b16 %v1510
    %v1830 = vunpack.c.h.b16 %v1510
    %v1831 = vunpack.c.l.b16 %v1511
    %v1832 = vunpack.c.h.b16 %v1511
    %v1833 = vunpack.c.l.b16 %v1512
    %v1834 = vunpack.c.h.b16 %v1512
    %v1835 = vunpack.c.l.b16 %v1513
    %v1836 = vunpack.c.h.b16 %v1513
    %v1837 = vunpack.c.l.b16 %v1514
    %v1838 = vunpack.c.h.b16 %v1514
    %v1839 = vunpack.c.l.b16 %v1515
    %v1840 = vunpack.c.h.b16 %v1515
    %v1841 = vunpack.c.l.b16 %v1516
    %v1842 = vunpack.c.h.b16 %v1516
    %v1843 = vunpack.c.l.b16 %v1517
    %v1844 = vunpack.c.h.b16 %v1517
    %v1845 = vunpack.c.l.b16 %v1518
    %v1846 = vunpack.c.h.b16 %v1518
    %v1847 = vunpack.c.l.b16 %v1519
    %v1848 = vunpack.c.h.b16 %v1519
    %v1849 = vunpack.c.l.b16 %v1520
    %v1850 = vunpack.c.h.b16 %v1520
    %v1851 = vunpack.c.l.b16 %v1521
    %v1852 = vunpack.c.h.b16 %v1521
    %v1853 = vunpack.c.l.b16 %v1522
    %v1854 = vunpack.c.h.b16 %v1522
    %v1855 = vunpack.c.l.b16 %v1523
    %v1856 = vunpack.c.h.b16 %v1523
    %v1857 = vunpack.c.l.b16 %v1524
    %v1858 = vunpack.c.h.b16 %v1524
    %v1859 = vunpack.c.l.b16 %v1525
    %v1860 = vunpack.c.h.b16 %v1525
    %v1861 = vunpack.c.l.b16 %v1526
    %v1862 = vunpack.c.h.b16 %v1526
    %v1863 = vunpack.c.l.b16 %v1527
    %v1864 = vunpack.c.h.b16 %v1527
    %v1865 = vunpack.c.l.b16 %v1528
    %v1866 = vunpack.c.h.b16 %v1528
    %v1867 = vunpack.c.l.b16 %v1529
    %v1868 = vunpack.c.h.b16 %v1529
    %v1869 = vunpack.c.l.b16 %v1530
    %v1870 = vunpack.c.h.b16 %v1530
    %v1871 = vunpack.c.l.b16 %v1531
    %v1872 = vunpack.c.h.b16 %v1531
    %v1873 = vunpack.c.l.b16 %v1532
    %v1874 = vunpack.c.h.b16 %v1532
    %v1875 = vunpack.c.l.b16 %v1533
    %v1876 = vunpack.c.h.b16 %v1533
    %v1877 = vunpack.c.l.b16 %v1534
    %v1878 = vunpack.c.h.b16 %v1534
    %v1879 = vunpack.c.l.b16 %v1535
    %v1880 = vunpack.c.h.b16 %v1535
    %v1881 = vunpack.c.l.b16 %v1536
    %v1882 = vunpack.c.h.b16 %v1536
    %v1883 = vunpack.c.l.b16 %v1537
    %v1884 = vunpack.c.h.b16 %v1537
    %v1885 = vunpack.c.l.b16 %v1538
    %v1886 = vunpack.c.h.b16 %v1538
    %v1887 = vunpack.c.l.b16 %v1539
    %v1888 = vunpack.c.h.b16 %v1539
    %v1889 = vunpack.c.l.b16 %v1540
    %v1890 = vunpack.c.h.b16 %v1540
    %v1891 = vunpack.c.l.b16 %v1541
    %v1892 = vunpack.c.h.b16 %v1541
    %v1893 = vunpack.c.l.b16 %v1542
    %v1894 = vunpack.c.h.b16 %v1542
    %v1895 = vunpack.c.l.b16 %v1543
    %v1896 = vunpack.c.h.b16 %v1543
    %v1897 = vunpack.c.l.b16 %v1544
    %v1898 = vunpack.c.h.b16 %v1544
    %v1899 = vunpack.c.l.b16 %v1545
    %v1900 = vunpack.c.h.b16 %v1545
    %v1901 = vunpack.c.l.b16 %v1546
    %v1902 = vunpack.c.h.b16 %v1546
    %v1903 = vunpack.c.l.b16 %v1547
    %v1904 = vunpack.c.h.b16 %v1547
    %v1905 = vunpack.c.l.b16 %v1548
    %v1906 = vunpack.c.h.b16 %v1548
    %v1907 = vunpack.c.l.b16 %v1549
    %v1908 = vunpack.c.h.b16 %v1549
    %v1909 = vunpack.c.l.b16 %v1550
    %v1910 = vunpack.c.h.b16 %v1550
    %v1911 = vunpack.c.l.b16 %v1551
    %v1912 = vunpack.c.h.b16 %v1551
    %v1913 = vunpack.c.l.b16 %v1552
    %v1914 = vunpack.c.h.b16 %v1552
    %v1915 = vunpack.c.l.b16 %v1553
    %v1916 = vunpack.c.h.b16 %v1553
    %v1917 = vunpack.c.l.b16 %v1554
    %v1918 = vunpack.c.h.b16 %v1554
    %v1919 = vunpack.c.l.b16 %v1555
    %v1920 = vunpack.c.h.b16 %v1555
    %v1921 = vunpack.c.l.b16 %v1556
    %v1922 = vunpack.c.h.b16 %v1556
    %v1923 = vunpack.c.l.b16 %v1557
    %v1924 = vunpack.c.h.b16 %v1557
    %v1925 = vunpack.c.l.b16 %v1558
    %v1926 = vunpack.c.h.b16 %v1558
    %v1927 = vunpack.c.l.b16 %v1559
    %v1928 = vunpack.c.h.b16 %v1559
    %v1929 = vunpack.c.l.b16 %v1560
    %v1930 = vunpack.c.h.b16 %v1560
    %v1931 = vunpack.c.l.b16 %v1561
    %v1932 = vunpack.c.h.b16 %v1561
    %v1933 = vunpack.c.l.b16 %v1562
    %v1934 = vunpack.c.h.b16 %v1562
    %v1935 = vunpack.c.l.b16 %v1563
    %v1936 = vunpack.c.h.b16 %v1563
    %v1937 = vunpack.c.l.b16 %v1564
    %v1938 = vunpack.c.h.b16 %v1564
    %v1939 = vunpack.c.l.b16 %v1565
    %v1940 = vunpack.c.h.b16 %v1565
    %v1941 = vunpack.c.l.b16 %v1566
    %v1942 = vunpack.c.h.b16 %v1566
    %v1943 = vunpack.c.l.b16 %v1567
    %v1944 = vunpack.c.h.b16 %v1567
    %v1945 = vunpack.c.l.b16 %v1568
    %v1946 = vunpack.c.h.b16 %v1568
    %v1947 = vunpack.c.l.b16 %v1569
    %v1948 = vunpack.c.h.b16 %v1569
    %v1949 = vunpack.c.l.b16 %v1570
    %v1950 = vunpack.c.h.b16 %v1570
    %v1951 = vunpack.c.l.b16 %v1571
    %v1952 = vunpack.c.h.b16 %v1571
    %v1953 = vunpack.c.l.b16 %v1572
    %v1954 = vunpack.c.h.b16 %v1572
    %v1955 = vunpack.c.l.b16 %v1573
    %v1956 = vunpack.c.h.b16 %v1573
    %v1957 = vunpack.c.l.b16 %v1574
    %v1958 = vunpack.c.h.b16 %v1574
    %v1959 = vunpack.c.l.b16 %v1575
    %v1960 = vunpack.c.h.b16 %v1575
    %v1961 = vunpack.c.l.b16 %v1576
    %v1962 = vunpack.c.h.b16 %v1576
    %v1963 = vunpack.c.l.b16 %v1577
    %v1964 = vunpack.c.h.b16 %v1577
    %v1965 = vunpack.c.l.b16 %v1578
    %v1966 = vunpack.c.h.b16 %v1578
    %v1967 = vunpack.c.l.b16 %v1579
    %v1968 = vunpack.c.h.b16 %v1579
    %v1969 = vunpack.c.l.b16 %v1580
    %v1970 = vunpack.c.h.b16 %v1580
    %v1971 = vunpack.c.l.b16 %v1581
    %v1972 = vunpack.c.h.b16 %v1581
    %v1973 = vunpack.c.l.b16 %v1582
    %v1974 = vunpack.c.h.b16 %v1582
    %v1975 = vunpack.c.l.b16 %v1583
    %v1976 = vunpack.c.h.b16 %v1583
    %v1977 = vunpack.c.l.b16 %v1584
    %v1978 = vunpack.c.h.b16 %v1584
    %v1979 = vunpack.c.l.b16 %v1585
    %v1980 = vunpack.c.h.b16 %v1585
    %v1981 = vunpack.c.l.b16 %v1586
    %v1982 = vunpack.c.h.b16 %v1586
    %v1983 = vunpack.c.l.b16 %v1587
    %v1984 = vunpack.c.h.b16 %v1587
    %v1985 = vunpack.c.l.b16 %v1588
    %v1986 = vunpack.c.h.b16 %v1588
    %v1987 = vunpack.c.l.b16 %v1589
    %v1988 = vunpack.c.h.b16 %v1589
    %v1989 = vunpack.c.l.b16 %v1590
    %v1990 = vunpack.c.h.b16 %v1590
    %v1991 = vunpack.c.l.b16 %v1591
    %v1992 = vunpack.c.h.b16 %v1591
    %v1993 = vunpack.c.l.b16 %v1592
    %v1994 = vunpack.c.h.b16 %v1592
    %v1995 = vunpack.c.l.b16 %v1593
    %v1996 = vunpack.c.h.b16 %v1593
    %v1997 = vunpack.c.l.b16 %v1594
    %v1998 = vunpack.c.h.b16 %v1594
    %v1999 = vunpack.c.l.b16 %v1595
    %v2000 = vunpack.c.h.b16 %v1595
    %v2001 = vunpack.c.l.b16 %v1596
    %v2002 = vunpack.c.h.b16 %v1596
    %v2003 = vunpack.c.l.b16 %v1597
    %v2004 = vunpack.c.h.b16 %v1597
    %v2005 = vunpack.c.l.b16 %v1598
    %v2006 = vunpack.c.h.b16 %v1598
    %v2007 = vunpack.c.l.b16 %v1599
    %v2008 = vunpack.c.h.b16 %v1599
    %v2009 = vunpack.c.l.b16 %v1600
    %v2010 = vunpack.c.h.b16 %v1600
    %v2011 = vunpack.c.l.b16 %v1601
    %v2012 = vunpack.c.h.b16 %v1601
    %v2013 = vunpack.c.l.b16 %v1602
    %v2014 = vunpack.c.h.b16 %v1602
    %v2015 = vunpack.c.l.b16 %v1603
    %v2016 = vunpack.c.h.b16 %v1603
    %v2017 = vunpack.c.l.b16 %v1604
    %v2018 = vunpack.c.h.b16 %v1604
    %v2019 = vunpack.c.l.b16 %v1605
    %v2020 = vunpack.c.h.b16 %v1605
    %v2021 = vunpack.c.l.b16 %v1606
    %v2022 = vunpack.c.h.b16 %v1606
    %v2023 = vunpack.c.l.b16 %v1607
    %v2024 = vunpack.c.h.b16 %v1607
    %v2025 = vunpack.c.l.b16 %v1608
    %v2026 = vunpack.c.h.b16 %v1608
    %v2027 = vunpack.c.l.b16 %v1609
    %v2028 = vunpack.c.h.b16 %v1609
    %v2029 = vunpack.c.l.b16 %v1610
    %v2030 = vunpack.c.h.b16 %v1610
    %v2031 = vunpack.c.l.b16 %v1611
    %v2032 = vunpack.c.h.b16 %v1611
    %v2033 = vunpack.c.l.b16 %v1612
    %v2034 = vunpack.c.h.b16 %v1612
    %v2035 = vunpack.c.l.b16 %v1613
    %v2036 = vunpack.c.h.b16 %v1613
    %v2037 = vunpack.c.l.b16 %v1614
    %v2038 = vunpack.c.h.b16 %v1614
    %v2039 = vunpack.c.l.b16 %v1615
    %v2040 = vunpack.c.h.b16 %v1615
    %v2041 = vunpack.c.l.b16 %v1616
    %v2042 = vunpack.c.h.b16 %v1616
    %v2043 = vpack.c.b16 %v1795, %v1787
    %v2044 = vpack.c.b16 %v1796, %v1788
    %v2045 = vpack.c.b16 %v1797, %v1789
    %v2046 = vpack.c.b16 %v1798, %v1790
    %v2047 = vpack.c.b16 %v1799, %v1791
    %v2048 = vpack.c.b16 %v1800, %v1792
    %v2049 = vpack.c.b16 %v1801, %v1793
    %v2050 = vpack.c.b16 %v1802, %v1794
    %v2051 = vpack.c.b16 %v1811, %v1803
    %v2052 = vpack.c.b16 %v1812, %v1804
    %v2053 = vpack.c.b16 %v1813, %v1805
    %v2054 = vpack.c.b16 %v1814, %v1806
    %v2055 = vpack.c.b16 %v1815, %v1807
    %v2056 = vpack.c.b16 %v1816, %v1808
    %v2057 = vpack.c.b16 %v1817, %v1809
    %v2058 = vpack.c.b16 %v1818, %v1810
    %v2059 = vpack.c.b16 %v1827, %v1819
    %v2060 = vpack.c.b16 %v1828, %v1820
    %v2061 = vpack.c.b16 %v1829, %v1821
    %v2062 = vpack.c.b16 %v1830, %v1822
    %v2063 = vpack.c.b16 %v1831, %v1823
    %v2064 = vpack.c.b16 %v1832, %v1824
    %v2065 = vpack.c.b16 %v1833, %v1825
    %v2066 = vpack.c.b16 %v1834, %v1826
    %v2067 = vpack.c.b16 %v1843, %v1835
    %v2068 = vpack.c.b16 %v1844, %v1836
    %v2069 = vpack.c.b16 %v1845, %v1837
    %v2070 = vpack.c.b16 %v1846, %v1838
    %v2071 = vpack.c.b16 %v1847, %v1839
    %v2072 = vpack.c.b16 %v1848, %v1840
    %v2073 = vpack.c.b16 %v1849, %v1841
    %v2074 = vpack.c.b16 %v1850, %v1842
    %v2075 = vpack.c.b16 %v1859, %v1851
    %v2076 = vpack.c.b16 %v1860, %v1852
    %v2077 = vpack.c.b16 %v1861, %v1853
    %v2078 = vpack.c.b16 %v1862, %v1854
    %v2079 = vpack.c.b16 %v1863, %v1855
    %v2080 = vpack.c.b16 %v1864, %v1856
    %v2081 = vpack.c.b16 %v1865, %v1857
    %v2082 = vpack.c.b16 %v1866, %v1858
    %v2083 = vpack.c.b16 %v1875, %v1867
    %v2084 = vpack.c.b16 %v1876, %v1868
    %v2085 = vpack.c.b16 %v1877, %v1869
    %v2086 = vpack.c.b16 %v1878, %v1870
    %v2087 = vpack.c.b16 %v1879, %v1871
    %v2088 = vpack.c.b16 %v1880, %v1872
    %v2089 = vpack.c.b16 %v1881, %v1873
    %v2090 = vpack.c.b16 %v1882, %v1874
    %v2091 = vpack.c.b16 %v1891, %v1883
    %v2092 = vpack.c.b16 %v1892, %v1884
    %v2093 = vpack.c.b16 %v1893, %v1885
    %v2094 = vpack.c.b16 %v1894, %v1886
    %v2095 = vpack.c.b16 %v1895, %v1887
    %v2096 = vpack.c.b16 %v1896, %v1888
    %v2097 = vpack.c.b16 %v1897, %v1889
    %v2098 = vpack.c.b16 %v1898, %v1890
    %v2099 = vpack.c.b16 %v1907, %v1899
    %v2100 = vpack.c.b16 %v1908, %v1900
    %v2101 = vpack.c.b16 %v1909, %v1901
    %v2102 = vpack.c.b16 %v1910, %v1902
    %v2103 = vpack.c.b16 %v1911, %v1903
    %v2104 = vpack.c.b16 %v1912, %v1904
    %v2105 = vpack.c.b16 %v1913, %v1905
    %v2106 = vpack.c.b16 %v1914, %v1906
    %v2107 = vpack.c.b16 %v1923, %v1915
    %v2108 = vpack.c.b16 %v1924, %v1916
    %v2109 = vpack.c.b16 %v1925, %v1917
    %v2110 = vpack.c.b16 %v1926, %v1918
    %v2111 = vpack.c.b16 %v1927, %v1919
    %v2112 = vpack.c.b16 %v1928, %v1920
    %v2113 = vpack.c.b16 %v1929, %v1921
    %v2114 = vpack.c.b16 %v1930, %v1922
    %v2115 = vpack.c.b16 %v1939, %v1931
    %v2116 = vpack.c.b16 %v1940, %v1932
    %v2117 = vpack.c.b16 %v1941, %v1933
    %v2118 = vpack.c.b16 %v1942, %v1934
    %v2119 = vpack.c.b16 %v1943, %v1935
    %v2120 = vpack.c.b16 %v1944, %v1936
    %v2121 = vpack.c.b16 %v1945, %v1937
    %v2122 = vpack.c.b16 %v1946, %v1938
    %v2123 = vpack.c.b16 %v1955, %v1947
    %v2124 = vpack.c.b16 %v1956, %v1948
    %v2125 = vpack.c.b16 %v1957, %v1949
    %v2126 = vpack.c.b16 %v1958, %v1950
    %v2127 = vpack.c.b16 %v1959, %v1951
    %v2128 = vpack.c.b16 %v1960, %v1952
    %v2129 = vpack.c.b16 %v1961, %v1953
    %v2130 = vpack.c.b16 %v1962, %v1954
    %v2131 = vpack.c.b16 %v1971, %v1963
    %v2132 = vpack.c.b16 %v1972, %v1964
    %v2133 = vpack.c.b16 %v1973, %v1965
    %v2134 = vpack.c.b16 %v1974, %v1966
    %v2135 = vpack.c.b16 %v1975, %v1967
    %v2136 = vpack.c.b16 %v1976, %v1968
    %v2137 = vpack.c.b16 %v1977, %v1969
    %v2138 = vpack.c.b16 %v1978, %v1970
    %v2139 = vpack.c.b16 %v1987, %v1979
    %v2140 = vpack.c.b16 %v1988, %v1980
    %v2141 = vpack.c.b16 %v1989, %v1981
    %v2142 = vpack.c.b16 %v1990, %v1982
    %v2143 = vpack.c.b16 %v1991, %v1983
    %v2144 = vpack.c.b16 %v1992, %v1984
    %v2145 = vpack.c.b16 %v1993, %v1985
    %v2146 = vpack.c.b16 %v1994, %v1986
    %v2147 = vpack.c.b16 %v2003, %v1995
    %v2148 = vpack.c.b16 %v2004, %v1996
    %v2149 = vpack.c.b16 %v2005, %v1997
    %v2150 = vpack.c.b16 %v2006, %v1998
    %v2151 = vpack.c.b16 %v2007, %v1999
    %v2152 = vpack.c.b16 %v2008, %v2000
    %v2153 = vpack.c.b16 %v2009, %v2001
    %v2154 = vpack.c.b16 %v2010, %v2002
    %v2155 = vpack.c.b16 %v2019, %v2011
    %v2156 = vpack.c.b16 %v2020, %v2012
    %v2157 = vpack.c.b16 %v2021, %v2013
    %v2158 = vpack.c.b16 %v2022, %v2014
    %v2159 = vpack.c.b16 %v2023, %v2015
    %v2160 = vpack.c.b16 %v2024, %v2016
    %v2161 = vpack.c.b16 %v2025, %v2017
    %v2162 = vpack.c.b16 %v2026, %v2018
    %v2163 = vpack.c.b16 %v2035, %v2027
    %v2164 = vpack.c.b16 %v2036, %v2028
    %v2165 = vpack.c.b16 %v2037, %v2029
    %v2166 = vpack.c.b16 %v2038, %v2030
    %v2167 = vpack.c.b16 %v2039, %v2031
    %v2168 = vpack.c.b16 %v2040, %v2032
    %v2169 = vpack.c.b16 %v2041, %v2033
    %v2170 = vpack.c.b16 %v2042, %v2034
    %2299 = vmatprep.subr.bf16.mxu0 %v2044
    %2300 = vmatpush1.bf16.msra.mxu0 %v2043
    %2301 = vmatprep.subr.bf16.mxu0 %v2052
    %2302 = vmatpush1.bf16.msra.mxu0 %v2051
    %2303 = vmatprep.subr.bf16.mxu0 %v2060
    %2304 = vmatpush1.bf16.msra.mxu0 %v2059
    %2305 = vmatprep.subr.bf16.mxu0 %v2068
    %2306 = vmatpush1.bf16.msra.mxu0 %v2067
    %2307 = vmatprep.subr.bf16.mxu0 %v2076
    %2308 = vmatpush1.bf16.msra.mxu0 %v2075
    %2309 = vmatprep.subr.bf16.mxu0 %v2084
    %2310 = vmatpush1.bf16.msra.mxu0 %v2083
    %2311 = vmatprep.subr.bf16.mxu0 %v2092
    %2312 = vmatpush1.bf16.msra.mxu0 %v2091
    %2313 = vmatprep.subr.bf16.mxu0 %v2100
    %2314 = vmatpush1.bf16.msra.mxu0 %v2099
    %2315 = vmatprep.subr.bf16.mxu0 %v2108
    %2316 = vmatpush1.bf16.msra.mxu0 %v2107
    %2317 = vmatprep.subr.bf16.mxu0 %v2116
    %2318 = vmatpush1.bf16.msra.mxu0 %v2115
    %2319 = vmatprep.subr.bf16.mxu0 %v2124
    %2320 = vmatpush1.bf16.msra.mxu0 %v2123
    %2321 = vmatprep.subr.bf16.mxu0 %v2132
    %2322 = vmatpush1.bf16.msra.mxu0 %v2131
    %2323 = vmatprep.subr.bf16.mxu0 %v2140
    %2324 = vmatpush1.bf16.msra.mxu0 %v2139
    %2325 = vmatprep.subr.bf16.mxu0 %v2148
    %2326 = vmatpush1.bf16.msra.mxu0 %v2147
    %2327 = vmatprep.subr.bf16.mxu0 %v2156
    %2328 = vmatpush1.bf16.msra.mxu0 %v2155
    %2329 = vmatprep.subr.bf16.mxu0 %v2164
    %2330 = vmatpush1.bf16.msra.mxu0 %v2163
    %2331 = vmatprep.mubr.bf16.mxu0 %v1488
    %2332 = vmatmul.mubr.bf16.gmra.mrb[0].mxu0 %v1487
    %v2333 = vpop.f32.mrb[0].mxu0
    %v2334 = vadd.f32 %v1622, %v2333
    %v2335 = vpop.f32.mrb[0].mxu0
    %v2336 = vadd.f32 %v1626, %v2335
    %v2337 = vpop.f32.mrb[0].mxu0
    %v2338 = vpop.f32.mrb[0].mxu0
    %2339 = vdwg.mxu0
    %2340 = vmatprep.subr.bf16.mxu0 %v2046
    %2341 = vmatpush1.bf16.msra.mxu0 %v2045
    %2342 = vmatprep.subr.bf16.mxu0 %v2054
    %2343 = vmatpush1.bf16.msra.mxu0 %v2053
    %2344 = vmatprep.subr.bf16.mxu0 %v2062
    %2345 = vmatpush1.bf16.msra.mxu0 %v2061
    %2346 = vmatprep.subr.bf16.mxu0 %v2070
    %2347 = vmatpush1.bf16.msra.mxu0 %v2069
    %2348 = vmatprep.subr.bf16.mxu0 %v2078
    %2349 = vmatpush1.bf16.msra.mxu0 %v2077
    %2350 = vmatprep.subr.bf16.mxu0 %v2086
    %2351 = vmatpush1.bf16.msra.mxu0 %v2085
    %2352 = vmatprep.subr.bf16.mxu0 %v2094
    %2353 = vmatpush1.bf16.msra.mxu0 %v2093
    %2354 = vmatprep.subr.bf16.mxu0 %v2102
    %2355 = vmatpush1.bf16.msra.mxu0 %v2101
    %2356 = vmatprep.subr.bf16.mxu0 %v2110
    %2357 = vmatpush1.bf16.msra.mxu0 %v2109
    %2358 = vmatprep.subr.bf16.mxu0 %v2118
    %2359 = vmatpush1.bf16.msra.mxu0 %v2117
    %2360 = vmatprep.subr.bf16.mxu0 %v2126
    %2361 = vmatpush1.bf16.msra.mxu0 %v2125
    %2362 = vmatprep.subr.bf16.mxu0 %v2134
    %2363 = vmatpush1.bf16.msra.mxu0 %v2133
    %2364 = vmatprep.subr.bf16.mxu0 %v2142
    %2365 = vmatpush1.bf16.msra.mxu0 %v2141
    %2366 = vmatprep.subr.bf16.mxu0 %v2150
    %2367 = vmatpush1.bf16.msra.mxu0 %v2149
    %2368 = vmatprep.subr.bf16.mxu0 %v2158
    %2369 = vmatpush1.bf16.msra.mxu0 %v2157
    %2370 = vmatprep.subr.bf16.mxu0 %v2166
    %2371 = vmatpush1.bf16.msra.mxu0 %v2165
    %2372 = vmatprep.mubr.bf16.mxu0 %v1488
    %2373 = vmatmul.mubr.bf16.gmra.mrb[0].mxu0 %v1487
    %v2374 = vpop.f32.mrb[0].mxu0
    %v2375 = vadd.f32 %v1630, %v2374
    %v2376 = vpop.f32.mrb[0].mxu0
    %v2377 = vadd.f32 %v1634, %v2376
    %v2378 = vpop.f32.mrb[0].mxu0
    %v2379 = vpop.f32.mrb[0].mxu0
    %2380 = vdwg.mxu0
    %2381 = vmatprep.subr.bf16.mxu0 %v2048
    %2382 = vmatpush1.bf16.msra.mxu0 %v2047
    %2383 = vmatprep.subr.bf16.mxu0 %v2056
    %2384 = vmatpush1.bf16.msra.mxu0 %v2055
    %2385 = vmatprep.subr.bf16.mxu0 %v2064
    %2386 = vmatpush1.bf16.msra.mxu0 %v2063
    %2387 = vmatprep.subr.bf16.mxu0 %v2072
    %2388 = vmatpush1.bf16.msra.mxu0 %v2071
    %2389 = vmatprep.subr.bf16.mxu0 %v2080
    %2390 = vmatpush1.bf16.msra.mxu0 %v2079
    %2391 = vmatprep.subr.bf16.mxu0 %v2088
    %2392 = vmatpush1.bf16.msra.mxu0 %v2087
    %2393 = vmatprep.subr.bf16.mxu0 %v2096
    %2394 = vmatpush1.bf16.msra.mxu0 %v2095
    %2395 = vmatprep.subr.bf16.mxu0 %v2104
    %2396 = vmatpush1.bf16.msra.mxu0 %v2103
    %2397 = vmatprep.subr.bf16.mxu0 %v2112
    %2398 = vmatpush1.bf16.msra.mxu0 %v2111
    %2399 = vmatprep.subr.bf16.mxu0 %v2120
    %2400 = vmatpush1.bf16.msra.mxu0 %v2119
    %2401 = vmatprep.subr.bf16.mxu0 %v2128
    %2402 = vmatpush1.bf16.msra.mxu0 %v2127
    %2403 = vmatprep.subr.bf16.mxu0 %v2136
    %2404 = vmatpush1.bf16.msra.mxu0 %v2135
    %2405 = vmatprep.subr.bf16.mxu0 %v2144
    %2406 = vmatpush1.bf16.msra.mxu0 %v2143
    %2407 = vmatprep.subr.bf16.mxu0 %v2152
    %2408 = vmatpush1.bf16.msra.mxu0 %v2151
    %2409 = vmatprep.subr.bf16.mxu0 %v2160
    %2410 = vmatpush1.bf16.msra.mxu0 %v2159
    %2411 = vmatprep.subr.bf16.mxu0 %v2168
    %2412 = vmatpush1.bf16.msra.mxu0 %v2167
    %2413 = vmatprep.mubr.bf16.mxu0 %v1488
    %2414 = vmatmul.mubr.bf16.gmra.mrb[0].mxu0 %v1487
    %v2415 = vpop.f32.mrb[0].mxu0
    %v2416 = vadd.f32 %v1638, %v2415
    %v2417 = vpop.f32.mrb[0].mxu0
    %v2418 = vadd.f32 %v1642, %v2417
    %v2419 = vpop.f32.mrb[0].mxu0
    %v2420 = vpop.f32.mrb[0].mxu0
    %2421 = vdwg.mxu0
    %2422 = vmatprep.subr.bf16.mxu0 %v2050
    %2423 = vmatpush1.bf16.msra.mxu0 %v2049
    %2424 = vmatprep.subr.bf16.mxu0 %v2058
    %2425 = vmatpush1.bf16.msra.mxu0 %v2057
    %2426 = vmatprep.subr.bf16.mxu0 %v2066
    %2427 = vmatpush1.bf16.msra.mxu0 %v2065
    %2428 = vmatprep.subr.bf16.mxu0 %v2074
    %2429 = vmatpush1.bf16.msra.mxu0 %v2073
    %2430 = vmatprep.subr.bf16.mxu0 %v2082
    %2431 = vmatpush1.bf16.msra.mxu0 %v2081
    %2432 = vmatprep.subr.bf16.mxu0 %v2090
    %2433 = vmatpush1.bf16.msra.mxu0 %v2089
    %2434 = vmatprep.subr.bf16.mxu0 %v2098
    %2435 = vmatpush1.bf16.msra.mxu0 %v2097
    %2436 = vmatprep.subr.bf16.mxu0 %v2106
    %2437 = vmatpush1.bf16.msra.mxu0 %v2105
    %2438 = vmatprep.subr.bf16.mxu0 %v2114
    %2439 = vmatpush1.bf16.msra.mxu0 %v2113
    %2440 = vmatprep.subr.bf16.mxu0 %v2122
    %2441 = vmatpush1.bf16.msra.mxu0 %v2121
    %2442 = vmatprep.subr.bf16.mxu0 %v2130
    %2443 = vmatpush1.bf16.msra.mxu0 %v2129
    %2444 = vmatprep.subr.bf16.mxu0 %v2138
    %2445 = vmatpush1.bf16.msra.mxu0 %v2137
    %2446 = vmatprep.subr.bf16.mxu0 %v2146
    %2447 = vmatpush1.bf16.msra.mxu0 %v2145
    %2448 = vmatprep.subr.bf16.mxu0 %v2154
    %2449 = vmatpush1.bf16.msra.mxu0 %v2153
    %2450 = vmatprep.subr.bf16.mxu0 %v2162
    %2451 = vmatpush1.bf16.msra.mxu0 %v2161
    %2452 = vmatprep.subr.bf16.mxu0 %v2170
    %2453 = vmatpush1.bf16.msra.mxu0 %v2169
    %2454 = vmatprep.mubr.bf16.mxu0 %v1488
    %2455 = vmatmul.mubr.bf16.gmra.mrb[0].mxu0 %v1487
    %v2456 = vpop.f32.mrb[0].mxu0
    %v2457 = vadd.f32 %v1646, %v2456
    %v2458 = vpop.f32.mrb[0].mxu0
    %v2459 = vadd.f32 %v1650, %v2458
    %v2460 = vpop.f32.mrb[0].mxu0
    %v2461 = vpop.f32.mrb[0].mxu0
    %2462 = vdwg.mxu0
    %v2463 = vmax.f32 %v2334, 0.0
    %v2464 = vmax.f32 %v2336, 0.0
    %v2465 = vmax.f32 %v2375, 0.0
    %v2466 = vmax.f32 %v2377, 0.0
    %v2467 = vmax.f32 %v2416, 0.0
    %v2468 = vmax.f32 %v2418, 0.0
    %v2469 = vmax.f32 %v2457, 0.0
    %v2470 = vmax.f32 %v2459, 0.0
    %vm2471 = vcmask 74752
    %2472 = vst.msk [vmem:[#allocation2] sm:$0x3] %vm2471, %v1224
    %2473 = vst.msk [vmem:[#allocation4] sm:$0x3] %vm2471, %v1399
    %v2474 = vpack.c.bf16 %v2463, %v2463
    %v2475 = vpack.c.bf16 %v2464, %v2464
    %v2476 = vpack.c.bf16 %v2465, %v2465
    %v2477 = vpack.c.bf16 %v2466, %v2466
    %v2478 = vpack.c.bf16 %v2467, %v2467
    %v2479 = vpack.c.bf16 %v2468, %v2468
    %v2480 = vpack.c.bf16 %v2469, %v2469
    %v2481 = vpack.c.bf16 %v2470, %v2470
    %v2490 = vcombine.low %v2474, %v2475
    %v2491 = vcombine.low %v2476, %v2477
    %v2492 = vcombine.low %v2478, %v2479
    %v2493 = vcombine.low %v2480, %v2481
    %v2495 = vunpack.c.l.s4 1966171168
    %v2496 = vunpack.c.0.s8 %v2495
    %v2497 = vlaneseq
    %v2498 = vshrl.u32 %v2497, 7
    %v2499 = vsub.s32 %v2496, %v2498
    %v2500 = vrot.slane %v2490, %v2499
    %v2502 = vunpack.c.l.s4 1966171168
    %v2503 = vunpack.c.0.s8 %v2502
    %v2504 = vlaneseq
    %v2505 = vshrl.u32 %v2504, 7
    %v2506 = vsub.s32 %v2503, %v2505
    %v2507 = vrot.slane %v2491, %v2506
    %v2509 = vunpack.c.l.s4 1966171168
    %v2510 = vunpack.c.0.s8 %v2509
    %v2511 = vlaneseq
    %v2512 = vshrl.u32 %v2511, 7
    %v2513 = vsub.s32 %v2510, %v2512
    %v2514 = vrot.slane %v2492, %v2513
    %v2516 = vunpack.c.l.s4 1966171168
    %v2517 = vunpack.c.0.s8 %v2516
    %v2518 = vlaneseq
    %v2519 = vshrl.u32 %v2518, 7
    %v2520 = vsub.s32 %v2517, %v2519
    %v2521 = vrot.slane %v2493, %v2520
    %v2522 = vcombine.low %v2500, %v2507
    %v2523 = vcombine.low %v2514, %v2521
    %v2525 = vunpack.c.l.s4 1966171168
    %v2526 = vunpack.c.0.s8 %v2525
    %v2527 = vlaneseq
    %v2528 = vshrl.u32 %v2527, 7
    %v2529 = vsub.s32 %v2526, %v2528
    %v2530 = vrot.slane %v2522, %v2529
    %v2532 = vunpack.c.l.s4 1966171168
    %v2533 = vunpack.c.0.s8 %v2532
    %v2534 = vlaneseq
    %v2535 = vshrl.u32 %v2534, 7
    %v2536 = vsub.s32 %v2533, %v2535
    %v2537 = vrot.slane %v2523, %v2536
    %v2538 = vcombine.low %v2530, %v2537
    %2540 = vst [vmem:[%s14] sm:$0xff] %v2538
    // Predicated region
    $region50: #{vae_forward.10} parent=1 // pred_check
      _
    $region51: #{vae_forward.10} parent=1 // pred_check_branch
      %2542 = sbr.rel (0) target = $region53
    $region52: #{vae_forward.10} parent=1 // pred_region
      %s2544 = ssub.s32 32, 32
      %2545 = vsyncadd [#allocation3], %s2544
      %s2547 = sshll.u32 [#allocation2], 4
      %s2548 = int_to_ptr.vmem [resolvable:$true] %s2547
      %2550 = dma.vmem_to_hbm [thread:$0]  %s2548, 32, %s12, [#allocation3]
    $region53: #{vae_forward.10} parent=1 // pred_fallthru
      _
    // Predicated region
    $region54: #{vae_forward.10} parent=1 // pred_check
      _
    $region55: #{vae_forward.10} parent=1 // pred_check_branch
      %2552 = sbr.rel (0) target = $region57
    $region56: #{vae_forward.10} parent=1 // pred_region
      %s2554 = ssub.s32 32, 32
      %2555 = vsyncadd [#allocation5], %s2554
      %s2557 = sshll.u32 [#allocation4], 4
      %s2558 = int_to_ptr.vmem [resolvable:$true] %s2557
      %2560 = dma.vmem_to_hbm [thread:$0]  %s2558, 32, %s13, [#allocation5]
    $region57: #{vae_forward.10} parent=1 // pred_fallthru
      _
    // Predicated region
    $region58: #{vae_forward.10} parent=1 // pred_check
      _
    $region59: #{vae_forward.10} parent=1 // pred_check_branch
      %2562 = sbr.rel (0) target = $region61
    $region60: #{vae_forward.10} parent=1 // pred_region
      _
    $region61: #{vae_forward.10} parent=1 // pred_fallthru
      _
    // Predicated region
    $region62: #{vae_forward.10} parent=1 // pred_check
      _
    $region63: #{vae_forward.10} parent=1 // pred_check_branch
      %2564 = sbr.rel (0) target = $region65
    $region64: #{vae_forward.10} parent=1 // pred_region
      %2565 = dma.done [#allocation3], 32
    $region65: #{vae_forward.10} parent=1 // pred_fallthru
      _
    // Predicated region
    $region66: #{vae_forward.10} parent=1 // pred_check
      _
    $region67: #{vae_forward.10} parent=1 // pred_check_branch
      %2567 = sbr.rel (0) target = $region69
    $region68: #{vae_forward.10} parent=1 // pred_region
      %2568 = dma.done [#allocation5], 32
    $region69: #{vae_forward.10} parent=1 // pred_fallthru
      _
    // Predicated region
    $region70: #{vae_forward.10} parent=1 // pred_check
      _
    $region71: #{vae_forward.10} parent=1 // pred_check_branch
      %2570 = sbr.rel (0) target = $region73
    $region72: #{vae_forward.10} parent=1 // pred_region
      _
    $region73: #{vae_forward.10} parent=1 // pred_fallthru
      _
    %2571 = vsyncpa [#allocation3], 1
    %2572 = vsyncpa [#allocation5], 1

// kernel: vae_forward.11
$region0: #{vae_forward.11}
  #allocation0 [shape = 'u32[]', space=smem, size = 0x4, offset = 0x4, fixed_abs, tag = 'smem constant byte address 0x4 - core index']
  #allocation1 [shape = 'u32[144,128]{1,0:T(1,128)}', space=vmem, size = 0x12000, scoped, tag = 'internal scratch']
  %s0 = inlined_call_operand.vmem [shape: bf16[128,1024], index: 0, kind: input, shape index: {}]
  %s1 = inlined_call_operand.vmem [shape: bf16[1024,32], index: 1, kind: input, shape index: {}]
  %s2 = inlined_call_operand.vmem [shape: f32[1,32], index: 2, kind: input, shape index: {}]
  %s3 = inlined_call_operand.vmem [shape: bf16[128,32], index: 3, kind: output, shape index: {}]
  %s4 = sld [smem:[#allocation0]]
  $region45: #{vae_forward.11} parent=0
    _
  %s6 = ssub.s32 1, %s4
  %s7 = scalar_select 0, %s6, %s4
  loop: start=0, step=1, limit=4
  $region2: #{vae_forward.11} parent=0 // loop_pre_header
    _
  $region3: #{vae_forward.11} parent=0 // loop_header
    %s9 = sphi 0, %s13
    %p10 = scmp.ge.s32.totalorder %s9, 4
    %s19 = sphi 0, %s21
    %s22 = sphi 0, %s19
    %s23 = sphi 0, %s22
    %s39 = sphi 0, %s23
    %s43 = sphi 0, %s43
    %s45 = sphi 0, %s43
    %s46 = sphi 0, %s45
    %s60 = sphi 0, %s46
    %s64 = sphi 0, %s64
    %s66 = sphi 0, %s64
    %s67 = sphi 0, %s66
    %s81 = sphi 0, %s67
    %s87 = sphi 0, %s89
    %s90 = sphi 0, %s87
    %s91 = sphi 0, %s90
    %s107 = sphi 0, %s91
  $region4: #{vae_forward.11} parent=0 // loop_header_branch
    %12 = sbr.rel (%p10) target = $region8
  $region5: #{vae_forward.11} parent=0 // loop_body
    %s14 = ssub.s32 %s9, 1
    %s15 = ssub.s32 %s9, 2
    %s16 = sadd.s32 %s9, 1
    %s17 = ssub.s32 %s9, %s16
    %p18 = scmp.eq.s32.totalorder %s17, 0
    %s20 = sadd.s32 %s19, 1
    %s21 = scalar_select %p18, %s19, %s20
    %p24 = pneg %p18
    %p25 = scmp.eq.s32.totalorder %s9, 1
    %p26 = por %p24, %p25
    %p27 = scmp.ne.s32.totalorder %s19, %s22
    %p28 = scmp.eq.s32.totalorder %s9, 0
    %p29 = por %p27, %p28
    %p30 = scmp.ne.s32.totalorder %s19, %s22
    %p31 = scmp.eq.s32.totalorder %s14, 1
    %p32 = por %p30, %p31
    %p33 = scmp.ne.s32.totalorder %s22, %s23
    %p34 = scmp.eq.s32.totalorder %s14, 0
    %p35 = por %p33, %p34
    %p36 = scmp.ne.s32.totalorder %s22, %s23
    %p37 = scmp.eq.s32.totalorder %s15, 1
    %p38 = por %p36, %p37
    %p40 = scmp.ne.s32.totalorder %s23, %s39
    %p41 = scmp.eq.s32.totalorder %s15, 0
    %p42 = por %p40, %p41
    %s44 = sadd.s32 %s43, 1
    %p47 = scmp.eq.s32.totalorder %s9, 1
    %p48 = scmp.ne.s32.totalorder %s43, %s45
    %p49 = scmp.eq.s32.totalorder %s9, 0
    %p50 = por %p48, %p49
    %p51 = scmp.ne.s32.totalorder %s43, %s45
    %p52 = scmp.eq.s32.totalorder %s14, 1
    %p53 = por %p51, %p52
    %p54 = scmp.ne.s32.totalorder %s45, %s46
    %p55 = scmp.eq.s32.totalorder %s14, 0
    %p56 = por %p54, %p55
    %p57 = scmp.ne.s32.totalorder %s45, %s46
    %p58 = scmp.eq.s32.totalorder %s15, 1
    %p59 = por %p57, %p58
    %p61 = scmp.ne.s32.totalorder %s46, %s60
    %p62 = scmp.eq.s32.totalorder %s15, 0
    %p63 = por %p61, %p62
    %s65 = sadd.s32 %s64, 1
    %p68 = scmp.eq.s32.totalorder %s9, 1
    %p69 = scmp.ne.s32.totalorder %s64, %s66
    %p70 = scmp.eq.s32.totalorder %s9, 0
    %p71 = por %p69, %p70
    %p72 = scmp.ne.s32.totalorder %s64, %s66
    %p73 = scmp.eq.s32.totalorder %s14, 1
    %p74 = por %p72, %p73
    %p75 = scmp.ne.s32.totalorder %s66, %s67
    %p76 = scmp.eq.s32.totalorder %s14, 0
    %p77 = por %p75, %p76
    %p78 = scmp.ne.s32.totalorder %s66, %s67
    %p79 = scmp.eq.s32.totalorder %s15, 1
    %p80 = por %p78, %p79
    %p82 = scmp.ne.s32.totalorder %s67, %s81
    %p83 = scmp.eq.s32.totalorder %s15, 0
    %p84 = por %p82, %p83
    %s85 = ssub.s32 %s9, %s16
    %p86 = scmp.eq.s32.totalorder %s85, 0
    %s88 = sadd.s32 %s87, 1
    %s89 = scalar_select %p86, %s87, %s88
    %p92 = pneg %p86
    %p93 = scmp.eq.s32.totalorder %s9, 1
    %p94 = por %p92, %p93
    %p95 = scmp.ne.s32.totalorder %s87, %s90
    %p96 = scmp.eq.s32.totalorder %s9, 0
    %p97 = por %p95, %p96
    %p98 = scmp.ne.s32.totalorder %s87, %s90
    %p99 = scmp.eq.s32.totalorder %s14, 1
    %p100 = por %p98, %p99
    %p101 = scmp.ne.s32.totalorder %s90, %s91
    %p102 = scmp.eq.s32.totalorder %s14, 0
    %p103 = por %p101, %p102
    %p104 = scmp.ne.s32.totalorder %s90, %s91
    %p105 = scmp.eq.s32.totalorder %s15, 1
    %p106 = por %p104, %p105
    %p108 = scmp.ne.s32.totalorder %s91, %s107
    %p109 = scmp.eq.s32.totalorder %s15, 0
    %p110 = por %p108, %p109
    %p111 = scmp.le.s32.totalorder 1, %s9
    %p112 = scmp.lt.s32.totalorder %s9, 3
    %p113 = pnand %p111, %p112
    %p114 = pneg %p113
    // Predicated region
    $region9: #{vae_forward.11} parent=5 // pred_check
      _
    $region10: #{vae_forward.11} parent=5 // pred_check_branch
      %116 = sbr.rel (%p113) target = $region12
    $region11: #{vae_forward.11} parent=5 // pred_region
      %s117 = ssub.s32 %s9, 1
      // Predicated region
      $region13: #{vae_forward.11} parent=11 // pred_check
        %p118 = pneg %p56
      $region14: #{vae_forward.11} parent=11 // pred_check_branch
        %120 = sbr.rel (%p118) target = $region16
      $region15: #{vae_forward.11} parent=11 // pred_region
        _
      $region16: #{vae_forward.11} parent=11 // pred_fallthru
        _
      // Predicated region
      $region17: #{vae_forward.11} parent=11 // pred_check
        %p121 = pneg %p77
      $region18: #{vae_forward.11} parent=11 // pred_check_branch
        %123 = sbr.rel (%p121) target = $region20
      $region19: #{vae_forward.11} parent=11 // pred_region
        _
      $region20: #{vae_forward.11} parent=11 // pred_fallthru
        _
    $region12: #{vae_forward.11} parent=5 // pred_fallthru
      _
    %p124 = scmp.lt.s32.totalorder %s9, 2
    // Predicated region
    $region21: #{vae_forward.11} parent=5 // pred_check
      %p125 = pneg %p124
    $region22: #{vae_forward.11} parent=5 // pred_check_branch
      %127 = sbr.rel (%p125) target = $region24
    $region23: #{vae_forward.11} parent=5 // pred_region
      // Predicated region
      $region25: #{vae_forward.11} parent=23 // pred_check
        %p128 = pneg %p29
      $region26: #{vae_forward.11} parent=23 // pred_check_branch
        %130 = sbr.rel (%p128) target = $region28
      $region27: #{vae_forward.11} parent=23 // pred_region
        %s131 = smul.u32 8, %s9
        %p132 = scmp.lt.s32.totalorder %s131, 15
        %s133 = scalar_select %p132, %s131, 15
        %s134 = smul.addr %s133, 8
        %s135 = smul.addr %s134, 4
        %s136 = scalar_lea.vmem %s0, %s135
        %s137 = smul.u32 8, %s9
      $region28: #{vae_forward.11} parent=23 // pred_fallthru
        _
    $region24: #{vae_forward.11} parent=5 // pred_fallthru
      _
    %p138 = scmp.le.s32.totalorder 1, %s9
    %p139 = scmp.lt.s32.totalorder %s9, 3
    %p140 = pnand %p138, %p139
    %p141 = pneg %p140
    // Predicated region
    $region29: #{vae_forward.11} parent=5 // pred_check
      _
    $region30: #{vae_forward.11} parent=5 // pred_check_branch
      %143 = sbr.rel (%p140) target = $region32
    $region31: #{vae_forward.11} parent=5 // pred_region
      %s144 = ssub.s32 %s9, 1
      %s145 = smul.u32 8, %s14
      %p146 = scmp.lt.s32.totalorder %s145, 15
      %s147 = scalar_select %p146, %s145, 15
      %s148 = smul.addr %s147, 8
      %s149 = smul.addr %s148, 4
      %s150 = scalar_lea.vmem %s0, %s149
      %p151 = pneg %p35
      %p152 = pneg %p32
      %p153 = pneg %p56
      %p154 = pneg %p53
      %p155 = pneg %p77
      %p156 = pneg %p74
      %p157 = pneg %p103
      %p158 = pneg %p100
      %s159 = smul.u32 8, %s14
      %p160 = scmp.lt.s32.totalorder %s159, 15
      %s161 = scalar_select %p160, %s159, 15
      %s162 = smul.addr %s161, 4
      %s163 = scalar_lea.vmem %s3, %s162
      %s164 = smul.u32 8, %s14
      %p165 = scmp.lt.s32.totalorder %s164, 15
      %s166 = scalar_select %p165, %s164, 15
      %s167 = smul.addr %s166, 8
      %s168 = smul.addr %s167, 4
      %s169 = scalar_lea.vmem %s0, %s168
      %s170 = smul.u32 8, %s14
      %s171 = smul.u32 8, %s14
      %p172 = scmp.lt.s32.totalorder %s171, 15
      %s173 = scalar_select %p172, %s171, 15
      %s174 = smul.addr %s173, 4
      %s175 = scalar_lea.vmem %s3, %s174
      %s176 = smul.u32 8, %s14
      %v178 = vld [vmem:[%s169] sm:$0xff]
      %v179 = vld [vmem:[%s169 + $0x8] sm:$0xff]
      %v180 = vld [vmem:[%s169 + $0x10] sm:$0xff]
      %v181 = vld [vmem:[%s169 + $0x18] sm:$0xff]
      %v182 = vld [vmem:[%s169 + $0x20] sm:$0xff]
      %v183 = vld [vmem:[%s169 + $0x28] sm:$0xff]
      %v184 = vld [vmem:[%s169 + $0x30] sm:$0xff]
      %v185 = vld [vmem:[%s169 + $0x38] sm:$0xff]
      %v186 = vld [vmem:[%s169 + $0x40] sm:$0xff]
      %v187 = vld [vmem:[%s169 + $0x48] sm:$0xff]
      %v188 = vld [vmem:[%s169 + $0x50] sm:$0xff]
      %v189 = vld [vmem:[%s169 + $0x58] sm:$0xff]
      %v190 = vld [vmem:[%s169 + $0x60] sm:$0xff]
      %v191 = vld [vmem:[%s169 + $0x68] sm:$0xff]
      %v192 = vld [vmem:[%s169 + $0x70] sm:$0xff]
      %v193 = vld [vmem:[%s169 + $0x78] sm:$0xff]
      %v194 = vld [vmem:[%s169 + $0x80] sm:$0xff]
      %v195 = vld [vmem:[%s169 + $0x88] sm:$0xff]
      %v196 = vld [vmem:[%s169 + $0x90] sm:$0xff]
      %v197 = vld [vmem:[%s169 + $0x98] sm:$0xff]
      %v198 = vld [vmem:[%s169 + $0xa0] sm:$0xff]
      %v199 = vld [vmem:[%s169 + $0xa8] sm:$0xff]
      %v200 = vld [vmem:[%s169 + $0xb0] sm:$0xff]
      %v201 = vld [vmem:[%s169 + $0xb8] sm:$0xff]
      %v202 = vld [vmem:[%s169 + $0xc0] sm:$0xff]
      %v203 = vld [vmem:[%s169 + $0xc8] sm:$0xff]
      %v204 = vld [vmem:[%s169 + $0xd0] sm:$0xff]
      %v205 = vld [vmem:[%s169 + $0xd8] sm:$0xff]
      %v206 = vld [vmem:[%s169 + $0xe0] sm:$0xff]
      %v207 = vld [vmem:[%s169 + $0xe8] sm:$0xff]
      %v208 = vld [vmem:[%s169 + $0xf0] sm:$0xff]
      %v209 = vld [vmem:[%s169 + $0xf8] sm:$0xff]
      %v210 = vld [vmem:[%s1] sm:$0xf]
      %v211 = vld [vmem:[%s1 + $0x4] sm:$0xf]
      %v212 = vld [vmem:[%s1 + $0x8] sm:$0xf]
      %v213 = vld [vmem:[%s1 + $0xc] sm:$0xf]
      %v214 = vld [vmem:[%s1 + $0x10] sm:$0xf]
      %v215 = vld [vmem:[%s1 + $0x14] sm:$0xf]
      %v216 = vld [vmem:[%s1 + $0x18] sm:$0xf]
      %v217 = vld [vmem:[%s1 + $0x1c] sm:$0xf]
      %v218 = vld [vmem:[%s1 + $0x20] sm:$0xf]
      %v219 = vld [vmem:[%s1 + $0x24] sm:$0xf]
      %v220 = vld [vmem:[%s1 + $0x28] sm:$0xf]
      %v221 = vld [vmem:[%s1 + $0x2c] sm:$0xf]
      %v222 = vld [vmem:[%s1 + $0x30] sm:$0xf]
      %v223 = vld [vmem:[%s1 + $0x34] sm:$0xf]
      %v224 = vld [vmem:[%s1 + $0x38] sm:$0xf]
      %v225 = vld [vmem:[%s1 + $0x3c] sm:$0xf]
      %v226 = vld [vmem:[%s1 + $0x40] sm:$0xf]
      %v227 = vld [vmem:[%s1 + $0x44] sm:$0xf]
      %v228 = vld [vmem:[%s1 + $0x48] sm:$0xf]
      %v229 = vld [vmem:[%s1 + $0x4c] sm:$0xf]
      %v230 = vld [vmem:[%s1 + $0x50] sm:$0xf]
      %v231 = vld [vmem:[%s1 + $0x54] sm:$0xf]
      %v232 = vld [vmem:[%s1 + $0x58] sm:$0xf]
      %v233 = vld [vmem:[%s1 + $0x5c] sm:$0xf]
      %v234 = vld [vmem:[%s1 + $0x60] sm:$0xf]
      %v235 = vld [vmem:[%s1 + $0x64] sm:$0xf]
      %v236 = vld [vmem:[%s1 + $0x68] sm:$0xf]
      %v237 = vld [vmem:[%s1 + $0x6c] sm:$0xf]
      %v238 = vld [vmem:[%s1 + $0x70] sm:$0xf]
      %v239 = vld [vmem:[%s1 + $0x74] sm:$0xf]
      %v240 = vld [vmem:[%s1 + $0x78] sm:$0xf]
      %v241 = vld [vmem:[%s1 + $0x7c] sm:$0xf]
      %v242 = vld [vmem:[%s1 + $0x80] sm:$0xf]
      %v243 = vld [vmem:[%s1 + $0x84] sm:$0xf]
      %v244 = vld [vmem:[%s1 + $0x88] sm:$0xf]
      %v245 = vld [vmem:[%s1 + $0x8c] sm:$0xf]
      %v246 = vld [vmem:[%s1 + $0x90] sm:$0xf]
      %v247 = vld [vmem:[%s1 + $0x94] sm:$0xf]
      %v248 = vld [vmem:[%s1 + $0x98] sm:$0xf]
      %v249 = vld [vmem:[%s1 + $0x9c] sm:$0xf]
      %v250 = vld [vmem:[%s1 + $0xa0] sm:$0xf]
      %v251 = vld [vmem:[%s1 + $0xa4] sm:$0xf]
      %v252 = vld [vmem:[%s1 + $0xa8] sm:$0xf]
      %v253 = vld [vmem:[%s1 + $0xac] sm:$0xf]
      %v254 = vld [vmem:[%s1 + $0xb0] sm:$0xf]
      %v255 = vld [vmem:[%s1 + $0xb4] sm:$0xf]
      %v256 = vld [vmem:[%s1 + $0xb8] sm:$0xf]
      %v257 = vld [vmem:[%s1 + $0xbc] sm:$0xf]
      %v258 = vld [vmem:[%s1 + $0xc0] sm:$0xf]
      %v259 = vld [vmem:[%s1 + $0xc4] sm:$0xf]
      %v260 = vld [vmem:[%s1 + $0xc8] sm:$0xf]
      %v261 = vld [vmem:[%s1 + $0xcc] sm:$0xf]
      %v262 = vld [vmem:[%s1 + $0xd0] sm:$0xf]
      %v263 = vld [vmem:[%s1 + $0xd4] sm:$0xf]
      %v264 = vld [vmem:[%s1 + $0xd8] sm:$0xf]
      %v265 = vld [vmem:[%s1 + $0xdc] sm:$0xf]
      %v266 = vld [vmem:[%s1 + $0xe0] sm:$0xf]
      %v267 = vld [vmem:[%s1 + $0xe4] sm:$0xf]
      %v268 = vld [vmem:[%s1 + $0xe8] sm:$0xf]
      %v269 = vld [vmem:[%s1 + $0xec] sm:$0xf]
      %v270 = vld [vmem:[%s1 + $0xf0] sm:$0xf]
      %v271 = vld [vmem:[%s1 + $0xf4] sm:$0xf]
      %v272 = vld [vmem:[%s1 + $0xf8] sm:$0xf]
      %v273 = vld [vmem:[%s1 + $0xfc] sm:$0xf]
      %v274 = vld [vmem:[%s1 + $0x100] sm:$0xf]
      %v275 = vld [vmem:[%s1 + $0x104] sm:$0xf]
      %v276 = vld [vmem:[%s1 + $0x108] sm:$0xf]
      %v277 = vld [vmem:[%s1 + $0x10c] sm:$0xf]
      %v278 = vld [vmem:[%s1 + $0x110] sm:$0xf]
      %v279 = vld [vmem:[%s1 + $0x114] sm:$0xf]
      %v280 = vld [vmem:[%s1 + $0x118] sm:$0xf]
      %v281 = vld [vmem:[%s1 + $0x11c] sm:$0xf]
      %v282 = vld [vmem:[%s1 + $0x120] sm:$0xf]
      %v283 = vld [vmem:[%s1 + $0x124] sm:$0xf]
      %v284 = vld [vmem:[%s1 + $0x128] sm:$0xf]
      %v285 = vld [vmem:[%s1 + $0x12c] sm:$0xf]
      %v286 = vld [vmem:[%s1 + $0x130] sm:$0xf]
      %v287 = vld [vmem:[%s1 + $0x134] sm:$0xf]
      %v288 = vld [vmem:[%s1 + $0x138] sm:$0xf]
      %v289 = vld [vmem:[%s1 + $0x13c] sm:$0xf]
      %v290 = vld [vmem:[%s1 + $0x140] sm:$0xf]
      %v291 = vld [vmem:[%s1 + $0x144] sm:$0xf]
      %v292 = vld [vmem:[%s1 + $0x148] sm:$0xf]
      %v293 = vld [vmem:[%s1 + $0x14c] sm:$0xf]
      %v294 = vld [vmem:[%s1 + $0x150] sm:$0xf]
      %v295 = vld [vmem:[%s1 + $0x154] sm:$0xf]
      %v296 = vld [vmem:[%s1 + $0x158] sm:$0xf]
      %v297 = vld [vmem:[%s1 + $0x15c] sm:$0xf]
      %v298 = vld [vmem:[%s1 + $0x160] sm:$0xf]
      %v299 = vld [vmem:[%s1 + $0x164] sm:$0xf]
      %v300 = vld [vmem:[%s1 + $0x168] sm:$0xf]
      %v301 = vld [vmem:[%s1 + $0x16c] sm:$0xf]
      %v302 = vld [vmem:[%s1 + $0x170] sm:$0xf]
      %v303 = vld [vmem:[%s1 + $0x174] sm:$0xf]
      %v304 = vld [vmem:[%s1 + $0x178] sm:$0xf]
      %v305 = vld [vmem:[%s1 + $0x17c] sm:$0xf]
      %v306 = vld [vmem:[%s1 + $0x180] sm:$0xf]
      %v307 = vld [vmem:[%s1 + $0x184] sm:$0xf]
      %v308 = vld [vmem:[%s1 + $0x188] sm:$0xf]
      %v309 = vld [vmem:[%s1 + $0x18c] sm:$0xf]
      %v310 = vld [vmem:[%s1 + $0x190] sm:$0xf]
      %v311 = vld [vmem:[%s1 + $0x194] sm:$0xf]
      %v312 = vld [vmem:[%s1 + $0x198] sm:$0xf]
      %v313 = vld [vmem:[%s1 + $0x19c] sm:$0xf]
      %v314 = vld [vmem:[%s1 + $0x1a0] sm:$0xf]
      %v315 = vld [vmem:[%s1 + $0x1a4] sm:$0xf]
      %v316 = vld [vmem:[%s1 + $0x1a8] sm:$0xf]
      %v317 = vld [vmem:[%s1 + $0x1ac] sm:$0xf]
      %v318 = vld [vmem:[%s1 + $0x1b0] sm:$0xf]
      %v319 = vld [vmem:[%s1 + $0x1b4] sm:$0xf]
      %v320 = vld [vmem:[%s1 + $0x1b8] sm:$0xf]
      %v321 = vld [vmem:[%s1 + $0x1bc] sm:$0xf]
      %v322 = vld [vmem:[%s1 + $0x1c0] sm:$0xf]
      %v323 = vld [vmem:[%s1 + $0x1c4] sm:$0xf]
      %v324 = vld [vmem:[%s1 + $0x1c8] sm:$0xf]
      %v325 = vld [vmem:[%s1 + $0x1cc] sm:$0xf]
      %v326 = vld [vmem:[%s1 + $0x1d0] sm:$0xf]
      %v327 = vld [vmem:[%s1 + $0x1d4] sm:$0xf]
      %v328 = vld [vmem:[%s1 + $0x1d8] sm:$0xf]
      %v329 = vld [vmem:[%s1 + $0x1dc] sm:$0xf]
      %v330 = vld [vmem:[%s1 + $0x1e0] sm:$0xf]
      %v331 = vld [vmem:[%s1 + $0x1e4] sm:$0xf]
      %v332 = vld [vmem:[%s1 + $0x1e8] sm:$0xf]
      %v333 = vld [vmem:[%s1 + $0x1ec] sm:$0xf]
      %v334 = vld [vmem:[%s1 + $0x1f0] sm:$0xf]
      %v335 = vld [vmem:[%s1 + $0x1f4] sm:$0xf]
      %v336 = vld [vmem:[%s1 + $0x1f8] sm:$0xf]
      %v337 = vld [vmem:[%s1 + $0x1fc] sm:$0xf]
      %v338 = vld [vmem:[%s2] sm:$0x1]
      %v340 = vlaneseq
      %v341 = vshrl.u32 %v340, 7
      %v342 = vsub.s32 0, %v341
      %v343 = vrot.slane %v338, %v342
      %v377 = vunpack.c.l.b16 %v178
      %v378 = vunpack.c.h.b16 %v178
      %v379 = vunpack.c.l.b16 %v179
      %v380 = vunpack.c.h.b16 %v179
      %v381 = vunpack.c.l.b16 %v180
      %v382 = vunpack.c.h.b16 %v180
      %v383 = vunpack.c.l.b16 %v181
      %v384 = vunpack.c.h.b16 %v181
      %v385 = vunpack.c.l.b16 %v182
      %v386 = vunpack.c.h.b16 %v182
      %v387 = vunpack.c.l.b16 %v183
      %v388 = vunpack.c.h.b16 %v183
      %v389 = vunpack.c.l.b16 %v184
      %v390 = vunpack.c.h.b16 %v184
      %v391 = vunpack.c.l.b16 %v185
      %v392 = vunpack.c.h.b16 %v185
      %v393 = vunpack.c.l.b16 %v186
      %v394 = vunpack.c.h.b16 %v186
      %v395 = vunpack.c.l.b16 %v187
      %v396 = vunpack.c.h.b16 %v187
      %v397 = vunpack.c.l.b16 %v188
      %v398 = vunpack.c.h.b16 %v188
      %v399 = vunpack.c.l.b16 %v189
      %v400 = vunpack.c.h.b16 %v189
      %v401 = vunpack.c.l.b16 %v190
      %v402 = vunpack.c.h.b16 %v190
      %v403 = vunpack.c.l.b16 %v191
      %v404 = vunpack.c.h.b16 %v191
      %v405 = vunpack.c.l.b16 %v192
      %v406 = vunpack.c.h.b16 %v192
      %v407 = vunpack.c.l.b16 %v193
      %v408 = vunpack.c.h.b16 %v193
      %v409 = vunpack.c.l.b16 %v194
      %v410 = vunpack.c.h.b16 %v194
      %v411 = vunpack.c.l.b16 %v195
      %v412 = vunpack.c.h.b16 %v195
      %v413 = vunpack.c.l.b16 %v196
      %v414 = vunpack.c.h.b16 %v196
      %v415 = vunpack.c.l.b16 %v197
      %v416 = vunpack.c.h.b16 %v197
      %v417 = vunpack.c.l.b16 %v198
      %v418 = vunpack.c.h.b16 %v198
      %v419 = vunpack.c.l.b16 %v199
      %v420 = vunpack.c.h.b16 %v199
      %v421 = vunpack.c.l.b16 %v200
      %v422 = vunpack.c.h.b16 %v200
      %v423 = vunpack.c.l.b16 %v201
      %v424 = vunpack.c.h.b16 %v201
      %v425 = vunpack.c.l.b16 %v202
      %v426 = vunpack.c.h.b16 %v202
      %v427 = vunpack.c.l.b16 %v203
      %v428 = vunpack.c.h.b16 %v203
      %v429 = vunpack.c.l.b16 %v204
      %v430 = vunpack.c.h.b16 %v204
      %v431 = vunpack.c.l.b16 %v205
      %v432 = vunpack.c.h.b16 %v205
      %v433 = vunpack.c.l.b16 %v206
      %v434 = vunpack.c.h.b16 %v206
      %v435 = vunpack.c.l.b16 %v207
      %v436 = vunpack.c.h.b16 %v207
      %v437 = vunpack.c.l.b16 %v208
      %v438 = vunpack.c.h.b16 %v208
      %v439 = vunpack.c.l.b16 %v209
      %v440 = vunpack.c.h.b16 %v209
      %v441 = vpack.c.b16 %v385, %v377
      %v442 = vpack.c.b16 %v386, %v378
      %v443 = vpack.c.b16 %v387, %v379
      %v444 = vpack.c.b16 %v388, %v380
      %v445 = vpack.c.b16 %v389, %v381
      %v446 = vpack.c.b16 %v390, %v382
      %v447 = vpack.c.b16 %v391, %v383
      %v448 = vpack.c.b16 %v392, %v384
      %v449 = vpack.c.b16 %v401, %v393
      %v450 = vpack.c.b16 %v402, %v394
      %v451 = vpack.c.b16 %v403, %v395
      %v452 = vpack.c.b16 %v404, %v396
      %v453 = vpack.c.b16 %v405, %v397
      %v454 = vpack.c.b16 %v406, %v398
      %v455 = vpack.c.b16 %v407, %v399
      %v456 = vpack.c.b16 %v408, %v400
      %v457 = vpack.c.b16 %v417, %v409
      %v458 = vpack.c.b16 %v418, %v410
      %v459 = vpack.c.b16 %v419, %v411
      %v460 = vpack.c.b16 %v420, %v412
      %v461 = vpack.c.b16 %v421, %v413
      %v462 = vpack.c.b16 %v422, %v414
      %v463 = vpack.c.b16 %v423, %v415
      %v464 = vpack.c.b16 %v424, %v416
      %v465 = vpack.c.b16 %v433, %v425
      %v466 = vpack.c.b16 %v434, %v426
      %v467 = vpack.c.b16 %v435, %v427
      %v468 = vpack.c.b16 %v436, %v428
      %v469 = vpack.c.b16 %v437, %v429
      %v470 = vpack.c.b16 %v438, %v430
      %v471 = vpack.c.b16 %v439, %v431
      %v472 = vpack.c.b16 %v440, %v432
      %v633 = vunpack.c.l.b16 %v210
      %v634 = vunpack.c.l.b16 %v211
      %v635 = vunpack.c.l.b16 %v212
      %v636 = vunpack.c.l.b16 %v213
      %v637 = vunpack.c.l.b16 %v214
      %v638 = vunpack.c.l.b16 %v215
      %v639 = vunpack.c.l.b16 %v216
      %v640 = vunpack.c.l.b16 %v217
      %v641 = vunpack.c.l.b16 %v218
      %v642 = vunpack.c.l.b16 %v219
      %v643 = vunpack.c.l.b16 %v220
      %v644 = vunpack.c.l.b16 %v221
      %v645 = vunpack.c.l.b16 %v222
      %v646 = vunpack.c.l.b16 %v223
      %v647 = vunpack.c.l.b16 %v224
      %v648 = vunpack.c.l.b16 %v225
      %v649 = vunpack.c.l.b16 %v226
      %v650 = vunpack.c.l.b16 %v227
      %v651 = vunpack.c.l.b16 %v228
      %v652 = vunpack.c.l.b16 %v229
      %v653 = vunpack.c.l.b16 %v230
      %v654 = vunpack.c.l.b16 %v231
      %v655 = vunpack.c.l.b16 %v232
      %v656 = vunpack.c.l.b16 %v233
      %v657 = vunpack.c.l.b16 %v234
      %v658 = vunpack.c.l.b16 %v235
      %v659 = vunpack.c.l.b16 %v236
      %v660 = vunpack.c.l.b16 %v237
      %v661 = vunpack.c.l.b16 %v238
      %v662 = vunpack.c.l.b16 %v239
      %v663 = vunpack.c.l.b16 %v240
      %v664 = vunpack.c.l.b16 %v241
      %v665 = vunpack.c.l.b16 %v242
      %v666 = vunpack.c.l.b16 %v243
      %v667 = vunpack.c.l.b16 %v244
      %v668 = vunpack.c.l.b16 %v245
      %v669 = vunpack.c.l.b16 %v246
      %v670 = vunpack.c.l.b16 %v247
      %v671 = vunpack.c.l.b16 %v248
      %v672 = vunpack.c.l.b16 %v249
      %v673 = vunpack.c.l.b16 %v250
      %v674 = vunpack.c.l.b16 %v251
      %v675 = vunpack.c.l.b16 %v252
      %v676 = vunpack.c.l.b16 %v253
      %v677 = vunpack.c.l.b16 %v254
      %v678 = vunpack.c.l.b16 %v255
      %v679 = vunpack.c.l.b16 %v256
      %v680 = vunpack.c.l.b16 %v257
      %v681 = vunpack.c.l.b16 %v258
      %v682 = vunpack.c.l.b16 %v259
      %v683 = vunpack.c.l.b16 %v260
      %v684 = vunpack.c.l.b16 %v261
      %v685 = vunpack.c.l.b16 %v262
      %v686 = vunpack.c.l.b16 %v263
      %v687 = vunpack.c.l.b16 %v264
      %v688 = vunpack.c.l.b16 %v265
      %v689 = vunpack.c.l.b16 %v266
      %v690 = vunpack.c.l.b16 %v267
      %v691 = vunpack.c.l.b16 %v268
      %v692 = vunpack.c.l.b16 %v269
      %v693 = vunpack.c.l.b16 %v270
      %v694 = vunpack.c.l.b16 %v271
      %v695 = vunpack.c.l.b16 %v272
      %v696 = vunpack.c.l.b16 %v273
      %v697 = vunpack.c.l.b16 %v274
      %v698 = vunpack.c.l.b16 %v275
      %v699 = vunpack.c.l.b16 %v276
      %v700 = vunpack.c.l.b16 %v277
      %v701 = vunpack.c.l.b16 %v278
      %v702 = vunpack.c.l.b16 %v279
      %v703 = vunpack.c.l.b16 %v280
      %v704 = vunpack.c.l.b16 %v281
      %v705 = vunpack.c.l.b16 %v282
      %v706 = vunpack.c.l.b16 %v283
      %v707 = vunpack.c.l.b16 %v284
      %v708 = vunpack.c.l.b16 %v285
      %v709 = vunpack.c.l.b16 %v286
      %v710 = vunpack.c.l.b16 %v287
      %v711 = vunpack.c.l.b16 %v288
      %v712 = vunpack.c.l.b16 %v289
      %v713 = vunpack.c.l.b16 %v290
      %v714 = vunpack.c.l.b16 %v291
      %v715 = vunpack.c.l.b16 %v292
      %v716 = vunpack.c.l.b16 %v293
      %v717 = vunpack.c.l.b16 %v294
      %v718 = vunpack.c.l.b16 %v295
      %v719 = vunpack.c.l.b16 %v296
      %v720 = vunpack.c.l.b16 %v297
      %v721 = vunpack.c.l.b16 %v298
      %v722 = vunpack.c.l.b16 %v299
      %v723 = vunpack.c.l.b16 %v300
      %v724 = vunpack.c.l.b16 %v301
      %v725 = vunpack.c.l.b16 %v302
      %v726 = vunpack.c.l.b16 %v303
      %v727 = vunpack.c.l.b16 %v304
      %v728 = vunpack.c.l.b16 %v305
      %v729 = vunpack.c.l.b16 %v306
      %v730 = vunpack.c.l.b16 %v307
      %v731 = vunpack.c.l.b16 %v308
      %v732 = vunpack.c.l.b16 %v309
      %v733 = vunpack.c.l.b16 %v310
      %v734 = vunpack.c.l.b16 %v311
      %v735 = vunpack.c.l.b16 %v312
      %v736 = vunpack.c.l.b16 %v313
      %v737 = vunpack.c.l.b16 %v314
      %v738 = vunpack.c.l.b16 %v315
      %v739 = vunpack.c.l.b16 %v316
      %v740 = vunpack.c.l.b16 %v317
      %v741 = vunpack.c.l.b16 %v318
      %v742 = vunpack.c.l.b16 %v319
      %v743 = vunpack.c.l.b16 %v320
      %v744 = vunpack.c.l.b16 %v321
      %v745 = vunpack.c.l.b16 %v322
      %v746 = vunpack.c.l.b16 %v323
      %v747 = vunpack.c.l.b16 %v324
      %v748 = vunpack.c.l.b16 %v325
      %v749 = vunpack.c.l.b16 %v326
      %v750 = vunpack.c.l.b16 %v327
      %v751 = vunpack.c.l.b16 %v328
      %v752 = vunpack.c.l.b16 %v329
      %v753 = vunpack.c.l.b16 %v330
      %v754 = vunpack.c.l.b16 %v331
      %v755 = vunpack.c.l.b16 %v332
      %v756 = vunpack.c.l.b16 %v333
      %v757 = vunpack.c.l.b16 %v334
      %v758 = vunpack.c.l.b16 %v335
      %v759 = vunpack.c.l.b16 %v336
      %v760 = vunpack.c.l.b16 %v337
      %v761 = vpack.c.b16 %v634, %v633
      %v762 = vpack.c.b16 %v636, %v635
      %v763 = vpack.c.b16 %v638, %v637
      %v764 = vpack.c.b16 %v640, %v639
      %v765 = vpack.c.b16 %v642, %v641
      %v766 = vpack.c.b16 %v644, %v643
      %v767 = vpack.c.b16 %v646, %v645
      %v768 = vpack.c.b16 %v648, %v647
      %v769 = vpack.c.b16 %v650, %v649
      %v770 = vpack.c.b16 %v652, %v651
      %v771 = vpack.c.b16 %v654, %v653
      %v772 = vpack.c.b16 %v656, %v655
      %v773 = vpack.c.b16 %v658, %v657
      %v774 = vpack.c.b16 %v660, %v659
      %v775 = vpack.c.b16 %v662, %v661
      %v776 = vpack.c.b16 %v664, %v663
      %v777 = vpack.c.b16 %v666, %v665
      %v778 = vpack.c.b16 %v668, %v667
      %v779 = vpack.c.b16 %v670, %v669
      %v780 = vpack.c.b16 %v672, %v671
      %v781 = vpack.c.b16 %v674, %v673
      %v782 = vpack.c.b16 %v676, %v675
      %v783 = vpack.c.b16 %v678, %v677
      %v784 = vpack.c.b16 %v680, %v679
      %v785 = vpack.c.b16 %v682, %v681
      %v786 = vpack.c.b16 %v684, %v683
      %v787 = vpack.c.b16 %v686, %v685
      %v788 = vpack.c.b16 %v688, %v687
      %v789 = vpack.c.b16 %v690, %v689
      %v790 = vpack.c.b16 %v692, %v691
      %v791 = vpack.c.b16 %v694, %v693
      %v792 = vpack.c.b16 %v696, %v695
      %v793 = vpack.c.b16 %v698, %v697
      %v794 = vpack.c.b16 %v700, %v699
      %v795 = vpack.c.b16 %v702, %v701
      %v796 = vpack.c.b16 %v704, %v703
      %v797 = vpack.c.b16 %v706, %v705
      %v798 = vpack.c.b16 %v708, %v707
      %v799 = vpack.c.b16 %v710, %v709
      %v800 = vpack.c.b16 %v712, %v711
      %v801 = vpack.c.b16 %v714, %v713
      %v802 = vpack.c.b16 %v716, %v715
      %v803 = vpack.c.b16 %v718, %v717
      %v804 = vpack.c.b16 %v720, %v719
      %v805 = vpack.c.b16 %v722, %v721
      %v806 = vpack.c.b16 %v724, %v723
      %v807 = vpack.c.b16 %v726, %v725
      %v808 = vpack.c.b16 %v728, %v727
      %v809 = vpack.c.b16 %v730, %v729
      %v810 = vpack.c.b16 %v732, %v731
      %v811 = vpack.c.b16 %v734, %v733
      %v812 = vpack.c.b16 %v736, %v735
      %v813 = vpack.c.b16 %v738, %v737
      %v814 = vpack.c.b16 %v740, %v739
      %v815 = vpack.c.b16 %v742, %v741
      %v816 = vpack.c.b16 %v744, %v743
      %v817 = vpack.c.b16 %v746, %v745
      %v818 = vpack.c.b16 %v748, %v747
      %v819 = vpack.c.b16 %v750, %v749
      %v820 = vpack.c.b16 %v752, %v751
      %v821 = vpack.c.b16 %v754, %v753
      %v822 = vpack.c.b16 %v756, %v755
      %v823 = vpack.c.b16 %v758, %v757
      %v824 = vpack.c.b16 %v760, %v759
      %889 = vmatprep.subr.bf16.mxu0 0
      %890 = vmatpush1.bf16.msra.mxu0 %v761
      %891 = vmatprep.subr.bf16.mxu0 0
      %892 = vmatpush1.bf16.msra.mxu0 %v762
      %893 = vmatprep.subr.bf16.mxu0 0
      %894 = vmatpush1.bf16.msra.mxu0 %v763
      %895 = vmatprep.subr.bf16.mxu0 0
      %896 = vmatpush1.bf16.msra.mxu0 %v764
      %897 = vmatprep.subr.bf16.mxu0 0
      %898 = vmatpush1.bf16.msra.mxu0 %v765
      %899 = vmatprep.subr.bf16.mxu0 0
      %900 = vmatpush1.bf16.msra.mxu0 %v766
      %901 = vmatprep.subr.bf16.mxu0 0
      %902 = vmatpush1.bf16.msra.mxu0 %v767
      %903 = vmatprep.subr.bf16.mxu0 0
      %904 = vmatpush1.bf16.msra.mxu0 %v768
      %905 = vmatprep.subr.bf16.mxu0 0
      %906 = vmatpush1.bf16.msra.mxu0 %v769
      %907 = vmatprep.subr.bf16.mxu0 0
      %908 = vmatpush1.bf16.msra.mxu0 %v770
      %909 = vmatprep.subr.bf16.mxu0 0
      %910 = vmatpush1.bf16.msra.mxu0 %v771
      %911 = vmatprep.subr.bf16.mxu0 0
      %912 = vmatpush1.bf16.msra.mxu0 %v772
      %913 = vmatprep.subr.bf16.mxu0 0
      %914 = vmatpush1.bf16.msra.mxu0 %v773
      %915 = vmatprep.subr.bf16.mxu0 0
      %916 = vmatpush1.bf16.msra.mxu0 %v774
      %917 = vmatprep.subr.bf16.mxu0 0
      %918 = vmatpush1.bf16.msra.mxu0 %v775
      %919 = vmatprep.subr.bf16.mxu0 0
      %920 = vmatpush1.bf16.msra.mxu0 %v776
      %921 = vmatprep.mubr.bf16.mxu0 %v442
      %922 = vmatmul.mubr.bf16.gmra.mrb[0].mxu0 %v441
      %v923 = vpop.f32.mrb[0].mxu0
      %v924 = vadd.f32 %v343, %v923
      %v925 = vpop.f32.mrb[0].mxu0
      %v926 = vpop.f32.mrb[0].mxu0
      %v927 = vadd.f32 %v343, %v926
      %v928 = vpop.f32.mrb[0].mxu0
      %929 = vmatprep.mubr.bf16.mxu0 %v450
      %930 = vmatmul.mubr.bf16.gmra.mrb[0].mxu0 %v449
      %v931 = vpop.f32.mrb[0].mxu0
      %v932 = vadd.f32 %v343, %v931
      %v933 = vpop.f32.mrb[0].mxu0
      %v934 = vpop.f32.mrb[0].mxu0
      %v935 = vadd.f32 %v343, %v934
      %v936 = vpop.f32.mrb[0].mxu0
      %937 = vmatprep.mubr.bf16.mxu0 %v458
      %938 = vmatmul.mubr.bf16.gmra.mrb[0].mxu0 %v457
      %v939 = vpop.f32.mrb[0].mxu0
      %v940 = vadd.f32 %v343, %v939
      %v941 = vpop.f32.mrb[0].mxu0
      %v942 = vpop.f32.mrb[0].mxu0
      %v943 = vadd.f32 %v343, %v942
      %v944 = vpop.f32.mrb[0].mxu0
      %945 = vmatprep.mubr.bf16.mxu0 %v466
      %946 = vmatmul.mubr.bf16.gmra.mrb[0].mxu0 %v465
      %v947 = vpop.f32.mrb[0].mxu0
      %v948 = vadd.f32 %v343, %v947
      %v949 = vpop.f32.mrb[0].mxu0
      %v950 = vpop.f32.mrb[0].mxu0
      %v951 = vadd.f32 %v343, %v950
      %v952 = vpop.f32.mrb[0].mxu0
      %953 = vdwg.mxu0
      %954 = vmatprep.subr.bf16.mxu0 0
      %955 = vmatpush1.bf16.msra.mxu0 %v777
      %956 = vmatprep.subr.bf16.mxu0 0
      %957 = vmatpush1.bf16.msra.mxu0 %v778
      %958 = vmatprep.subr.bf16.mxu0 0
      %959 = vmatpush1.bf16.msra.mxu0 %v779
      %960 = vmatprep.subr.bf16.mxu0 0
      %961 = vmatpush1.bf16.msra.mxu0 %v780
      %962 = vmatprep.subr.bf16.mxu0 0
      %963 = vmatpush1.bf16.msra.mxu0 %v781
      %964 = vmatprep.subr.bf16.mxu0 0
      %965 = vmatpush1.bf16.msra.mxu0 %v782
      %966 = vmatprep.subr.bf16.mxu0 0
      %967 = vmatpush1.bf16.msra.mxu0 %v783
      %968 = vmatprep.subr.bf16.mxu0 0
      %969 = vmatpush1.bf16.msra.mxu0 %v784
      %970 = vmatprep.subr.bf16.mxu0 0
      %971 = vmatpush1.bf16.msra.mxu0 %v785
      %972 = vmatprep.subr.bf16.mxu0 0
      %973 = vmatpush1.bf16.msra.mxu0 %v786
      %974 = vmatprep.subr.bf16.mxu0 0
      %975 = vmatpush1.bf16.msra.mxu0 %v787
      %976 = vmatprep.subr.bf16.mxu0 0
      %977 = vmatpush1.bf16.msra.mxu0 %v788
      %978 = vmatprep.subr.bf16.mxu0 0
      %979 = vmatpush1.bf16.msra.mxu0 %v789
      %980 = vmatprep.subr.bf16.mxu0 0
      %981 = vmatpush1.bf16.msra.mxu0 %v790
      %982 = vmatprep.subr.bf16.mxu0 0
      %983 = vmatpush1.bf16.msra.mxu0 %v791
      %984 = vmatprep.subr.bf16.mxu0 0
      %985 = vmatpush1.bf16.msra.mxu0 %v792
      %986 = vmatprep.mubr.bf16.mxu0 %v444
      %987 = vmatmul.mubr.bf16.gmra.mrb[0].mxu0 %v443
      %v988 = vpop.f32.mrb[0].mxu0
      %v989 = vadd.f32 %v924, %v988
      %v990 = vpop.f32.mrb[0].mxu0
      %v991 = vpop.f32.mrb[0].mxu0
      %v992 = vadd.f32 %v927, %v991
      %v993 = vpop.f32.mrb[0].mxu0
      %994 = vmatprep.mubr.bf16.mxu0 %v452
      %995 = vmatmul.mubr.bf16.gmra.mrb[0].mxu0 %v451
      %v996 = vpop.f32.mrb[0].mxu0
      %v997 = vadd.f32 %v932, %v996
      %v998 = vpop.f32.mrb[0].mxu0
      %v999 = vpop.f32.mrb[0].mxu0
      %v1000 = vadd.f32 %v935, %v999
      %v1001 = vpop.f32.mrb[0].mxu0
      %1002 = vmatprep.mubr.bf16.mxu0 %v460
      %1003 = vmatmul.mubr.bf16.gmra.mrb[0].mxu0 %v459
      %v1004 = vpop.f32.mrb[0].mxu0
      %v1005 = vadd.f32 %v940, %v1004
      %v1006 = vpop.f32.mrb[0].mxu0
      %v1007 = vpop.f32.mrb[0].mxu0
      %v1008 = vadd.f32 %v943, %v1007
      %v1009 = vpop.f32.mrb[0].mxu0
      %1010 = vmatprep.mubr.bf16.mxu0 %v468
      %1011 = vmatmul.mubr.bf16.gmra.mrb[0].mxu0 %v467
      %v1012 = vpop.f32.mrb[0].mxu0
      %v1013 = vadd.f32 %v948, %v1012
      %v1014 = vpop.f32.mrb[0].mxu0
      %v1015 = vpop.f32.mrb[0].mxu0
      %v1016 = vadd.f32 %v951, %v1015
      %v1017 = vpop.f32.mrb[0].mxu0
      %1018 = vdwg.mxu0
      %1019 = vmatprep.subr.bf16.mxu0 0
      %1020 = vmatpush1.bf16.msra.mxu0 %v793
      %1021 = vmatprep.subr.bf16.mxu0 0
      %1022 = vmatpush1.bf16.msra.mxu0 %v794
      %1023 = vmatprep.subr.bf16.mxu0 0
      %1024 = vmatpush1.bf16.msra.mxu0 %v795
      %1025 = vmatprep.subr.bf16.mxu0 0
      %1026 = vmatpush1.bf16.msra.mxu0 %v796
      %1027 = vmatprep.subr.bf16.mxu0 0
      %1028 = vmatpush1.bf16.msra.mxu0 %v797
      %1029 = vmatprep.subr.bf16.mxu0 0
      %1030 = vmatpush1.bf16.msra.mxu0 %v798
      %1031 = vmatprep.subr.bf16.mxu0 0
      %1032 = vmatpush1.bf16.msra.mxu0 %v799
      %1033 = vmatprep.subr.bf16.mxu0 0
      %1034 = vmatpush1.bf16.msra.mxu0 %v800
      %1035 = vmatprep.subr.bf16.mxu0 0
      %1036 = vmatpush1.bf16.msra.mxu0 %v801
      %1037 = vmatprep.subr.bf16.mxu0 0
      %1038 = vmatpush1.bf16.msra.mxu0 %v802
      %1039 = vmatprep.subr.bf16.mxu0 0
      %1040 = vmatpush1.bf16.msra.mxu0 %v803
      %1041 = vmatprep.subr.bf16.mxu0 0
      %1042 = vmatpush1.bf16.msra.mxu0 %v804
      %1043 = vmatprep.subr.bf16.mxu0 0
      %1044 = vmatpush1.bf16.msra.mxu0 %v805
      %1045 = vmatprep.subr.bf16.mxu0 0
      %1046 = vmatpush1.bf16.msra.mxu0 %v806
      %1047 = vmatprep.subr.bf16.mxu0 0
      %1048 = vmatpush1.bf16.msra.mxu0 %v807
      %1049 = vmatprep.subr.bf16.mxu0 0
      %1050 = vmatpush1.bf16.msra.mxu0 %v808
      %1051 = vmatprep.mubr.bf16.mxu0 %v446
      %1052 = vmatmul.mubr.bf16.gmra.mrb[0].mxu0 %v445
      %v1053 = vpop.f32.mrb[0].mxu0
      %v1054 = vadd.f32 %v989, %v1053
      %v1055 = vpop.f32.mrb[0].mxu0
      %v1056 = vpop.f32.mrb[0].mxu0
      %v1057 = vadd.f32 %v992, %v1056
      %v1058 = vpop.f32.mrb[0].mxu0
      %1059 = vmatprep.mubr.bf16.mxu0 %v454
      %1060 = vmatmul.mubr.bf16.gmra.mrb[0].mxu0 %v453
      %v1061 = vpop.f32.mrb[0].mxu0
      %v1062 = vadd.f32 %v997, %v1061
      %v1063 = vpop.f32.mrb[0].mxu0
      %v1064 = vpop.f32.mrb[0].mxu0
      %v1065 = vadd.f32 %v1000, %v1064
      %v1066 = vpop.f32.mrb[0].mxu0
      %1067 = vmatprep.mubr.bf16.mxu0 %v462
      %1068 = vmatmul.mubr.bf16.gmra.mrb[0].mxu0 %v461
      %v1069 = vpop.f32.mrb[0].mxu0
      %v1070 = vadd.f32 %v1005, %v1069
      %v1071 = vpop.f32.mrb[0].mxu0
      %v1072 = vpop.f32.mrb[0].mxu0
      %v1073 = vadd.f32 %v1008, %v1072
      %v1074 = vpop.f32.mrb[0].mxu0
      %1075 = vmatprep.mubr.bf16.mxu0 %v470
      %1076 = vmatmul.mubr.bf16.gmra.mrb[0].mxu0 %v469
      %v1077 = vpop.f32.mrb[0].mxu0
      %v1078 = vadd.f32 %v1013, %v1077
      %v1079 = vpop.f32.mrb[0].mxu0
      %v1080 = vpop.f32.mrb[0].mxu0
      %v1081 = vadd.f32 %v1016, %v1080
      %v1082 = vpop.f32.mrb[0].mxu0
      %1083 = vdwg.mxu0
      %1084 = vmatprep.subr.bf16.mxu0 0
      %1085 = vmatpush1.bf16.msra.mxu0 %v809
      %1086 = vmatprep.subr.bf16.mxu0 0
      %1087 = vmatpush1.bf16.msra.mxu0 %v810
      %1088 = vmatprep.subr.bf16.mxu0 0
      %1089 = vmatpush1.bf16.msra.mxu0 %v811
      %1090 = vmatprep.subr.bf16.mxu0 0
      %1091 = vmatpush1.bf16.msra.mxu0 %v812
      %1092 = vmatprep.subr.bf16.mxu0 0
      %1093 = vmatpush1.bf16.msra.mxu0 %v813
      %1094 = vmatprep.subr.bf16.mxu0 0
      %1095 = vmatpush1.bf16.msra.mxu0 %v814
      %1096 = vmatprep.subr.bf16.mxu0 0
      %1097 = vmatpush1.bf16.msra.mxu0 %v815
      %1098 = vmatprep.subr.bf16.mxu0 0
      %1099 = vmatpush1.bf16.msra.mxu0 %v816
      %1100 = vmatprep.subr.bf16.mxu0 0
      %1101 = vmatpush1.bf16.msra.mxu0 %v817
      %1102 = vmatprep.subr.bf16.mxu0 0
      %1103 = vmatpush1.bf16.msra.mxu0 %v818
      %1104 = vmatprep.subr.bf16.mxu0 0
      %1105 = vmatpush1.bf16.msra.mxu0 %v819
      %1106 = vmatprep.subr.bf16.mxu0 0
      %1107 = vmatpush1.bf16.msra.mxu0 %v820
      %1108 = vmatprep.subr.bf16.mxu0 0
      %1109 = vmatpush1.bf16.msra.mxu0 %v821
      %1110 = vmatprep.subr.bf16.mxu0 0
      %1111 = vmatpush1.bf16.msra.mxu0 %v822
      %1112 = vmatprep.subr.bf16.mxu0 0
      %1113 = vmatpush1.bf16.msra.mxu0 %v823
      %1114 = vmatprep.subr.bf16.mxu0 0
      %1115 = vmatpush1.bf16.msra.mxu0 %v824
      %1116 = vmatprep.mubr.bf16.mxu0 %v448
      %1117 = vmatmul.mubr.bf16.gmra.mrb[0].mxu0 %v447
      %v1118 = vpop.f32.mrb[0].mxu0
      %v1119 = vadd.f32 %v1054, %v1118
      %v1120 = vpop.f32.mrb[0].mxu0
      %v1121 = vpop.f32.mrb[0].mxu0
      %v1122 = vadd.f32 %v1057, %v1121
      %v1123 = vpop.f32.mrb[0].mxu0
      %1124 = vmatprep.mubr.bf16.mxu0 %v456
      %1125 = vmatmul.mubr.bf16.gmra.mrb[0].mxu0 %v455
      %v1126 = vpop.f32.mrb[0].mxu0
      %v1127 = vadd.f32 %v1062, %v1126
      %v1128 = vpop.f32.mrb[0].mxu0
      %v1129 = vpop.f32.mrb[0].mxu0
      %v1130 = vadd.f32 %v1065, %v1129
      %v1131 = vpop.f32.mrb[0].mxu0
      %1132 = vmatprep.mubr.bf16.mxu0 %v464
      %1133 = vmatmul.mubr.bf16.gmra.mrb[0].mxu0 %v463
      %v1134 = vpop.f32.mrb[0].mxu0
      %v1135 = vadd.f32 %v1070, %v1134
      %v1136 = vpop.f32.mrb[0].mxu0
      %v1137 = vpop.f32.mrb[0].mxu0
      %v1138 = vadd.f32 %v1073, %v1137
      %v1139 = vpop.f32.mrb[0].mxu0
      %1140 = vmatprep.mubr.bf16.mxu0 %v472
      %1141 = vmatmul.mubr.bf16.gmra.mrb[0].mxu0 %v471
      %v1142 = vpop.f32.mrb[0].mxu0
      %v1143 = vadd.f32 %v1078, %v1142
      %v1144 = vpop.f32.mrb[0].mxu0
      %v1145 = vpop.f32.mrb[0].mxu0
      %v1146 = vadd.f32 %v1081, %v1145
      %v1147 = vpop.f32.mrb[0].mxu0
      %1148 = vdwg.mxu0
      %v1149 = vmax.f32 %v1119, 0.0
      %v1150 = vmax.f32 %v1122, 0.0
      %v1151 = vmax.f32 %v1127, 0.0
      %v1152 = vmax.f32 %v1130, 0.0
      %v1153 = vmax.f32 %v1135, 0.0
      %v1154 = vmax.f32 %v1138, 0.0
      %v1155 = vmax.f32 %v1143, 0.0
      %v1156 = vmax.f32 %v1146, 0.0
      %v1157 = vpack.c.bf16 %v1150, %v1149
      %v1158 = vpack.c.bf16 %v1152, %v1151
      %v1159 = vpack.c.bf16 %v1154, %v1153
      %v1160 = vpack.c.bf16 %v1156, %v1155
      %v1165 = vunpack.c.l.b16 %v1157
      %v1166 = vunpack.c.h.b16 %v1157
      %v1167 = vunpack.c.l.b16 %v1158
      %v1168 = vunpack.c.h.b16 %v1158
      %v1169 = vunpack.c.l.b16 %v1159
      %v1170 = vunpack.c.h.b16 %v1159
      %v1171 = vunpack.c.l.b16 %v1160
      %v1172 = vunpack.c.h.b16 %v1160
      %v1173 = vpack.c.b16 %v1165, %v1165
      %v1174 = vpack.c.b16 %v1166, %v1166
      %v1175 = vpack.c.b16 %v1167, %v1167
      %v1176 = vpack.c.b16 %v1168, %v1168
      %v1177 = vpack.c.b16 %v1169, %v1169
      %v1178 = vpack.c.b16 %v1170, %v1170
      %v1179 = vpack.c.b16 %v1171, %v1171
      %v1180 = vpack.c.b16 %v1172, %v1172
      %vm1189 = vcmask 257024
      %1190 = vst.msk [vmem:[%s175] sm:$0xf] %vm1189, %v1173
      %1191 = vst.msk [vmem:[%s175 + $0x4] sm:$0xf] %vm1189, %v1174
      %1192 = vst.msk [vmem:[%s175 + $0x8] sm:$0xf] %vm1189, %v1175
      %1193 = vst.msk [vmem:[%s175 + $0xc] sm:$0xf] %vm1189, %v1176
      %1194 = vst.msk [vmem:[%s175 + $0x10] sm:$0xf] %vm1189, %v1177
      %1195 = vst.msk [vmem:[%s175 + $0x14] sm:$0xf] %vm1189, %v1178
      %1196 = vst.msk [vmem:[%s175 + $0x18] sm:$0xf] %vm1189, %v1179
      %1197 = vst.msk [vmem:[%s175 + $0x1c] sm:$0xf] %vm1189, %v1180
      %s1198 = smul.u32 8, %s14
      %p1199 = scmp.lt.s32.totalorder %s1198, 15
      %s1200 = scalar_select %p1199, %s1198, 15
      %s1201 = smul.addr %s1200, 4
      %s1202 = scalar_lea.vmem %s3, %s1201
      // Predicated region
      $region33: #{vae_forward.11} parent=31 // pred_check
        %p1203 = pneg %p100
      $region34: #{vae_forward.11} parent=31 // pred_check_branch
        %1205 = sbr.rel (%p1203) target = $region36
      $region35: #{vae_forward.11} parent=31 // pred_region
        %s1206 = smul.u32 8, %s14
      $region36: #{vae_forward.11} parent=31 // pred_fallthru
        _
    $region32: #{vae_forward.11} parent=5 // pred_fallthru
      _
    %p1207 = scmp.le.s32.totalorder 2, %s9
    // Predicated region
    $region37: #{vae_forward.11} parent=5 // pred_check
      %p1208 = pneg %p1207
    $region38: #{vae_forward.11} parent=5 // pred_check_branch
      %1210 = sbr.rel (%p1208) target = $region40
    $region39: #{vae_forward.11} parent=5 // pred_region
      %s1211 = ssub.s32 %s9, 2
      // Predicated region
      $region41: #{vae_forward.11} parent=39 // pred_check
        %p1212 = pneg %p106
      $region42: #{vae_forward.11} parent=39 // pred_check_branch
        %1214 = sbr.rel (%p1212) target = $region44
      $region43: #{vae_forward.11} parent=39 // pred_region
        %s1215 = smul.u32 8, %s15
        %p1216 = scmp.lt.s32.totalorder %s1215, 15
        %s1217 = scalar_select %p1216, %s1215, 15
        %s1218 = smul.addr %s1217, 4
        %s1219 = scalar_lea.vmem %s3, %s1218
      $region44: #{vae_forward.11} parent=39 // pred_fallthru
        _
    $region40: #{vae_forward.11} parent=5 // pred_fallthru
      _
  $region6: #{vae_forward.11} parent=0 // loop_footer
    %s13 = sadd.s32 1, %s9
  $region7: #{vae_forward.11} parent=0 // loop_footer_branch
    %8 = sbr.rel target = $region3
  $region8: #{vae_forward.11} parent=0 // loop_exit
    _

// kernel: vae_forward.12
$region0: #{vae_forward.12}
  #allocation0 [shape = 'u32[]', space=smem, size = 0x4, offset = 0x4, fixed_abs, tag = 'smem constant byte address 0x4 - core index']
  #allocation1 [shape = 'u32[144,128]{1,0:T(1,128)}', space=vmem, size = 0x12000, scoped, tag = 'internal scratch']
  %s0 = inlined_call_operand.vmem [shape: bf16[512,512], index: 0, kind: input, shape index: {}]
  %s1 = inlined_call_operand.vmem [shape: bf16[512,32], index: 1, kind: input, shape index: {}]
  %s2 = inlined_call_operand.vmem [shape: f32[1,32], index: 2, kind: input, shape index: {}]
  %s3 = inlined_call_operand.vmem [shape: bf16[512,32], index: 3, kind: output, shape index: {}]
  %s4 = sld [smem:[#allocation0]]
  $region45: #{vae_forward.12} parent=0
    _
  %s6 = ssub.s32 1, %s4
  %s7 = scalar_select 0, %s6, %s4
  loop: start=0, step=1, limit=4
  $region2: #{vae_forward.12} parent=0 // loop_pre_header
    _
  $region3: #{vae_forward.12} parent=0 // loop_header
    %s9 = sphi 0, %s13
    %p10 = scmp.ge.s32.totalorder %s9, 4
    %s19 = sphi 0, %s21
    %s22 = sphi 0, %s19
    %s23 = sphi 0, %s22
    %s39 = sphi 0, %s23
    %s43 = sphi 0, %s43
    %s45 = sphi 0, %s43
    %s46 = sphi 0, %s45
    %s60 = sphi 0, %s46
    %s64 = sphi 0, %s64
    %s66 = sphi 0, %s64
    %s67 = sphi 0, %s66
    %s81 = sphi 0, %s67
    %s87 = sphi 0, %s89
    %s90 = sphi 0, %s87
    %s91 = sphi 0, %s90
    %s107 = sphi 0, %s91
  $region4: #{vae_forward.12} parent=0 // loop_header_branch
    %12 = sbr.rel (%p10) target = $region8
  $region5: #{vae_forward.12} parent=0 // loop_body
    %s14 = ssub.s32 %s9, 1
    %s15 = ssub.s32 %s9, 2
    %s16 = sadd.s32 %s9, 1
    %s17 = ssub.s32 %s9, %s16
    %p18 = scmp.eq.s32.totalorder %s17, 0
    %s20 = sadd.s32 %s19, 1
    %s21 = scalar_select %p18, %s19, %s20
    %p24 = pneg %p18
    %p25 = scmp.eq.s32.totalorder %s9, 1
    %p26 = por %p24, %p25
    %p27 = scmp.ne.s32.totalorder %s19, %s22
    %p28 = scmp.eq.s32.totalorder %s9, 0
    %p29 = por %p27, %p28
    %p30 = scmp.ne.s32.totalorder %s19, %s22
    %p31 = scmp.eq.s32.totalorder %s14, 1
    %p32 = por %p30, %p31
    %p33 = scmp.ne.s32.totalorder %s22, %s23
    %p34 = scmp.eq.s32.totalorder %s14, 0
    %p35 = por %p33, %p34
    %p36 = scmp.ne.s32.totalorder %s22, %s23
    %p37 = scmp.eq.s32.totalorder %s15, 1
    %p38 = por %p36, %p37
    %p40 = scmp.ne.s32.totalorder %s23, %s39
    %p41 = scmp.eq.s32.totalorder %s15, 0
    %p42 = por %p40, %p41
    %s44 = sadd.s32 %s43, 1
    %p47 = scmp.eq.s32.totalorder %s9, 1
    %p48 = scmp.ne.s32.totalorder %s43, %s45
    %p49 = scmp.eq.s32.totalorder %s9, 0
    %p50 = por %p48, %p49
    %p51 = scmp.ne.s32.totalorder %s43, %s45
    %p52 = scmp.eq.s32.totalorder %s14, 1
    %p53 = por %p51, %p52
    %p54 = scmp.ne.s32.totalorder %s45, %s46
    %p55 = scmp.eq.s32.totalorder %s14, 0
    %p56 = por %p54, %p55
    %p57 = scmp.ne.s32.totalorder %s45, %s46
    %p58 = scmp.eq.s32.totalorder %s15, 1
    %p59 = por %p57, %p58
    %p61 = scmp.ne.s32.totalorder %s46, %s60
    %p62 = scmp.eq.s32.totalorder %s15, 0
    %p63 = por %p61, %p62
    %s65 = sadd.s32 %s64, 1
    %p68 = scmp.eq.s32.totalorder %s9, 1
    %p69 = scmp.ne.s32.totalorder %s64, %s66
    %p70 = scmp.eq.s32.totalorder %s9, 0
    %p71 = por %p69, %p70
    %p72 = scmp.ne.s32.totalorder %s64, %s66
    %p73 = scmp.eq.s32.totalorder %s14, 1
    %p74 = por %p72, %p73
    %p75 = scmp.ne.s32.totalorder %s66, %s67
    %p76 = scmp.eq.s32.totalorder %s14, 0
    %p77 = por %p75, %p76
    %p78 = scmp.ne.s32.totalorder %s66, %s67
    %p79 = scmp.eq.s32.totalorder %s15, 1
    %p80 = por %p78, %p79
    %p82 = scmp.ne.s32.totalorder %s67, %s81
    %p83 = scmp.eq.s32.totalorder %s15, 0
    %p84 = por %p82, %p83
    %s85 = ssub.s32 %s9, %s16
    %p86 = scmp.eq.s32.totalorder %s85, 0
    %s88 = sadd.s32 %s87, 1
    %s89 = scalar_select %p86, %s87, %s88
    %p92 = pneg %p86
    %p93 = scmp.eq.s32.totalorder %s9, 1
    %p94 = por %p92, %p93
    %p95 = scmp.ne.s32.totalorder %s87, %s90
    %p96 = scmp.eq.s32.totalorder %s9, 0
    %p97 = por %p95, %p96
    %p98 = scmp.ne.s32.totalorder %s87, %s90
    %p99 = scmp.eq.s32.totalorder %s14, 1
    %p100 = por %p98, %p99
    %p101 = scmp.ne.s32.totalorder %s90, %s91
    %p102 = scmp.eq.s32.totalorder %s14, 0
    %p103 = por %p101, %p102
    %p104 = scmp.ne.s32.totalorder %s90, %s91
    %p105 = scmp.eq.s32.totalorder %s15, 1
    %p106 = por %p104, %p105
    %p108 = scmp.ne.s32.totalorder %s91, %s107
    %p109 = scmp.eq.s32.totalorder %s15, 0
    %p110 = por %p108, %p109
    %p111 = scmp.le.s32.totalorder 1, %s9
    %p112 = scmp.lt.s32.totalorder %s9, 3
    %p113 = pnand %p111, %p112
    %p114 = pneg %p113
    // Predicated region
    $region9: #{vae_forward.12} parent=5 // pred_check
      _
    $region10: #{vae_forward.12} parent=5 // pred_check_branch
      %116 = sbr.rel (%p113) target = $region12
    $region11: #{vae_forward.12} parent=5 // pred_region
      %s117 = ssub.s32 %s9, 1
      // Predicated region
      $region13: #{vae_forward.12} parent=11 // pred_check
        %p118 = pneg %p56
      $region14: #{vae_forward.12} parent=11 // pred_check_branch
        %120 = sbr.rel (%p118) target = $region16
      $region15: #{vae_forward.12} parent=11 // pred_region
        _
      $region16: #{vae_forward.12} parent=11 // pred_fallthru
        _
      // Predicated region
      $region17: #{vae_forward.12} parent=11 // pred_check
        %p121 = pneg %p77
      $region18: #{vae_forward.12} parent=11 // pred_check_branch
        %123 = sbr.rel (%p121) target = $region20
      $region19: #{vae_forward.12} parent=11 // pred_region
        _
      $region20: #{vae_forward.12} parent=11 // pred_fallthru
        _
    $region12: #{vae_forward.12} parent=5 // pred_fallthru
      _
    %p124 = scmp.lt.s32.totalorder %s9, 2
    // Predicated region
    $region21: #{vae_forward.12} parent=5 // pred_check
      %p125 = pneg %p124
    $region22: #{vae_forward.12} parent=5 // pred_check_branch
      %127 = sbr.rel (%p125) target = $region24
    $region23: #{vae_forward.12} parent=5 // pred_region
      // Predicated region
      $region25: #{vae_forward.12} parent=23 // pred_check
        %p128 = pneg %p29
      $region26: #{vae_forward.12} parent=23 // pred_check_branch
        %130 = sbr.rel (%p128) target = $region28
      $region27: #{vae_forward.12} parent=23 // pred_region
        %s131 = smul.u32 32, %s9
        %p132 = scmp.lt.s32.totalorder %s131, 63
        %s133 = scalar_select %p132, %s131, 63
        %s134 = smul.addr %s133, 4
        %s135 = smul.addr %s134, 4
        %s136 = scalar_lea.vmem %s0, %s135
        %s137 = smul.u32 32, %s9
      $region28: #{vae_forward.12} parent=23 // pred_fallthru
        _
    $region24: #{vae_forward.12} parent=5 // pred_fallthru
      _
    %p138 = scmp.le.s32.totalorder 1, %s9
    %p139 = scmp.lt.s32.totalorder %s9, 3
    %p140 = pnand %p138, %p139
    %p141 = pneg %p140
    // Predicated region
    $region29: #{vae_forward.12} parent=5 // pred_check
      _
    $region30: #{vae_forward.12} parent=5 // pred_check_branch
      %143 = sbr.rel (%p140) target = $region32
    $region31: #{vae_forward.12} parent=5 // pred_region
      %s144 = ssub.s32 %s9, 1
      %s145 = smul.u32 32, %s14
      %p146 = scmp.lt.s32.totalorder %s145, 63
      %s147 = scalar_select %p146, %s145, 63
      %s148 = smul.addr %s147, 4
      %s149 = smul.addr %s148, 4
      %s150 = scalar_lea.vmem %s0, %s149
      %p151 = pneg %p35
      %p152 = pneg %p32
      %p153 = pneg %p56
      %p154 = pneg %p53
      %p155 = pneg %p77
      %p156 = pneg %p74
      %p157 = pneg %p103
      %p158 = pneg %p100
      %s159 = smul.u32 32, %s14
      %p160 = scmp.lt.s32.totalorder %s159, 63
      %s161 = scalar_select %p160, %s159, 63
      %s162 = smul.addr %s161, 4
      %s163 = scalar_lea.vmem %s3, %s162
      %s164 = smul.u32 32, %s14
      %p165 = scmp.lt.s32.totalorder %s164, 63
      %s166 = scalar_select %p165, %s164, 63
      %s167 = smul.addr %s166, 4
      %s168 = smul.addr %s167, 4
      %s169 = scalar_lea.vmem %s0, %s168
      %s170 = smul.u32 32, %s14
      %s171 = smul.u32 32, %s14
      %p172 = scmp.lt.s32.totalorder %s171, 63
      %s173 = scalar_select %p172, %s171, 63
      %s174 = smul.addr %s173, 4
      %s175 = scalar_lea.vmem %s3, %s174
      %s176 = smul.u32 32, %s14
      %v178 = vld [vmem:[%s169] sm:$0xff]
      %v179 = vld [vmem:[%s169 + $0x8] sm:$0xff]
      %v180 = vld [vmem:[%s169 + $0x10] sm:$0xff]
      %v181 = vld [vmem:[%s169 + $0x18] sm:$0xff]
      %v182 = vld [vmem:[%s169 + $0x20] sm:$0xff]
      %v183 = vld [vmem:[%s169 + $0x28] sm:$0xff]
      %v184 = vld [vmem:[%s169 + $0x30] sm:$0xff]
      %v185 = vld [vmem:[%s169 + $0x38] sm:$0xff]
      %v186 = vld [vmem:[%s169 + $0x40] sm:$0xff]
      %v187 = vld [vmem:[%s169 + $0x48] sm:$0xff]
      %v188 = vld [vmem:[%s169 + $0x50] sm:$0xff]
      %v189 = vld [vmem:[%s169 + $0x58] sm:$0xff]
      %v190 = vld [vmem:[%s169 + $0x60] sm:$0xff]
      %v191 = vld [vmem:[%s169 + $0x68] sm:$0xff]
      %v192 = vld [vmem:[%s169 + $0x70] sm:$0xff]
      %v193 = vld [vmem:[%s169 + $0x78] sm:$0xff]
      %v194 = vld [vmem:[%s169 + $0x80] sm:$0xff]
      %v195 = vld [vmem:[%s169 + $0x88] sm:$0xff]
      %v196 = vld [vmem:[%s169 + $0x90] sm:$0xff]
      %v197 = vld [vmem:[%s169 + $0x98] sm:$0xff]
      %v198 = vld [vmem:[%s169 + $0xa0] sm:$0xff]
      %v199 = vld [vmem:[%s169 + $0xa8] sm:$0xff]
      %v200 = vld [vmem:[%s169 + $0xb0] sm:$0xff]
      %v201 = vld [vmem:[%s169 + $0xb8] sm:$0xff]
      %v202 = vld [vmem:[%s169 + $0xc0] sm:$0xff]
      %v203 = vld [vmem:[%s169 + $0xc8] sm:$0xff]
      %v204 = vld [vmem:[%s169 + $0xd0] sm:$0xff]
      %v205 = vld [vmem:[%s169 + $0xd8] sm:$0xff]
      %v206 = vld [vmem:[%s169 + $0xe0] sm:$0xff]
      %v207 = vld [vmem:[%s169 + $0xe8] sm:$0xff]
      %v208 = vld [vmem:[%s169 + $0xf0] sm:$0xff]
      %v209 = vld [vmem:[%s169 + $0xf8] sm:$0xff]
      %v210 = vld [vmem:[%s169 + $0x100] sm:$0xff]
      %v211 = vld [vmem:[%s169 + $0x108] sm:$0xff]
      %v212 = vld [vmem:[%s169 + $0x110] sm:$0xff]
      %v213 = vld [vmem:[%s169 + $0x118] sm:$0xff]
      %v214 = vld [vmem:[%s169 + $0x120] sm:$0xff]
      %v215 = vld [vmem:[%s169 + $0x128] sm:$0xff]
      %v216 = vld [vmem:[%s169 + $0x130] sm:$0xff]
      %v217 = vld [vmem:[%s169 + $0x138] sm:$0xff]
      %v218 = vld [vmem:[%s169 + $0x140] sm:$0xff]
      %v219 = vld [vmem:[%s169 + $0x148] sm:$0xff]
      %v220 = vld [vmem:[%s169 + $0x150] sm:$0xff]
      %v221 = vld [vmem:[%s169 + $0x158] sm:$0xff]
      %v222 = vld [vmem:[%s169 + $0x160] sm:$0xff]
      %v223 = vld [vmem:[%s169 + $0x168] sm:$0xff]
      %v224 = vld [vmem:[%s169 + $0x170] sm:$0xff]
      %v225 = vld [vmem:[%s169 + $0x178] sm:$0xff]
      %v226 = vld [vmem:[%s169 + $0x180] sm:$0xff]
      %v227 = vld [vmem:[%s169 + $0x188] sm:$0xff]
      %v228 = vld [vmem:[%s169 + $0x190] sm:$0xff]
      %v229 = vld [vmem:[%s169 + $0x198] sm:$0xff]
      %v230 = vld [vmem:[%s169 + $0x1a0] sm:$0xff]
      %v231 = vld [vmem:[%s169 + $0x1a8] sm:$0xff]
      %v232 = vld [vmem:[%s169 + $0x1b0] sm:$0xff]
      %v233 = vld [vmem:[%s169 + $0x1b8] sm:$0xff]
      %v234 = vld [vmem:[%s169 + $0x1c0] sm:$0xff]
      %v235 = vld [vmem:[%s169 + $0x1c8] sm:$0xff]
      %v236 = vld [vmem:[%s169 + $0x1d0] sm:$0xff]
      %v237 = vld [vmem:[%s169 + $0x1d8] sm:$0xff]
      %v238 = vld [vmem:[%s169 + $0x1e0] sm:$0xff]
      %v239 = vld [vmem:[%s169 + $0x1e8] sm:$0xff]
      %v240 = vld [vmem:[%s169 + $0x1f0] sm:$0xff]
      %v241 = vld [vmem:[%s169 + $0x1f8] sm:$0xff]
      %v242 = vld [vmem:[%s1] sm:$0xf]
      %v243 = vld [vmem:[%s1 + $0x4] sm:$0xf]
      %v244 = vld [vmem:[%s1 + $0x8] sm:$0xf]
      %v245 = vld [vmem:[%s1 + $0xc] sm:$0xf]
      %v246 = vld [vmem:[%s1 + $0x10] sm:$0xf]
      %v247 = vld [vmem:[%s1 + $0x14] sm:$0xf]
      %v248 = vld [vmem:[%s1 + $0x18] sm:$0xf]
      %v249 = vld [vmem:[%s1 + $0x1c] sm:$0xf]
      %v250 = vld [vmem:[%s1 + $0x20] sm:$0xf]
      %v251 = vld [vmem:[%s1 + $0x24] sm:$0xf]
      %v252 = vld [vmem:[%s1 + $0x28] sm:$0xf]
      %v253 = vld [vmem:[%s1 + $0x2c] sm:$0xf]
      %v254 = vld [vmem:[%s1 + $0x30] sm:$0xf]
      %v255 = vld [vmem:[%s1 + $0x34] sm:$0xf]
      %v256 = vld [vmem:[%s1 + $0x38] sm:$0xf]
      %v257 = vld [vmem:[%s1 + $0x3c] sm:$0xf]
      %v258 = vld [vmem:[%s1 + $0x40] sm:$0xf]
      %v259 = vld [vmem:[%s1 + $0x44] sm:$0xf]
      %v260 = vld [vmem:[%s1 + $0x48] sm:$0xf]
      %v261 = vld [vmem:[%s1 + $0x4c] sm:$0xf]
      %v262 = vld [vmem:[%s1 + $0x50] sm:$0xf]
      %v263 = vld [vmem:[%s1 + $0x54] sm:$0xf]
      %v264 = vld [vmem:[%s1 + $0x58] sm:$0xf]
      %v265 = vld [vmem:[%s1 + $0x5c] sm:$0xf]
      %v266 = vld [vmem:[%s1 + $0x60] sm:$0xf]
      %v267 = vld [vmem:[%s1 + $0x64] sm:$0xf]
      %v268 = vld [vmem:[%s1 + $0x68] sm:$0xf]
      %v269 = vld [vmem:[%s1 + $0x6c] sm:$0xf]
      %v270 = vld [vmem:[%s1 + $0x70] sm:$0xf]
      %v271 = vld [vmem:[%s1 + $0x74] sm:$0xf]
      %v272 = vld [vmem:[%s1 + $0x78] sm:$0xf]
      %v273 = vld [vmem:[%s1 + $0x7c] sm:$0xf]
      %v274 = vld [vmem:[%s1 + $0x80] sm:$0xf]
      %v275 = vld [vmem:[%s1 + $0x84] sm:$0xf]
      %v276 = vld [vmem:[%s1 + $0x88] sm:$0xf]
      %v277 = vld [vmem:[%s1 + $0x8c] sm:$0xf]
      %v278 = vld [vmem:[%s1 + $0x90] sm:$0xf]
      %v279 = vld [vmem:[%s1 + $0x94] sm:$0xf]
      %v280 = vld [vmem:[%s1 + $0x98] sm:$0xf]
      %v281 = vld [vmem:[%s1 + $0x9c] sm:$0xf]
      %v282 = vld [vmem:[%s1 + $0xa0] sm:$0xf]
      %v283 = vld [vmem:[%s1 + $0xa4] sm:$0xf]
      %v284 = vld [vmem:[%s1 + $0xa8] sm:$0xf]
      %v285 = vld [vmem:[%s1 + $0xac] sm:$0xf]
      %v286 = vld [vmem:[%s1 + $0xb0] sm:$0xf]
      %v287 = vld [vmem:[%s1 + $0xb4] sm:$0xf]
      %v288 = vld [vmem:[%s1 + $0xb8] sm:$0xf]
      %v289 = vld [vmem:[%s1 + $0xbc] sm:$0xf]
      %v290 = vld [vmem:[%s1 + $0xc0] sm:$0xf]
      %v291 = vld [vmem:[%s1 + $0xc4] sm:$0xf]
      %v292 = vld [vmem:[%s1 + $0xc8] sm:$0xf]
      %v293 = vld [vmem:[%s1 + $0xcc] sm:$0xf]
      %v294 = vld [vmem:[%s1 + $0xd0] sm:$0xf]
      %v295 = vld [vmem:[%s1 + $0xd4] sm:$0xf]
      %v296 = vld [vmem:[%s1 + $0xd8] sm:$0xf]
      %v297 = vld [vmem:[%s1 + $0xdc] sm:$0xf]
      %v298 = vld [vmem:[%s1 + $0xe0] sm:$0xf]
      %v299 = vld [vmem:[%s1 + $0xe4] sm:$0xf]
      %v300 = vld [vmem:[%s1 + $0xe8] sm:$0xf]
      %v301 = vld [vmem:[%s1 + $0xec] sm:$0xf]
      %v302 = vld [vmem:[%s1 + $0xf0] sm:$0xf]
      %v303 = vld [vmem:[%s1 + $0xf4] sm:$0xf]
      %v304 = vld [vmem:[%s1 + $0xf8] sm:$0xf]
      %v305 = vld [vmem:[%s1 + $0xfc] sm:$0xf]
      %v306 = vld [vmem:[%s2] sm:$0x1]
      %v308 = vlaneseq
      %v309 = vshrl.u32 %v308, 7
      %v310 = vsub.s32 0, %v309
      %v311 = vrot.slane %v306, %v310
      %v377 = vunpack.c.l.b16 %v178
      %v378 = vunpack.c.h.b16 %v178
      %v379 = vunpack.c.l.b16 %v179
      %v380 = vunpack.c.h.b16 %v179
      %v381 = vunpack.c.l.b16 %v180
      %v382 = vunpack.c.h.b16 %v180
      %v383 = vunpack.c.l.b16 %v181
      %v384 = vunpack.c.h.b16 %v181
      %v385 = vunpack.c.l.b16 %v182
      %v386 = vunpack.c.h.b16 %v182
      %v387 = vunpack.c.l.b16 %v183
      %v388 = vunpack.c.h.b16 %v183
      %v389 = vunpack.c.l.b16 %v184
      %v390 = vunpack.c.h.b16 %v184
      %v391 = vunpack.c.l.b16 %v185
      %v392 = vunpack.c.h.b16 %v185
      %v393 = vunpack.c.l.b16 %v186
      %v394 = vunpack.c.h.b16 %v186
      %v395 = vunpack.c.l.b16 %v187
      %v396 = vunpack.c.h.b16 %v187
      %v397 = vunpack.c.l.b16 %v188
      %v398 = vunpack.c.h.b16 %v188
      %v399 = vunpack.c.l.b16 %v189
      %v400 = vunpack.c.h.b16 %v189
      %v401 = vunpack.c.l.b16 %v190
      %v402 = vunpack.c.h.b16 %v190
      %v403 = vunpack.c.l.b16 %v191
      %v404 = vunpack.c.h.b16 %v191
      %v405 = vunpack.c.l.b16 %v192
      %v406 = vunpack.c.h.b16 %v192
      %v407 = vunpack.c.l.b16 %v193
      %v408 = vunpack.c.h.b16 %v193
      %v409 = vunpack.c.l.b16 %v194
      %v410 = vunpack.c.h.b16 %v194
      %v411 = vunpack.c.l.b16 %v195
      %v412 = vunpack.c.h.b16 %v195
      %v413 = vunpack.c.l.b16 %v196
      %v414 = vunpack.c.h.b16 %v196
      %v415 = vunpack.c.l.b16 %v197
      %v416 = vunpack.c.h.b16 %v197
      %v417 = vunpack.c.l.b16 %v198
      %v418 = vunpack.c.h.b16 %v198
      %v419 = vunpack.c.l.b16 %v199
      %v420 = vunpack.c.h.b16 %v199
      %v421 = vunpack.c.l.b16 %v200
      %v422 = vunpack.c.h.b16 %v200
      %v423 = vunpack.c.l.b16 %v201
      %v424 = vunpack.c.h.b16 %v201
      %v425 = vunpack.c.l.b16 %v202
      %v426 = vunpack.c.h.b16 %v202
      %v427 = vunpack.c.l.b16 %v203
      %v428 = vunpack.c.h.b16 %v203
      %v429 = vunpack.c.l.b16 %v204
      %v430 = vunpack.c.h.b16 %v204
      %v431 = vunpack.c.l.b16 %v205
      %v432 = vunpack.c.h.b16 %v205
      %v433 = vunpack.c.l.b16 %v206
      %v434 = vunpack.c.h.b16 %v206
      %v435 = vunpack.c.l.b16 %v207
      %v436 = vunpack.c.h.b16 %v207
      %v437 = vunpack.c.l.b16 %v208
      %v438 = vunpack.c.h.b16 %v208
      %v439 = vunpack.c.l.b16 %v209
      %v440 = vunpack.c.h.b16 %v209
      %v441 = vunpack.c.l.b16 %v210
      %v442 = vunpack.c.h.b16 %v210
      %v443 = vunpack.c.l.b16 %v211
      %v444 = vunpack.c.h.b16 %v211
      %v445 = vunpack.c.l.b16 %v212
      %v446 = vunpack.c.h.b16 %v212
      %v447 = vunpack.c.l.b16 %v213
      %v448 = vunpack.c.h.b16 %v213
      %v449 = vunpack.c.l.b16 %v214
      %v450 = vunpack.c.h.b16 %v214
      %v451 = vunpack.c.l.b16 %v215
      %v452 = vunpack.c.h.b16 %v215
      %v453 = vunpack.c.l.b16 %v216
      %v454 = vunpack.c.h.b16 %v216
      %v455 = vunpack.c.l.b16 %v217
      %v456 = vunpack.c.h.b16 %v217
      %v457 = vunpack.c.l.b16 %v218
      %v458 = vunpack.c.h.b16 %v218
      %v459 = vunpack.c.l.b16 %v219
      %v460 = vunpack.c.h.b16 %v219
      %v461 = vunpack.c.l.b16 %v220
      %v462 = vunpack.c.h.b16 %v220
      %v463 = vunpack.c.l.b16 %v221
      %v464 = vunpack.c.h.b16 %v221
      %v465 = vunpack.c.l.b16 %v222
      %v466 = vunpack.c.h.b16 %v222
      %v467 = vunpack.c.l.b16 %v223
      %v468 = vunpack.c.h.b16 %v223
      %v469 = vunpack.c.l.b16 %v224
      %v470 = vunpack.c.h.b16 %v224
      %v471 = vunpack.c.l.b16 %v225
      %v472 = vunpack.c.h.b16 %v225
      %v473 = vunpack.c.l.b16 %v226
      %v474 = vunpack.c.h.b16 %v226
      %v475 = vunpack.c.l.b16 %v227
      %v476 = vunpack.c.h.b16 %v227
      %v477 = vunpack.c.l.b16 %v228
      %v478 = vunpack.c.h.b16 %v228
      %v479 = vunpack.c.l.b16 %v229
      %v480 = vunpack.c.h.b16 %v229
      %v481 = vunpack.c.l.b16 %v230
      %v482 = vunpack.c.h.b16 %v230
      %v483 = vunpack.c.l.b16 %v231
      %v484 = vunpack.c.h.b16 %v231
      %v485 = vunpack.c.l.b16 %v232
      %v486 = vunpack.c.h.b16 %v232
      %v487 = vunpack.c.l.b16 %v233
      %v488 = vunpack.c.h.b16 %v233
      %v489 = vunpack.c.l.b16 %v234
      %v490 = vunpack.c.h.b16 %v234
      %v491 = vunpack.c.l.b16 %v235
      %v492 = vunpack.c.h.b16 %v235
      %v493 = vunpack.c.l.b16 %v236
      %v494 = vunpack.c.h.b16 %v236
      %v495 = vunpack.c.l.b16 %v237
      %v496 = vunpack.c.h.b16 %v237
      %v497 = vunpack.c.l.b16 %v238
      %v498 = vunpack.c.h.b16 %v238
      %v499 = vunpack.c.l.b16 %v239
      %v500 = vunpack.c.h.b16 %v239
      %v501 = vunpack.c.l.b16 %v240
      %v502 = vunpack.c.h.b16 %v240
      %v503 = vunpack.c.l.b16 %v241
      %v504 = vunpack.c.h.b16 %v241
      %v505 = vpack.c.b16 %v381, %v377
      %v506 = vpack.c.b16 %v382, %v378
      %v507 = vpack.c.b16 %v383, %v379
      %v508 = vpack.c.b16 %v384, %v380
      %v509 = vpack.c.b16 %v389, %v385
      %v510 = vpack.c.b16 %v390, %v386
      %v511 = vpack.c.b16 %v391, %v387
      %v512 = vpack.c.b16 %v392, %v388
      %v513 = vpack.c.b16 %v397, %v393
      %v514 = vpack.c.b16 %v398, %v394
      %v515 = vpack.c.b16 %v399, %v395
      %v516 = vpack.c.b16 %v400, %v396
      %v517 = vpack.c.b16 %v405, %v401
      %v518 = vpack.c.b16 %v406, %v402
      %v519 = vpack.c.b16 %v407, %v403
      %v520 = vpack.c.b16 %v408, %v404
      %v521 = vpack.c.b16 %v413, %v409
      %v522 = vpack.c.b16 %v414, %v410
      %v523 = vpack.c.b16 %v415, %v411
      %v524 = vpack.c.b16 %v416, %v412
      %v525 = vpack.c.b16 %v421, %v417
      %v526 = vpack.c.b16 %v422, %v418
      %v527 = vpack.c.b16 %v423, %v419
      %v528 = vpack.c.b16 %v424, %v420
      %v529 = vpack.c.b16 %v429, %v425
      %v530 = vpack.c.b16 %v430, %v426
      %v531 = vpack.c.b16 %v431, %v427
      %v532 = vpack.c.b16 %v432, %v428
      %v533 = vpack.c.b16 %v437, %v433
      %v534 = vpack.c.b16 %v438, %v434
      %v535 = vpack.c.b16 %v439, %v435
      %v536 = vpack.c.b16 %v440, %v436
      %v537 = vpack.c.b16 %v445, %v441
      %v538 = vpack.c.b16 %v446, %v442
      %v539 = vpack.c.b16 %v447, %v443
      %v540 = vpack.c.b16 %v448, %v444
      %v541 = vpack.c.b16 %v453, %v449
      %v542 = vpack.c.b16 %v454, %v450
      %v543 = vpack.c.b16 %v455, %v451
      %v544 = vpack.c.b16 %v456, %v452
      %v545 = vpack.c.b16 %v461, %v457
      %v546 = vpack.c.b16 %v462, %v458
      %v547 = vpack.c.b16 %v463, %v459
      %v548 = vpack.c.b16 %v464, %v460
      %v549 = vpack.c.b16 %v469, %v465
      %v550 = vpack.c.b16 %v470, %v466
      %v551 = vpack.c.b16 %v471, %v467
      %v552 = vpack.c.b16 %v472, %v468
      %v553 = vpack.c.b16 %v477, %v473
      %v554 = vpack.c.b16 %v478, %v474
      %v555 = vpack.c.b16 %v479, %v475
      %v556 = vpack.c.b16 %v480, %v476
      %v557 = vpack.c.b16 %v485, %v481
      %v558 = vpack.c.b16 %v486, %v482
      %v559 = vpack.c.b16 %v487, %v483
      %v560 = vpack.c.b16 %v488, %v484
      %v561 = vpack.c.b16 %v493, %v489
      %v562 = vpack.c.b16 %v494, %v490
      %v563 = vpack.c.b16 %v495, %v491
      %v564 = vpack.c.b16 %v496, %v492
      %v565 = vpack.c.b16 %v501, %v497
      %v566 = vpack.c.b16 %v502, %v498
      %v567 = vpack.c.b16 %v503, %v499
      %v568 = vpack.c.b16 %v504, %v500
      %v697 = vunpack.c.l.b16 %v242
      %v698 = vunpack.c.l.b16 %v243
      %v699 = vunpack.c.l.b16 %v244
      %v700 = vunpack.c.l.b16 %v245
      %v701 = vunpack.c.l.b16 %v246
      %v702 = vunpack.c.l.b16 %v247
      %v703 = vunpack.c.l.b16 %v248
      %v704 = vunpack.c.l.b16 %v249
      %v705 = vunpack.c.l.b16 %v250
      %v706 = vunpack.c.l.b16 %v251
      %v707 = vunpack.c.l.b16 %v252
      %v708 = vunpack.c.l.b16 %v253
      %v709 = vunpack.c.l.b16 %v254
      %v710 = vunpack.c.l.b16 %v255
      %v711 = vunpack.c.l.b16 %v256
      %v712 = vunpack.c.l.b16 %v257
      %v713 = vunpack.c.l.b16 %v258
      %v714 = vunpack.c.l.b16 %v259
      %v715 = vunpack.c.l.b16 %v260
      %v716 = vunpack.c.l.b16 %v261
      %v717 = vunpack.c.l.b16 %v262
      %v718 = vunpack.c.l.b16 %v263
      %v719 = vunpack.c.l.b16 %v264
      %v720 = vunpack.c.l.b16 %v265
      %v721 = vunpack.c.l.b16 %v266
      %v722 = vunpack.c.l.b16 %v267
      %v723 = vunpack.c.l.b16 %v268
      %v724 = vunpack.c.l.b16 %v269
      %v725 = vunpack.c.l.b16 %v270
      %v726 = vunpack.c.l.b16 %v271
      %v727 = vunpack.c.l.b16 %v272
      %v728 = vunpack.c.l.b16 %v273
      %v729 = vunpack.c.l.b16 %v274
      %v730 = vunpack.c.l.b16 %v275
      %v731 = vunpack.c.l.b16 %v276
      %v732 = vunpack.c.l.b16 %v277
      %v733 = vunpack.c.l.b16 %v278
      %v734 = vunpack.c.l.b16 %v279
      %v735 = vunpack.c.l.b16 %v280
      %v736 = vunpack.c.l.b16 %v281
      %v737 = vunpack.c.l.b16 %v282
      %v738 = vunpack.c.l.b16 %v283
      %v739 = vunpack.c.l.b16 %v284
      %v740 = vunpack.c.l.b16 %v285
      %v741 = vunpack.c.l.b16 %v286
      %v742 = vunpack.c.l.b16 %v287
      %v743 = vunpack.c.l.b16 %v288
      %v744 = vunpack.c.l.b16 %v289
      %v745 = vunpack.c.l.b16 %v290
      %v746 = vunpack.c.l.b16 %v291
      %v747 = vunpack.c.l.b16 %v292
      %v748 = vunpack.c.l.b16 %v293
      %v749 = vunpack.c.l.b16 %v294
      %v750 = vunpack.c.l.b16 %v295
      %v751 = vunpack.c.l.b16 %v296
      %v752 = vunpack.c.l.b16 %v297
      %v753 = vunpack.c.l.b16 %v298
      %v754 = vunpack.c.l.b16 %v299
      %v755 = vunpack.c.l.b16 %v300
      %v756 = vunpack.c.l.b16 %v301
      %v757 = vunpack.c.l.b16 %v302
      %v758 = vunpack.c.l.b16 %v303
      %v759 = vunpack.c.l.b16 %v304
      %v760 = vunpack.c.l.b16 %v305
      %v761 = vpack.c.b16 %v698, %v697
      %v762 = vpack.c.b16 %v700, %v699
      %v763 = vpack.c.b16 %v702, %v701
      %v764 = vpack.c.b16 %v704, %v703
      %v765 = vpack.c.b16 %v706, %v705
      %v766 = vpack.c.b16 %v708, %v707
      %v767 = vpack.c.b16 %v710, %v709
      %v768 = vpack.c.b16 %v712, %v711
      %v769 = vpack.c.b16 %v714, %v713
      %v770 = vpack.c.b16 %v716, %v715
      %v771 = vpack.c.b16 %v718, %v717
      %v772 = vpack.c.b16 %v720, %v719
      %v773 = vpack.c.b16 %v722, %v721
      %v774 = vpack.c.b16 %v724, %v723
      %v775 = vpack.c.b16 %v726, %v725
      %v776 = vpack.c.b16 %v728, %v727
      %v777 = vpack.c.b16 %v730, %v729
      %v778 = vpack.c.b16 %v732, %v731
      %v779 = vpack.c.b16 %v734, %v733
      %v780 = vpack.c.b16 %v736, %v735
      %v781 = vpack.c.b16 %v738, %v737
      %v782 = vpack.c.b16 %v740, %v739
      %v783 = vpack.c.b16 %v742, %v741
      %v784 = vpack.c.b16 %v744, %v743
      %v785 = vpack.c.b16 %v746, %v745
      %v786 = vpack.c.b16 %v748, %v747
      %v787 = vpack.c.b16 %v750, %v749
      %v788 = vpack.c.b16 %v752, %v751
      %v789 = vpack.c.b16 %v754, %v753
      %v790 = vpack.c.b16 %v756, %v755
      %v791 = vpack.c.b16 %v758, %v757
      %v792 = vpack.c.b16 %v760, %v759
      %825 = vmatprep.subr.bf16.mxu0 0
      %826 = vmatpush1.bf16.msra.mxu0 %v761
      %827 = vmatprep.subr.bf16.mxu0 0
      %828 = vmatpush1.bf16.msra.mxu0 %v762
      %829 = vmatprep.subr.bf16.mxu0 0
      %830 = vmatpush1.bf16.msra.mxu0 %v763
      %831 = vmatprep.subr.bf16.mxu0 0
      %832 = vmatpush1.bf16.msra.mxu0 %v764
      %833 = vmatprep.subr.bf16.mxu0 0
      %834 = vmatpush1.bf16.msra.mxu0 %v765
      %835 = vmatprep.subr.bf16.mxu0 0
      %836 = vmatpush1.bf16.msra.mxu0 %v766
      %837 = vmatprep.subr.bf16.mxu0 0
      %838 = vmatpush1.bf16.msra.mxu0 %v767
      %839 = vmatprep.subr.bf16.mxu0 0
      %840 = vmatpush1.bf16.msra.mxu0 %v768
      %841 = vmatprep.subr.bf16.mxu0 0
      %842 = vmatpush1.bf16.msra.mxu0 %v769
      %843 = vmatprep.subr.bf16.mxu0 0
      %844 = vmatpush1.bf16.msra.mxu0 %v770
      %845 = vmatprep.subr.bf16.mxu0 0
      %846 = vmatpush1.bf16.msra.mxu0 %v771
      %847 = vmatprep.subr.bf16.mxu0 0
      %848 = vmatpush1.bf16.msra.mxu0 %v772
      %849 = vmatprep.subr.bf16.mxu0 0
      %850 = vmatpush1.bf16.msra.mxu0 %v773
      %851 = vmatprep.subr.bf16.mxu0 0
      %852 = vmatpush1.bf16.msra.mxu0 %v774
      %853 = vmatprep.subr.bf16.mxu0 0
      %854 = vmatpush1.bf16.msra.mxu0 %v775
      %855 = vmatprep.subr.bf16.mxu0 0
      %856 = vmatpush1.bf16.msra.mxu0 %v776
      %857 = vmatprep.mubr.bf16.mxu0 %v506
      %858 = vmatmul.mubr.bf16.gmra.mrb[0].mxu0 %v505
      %v859 = vpop.f32.mrb[0].mxu0
      %v860 = vadd.f32 %v311, %v859
      %v861 = vpop.f32.mrb[0].mxu0
      %v862 = vpop.f32.mrb[0].mxu0
      %v863 = vadd.f32 %v311, %v862
      %v864 = vpop.f32.mrb[0].mxu0
      %865 = vmatprep.mubr.bf16.mxu0 %v510
      %866 = vmatmul.mubr.bf16.gmra.mrb[0].mxu0 %v509
      %v867 = vpop.f32.mrb[0].mxu0
      %v868 = vadd.f32 %v311, %v867
      %v869 = vpop.f32.mrb[0].mxu0
      %v870 = vpop.f32.mrb[0].mxu0
      %v871 = vadd.f32 %v311, %v870
      %v872 = vpop.f32.mrb[0].mxu0
      %873 = vmatprep.mubr.bf16.mxu0 %v514
      %874 = vmatmul.mubr.bf16.gmra.mrb[0].mxu0 %v513
      %v875 = vpop.f32.mrb[0].mxu0
      %v876 = vadd.f32 %v311, %v875
      %v877 = vpop.f32.mrb[0].mxu0
      %v878 = vpop.f32.mrb[0].mxu0
      %v879 = vadd.f32 %v311, %v878
      %v880 = vpop.f32.mrb[0].mxu0
      %881 = vmatprep.mubr.bf16.mxu0 %v518
      %882 = vmatmul.mubr.bf16.gmra.mrb[0].mxu0 %v517
      %v883 = vpop.f32.mrb[0].mxu0
      %v884 = vadd.f32 %v311, %v883
      %v885 = vpop.f32.mrb[0].mxu0
      %v886 = vpop.f32.mrb[0].mxu0
      %v887 = vadd.f32 %v311, %v886
      %v888 = vpop.f32.mrb[0].mxu0
      %889 = vmatprep.mubr.bf16.mxu0 %v522
      %890 = vmatmul.mubr.bf16.gmra.mrb[0].mxu0 %v521
      %v891 = vpop.f32.mrb[0].mxu0
      %v892 = vadd.f32 %v311, %v891
      %v893 = vpop.f32.mrb[0].mxu0
      %v894 = vpop.f32.mrb[0].mxu0
      %v895 = vadd.f32 %v311, %v894
      %v896 = vpop.f32.mrb[0].mxu0
      %897 = vmatprep.mubr.bf16.mxu0 %v526
      %898 = vmatmul.mubr.bf16.gmra.mrb[0].mxu0 %v525
      %v899 = vpop.f32.mrb[0].mxu0
      %v900 = vadd.f32 %v311, %v899
      %v901 = vpop.f32.mrb[0].mxu0
      %v902 = vpop.f32.mrb[0].mxu0
      %v903 = vadd.f32 %v311, %v902
      %v904 = vpop.f32.mrb[0].mxu0
      %905 = vmatprep.mubr.bf16.mxu0 %v530
      %906 = vmatmul.mubr.bf16.gmra.mrb[0].mxu0 %v529
      %v907 = vpop.f32.mrb[0].mxu0
      %v908 = vadd.f32 %v311, %v907
      %v909 = vpop.f32.mrb[0].mxu0
      %v910 = vpop.f32.mrb[0].mxu0
      %v911 = vadd.f32 %v311, %v910
      %v912 = vpop.f32.mrb[0].mxu0
      %913 = vmatprep.mubr.bf16.mxu0 %v534
      %914 = vmatmul.mubr.bf16.gmra.mrb[0].mxu0 %v533
      %v915 = vpop.f32.mrb[0].mxu0
      %v916 = vadd.f32 %v311, %v915
      %v917 = vpop.f32.mrb[0].mxu0
      %v918 = vpop.f32.mrb[0].mxu0
      %v919 = vadd.f32 %v311, %v918
      %v920 = vpop.f32.mrb[0].mxu0
      %921 = vmatprep.mubr.bf16.mxu0 %v538
      %922 = vmatmul.mubr.bf16.gmra.mrb[0].mxu0 %v537
      %v923 = vpop.f32.mrb[0].mxu0
      %v924 = vadd.f32 %v311, %v923
      %v925 = vpop.f32.mrb[0].mxu0
      %v926 = vpop.f32.mrb[0].mxu0
      %v927 = vadd.f32 %v311, %v926
      %v928 = vpop.f32.mrb[0].mxu0
      %929 = vmatprep.mubr.bf16.mxu0 %v542
      %930 = vmatmul.mubr.bf16.gmra.mrb[0].mxu0 %v541
      %v931 = vpop.f32.mrb[0].mxu0
      %v932 = vadd.f32 %v311, %v931
      %v933 = vpop.f32.mrb[0].mxu0
      %v934 = vpop.f32.mrb[0].mxu0
      %v935 = vadd.f32 %v311, %v934
      %v936 = vpop.f32.mrb[0].mxu0
      %937 = vmatprep.mubr.bf16.mxu0 %v546
      %938 = vmatmul.mubr.bf16.gmra.mrb[0].mxu0 %v545
      %v939 = vpop.f32.mrb[0].mxu0
      %v940 = vadd.f32 %v311, %v939
      %v941 = vpop.f32.mrb[0].mxu0
      %v942 = vpop.f32.mrb[0].mxu0
      %v943 = vadd.f32 %v311, %v942
      %v944 = vpop.f32.mrb[0].mxu0
      %945 = vmatprep.mubr.bf16.mxu0 %v550
      %946 = vmatmul.mubr.bf16.gmra.mrb[0].mxu0 %v549
      %v947 = vpop.f32.mrb[0].mxu0
      %v948 = vadd.f32 %v311, %v947
      %v949 = vpop.f32.mrb[0].mxu0
      %v950 = vpop.f32.mrb[0].mxu0
      %v951 = vadd.f32 %v311, %v950
      %v952 = vpop.f32.mrb[0].mxu0
      %953 = vmatprep.mubr.bf16.mxu0 %v554
      %954 = vmatmul.mubr.bf16.gmra.mrb[0].mxu0 %v553
      %v955 = vpop.f32.mrb[0].mxu0
      %v956 = vadd.f32 %v311, %v955
      %v957 = vpop.f32.mrb[0].mxu0
      %v958 = vpop.f32.mrb[0].mxu0
      %v959 = vadd.f32 %v311, %v958
      %v960 = vpop.f32.mrb[0].mxu0
      %961 = vmatprep.mubr.bf16.mxu0 %v558
      %962 = vmatmul.mubr.bf16.gmra.mrb[0].mxu0 %v557
      %v963 = vpop.f32.mrb[0].mxu0
      %v964 = vadd.f32 %v311, %v963
      %v965 = vpop.f32.mrb[0].mxu0
      %v966 = vpop.f32.mrb[0].mxu0
      %v967 = vadd.f32 %v311, %v966
      %v968 = vpop.f32.mrb[0].mxu0
      %969 = vmatprep.mubr.bf16.mxu0 %v562
      %970 = vmatmul.mubr.bf16.gmra.mrb[0].mxu0 %v561
      %v971 = vpop.f32.mrb[0].mxu0
      %v972 = vadd.f32 %v311, %v971
      %v973 = vpop.f32.mrb[0].mxu0
      %v974 = vpop.f32.mrb[0].mxu0
      %v975 = vadd.f32 %v311, %v974
      %v976 = vpop.f32.mrb[0].mxu0
      %977 = vmatprep.mubr.bf16.mxu0 %v566
      %978 = vmatmul.mubr.bf16.gmra.mrb[0].mxu0 %v565
      %v979 = vpop.f32.mrb[0].mxu0
      %v980 = vadd.f32 %v311, %v979
      %v981 = vpop.f32.mrb[0].mxu0
      %v982 = vpop.f32.mrb[0].mxu0
      %v983 = vadd.f32 %v311, %v982
      %v984 = vpop.f32.mrb[0].mxu0
      %985 = vdwg.mxu0
      %986 = vmatprep.subr.bf16.mxu0 0
      %987 = vmatpush1.bf16.msra.mxu0 %v777
      %988 = vmatprep.subr.bf16.mxu0 0
      %989 = vmatpush1.bf16.msra.mxu0 %v778
      %990 = vmatprep.subr.bf16.mxu0 0
      %991 = vmatpush1.bf16.msra.mxu0 %v779
      %992 = vmatprep.subr.bf16.mxu0 0
      %993 = vmatpush1.bf16.msra.mxu0 %v780
      %994 = vmatprep.subr.bf16.mxu0 0
      %995 = vmatpush1.bf16.msra.mxu0 %v781
      %996 = vmatprep.subr.bf16.mxu0 0
      %997 = vmatpush1.bf16.msra.mxu0 %v782
      %998 = vmatprep.subr.bf16.mxu0 0
      %999 = vmatpush1.bf16.msra.mxu0 %v783
      %1000 = vmatprep.subr.bf16.mxu0 0
      %1001 = vmatpush1.bf16.msra.mxu0 %v784
      %1002 = vmatprep.subr.bf16.mxu0 0
      %1003 = vmatpush1.bf16.msra.mxu0 %v785
      %1004 = vmatprep.subr.bf16.mxu0 0
      %1005 = vmatpush1.bf16.msra.mxu0 %v786
      %1006 = vmatprep.subr.bf16.mxu0 0
      %1007 = vmatpush1.bf16.msra.mxu0 %v787
      %1008 = vmatprep.subr.bf16.mxu0 0
      %1009 = vmatpush1.bf16.msra.mxu0 %v788
      %1010 = vmatprep.subr.bf16.mxu0 0
      %1011 = vmatpush1.bf16.msra.mxu0 %v789
      %1012 = vmatprep.subr.bf16.mxu0 0
      %1013 = vmatpush1.bf16.msra.mxu0 %v790
      %1014 = vmatprep.subr.bf16.mxu0 0
      %1015 = vmatpush1.bf16.msra.mxu0 %v791
      %1016 = vmatprep.subr.bf16.mxu0 0
      %1017 = vmatpush1.bf16.msra.mxu0 %v792
      %1018 = vmatprep.mubr.bf16.mxu0 %v508
      %1019 = vmatmul.mubr.bf16.gmra.mrb[0].mxu0 %v507
      %v1020 = vpop.f32.mrb[0].mxu0
      %v1021 = vadd.f32 %v860, %v1020
      %v1022 = vpop.f32.mrb[0].mxu0
      %v1023 = vpop.f32.mrb[0].mxu0
      %v1024 = vadd.f32 %v863, %v1023
      %v1025 = vpop.f32.mrb[0].mxu0
      %1026 = vmatprep.mubr.bf16.mxu0 %v512
      %1027 = vmatmul.mubr.bf16.gmra.mrb[0].mxu0 %v511
      %v1028 = vpop.f32.mrb[0].mxu0
      %v1029 = vadd.f32 %v868, %v1028
      %v1030 = vpop.f32.mrb[0].mxu0
      %v1031 = vpop.f32.mrb[0].mxu0
      %v1032 = vadd.f32 %v871, %v1031
      %v1033 = vpop.f32.mrb[0].mxu0
      %1034 = vmatprep.mubr.bf16.mxu0 %v516
      %1035 = vmatmul.mubr.bf16.gmra.mrb[0].mxu0 %v515
      %v1036 = vpop.f32.mrb[0].mxu0
      %v1037 = vadd.f32 %v876, %v1036
      %v1038 = vpop.f32.mrb[0].mxu0
      %v1039 = vpop.f32.mrb[0].mxu0
      %v1040 = vadd.f32 %v879, %v1039
      %v1041 = vpop.f32.mrb[0].mxu0
      %1042 = vmatprep.mubr.bf16.mxu0 %v520
      %1043 = vmatmul.mubr.bf16.gmra.mrb[0].mxu0 %v519
      %v1044 = vpop.f32.mrb[0].mxu0
      %v1045 = vadd.f32 %v884, %v1044
      %v1046 = vpop.f32.mrb[0].mxu0
      %v1047 = vpop.f32.mrb[0].mxu0
      %v1048 = vadd.f32 %v887, %v1047
      %v1049 = vpop.f32.mrb[0].mxu0
      %1050 = vmatprep.mubr.bf16.mxu0 %v524
      %1051 = vmatmul.mubr.bf16.gmra.mrb[0].mxu0 %v523
      %v1052 = vpop.f32.mrb[0].mxu0
      %v1053 = vadd.f32 %v892, %v1052
      %v1054 = vpop.f32.mrb[0].mxu0
      %v1055 = vpop.f32.mrb[0].mxu0
      %v1056 = vadd.f32 %v895, %v1055
      %v1057 = vpop.f32.mrb[0].mxu0
      %1058 = vmatprep.mubr.bf16.mxu0 %v528
      %1059 = vmatmul.mubr.bf16.gmra.mrb[0].mxu0 %v527
      %v1060 = vpop.f32.mrb[0].mxu0
      %v1061 = vadd.f32 %v900, %v1060
      %v1062 = vpop.f32.mrb[0].mxu0
      %v1063 = vpop.f32.mrb[0].mxu0
      %v1064 = vadd.f32 %v903, %v1063
      %v1065 = vpop.f32.mrb[0].mxu0
      %1066 = vmatprep.mubr.bf16.mxu0 %v532
      %1067 = vmatmul.mubr.bf16.gmra.mrb[0].mxu0 %v531
      %v1068 = vpop.f32.mrb[0].mxu0
      %v1069 = vadd.f32 %v908, %v1068
      %v1070 = vpop.f32.mrb[0].mxu0
      %v1071 = vpop.f32.mrb[0].mxu0
      %v1072 = vadd.f32 %v911, %v1071
      %v1073 = vpop.f32.mrb[0].mxu0
      %1074 = vmatprep.mubr.bf16.mxu0 %v536
      %1075 = vmatmul.mubr.bf16.gmra.mrb[0].mxu0 %v535
      %v1076 = vpop.f32.mrb[0].mxu0
      %v1077 = vadd.f32 %v916, %v1076
      %v1078 = vpop.f32.mrb[0].mxu0
      %v1079 = vpop.f32.mrb[0].mxu0
      %v1080 = vadd.f32 %v919, %v1079
      %v1081 = vpop.f32.mrb[0].mxu0
      %1082 = vmatprep.mubr.bf16.mxu0 %v540
      %1083 = vmatmul.mubr.bf16.gmra.mrb[0].mxu0 %v539
      %v1084 = vpop.f32.mrb[0].mxu0
      %v1085 = vadd.f32 %v924, %v1084
      %v1086 = vpop.f32.mrb[0].mxu0
      %v1087 = vpop.f32.mrb[0].mxu0
      %v1088 = vadd.f32 %v927, %v1087
      %v1089 = vpop.f32.mrb[0].mxu0
      %1090 = vmatprep.mubr.bf16.mxu0 %v544
      %1091 = vmatmul.mubr.bf16.gmra.mrb[0].mxu0 %v543
      %v1092 = vpop.f32.mrb[0].mxu0
      %v1093 = vadd.f32 %v932, %v1092
      %v1094 = vpop.f32.mrb[0].mxu0
      %v1095 = vpop.f32.mrb[0].mxu0
      %v1096 = vadd.f32 %v935, %v1095
      %v1097 = vpop.f32.mrb[0].mxu0
      %1098 = vmatprep.mubr.bf16.mxu0 %v548
      %1099 = vmatmul.mubr.bf16.gmra.mrb[0].mxu0 %v547
      %v1100 = vpop.f32.mrb[0].mxu0
      %v1101 = vadd.f32 %v940, %v1100
      %v1102 = vpop.f32.mrb[0].mxu0
      %v1103 = vpop.f32.mrb[0].mxu0
      %v1104 = vadd.f32 %v943, %v1103
      %v1105 = vpop.f32.mrb[0].mxu0
      %1106 = vmatprep.mubr.bf16.mxu0 %v552
      %1107 = vmatmul.mubr.bf16.gmra.mrb[0].mxu0 %v551
      %v1108 = vpop.f32.mrb[0].mxu0
      %v1109 = vadd.f32 %v948, %v1108
      %v1110 = vpop.f32.mrb[0].mxu0
      %v1111 = vpop.f32.mrb[0].mxu0
      %v1112 = vadd.f32 %v951, %v1111
      %v1113 = vpop.f32.mrb[0].mxu0
      %1114 = vmatprep.mubr.bf16.mxu0 %v556
      %1115 = vmatmul.mubr.bf16.gmra.mrb[0].mxu0 %v555
      %v1116 = vpop.f32.mrb[0].mxu0
      %v1117 = vadd.f32 %v956, %v1116
      %v1118 = vpop.f32.mrb[0].mxu0
      %v1119 = vpop.f32.mrb[0].mxu0
      %v1120 = vadd.f32 %v959, %v1119
      %v1121 = vpop.f32.mrb[0].mxu0
      %1122 = vmatprep.mubr.bf16.mxu0 %v560
      %1123 = vmatmul.mubr.bf16.gmra.mrb[0].mxu0 %v559
      %v1124 = vpop.f32.mrb[0].mxu0
      %v1125 = vadd.f32 %v964, %v1124
      %v1126 = vpop.f32.mrb[0].mxu0
      %v1127 = vpop.f32.mrb[0].mxu0
      %v1128 = vadd.f32 %v967, %v1127
      %v1129 = vpop.f32.mrb[0].mxu0
      %1130 = vmatprep.mubr.bf16.mxu0 %v564
      %1131 = vmatmul.mubr.bf16.gmra.mrb[0].mxu0 %v563
      %v1132 = vpop.f32.mrb[0].mxu0
      %v1133 = vadd.f32 %v972, %v1132
      %v1134 = vpop.f32.mrb[0].mxu0
      %v1135 = vpop.f32.mrb[0].mxu0
      %v1136 = vadd.f32 %v975, %v1135
      %v1137 = vpop.f32.mrb[0].mxu0
      %1138 = vmatprep.mubr.bf16.mxu0 %v568
      %1139 = vmatmul.mubr.bf16.gmra.mrb[0].mxu0 %v567
      %v1140 = vpop.f32.mrb[0].mxu0
      %v1141 = vadd.f32 %v980, %v1140
      %v1142 = vpop.f32.mrb[0].mxu0
      %v1143 = vpop.f32.mrb[0].mxu0
      %v1144 = vadd.f32 %v983, %v1143
      %v1145 = vpop.f32.mrb[0].mxu0
      %1146 = vdwg.mxu0
      %v1147 = vmax.f32 %v1021, 0.0
      %v1148 = vmax.f32 %v1024, 0.0
      %v1149 = vmax.f32 %v1029, 0.0
      %v1150 = vmax.f32 %v1032, 0.0
      %v1151 = vmax.f32 %v1037, 0.0
      %v1152 = vmax.f32 %v1040, 0.0
      %v1153 = vmax.f32 %v1045, 0.0
      %v1154 = vmax.f32 %v1048, 0.0
      %v1155 = vmax.f32 %v1053, 0.0
      %v1156 = vmax.f32 %v1056, 0.0
      %v1157 = vmax.f32 %v1061, 0.0
      %v1158 = vmax.f32 %v1064, 0.0
      %v1159 = vmax.f32 %v1069, 0.0
      %v1160 = vmax.f32 %v1072, 0.0
      %v1161 = vmax.f32 %v1077, 0.0
      %v1162 = vmax.f32 %v1080, 0.0
      %v1163 = vmax.f32 %v1085, 0.0
      %v1164 = vmax.f32 %v1088, 0.0
      %v1165 = vmax.f32 %v1093, 0.0
      %v1166 = vmax.f32 %v1096, 0.0
      %v1167 = vmax.f32 %v1101, 0.0
      %v1168 = vmax.f32 %v1104, 0.0
      %v1169 = vmax.f32 %v1109, 0.0
      %v1170 = vmax.f32 %v1112, 0.0
      %v1171 = vmax.f32 %v1117, 0.0
      %v1172 = vmax.f32 %v1120, 0.0
      %v1173 = vmax.f32 %v1125, 0.0
      %v1174 = vmax.f32 %v1128, 0.0
      %v1175 = vmax.f32 %v1133, 0.0
      %v1176 = vmax.f32 %v1136, 0.0
      %v1177 = vmax.f32 %v1141, 0.0
      %v1178 = vmax.f32 %v1144, 0.0
      %v1179 = vpack.c.bf16 %v1148, %v1147
      %v1180 = vpack.c.bf16 %v1150, %v1149
      %v1181 = vpack.c.bf16 %v1152, %v1151
      %v1182 = vpack.c.bf16 %v1154, %v1153
      %v1183 = vpack.c.bf16 %v1156, %v1155
      %v1184 = vpack.c.bf16 %v1158, %v1157
      %v1185 = vpack.c.bf16 %v1160, %v1159
      %v1186 = vpack.c.bf16 %v1162, %v1161
      %v1187 = vpack.c.bf16 %v1164, %v1163
      %v1188 = vpack.c.bf16 %v1166, %v1165
      %v1189 = vpack.c.bf16 %v1168, %v1167
      %v1190 = vpack.c.bf16 %v1170, %v1169
      %v1191 = vpack.c.bf16 %v1172, %v1171
      %v1192 = vpack.c.bf16 %v1174, %v1173
      %v1193 = vpack.c.bf16 %v1176, %v1175
      %v1194 = vpack.c.bf16 %v1178, %v1177
      %v1211 = vunpack.c.l.b16 %v1179
      %v1212 = vunpack.c.h.b16 %v1179
      %v1213 = vunpack.c.l.b16 %v1180
      %v1214 = vunpack.c.h.b16 %v1180
      %v1215 = vunpack.c.l.b16 %v1181
      %v1216 = vunpack.c.h.b16 %v1181
      %v1217 = vunpack.c.l.b16 %v1182
      %v1218 = vunpack.c.h.b16 %v1182
      %v1219 = vunpack.c.l.b16 %v1183
      %v1220 = vunpack.c.h.b16 %v1183
      %v1221 = vunpack.c.l.b16 %v1184
      %v1222 = vunpack.c.h.b16 %v1184
      %v1223 = vunpack.c.l.b16 %v1185
      %v1224 = vunpack.c.h.b16 %v1185
      %v1225 = vunpack.c.l.b16 %v1186
      %v1226 = vunpack.c.h.b16 %v1186
      %v1227 = vunpack.c.l.b16 %v1187
      %v1228 = vunpack.c.h.b16 %v1187
      %v1229 = vunpack.c.l.b16 %v1188
      %v1230 = vunpack.c.h.b16 %v1188
      %v1231 = vunpack.c.l.b16 %v1189
      %v1232 = vunpack.c.h.b16 %v1189
      %v1233 = vunpack.c.l.b16 %v1190
      %v1234 = vunpack.c.h.b16 %v1190
      %v1235 = vunpack.c.l.b16 %v1191
      %v1236 = vunpack.c.h.b16 %v1191
      %v1237 = vunpack.c.l.b16 %v1192
      %v1238 = vunpack.c.h.b16 %v1192
      %v1239 = vunpack.c.l.b16 %v1193
      %v1240 = vunpack.c.h.b16 %v1193
      %v1241 = vunpack.c.l.b16 %v1194
      %v1242 = vunpack.c.h.b16 %v1194
      %v1243 = vpack.c.b16 %v1211, %v1211
      %v1244 = vpack.c.b16 %v1212, %v1212
      %v1245 = vpack.c.b16 %v1213, %v1213
      %v1246 = vpack.c.b16 %v1214, %v1214
      %v1247 = vpack.c.b16 %v1215, %v1215
      %v1248 = vpack.c.b16 %v1216, %v1216
      %v1249 = vpack.c.b16 %v1217, %v1217
      %v1250 = vpack.c.b16 %v1218, %v1218
      %v1251 = vpack.c.b16 %v1219, %v1219
      %v1252 = vpack.c.b16 %v1220, %v1220
      %v1253 = vpack.c.b16 %v1221, %v1221
      %v1254 = vpack.c.b16 %v1222, %v1222
      %v1255 = vpack.c.b16 %v1223, %v1223
      %v1256 = vpack.c.b16 %v1224, %v1224
      %v1257 = vpack.c.b16 %v1225, %v1225
      %v1258 = vpack.c.b16 %v1226, %v1226
      %v1259 = vpack.c.b16 %v1227, %v1227
      %v1260 = vpack.c.b16 %v1228, %v1228
      %v1261 = vpack.c.b16 %v1229, %v1229
      %v1262 = vpack.c.b16 %v1230, %v1230
      %v1263 = vpack.c.b16 %v1231, %v1231
      %v1264 = vpack.c.b16 %v1232, %v1232
      %v1265 = vpack.c.b16 %v1233, %v1233
      %v1266 = vpack.c.b16 %v1234, %v1234
      %v1267 = vpack.c.b16 %v1235, %v1235
      %v1268 = vpack.c.b16 %v1236, %v1236
      %v1269 = vpack.c.b16 %v1237, %v1237
      %v1270 = vpack.c.b16 %v1238, %v1238
      %v1271 = vpack.c.b16 %v1239, %v1239
      %v1272 = vpack.c.b16 %v1240, %v1240
      %v1273 = vpack.c.b16 %v1241, %v1241
      %v1274 = vpack.c.b16 %v1242, %v1242
      %vm1307 = vcmask 257024
      %1308 = vst.msk [vmem:[%s175] sm:$0xf] %vm1307, %v1243
      %1309 = vst.msk [vmem:[%s175 + $0x4] sm:$0xf] %vm1307, %v1244
      %1310 = vst.msk [vmem:[%s175 + $0x8] sm:$0xf] %vm1307, %v1245
      %1311 = vst.msk [vmem:[%s175 + $0xc] sm:$0xf] %vm1307, %v1246
      %1312 = vst.msk [vmem:[%s175 + $0x10] sm:$0xf] %vm1307, %v1247
      %1313 = vst.msk [vmem:[%s175 + $0x14] sm:$0xf] %vm1307, %v1248
      %1314 = vst.msk [vmem:[%s175 + $0x18] sm:$0xf] %vm1307, %v1249
      %1315 = vst.msk [vmem:[%s175 + $0x1c] sm:$0xf] %vm1307, %v1250
      %1316 = vst.msk [vmem:[%s175 + $0x20] sm:$0xf] %vm1307, %v1251
      %1317 = vst.msk [vmem:[%s175 + $0x24] sm:$0xf] %vm1307, %v1252
      %1318 = vst.msk [vmem:[%s175 + $0x28] sm:$0xf] %vm1307, %v1253
      %1319 = vst.msk [vmem:[%s175 + $0x2c] sm:$0xf] %vm1307, %v1254
      %1320 = vst.msk [vmem:[%s175 + $0x30] sm:$0xf] %vm1307, %v1255
      %1321 = vst.msk [vmem:[%s175 + $0x34] sm:$0xf] %vm1307, %v1256
      %1322 = vst.msk [vmem:[%s175 + $0x38] sm:$0xf] %vm1307, %v1257
      %1323 = vst.msk [vmem:[%s175 + $0x3c] sm:$0xf] %vm1307, %v1258
      %1324 = vst.msk [vmem:[%s175 + $0x40] sm:$0xf] %vm1307, %v1259
      %1325 = vst.msk [vmem:[%s175 + $0x44] sm:$0xf] %vm1307, %v1260
      %1326 = vst.msk [vmem:[%s175 + $0x48] sm:$0xf] %vm1307, %v1261
      %1327 = vst.msk [vmem:[%s175 + $0x4c] sm:$0xf] %vm1307, %v1262
      %1328 = vst.msk [vmem:[%s175 + $0x50] sm:$0xf] %vm1307, %v1263
      %1329 = vst.msk [vmem:[%s175 + $0x54] sm:$0xf] %vm1307, %v1264
      %1330 = vst.msk [vmem:[%s175 + $0x58] sm:$0xf] %vm1307, %v1265
      %1331 = vst.msk [vmem:[%s175 + $0x5c] sm:$0xf] %vm1307, %v1266
      %1332 = vst.msk [vmem:[%s175 + $0x60] sm:$0xf] %vm1307, %v1267
      %1333 = vst.msk [vmem:[%s175 + $0x64] sm:$0xf] %vm1307, %v1268
      %1334 = vst.msk [vmem:[%s175 + $0x68] sm:$0xf] %vm1307, %v1269
      %1335 = vst.msk [vmem:[%s175 + $0x6c] sm:$0xf] %vm1307, %v1270
      %1336 = vst.msk [vmem:[%s175 + $0x70] sm:$0xf] %vm1307, %v1271
      %1337 = vst.msk [vmem:[%s175 + $0x74] sm:$0xf] %vm1307, %v1272
      %1338 = vst.msk [vmem:[%s175 + $0x78] sm:$0xf] %vm1307, %v1273
      %1339 = vst.msk [vmem:[%s175 + $0x7c] sm:$0xf] %vm1307, %v1274
      %s1340 = smul.u32 32, %s14
      %p1341 = scmp.lt.s32.totalorder %s1340, 63
      %s1342 = scalar_select %p1341, %s1340, 63
      %s1343 = smul.addr %s1342, 4
      %s1344 = scalar_lea.vmem %s3, %s1343
      // Predicated region
      $region33: #{vae_forward.12} parent=31 // pred_check
        %p1345 = pneg %p100
      $region34: #{vae_forward.12} parent=31 // pred_check_branch
        %1347 = sbr.rel (%p1345) target = $region36
      $region35: #{vae_forward.12} parent=31 // pred_region
        %s1348 = smul.u32 32, %s14
      $region36: #{vae_forward.12} parent=31 // pred_fallthru
        _
    $region32: #{vae_forward.12} parent=5 // pred_fallthru
      _
    %p1349 = scmp.le.s32.totalorder 2, %s9
    // Predicated region
    $region37: #{vae_forward.12} parent=5 // pred_check
      %p1350 = pneg %p1349
    $region38: #{vae_forward.12} parent=5 // pred_check_branch
      %1352 = sbr.rel (%p1350) target = $region40
    $region39: #{vae_forward.12} parent=5 // pred_region
      %s1353 = ssub.s32 %s9, 2
      // Predicated region
      $region41: #{vae_forward.12} parent=39 // pred_check
        %p1354 = pneg %p106
      $region42: #{vae_forward.12} parent=39 // pred_check_branch
        %1356 = sbr.rel (%p1354) target = $region44
      $region43: #{vae_forward.12} parent=39 // pred_region
        %s1357 = smul.u32 32, %s15
        %p1358 = scmp.lt.s32.totalorder %s1357, 63
        %s1359 = scalar_select %p1358, %s1357, 63
        %s1360 = smul.addr %s1359, 4
        %s1361 = scalar_lea.vmem %s3, %s1360
      $region44: #{vae_forward.12} parent=39 // pred_fallthru
        _
    $region40: #{vae_forward.12} parent=5 // pred_fallthru
      _
  $region6: #{vae_forward.12} parent=0 // loop_footer
    %s13 = sadd.s32 1, %s9
  $region7: #{vae_forward.12} parent=0 // loop_footer_branch
    %8 = sbr.rel target = $region3
  $region8: #{vae_forward.12} parent=0 // loop_exit
    _

// kernel: vae_forward.13
$region0: #{vae_forward.13}
  #allocation0 [shape = 'u32[]', space=smem, size = 0x4, offset = 0x4, fixed_abs, tag = 'smem constant byte address 0x4 - core index']
  #allocation1 [shape = 'u32[144,128]{1,0:T(1,128)}', space=vmem, size = 0x12000, scoped, tag = 'internal scratch']
  #allocation2 [shape = 'f32[1,1]{1,0:T(1,128)S(1)}', space=vmem, size = 0x200, scoped, tag = 'scoped memory for vae_forward.13']
  %s0 = inlined_call_operand.vmem [shape: bf16[2048,512], index: 0, kind: input, shape index: {}]
  %s1 = inlined_call_operand.vmem [shape: bf16[512,1], index: 1, kind: input, shape index: {}]
  %s2 = inlined_call_operand.<no memory space> [shape: f32[1,1], index: 2, kind: input, shape index: {}]
  %s3 = inlined_call_operand.vmem [shape: f32[2048,1], index: 3, kind: output, shape index: {}]
  %s4 = sld [smem:[#allocation0]]
  $region45: #{vae_forward.13} parent=0
    _
  %s6 = ssub.s32 1, %s4
  %s7 = scalar_select 0, %s6, %s4
  %v8 = vstv %s2
  %9 = vst [vmem:[#allocation2] sm:$0x1] %v8
  loop: start=0, step=1, limit=10
  $region2: #{vae_forward.13} parent=0 // loop_pre_header
    _
  $region3: #{vae_forward.13} parent=0 // loop_header
    %s11 = sphi 0, %s15
    %p12 = scmp.ge.s32.totalorder %s11, 10
    %s21 = sphi 0, %s23
    %s24 = sphi 0, %s21
    %s25 = sphi 0, %s24
    %s41 = sphi 0, %s25
    %s45 = sphi 0, %s45
    %s47 = sphi 0, %s45
    %s48 = sphi 0, %s47
    %s62 = sphi 0, %s48
    %s66 = sphi 0, %s66
    %s68 = sphi 0, %s66
    %s69 = sphi 0, %s68
    %s83 = sphi 0, %s69
    %s89 = sphi 0, %s91
    %s92 = sphi 0, %s89
    %s93 = sphi 0, %s92
    %s109 = sphi 0, %s93
  $region4: #{vae_forward.13} parent=0 // loop_header_branch
    %14 = sbr.rel (%p12) target = $region8
  $region5: #{vae_forward.13} parent=0 // loop_body
    %s16 = ssub.s32 %s11, 1
    %s17 = ssub.s32 %s11, 2
    %s18 = sadd.s32 %s11, 1
    %s19 = ssub.s32 %s11, %s18
    %p20 = scmp.eq.s32.totalorder %s19, 0
    %s22 = sadd.s32 %s21, 1
    %s23 = scalar_select %p20, %s21, %s22
    %p26 = pneg %p20
    %p27 = scmp.eq.s32.totalorder %s11, 7
    %p28 = por %p26, %p27
    %p29 = scmp.ne.s32.totalorder %s21, %s24
    %p30 = scmp.eq.s32.totalorder %s11, 0
    %p31 = por %p29, %p30
    %p32 = scmp.ne.s32.totalorder %s21, %s24
    %p33 = scmp.eq.s32.totalorder %s16, 7
    %p34 = por %p32, %p33
    %p35 = scmp.ne.s32.totalorder %s24, %s25
    %p36 = scmp.eq.s32.totalorder %s16, 0
    %p37 = por %p35, %p36
    %p38 = scmp.ne.s32.totalorder %s24, %s25
    %p39 = scmp.eq.s32.totalorder %s17, 7
    %p40 = por %p38, %p39
    %p42 = scmp.ne.s32.totalorder %s25, %s41
    %p43 = scmp.eq.s32.totalorder %s17, 0
    %p44 = por %p42, %p43
    %s46 = sadd.s32 %s45, 1
    %p49 = scmp.eq.s32.totalorder %s11, 7
    %p50 = scmp.ne.s32.totalorder %s45, %s47
    %p51 = scmp.eq.s32.totalorder %s11, 0
    %p52 = por %p50, %p51
    %p53 = scmp.ne.s32.totalorder %s45, %s47
    %p54 = scmp.eq.s32.totalorder %s16, 7
    %p55 = por %p53, %p54
    %p56 = scmp.ne.s32.totalorder %s47, %s48
    %p57 = scmp.eq.s32.totalorder %s16, 0
    %p58 = por %p56, %p57
    %p59 = scmp.ne.s32.totalorder %s47, %s48
    %p60 = scmp.eq.s32.totalorder %s17, 7
    %p61 = por %p59, %p60
    %p63 = scmp.ne.s32.totalorder %s48, %s62
    %p64 = scmp.eq.s32.totalorder %s17, 0
    %p65 = por %p63, %p64
    %s67 = sadd.s32 %s66, 1
    %p70 = scmp.eq.s32.totalorder %s11, 7
    %p71 = scmp.ne.s32.totalorder %s66, %s68
    %p72 = scmp.eq.s32.totalorder %s11, 0
    %p73 = por %p71, %p72
    %p74 = scmp.ne.s32.totalorder %s66, %s68
    %p75 = scmp.eq.s32.totalorder %s16, 7
    %p76 = por %p74, %p75
    %p77 = scmp.ne.s32.totalorder %s68, %s69
    %p78 = scmp.eq.s32.totalorder %s16, 0
    %p79 = por %p77, %p78
    %p80 = scmp.ne.s32.totalorder %s68, %s69
    %p81 = scmp.eq.s32.totalorder %s17, 7
    %p82 = por %p80, %p81
    %p84 = scmp.ne.s32.totalorder %s69, %s83
    %p85 = scmp.eq.s32.totalorder %s17, 0
    %p86 = por %p84, %p85
    %s87 = ssub.s32 %s11, %s18
    %p88 = scmp.eq.s32.totalorder %s87, 0
    %s90 = sadd.s32 %s89, 1
    %s91 = scalar_select %p88, %s89, %s90
    %p94 = pneg %p88
    %p95 = scmp.eq.s32.totalorder %s11, 7
    %p96 = por %p94, %p95
    %p97 = scmp.ne.s32.totalorder %s89, %s92
    %p98 = scmp.eq.s32.totalorder %s11, 0
    %p99 = por %p97, %p98
    %p100 = scmp.ne.s32.totalorder %s89, %s92
    %p101 = scmp.eq.s32.totalorder %s16, 7
    %p102 = por %p100, %p101
    %p103 = scmp.ne.s32.totalorder %s92, %s93
    %p104 = scmp.eq.s32.totalorder %s16, 0
    %p105 = por %p103, %p104
    %p106 = scmp.ne.s32.totalorder %s92, %s93
    %p107 = scmp.eq.s32.totalorder %s17, 7
    %p108 = por %p106, %p107
    %p110 = scmp.ne.s32.totalorder %s93, %s109
    %p111 = scmp.eq.s32.totalorder %s17, 0
    %p112 = por %p110, %p111
    %p113 = scmp.le.s32.totalorder 1, %s11
    %p114 = scmp.lt.s32.totalorder %s11, 9
    %p115 = pnand %p113, %p114
    %p116 = pneg %p115
    // Predicated region
    $region9: #{vae_forward.13} parent=5 // pred_check
      _
    $region10: #{vae_forward.13} parent=5 // pred_check_branch
      %118 = sbr.rel (%p115) target = $region12
    $region11: #{vae_forward.13} parent=5 // pred_region
      %s119 = ssub.s32 %s11, 1
      // Predicated region
      $region13: #{vae_forward.13} parent=11 // pred_check
        %p120 = pneg %p58
      $region14: #{vae_forward.13} parent=11 // pred_check_branch
        %122 = sbr.rel (%p120) target = $region16
      $region15: #{vae_forward.13} parent=11 // pred_region
        _
      $region16: #{vae_forward.13} parent=11 // pred_fallthru
        _
      // Predicated region
      $region17: #{vae_forward.13} parent=11 // pred_check
        %p123 = pneg %p79
      $region18: #{vae_forward.13} parent=11 // pred_check_branch
        %125 = sbr.rel (%p123) target = $region20
      $region19: #{vae_forward.13} parent=11 // pred_region
        _
      $region20: #{vae_forward.13} parent=11 // pred_fallthru
        _
    $region12: #{vae_forward.13} parent=5 // pred_fallthru
      _
    %p126 = scmp.lt.s32.totalorder %s11, 8
    // Predicated region
    $region21: #{vae_forward.13} parent=5 // pred_check
      %p127 = pneg %p126
    $region22: #{vae_forward.13} parent=5 // pred_check_branch
      %129 = sbr.rel (%p127) target = $region24
    $region23: #{vae_forward.13} parent=5 // pred_region
      // Predicated region
      $region25: #{vae_forward.13} parent=23 // pred_check
        %p130 = pneg %p31
      $region26: #{vae_forward.13} parent=23 // pred_check_branch
        %132 = sbr.rel (%p130) target = $region28
      $region27: #{vae_forward.13} parent=23 // pred_region
        %s133 = smul.u32 32, %s11
        %p134 = scmp.lt.s32.totalorder %s133, 255
        %s135 = scalar_select %p134, %s133, 255
        %s136 = smul.addr %s135, 4
        %s137 = smul.addr %s136, 4
        %s138 = scalar_lea.vmem %s0, %s137
        %s139 = smul.u32 32, %s11
      $region28: #{vae_forward.13} parent=23 // pred_fallthru
        _
    $region24: #{vae_forward.13} parent=5 // pred_fallthru
      _
    %p140 = scmp.le.s32.totalorder 1, %s11
    %p141 = scmp.lt.s32.totalorder %s11, 9
    %p142 = pnand %p140, %p141
    %p143 = pneg %p142
    // Predicated region
    $region29: #{vae_forward.13} parent=5 // pred_check
      _
    $region30: #{vae_forward.13} parent=5 // pred_check_branch
      %145 = sbr.rel (%p142) target = $region32
    $region31: #{vae_forward.13} parent=5 // pred_region
      %s146 = ssub.s32 %s11, 1
      %s147 = smul.u32 32, %s16
      %p148 = scmp.lt.s32.totalorder %s147, 255
      %s149 = scalar_select %p148, %s147, 255
      %s150 = smul.addr %s149, 4
      %s151 = smul.addr %s150, 4
      %s152 = scalar_lea.vmem %s0, %s151
      %p153 = pneg %p37
      %p154 = pneg %p34
      %p155 = pneg %p58
      %p156 = pneg %p55
      %p157 = pneg %p79
      %p158 = pneg %p76
      %p159 = pneg %p105
      %p160 = pneg %p102
      %s161 = smul.u32 32, %s16
      %p162 = scmp.lt.s32.totalorder %s161, 255
      %s163 = scalar_select %p162, %s161, 255
      %s164 = smul.addr %s163, 8
      %s165 = scalar_lea.vmem %s3, %s164
      %s166 = smul.u32 32, %s16
      %p167 = scmp.lt.s32.totalorder %s166, 255
      %s168 = scalar_select %p167, %s166, 255
      %s169 = smul.addr %s168, 4
      %s170 = smul.addr %s169, 4
      %s171 = scalar_lea.vmem %s0, %s170
      %s172 = smul.u32 32, %s16
      %s173 = smul.u32 32, %s16
      %p174 = scmp.lt.s32.totalorder %s173, 255
      %s175 = scalar_select %p174, %s173, 255
      %s176 = smul.addr %s175, 8
      %s177 = scalar_lea.vmem %s3, %s176
      %s178 = smul.u32 32, %s16
      %v180 = vld [vmem:[%s171] sm:$0xff]
      %v181 = vld [vmem:[%s171 + $0x8] sm:$0xff]
      %v182 = vld [vmem:[%s171 + $0x10] sm:$0xff]
      %v183 = vld [vmem:[%s171 + $0x18] sm:$0xff]
      %v184 = vld [vmem:[%s171 + $0x20] sm:$0xff]
      %v185 = vld [vmem:[%s171 + $0x28] sm:$0xff]
      %v186 = vld [vmem:[%s171 + $0x30] sm:$0xff]
      %v187 = vld [vmem:[%s171 + $0x38] sm:$0xff]
      %v188 = vld [vmem:[%s171 + $0x40] sm:$0xff]
      %v189 = vld [vmem:[%s171 + $0x48] sm:$0xff]
      %v190 = vld [vmem:[%s171 + $0x50] sm:$0xff]
      %v191 = vld [vmem:[%s171 + $0x58] sm:$0xff]
      %v192 = vld [vmem:[%s171 + $0x60] sm:$0xff]
      %v193 = vld [vmem:[%s171 + $0x68] sm:$0xff]
      %v194 = vld [vmem:[%s171 + $0x70] sm:$0xff]
      %v195 = vld [vmem:[%s171 + $0x78] sm:$0xff]
      %v196 = vld [vmem:[%s171 + $0x80] sm:$0xff]
      %v197 = vld [vmem:[%s171 + $0x88] sm:$0xff]
      %v198 = vld [vmem:[%s171 + $0x90] sm:$0xff]
      %v199 = vld [vmem:[%s171 + $0x98] sm:$0xff]
      %v200 = vld [vmem:[%s171 + $0xa0] sm:$0xff]
      %v201 = vld [vmem:[%s171 + $0xa8] sm:$0xff]
      %v202 = vld [vmem:[%s171 + $0xb0] sm:$0xff]
      %v203 = vld [vmem:[%s171 + $0xb8] sm:$0xff]
      %v204 = vld [vmem:[%s171 + $0xc0] sm:$0xff]
      %v205 = vld [vmem:[%s171 + $0xc8] sm:$0xff]
      %v206 = vld [vmem:[%s171 + $0xd0] sm:$0xff]
      %v207 = vld [vmem:[%s171 + $0xd8] sm:$0xff]
      %v208 = vld [vmem:[%s171 + $0xe0] sm:$0xff]
      %v209 = vld [vmem:[%s171 + $0xe8] sm:$0xff]
      %v210 = vld [vmem:[%s171 + $0xf0] sm:$0xff]
      %v211 = vld [vmem:[%s171 + $0xf8] sm:$0xff]
      %v212 = vld [vmem:[%s171 + $0x100] sm:$0xff]
      %v213 = vld [vmem:[%s171 + $0x108] sm:$0xff]
      %v214 = vld [vmem:[%s171 + $0x110] sm:$0xff]
      %v215 = vld [vmem:[%s171 + $0x118] sm:$0xff]
      %v216 = vld [vmem:[%s171 + $0x120] sm:$0xff]
      %v217 = vld [vmem:[%s171 + $0x128] sm:$0xff]
      %v218 = vld [vmem:[%s171 + $0x130] sm:$0xff]
      %v219 = vld [vmem:[%s171 + $0x138] sm:$0xff]
      %v220 = vld [vmem:[%s171 + $0x140] sm:$0xff]
      %v221 = vld [vmem:[%s171 + $0x148] sm:$0xff]
      %v222 = vld [vmem:[%s171 + $0x150] sm:$0xff]
      %v223 = vld [vmem:[%s171 + $0x158] sm:$0xff]
      %v224 = vld [vmem:[%s171 + $0x160] sm:$0xff]
      %v225 = vld [vmem:[%s171 + $0x168] sm:$0xff]
      %v226 = vld [vmem:[%s171 + $0x170] sm:$0xff]
      %v227 = vld [vmem:[%s171 + $0x178] sm:$0xff]
      %v228 = vld [vmem:[%s171 + $0x180] sm:$0xff]
      %v229 = vld [vmem:[%s171 + $0x188] sm:$0xff]
      %v230 = vld [vmem:[%s171 + $0x190] sm:$0xff]
      %v231 = vld [vmem:[%s171 + $0x198] sm:$0xff]
      %v232 = vld [vmem:[%s171 + $0x1a0] sm:$0xff]
      %v233 = vld [vmem:[%s171 + $0x1a8] sm:$0xff]
      %v234 = vld [vmem:[%s171 + $0x1b0] sm:$0xff]
      %v235 = vld [vmem:[%s171 + $0x1b8] sm:$0xff]
      %v236 = vld [vmem:[%s171 + $0x1c0] sm:$0xff]
      %v237 = vld [vmem:[%s171 + $0x1c8] sm:$0xff]
      %v238 = vld [vmem:[%s171 + $0x1d0] sm:$0xff]
      %v239 = vld [vmem:[%s171 + $0x1d8] sm:$0xff]
      %v240 = vld [vmem:[%s171 + $0x1e0] sm:$0xff]
      %v241 = vld [vmem:[%s171 + $0x1e8] sm:$0xff]
      %v242 = vld [vmem:[%s171 + $0x1f0] sm:$0xff]
      %v243 = vld [vmem:[%s171 + $0x1f8] sm:$0xff]
      %v244 = vld [vmem:[%s1] sm:$0xf]
      %v245 = vld [vmem:[%s1 + $0x4] sm:$0xf]
      %v246 = vld [vmem:[%s1 + $0x8] sm:$0xf]
      %v247 = vld [vmem:[%s1 + $0xc] sm:$0xf]
      %v248 = vld [vmem:[%s1 + $0x10] sm:$0xf]
      %v249 = vld [vmem:[%s1 + $0x14] sm:$0xf]
      %v250 = vld [vmem:[%s1 + $0x18] sm:$0xf]
      %v251 = vld [vmem:[%s1 + $0x1c] sm:$0xf]
      %v252 = vld [vmem:[%s1 + $0x20] sm:$0xf]
      %v253 = vld [vmem:[%s1 + $0x24] sm:$0xf]
      %v254 = vld [vmem:[%s1 + $0x28] sm:$0xf]
      %v255 = vld [vmem:[%s1 + $0x2c] sm:$0xf]
      %v256 = vld [vmem:[%s1 + $0x30] sm:$0xf]
      %v257 = vld [vmem:[%s1 + $0x34] sm:$0xf]
      %v258 = vld [vmem:[%s1 + $0x38] sm:$0xf]
      %v259 = vld [vmem:[%s1 + $0x3c] sm:$0xf]
      %v260 = vld [vmem:[%s1 + $0x40] sm:$0xf]
      %v261 = vld [vmem:[%s1 + $0x44] sm:$0xf]
      %v262 = vld [vmem:[%s1 + $0x48] sm:$0xf]
      %v263 = vld [vmem:[%s1 + $0x4c] sm:$0xf]
      %v264 = vld [vmem:[%s1 + $0x50] sm:$0xf]
      %v265 = vld [vmem:[%s1 + $0x54] sm:$0xf]
      %v266 = vld [vmem:[%s1 + $0x58] sm:$0xf]
      %v267 = vld [vmem:[%s1 + $0x5c] sm:$0xf]
      %v268 = vld [vmem:[%s1 + $0x60] sm:$0xf]
      %v269 = vld [vmem:[%s1 + $0x64] sm:$0xf]
      %v270 = vld [vmem:[%s1 + $0x68] sm:$0xf]
      %v271 = vld [vmem:[%s1 + $0x6c] sm:$0xf]
      %v272 = vld [vmem:[%s1 + $0x70] sm:$0xf]
      %v273 = vld [vmem:[%s1 + $0x74] sm:$0xf]
      %v274 = vld [vmem:[%s1 + $0x78] sm:$0xf]
      %v275 = vld [vmem:[%s1 + $0x7c] sm:$0xf]
      %v276 = vld [vmem:[%s1 + $0x80] sm:$0xf]
      %v277 = vld [vmem:[%s1 + $0x84] sm:$0xf]
      %v278 = vld [vmem:[%s1 + $0x88] sm:$0xf]
      %v279 = vld [vmem:[%s1 + $0x8c] sm:$0xf]
      %v280 = vld [vmem:[%s1 + $0x90] sm:$0xf]
      %v281 = vld [vmem:[%s1 + $0x94] sm:$0xf]
      %v282 = vld [vmem:[%s1 + $0x98] sm:$0xf]
      %v283 = vld [vmem:[%s1 + $0x9c] sm:$0xf]
      %v284 = vld [vmem:[%s1 + $0xa0] sm:$0xf]
      %v285 = vld [vmem:[%s1 + $0xa4] sm:$0xf]
      %v286 = vld [vmem:[%s1 + $0xa8] sm:$0xf]
      %v287 = vld [vmem:[%s1 + $0xac] sm:$0xf]
      %v288 = vld [vmem:[%s1 + $0xb0] sm:$0xf]
      %v289 = vld [vmem:[%s1 + $0xb4] sm:$0xf]
      %v290 = vld [vmem:[%s1 + $0xb8] sm:$0xf]
      %v291 = vld [vmem:[%s1 + $0xbc] sm:$0xf]
      %v292 = vld [vmem:[%s1 + $0xc0] sm:$0xf]
      %v293 = vld [vmem:[%s1 + $0xc4] sm:$0xf]
      %v294 = vld [vmem:[%s1 + $0xc8] sm:$0xf]
      %v295 = vld [vmem:[%s1 + $0xcc] sm:$0xf]
      %v296 = vld [vmem:[%s1 + $0xd0] sm:$0xf]
      %v297 = vld [vmem:[%s1 + $0xd4] sm:$0xf]
      %v298 = vld [vmem:[%s1 + $0xd8] sm:$0xf]
      %v299 = vld [vmem:[%s1 + $0xdc] sm:$0xf]
      %v300 = vld [vmem:[%s1 + $0xe0] sm:$0xf]
      %v301 = vld [vmem:[%s1 + $0xe4] sm:$0xf]
      %v302 = vld [vmem:[%s1 + $0xe8] sm:$0xf]
      %v303 = vld [vmem:[%s1 + $0xec] sm:$0xf]
      %v304 = vld [vmem:[%s1 + $0xf0] sm:$0xf]
      %v305 = vld [vmem:[%s1 + $0xf4] sm:$0xf]
      %v306 = vld [vmem:[%s1 + $0xf8] sm:$0xf]
      %v307 = vld [vmem:[%s1 + $0xfc] sm:$0xf]
      %v308 = vld [vmem:[#allocation2] sm:$0x1]
      %v310 = vlaneseq
      %v311 = vshrl.u32 %v310, 7
      %v312 = vsub.s32 0, %v311
      %v313 = vrot.slane %v308, %v312
      %v379 = vunpack.c.l.b16 %v180
      %v380 = vunpack.c.h.b16 %v180
      %v381 = vunpack.c.l.b16 %v181
      %v382 = vunpack.c.h.b16 %v181
      %v383 = vunpack.c.l.b16 %v182
      %v384 = vunpack.c.h.b16 %v182
      %v385 = vunpack.c.l.b16 %v183
      %v386 = vunpack.c.h.b16 %v183
      %v387 = vunpack.c.l.b16 %v184
      %v388 = vunpack.c.h.b16 %v184
      %v389 = vunpack.c.l.b16 %v185
      %v390 = vunpack.c.h.b16 %v185
      %v391 = vunpack.c.l.b16 %v186
      %v392 = vunpack.c.h.b16 %v186
      %v393 = vunpack.c.l.b16 %v187
      %v394 = vunpack.c.h.b16 %v187
      %v395 = vunpack.c.l.b16 %v188
      %v396 = vunpack.c.h.b16 %v188
      %v397 = vunpack.c.l.b16 %v189
      %v398 = vunpack.c.h.b16 %v189
      %v399 = vunpack.c.l.b16 %v190
      %v400 = vunpack.c.h.b16 %v190
      %v401 = vunpack.c.l.b16 %v191
      %v402 = vunpack.c.h.b16 %v191
      %v403 = vunpack.c.l.b16 %v192
      %v404 = vunpack.c.h.b16 %v192
      %v405 = vunpack.c.l.b16 %v193
      %v406 = vunpack.c.h.b16 %v193
      %v407 = vunpack.c.l.b16 %v194
      %v408 = vunpack.c.h.b16 %v194
      %v409 = vunpack.c.l.b16 %v195
      %v410 = vunpack.c.h.b16 %v195
      %v411 = vunpack.c.l.b16 %v196
      %v412 = vunpack.c.h.b16 %v196
      %v413 = vunpack.c.l.b16 %v197
      %v414 = vunpack.c.h.b16 %v197
      %v415 = vunpack.c.l.b16 %v198
      %v416 = vunpack.c.h.b16 %v198
      %v417 = vunpack.c.l.b16 %v199
      %v418 = vunpack.c.h.b16 %v199
      %v419 = vunpack.c.l.b16 %v200
      %v420 = vunpack.c.h.b16 %v200
      %v421 = vunpack.c.l.b16 %v201
      %v422 = vunpack.c.h.b16 %v201
      %v423 = vunpack.c.l.b16 %v202
      %v424 = vunpack.c.h.b16 %v202
      %v425 = vunpack.c.l.b16 %v203
      %v426 = vunpack.c.h.b16 %v203
      %v427 = vunpack.c.l.b16 %v204
      %v428 = vunpack.c.h.b16 %v204
      %v429 = vunpack.c.l.b16 %v205
      %v430 = vunpack.c.h.b16 %v205
      %v431 = vunpack.c.l.b16 %v206
      %v432 = vunpack.c.h.b16 %v206
      %v433 = vunpack.c.l.b16 %v207
      %v434 = vunpack.c.h.b16 %v207
      %v435 = vunpack.c.l.b16 %v208
      %v436 = vunpack.c.h.b16 %v208
      %v437 = vunpack.c.l.b16 %v209
      %v438 = vunpack.c.h.b16 %v209
      %v439 = vunpack.c.l.b16 %v210
      %v440 = vunpack.c.h.b16 %v210
      %v441 = vunpack.c.l.b16 %v211
      %v442 = vunpack.c.h.b16 %v211
      %v443 = vunpack.c.l.b16 %v212
      %v444 = vunpack.c.h.b16 %v212
      %v445 = vunpack.c.l.b16 %v213
      %v446 = vunpack.c.h.b16 %v213
      %v447 = vunpack.c.l.b16 %v214
      %v448 = vunpack.c.h.b16 %v214
      %v449 = vunpack.c.l.b16 %v215
      %v450 = vunpack.c.h.b16 %v215
      %v451 = vunpack.c.l.b16 %v216
      %v452 = vunpack.c.h.b16 %v216
      %v453 = vunpack.c.l.b16 %v217
      %v454 = vunpack.c.h.b16 %v217
      %v455 = vunpack.c.l.b16 %v218
      %v456 = vunpack.c.h.b16 %v218
      %v457 = vunpack.c.l.b16 %v219
      %v458 = vunpack.c.h.b16 %v219
      %v459 = vunpack.c.l.b16 %v220
      %v460 = vunpack.c.h.b16 %v220
      %v461 = vunpack.c.l.b16 %v221
      %v462 = vunpack.c.h.b16 %v221
      %v463 = vunpack.c.l.b16 %v222
      %v464 = vunpack.c.h.b16 %v222
      %v465 = vunpack.c.l.b16 %v223
      %v466 = vunpack.c.h.b16 %v223
      %v467 = vunpack.c.l.b16 %v224
      %v468 = vunpack.c.h.b16 %v224
      %v469 = vunpack.c.l.b16 %v225
      %v470 = vunpack.c.h.b16 %v225
      %v471 = vunpack.c.l.b16 %v226
      %v472 = vunpack.c.h.b16 %v226
      %v473 = vunpack.c.l.b16 %v227
      %v474 = vunpack.c.h.b16 %v227
      %v475 = vunpack.c.l.b16 %v228
      %v476 = vunpack.c.h.b16 %v228
      %v477 = vunpack.c.l.b16 %v229
      %v478 = vunpack.c.h.b16 %v229
      %v479 = vunpack.c.l.b16 %v230
      %v480 = vunpack.c.h.b16 %v230
      %v481 = vunpack.c.l.b16 %v231
      %v482 = vunpack.c.h.b16 %v231
      %v483 = vunpack.c.l.b16 %v232
      %v484 = vunpack.c.h.b16 %v232
      %v485 = vunpack.c.l.b16 %v233
      %v486 = vunpack.c.h.b16 %v233
      %v487 = vunpack.c.l.b16 %v234
      %v488 = vunpack.c.h.b16 %v234
      %v489 = vunpack.c.l.b16 %v235
      %v490 = vunpack.c.h.b16 %v235
      %v491 = vunpack.c.l.b16 %v236
      %v492 = vunpack.c.h.b16 %v236
      %v493 = vunpack.c.l.b16 %v237
      %v494 = vunpack.c.h.b16 %v237
      %v495 = vunpack.c.l.b16 %v238
      %v496 = vunpack.c.h.b16 %v238
      %v497 = vunpack.c.l.b16 %v239
      %v498 = vunpack.c.h.b16 %v239
      %v499 = vunpack.c.l.b16 %v240
      %v500 = vunpack.c.h.b16 %v240
      %v501 = vunpack.c.l.b16 %v241
      %v502 = vunpack.c.h.b16 %v241
      %v503 = vunpack.c.l.b16 %v242
      %v504 = vunpack.c.h.b16 %v242
      %v505 = vunpack.c.l.b16 %v243
      %v506 = vunpack.c.h.b16 %v243
      %v507 = vpack.c.b16 %v383, %v379
      %v508 = vpack.c.b16 %v384, %v380
      %v509 = vpack.c.b16 %v385, %v381
      %v510 = vpack.c.b16 %v386, %v382
      %v511 = vpack.c.b16 %v391, %v387
      %v512 = vpack.c.b16 %v392, %v388
      %v513 = vpack.c.b16 %v393, %v389
      %v514 = vpack.c.b16 %v394, %v390
      %v515 = vpack.c.b16 %v399, %v395
      %v516 = vpack.c.b16 %v400, %v396
      %v517 = vpack.c.b16 %v401, %v397
      %v518 = vpack.c.b16 %v402, %v398
      %v519 = vpack.c.b16 %v407, %v403
      %v520 = vpack.c.b16 %v408, %v404
      %v521 = vpack.c.b16 %v409, %v405
      %v522 = vpack.c.b16 %v410, %v406
      %v523 = vpack.c.b16 %v415, %v411
      %v524 = vpack.c.b16 %v416, %v412
      %v525 = vpack.c.b16 %v417, %v413
      %v526 = vpack.c.b16 %v418, %v414
      %v527 = vpack.c.b16 %v423, %v419
      %v528 = vpack.c.b16 %v424, %v420
      %v529 = vpack.c.b16 %v425, %v421
      %v530 = vpack.c.b16 %v426, %v422
      %v531 = vpack.c.b16 %v431, %v427
      %v532 = vpack.c.b16 %v432, %v428
      %v533 = vpack.c.b16 %v433, %v429
      %v534 = vpack.c.b16 %v434, %v430
      %v535 = vpack.c.b16 %v439, %v435
      %v536 = vpack.c.b16 %v440, %v436
      %v537 = vpack.c.b16 %v441, %v437
      %v538 = vpack.c.b16 %v442, %v438
      %v539 = vpack.c.b16 %v447, %v443
      %v540 = vpack.c.b16 %v448, %v444
      %v541 = vpack.c.b16 %v449, %v445
      %v542 = vpack.c.b16 %v450, %v446
      %v543 = vpack.c.b16 %v455, %v451
      %v544 = vpack.c.b16 %v456, %v452
      %v545 = vpack.c.b16 %v457, %v453
      %v546 = vpack.c.b16 %v458, %v454
      %v547 = vpack.c.b16 %v463, %v459
      %v548 = vpack.c.b16 %v464, %v460
      %v549 = vpack.c.b16 %v465, %v461
      %v550 = vpack.c.b16 %v466, %v462
      %v551 = vpack.c.b16 %v471, %v467
      %v552 = vpack.c.b16 %v472, %v468
      %v553 = vpack.c.b16 %v473, %v469
      %v554 = vpack.c.b16 %v474, %v470
      %v555 = vpack.c.b16 %v479, %v475
      %v556 = vpack.c.b16 %v480, %v476
      %v557 = vpack.c.b16 %v481, %v477
      %v558 = vpack.c.b16 %v482, %v478
      %v559 = vpack.c.b16 %v487, %v483
      %v560 = vpack.c.b16 %v488, %v484
      %v561 = vpack.c.b16 %v489, %v485
      %v562 = vpack.c.b16 %v490, %v486
      %v563 = vpack.c.b16 %v495, %v491
      %v564 = vpack.c.b16 %v496, %v492
      %v565 = vpack.c.b16 %v497, %v493
      %v566 = vpack.c.b16 %v498, %v494
      %v567 = vpack.c.b16 %v503, %v499
      %v568 = vpack.c.b16 %v504, %v500
      %v569 = vpack.c.b16 %v505, %v501
      %v570 = vpack.c.b16 %v506, %v502
      %v699 = vunpack.c.l.b16 %v244
      %v700 = vunpack.c.l.b16 %v245
      %v701 = vunpack.c.l.b16 %v246
      %v702 = vunpack.c.l.b16 %v247
      %v703 = vunpack.c.l.b16 %v248
      %v704 = vunpack.c.l.b16 %v249
      %v705 = vunpack.c.l.b16 %v250
      %v706 = vunpack.c.l.b16 %v251
      %v707 = vunpack.c.l.b16 %v252
      %v708 = vunpack.c.l.b16 %v253
      %v709 = vunpack.c.l.b16 %v254
      %v710 = vunpack.c.l.b16 %v255
      %v711 = vunpack.c.l.b16 %v256
      %v712 = vunpack.c.l.b16 %v257
      %v713 = vunpack.c.l.b16 %v258
      %v714 = vunpack.c.l.b16 %v259
      %v715 = vunpack.c.l.b16 %v260
      %v716 = vunpack.c.l.b16 %v261
      %v717 = vunpack.c.l.b16 %v262
      %v718 = vunpack.c.l.b16 %v263
      %v719 = vunpack.c.l.b16 %v264
      %v720 = vunpack.c.l.b16 %v265
      %v721 = vunpack.c.l.b16 %v266
      %v722 = vunpack.c.l.b16 %v267
      %v723 = vunpack.c.l.b16 %v268
      %v724 = vunpack.c.l.b16 %v269
      %v725 = vunpack.c.l.b16 %v270
      %v726 = vunpack.c.l.b16 %v271
      %v727 = vunpack.c.l.b16 %v272
      %v728 = vunpack.c.l.b16 %v273
      %v729 = vunpack.c.l.b16 %v274
      %v730 = vunpack.c.l.b16 %v275
      %v731 = vunpack.c.l.b16 %v276
      %v732 = vunpack.c.l.b16 %v277
      %v733 = vunpack.c.l.b16 %v278
      %v734 = vunpack.c.l.b16 %v279
      %v735 = vunpack.c.l.b16 %v280
      %v736 = vunpack.c.l.b16 %v281
      %v737 = vunpack.c.l.b16 %v282
      %v738 = vunpack.c.l.b16 %v283
      %v739 = vunpack.c.l.b16 %v284
      %v740 = vunpack.c.l.b16 %v285
      %v741 = vunpack.c.l.b16 %v286
      %v742 = vunpack.c.l.b16 %v287
      %v743 = vunpack.c.l.b16 %v288
      %v744 = vunpack.c.l.b16 %v289
      %v745 = vunpack.c.l.b16 %v290
      %v746 = vunpack.c.l.b16 %v291
      %v747 = vunpack.c.l.b16 %v292
      %v748 = vunpack.c.l.b16 %v293
      %v749 = vunpack.c.l.b16 %v294
      %v750 = vunpack.c.l.b16 %v295
      %v751 = vunpack.c.l.b16 %v296
      %v752 = vunpack.c.l.b16 %v297
      %v753 = vunpack.c.l.b16 %v298
      %v754 = vunpack.c.l.b16 %v299
      %v755 = vunpack.c.l.b16 %v300
      %v756 = vunpack.c.l.b16 %v301
      %v757 = vunpack.c.l.b16 %v302
      %v758 = vunpack.c.l.b16 %v303
      %v759 = vunpack.c.l.b16 %v304
      %v760 = vunpack.c.l.b16 %v305
      %v761 = vunpack.c.l.b16 %v306
      %v762 = vunpack.c.l.b16 %v307
      %v763 = vpack.c.b16 %v700, %v699
      %v764 = vpack.c.b16 %v702, %v701
      %v765 = vpack.c.b16 %v704, %v703
      %v766 = vpack.c.b16 %v706, %v705
      %v767 = vpack.c.b16 %v708, %v707
      %v768 = vpack.c.b16 %v710, %v709
      %v769 = vpack.c.b16 %v712, %v711
      %v770 = vpack.c.b16 %v714, %v713
      %v771 = vpack.c.b16 %v716, %v715
      %v772 = vpack.c.b16 %v718, %v717
      %v773 = vpack.c.b16 %v720, %v719
      %v774 = vpack.c.b16 %v722, %v721
      %v775 = vpack.c.b16 %v724, %v723
      %v776 = vpack.c.b16 %v726, %v725
      %v777 = vpack.c.b16 %v728, %v727
      %v778 = vpack.c.b16 %v730, %v729
      %v779 = vpack.c.b16 %v732, %v731
      %v780 = vpack.c.b16 %v734, %v733
      %v781 = vpack.c.b16 %v736, %v735
      %v782 = vpack.c.b16 %v738, %v737
      %v783 = vpack.c.b16 %v740, %v739
      %v784 = vpack.c.b16 %v742, %v741
      %v785 = vpack.c.b16 %v744, %v743
      %v786 = vpack.c.b16 %v746, %v745
      %v787 = vpack.c.b16 %v748, %v747
      %v788 = vpack.c.b16 %v750, %v749
      %v789 = vpack.c.b16 %v752, %v751
      %v790 = vpack.c.b16 %v754, %v753
      %v791 = vpack.c.b16 %v756, %v755
      %v792 = vpack.c.b16 %v758, %v757
      %v793 = vpack.c.b16 %v760, %v759
      %v794 = vpack.c.b16 %v762, %v761
      %827 = vmatprep.subr.bf16.mxu0 0
      %828 = vmatpush1.bf16.msra.mxu0 %v763
      %829 = vmatprep.subr.bf16.mxu0 0
      %830 = vmatpush1.bf16.msra.mxu0 %v764
      %831 = vmatprep.subr.bf16.mxu0 0
      %832 = vmatpush1.bf16.msra.mxu0 %v765
      %833 = vmatprep.subr.bf16.mxu0 0
      %834 = vmatpush1.bf16.msra.mxu0 %v766
      %835 = vmatprep.subr.bf16.mxu0 0
      %836 = vmatpush1.bf16.msra.mxu0 %v767
      %837 = vmatprep.subr.bf16.mxu0 0
      %838 = vmatpush1.bf16.msra.mxu0 %v768
      %839 = vmatprep.subr.bf16.mxu0 0
      %840 = vmatpush1.bf16.msra.mxu0 %v769
      %841 = vmatprep.subr.bf16.mxu0 0
      %842 = vmatpush1.bf16.msra.mxu0 %v770
      %843 = vmatprep.subr.bf16.mxu0 0
      %844 = vmatpush1.bf16.msra.mxu0 %v771
      %845 = vmatprep.subr.bf16.mxu0 0
      %846 = vmatpush1.bf16.msra.mxu0 %v772
      %847 = vmatprep.subr.bf16.mxu0 0
      %848 = vmatpush1.bf16.msra.mxu0 %v773
      %849 = vmatprep.subr.bf16.mxu0 0
      %850 = vmatpush1.bf16.msra.mxu0 %v774
      %851 = vmatprep.subr.bf16.mxu0 0
      %852 = vmatpush1.bf16.msra.mxu0 %v775
      %853 = vmatprep.subr.bf16.mxu0 0
      %854 = vmatpush1.bf16.msra.mxu0 %v776
      %855 = vmatprep.subr.bf16.mxu0 0
      %856 = vmatpush1.bf16.msra.mxu0 %v777
      %857 = vmatprep.subr.bf16.mxu0 0
      %858 = vmatpush1.bf16.msra.mxu0 %v778
      %859 = vmatprep.mubr.bf16.mxu0 %v508
      %860 = vmatmul.mubr.bf16.gmra.mrb[0].mxu0 %v507
      %v861 = vpop.f32.mrb[0].mxu0
      %v862 = vadd.f32 %v313, %v861
      %v863 = vpop.f32.mrb[0].mxu0
      %v864 = vpop.f32.mrb[0].mxu0
      %v865 = vadd.f32 %v313, %v864
      %v866 = vpop.f32.mrb[0].mxu0
      %867 = vmatprep.mubr.bf16.mxu0 %v512
      %868 = vmatmul.mubr.bf16.gmra.mrb[0].mxu0 %v511
      %v869 = vpop.f32.mrb[0].mxu0
      %v870 = vadd.f32 %v313, %v869
      %v871 = vpop.f32.mrb[0].mxu0
      %v872 = vpop.f32.mrb[0].mxu0
      %v873 = vadd.f32 %v313, %v872
      %v874 = vpop.f32.mrb[0].mxu0
      %875 = vmatprep.mubr.bf16.mxu0 %v516
      %876 = vmatmul.mubr.bf16.gmra.mrb[0].mxu0 %v515
      %v877 = vpop.f32.mrb[0].mxu0
      %v878 = vadd.f32 %v313, %v877
      %v879 = vpop.f32.mrb[0].mxu0
      %v880 = vpop.f32.mrb[0].mxu0
      %v881 = vadd.f32 %v313, %v880
      %v882 = vpop.f32.mrb[0].mxu0
      %883 = vmatprep.mubr.bf16.mxu0 %v520
      %884 = vmatmul.mubr.bf16.gmra.mrb[0].mxu0 %v519
      %v885 = vpop.f32.mrb[0].mxu0
      %v886 = vadd.f32 %v313, %v885
      %v887 = vpop.f32.mrb[0].mxu0
      %v888 = vpop.f32.mrb[0].mxu0
      %v889 = vadd.f32 %v313, %v888
      %v890 = vpop.f32.mrb[0].mxu0
      %891 = vmatprep.mubr.bf16.mxu0 %v524
      %892 = vmatmul.mubr.bf16.gmra.mrb[0].mxu0 %v523
      %v893 = vpop.f32.mrb[0].mxu0
      %v894 = vadd.f32 %v313, %v893
      %v895 = vpop.f32.mrb[0].mxu0
      %v896 = vpop.f32.mrb[0].mxu0
      %v897 = vadd.f32 %v313, %v896
      %v898 = vpop.f32.mrb[0].mxu0
      %899 = vmatprep.mubr.bf16.mxu0 %v528
      %900 = vmatmul.mubr.bf16.gmra.mrb[0].mxu0 %v527
      %v901 = vpop.f32.mrb[0].mxu0
      %v902 = vadd.f32 %v313, %v901
      %v903 = vpop.f32.mrb[0].mxu0
      %v904 = vpop.f32.mrb[0].mxu0
      %v905 = vadd.f32 %v313, %v904
      %v906 = vpop.f32.mrb[0].mxu0
      %907 = vmatprep.mubr.bf16.mxu0 %v532
      %908 = vmatmul.mubr.bf16.gmra.mrb[0].mxu0 %v531
      %v909 = vpop.f32.mrb[0].mxu0
      %v910 = vadd.f32 %v313, %v909
      %v911 = vpop.f32.mrb[0].mxu0
      %v912 = vpop.f32.mrb[0].mxu0
      %v913 = vadd.f32 %v313, %v912
      %v914 = vpop.f32.mrb[0].mxu0
      %915 = vmatprep.mubr.bf16.mxu0 %v536
      %916 = vmatmul.mubr.bf16.gmra.mrb[0].mxu0 %v535
      %v917 = vpop.f32.mrb[0].mxu0
      %v918 = vadd.f32 %v313, %v917
      %v919 = vpop.f32.mrb[0].mxu0
      %v920 = vpop.f32.mrb[0].mxu0
      %v921 = vadd.f32 %v313, %v920
      %v922 = vpop.f32.mrb[0].mxu0
      %923 = vmatprep.mubr.bf16.mxu0 %v540
      %924 = vmatmul.mubr.bf16.gmra.mrb[0].mxu0 %v539
      %v925 = vpop.f32.mrb[0].mxu0
      %v926 = vadd.f32 %v313, %v925
      %v927 = vpop.f32.mrb[0].mxu0
      %v928 = vpop.f32.mrb[0].mxu0
      %v929 = vadd.f32 %v313, %v928
      %v930 = vpop.f32.mrb[0].mxu0
      %931 = vmatprep.mubr.bf16.mxu0 %v544
      %932 = vmatmul.mubr.bf16.gmra.mrb[0].mxu0 %v543
      %v933 = vpop.f32.mrb[0].mxu0
      %v934 = vadd.f32 %v313, %v933
      %v935 = vpop.f32.mrb[0].mxu0
      %v936 = vpop.f32.mrb[0].mxu0
      %v937 = vadd.f32 %v313, %v936
      %v938 = vpop.f32.mrb[0].mxu0
      %939 = vmatprep.mubr.bf16.mxu0 %v548
      %940 = vmatmul.mubr.bf16.gmra.mrb[0].mxu0 %v547
      %v941 = vpop.f32.mrb[0].mxu0
      %v942 = vadd.f32 %v313, %v941
      %v943 = vpop.f32.mrb[0].mxu0
      %v944 = vpop.f32.mrb[0].mxu0
      %v945 = vadd.f32 %v313, %v944
      %v946 = vpop.f32.mrb[0].mxu0
      %947 = vmatprep.mubr.bf16.mxu0 %v552
      %948 = vmatmul.mubr.bf16.gmra.mrb[0].mxu0 %v551
      %v949 = vpop.f32.mrb[0].mxu0
      %v950 = vadd.f32 %v313, %v949
      %v951 = vpop.f32.mrb[0].mxu0
      %v952 = vpop.f32.mrb[0].mxu0
      %v953 = vadd.f32 %v313, %v952
      %v954 = vpop.f32.mrb[0].mxu0
      %955 = vmatprep.mubr.bf16.mxu0 %v556
      %956 = vmatmul.mubr.bf16.gmra.mrb[0].mxu0 %v555
      %v957 = vpop.f32.mrb[0].mxu0
      %v958 = vadd.f32 %v313, %v957
      %v959 = vpop.f32.mrb[0].mxu0
      %v960 = vpop.f32.mrb[0].mxu0
      %v961 = vadd.f32 %v313, %v960
      %v962 = vpop.f32.mrb[0].mxu0
      %963 = vmatprep.mubr.bf16.mxu0 %v560
      %964 = vmatmul.mubr.bf16.gmra.mrb[0].mxu0 %v559
      %v965 = vpop.f32.mrb[0].mxu0
      %v966 = vadd.f32 %v313, %v965
      %v967 = vpop.f32.mrb[0].mxu0
      %v968 = vpop.f32.mrb[0].mxu0
      %v969 = vadd.f32 %v313, %v968
      %v970 = vpop.f32.mrb[0].mxu0
      %971 = vmatprep.mubr.bf16.mxu0 %v564
      %972 = vmatmul.mubr.bf16.gmra.mrb[0].mxu0 %v563
      %v973 = vpop.f32.mrb[0].mxu0
      %v974 = vadd.f32 %v313, %v973
      %v975 = vpop.f32.mrb[0].mxu0
      %v976 = vpop.f32.mrb[0].mxu0
      %v977 = vadd.f32 %v313, %v976
      %v978 = vpop.f32.mrb[0].mxu0
      %979 = vmatprep.mubr.bf16.mxu0 %v568
      %980 = vmatmul.mubr.bf16.gmra.mrb[0].mxu0 %v567
      %v981 = vpop.f32.mrb[0].mxu0
      %v982 = vadd.f32 %v313, %v981
      %v983 = vpop.f32.mrb[0].mxu0
      %v984 = vpop.f32.mrb[0].mxu0
      %v985 = vadd.f32 %v313, %v984
      %v986 = vpop.f32.mrb[0].mxu0
      %987 = vdwg.mxu0
      %988 = vmatprep.subr.bf16.mxu0 0
      %989 = vmatpush1.bf16.msra.mxu0 %v779
      %990 = vmatprep.subr.bf16.mxu0 0
      %991 = vmatpush1.bf16.msra.mxu0 %v780
      %992 = vmatprep.subr.bf16.mxu0 0
      %993 = vmatpush1.bf16.msra.mxu0 %v781
      %994 = vmatprep.subr.bf16.mxu0 0
      %995 = vmatpush1.bf16.msra.mxu0 %v782
      %996 = vmatprep.subr.bf16.mxu0 0
      %997 = vmatpush1.bf16.msra.mxu0 %v783
      %998 = vmatprep.subr.bf16.mxu0 0
      %999 = vmatpush1.bf16.msra.mxu0 %v784
      %1000 = vmatprep.subr.bf16.mxu0 0
      %1001 = vmatpush1.bf16.msra.mxu0 %v785
      %1002 = vmatprep.subr.bf16.mxu0 0
      %1003 = vmatpush1.bf16.msra.mxu0 %v786
      %1004 = vmatprep.subr.bf16.mxu0 0
      %1005 = vmatpush1.bf16.msra.mxu0 %v787
      %1006 = vmatprep.subr.bf16.mxu0 0
      %1007 = vmatpush1.bf16.msra.mxu0 %v788
      %1008 = vmatprep.subr.bf16.mxu0 0
      %1009 = vmatpush1.bf16.msra.mxu0 %v789
      %1010 = vmatprep.subr.bf16.mxu0 0
      %1011 = vmatpush1.bf16.msra.mxu0 %v790
      %1012 = vmatprep.subr.bf16.mxu0 0
      %1013 = vmatpush1.bf16.msra.mxu0 %v791
      %1014 = vmatprep.subr.bf16.mxu0 0
      %1015 = vmatpush1.bf16.msra.mxu0 %v792
      %1016 = vmatprep.subr.bf16.mxu0 0
      %1017 = vmatpush1.bf16.msra.mxu0 %v793
      %1018 = vmatprep.subr.bf16.mxu0 0
      %1019 = vmatpush1.bf16.msra.mxu0 %v794
      %1020 = vmatprep.mubr.bf16.mxu0 %v510
      %1021 = vmatmul.mubr.bf16.gmra.mrb[0].mxu0 %v509
      %v1022 = vpop.f32.mrb[0].mxu0
      %v1023 = vadd.f32 %v862, %v1022
      %v1024 = vpop.f32.mrb[0].mxu0
      %v1025 = vpop.f32.mrb[0].mxu0
      %v1026 = vadd.f32 %v865, %v1025
      %v1027 = vpop.f32.mrb[0].mxu0
      %1028 = vmatprep.mubr.bf16.mxu0 %v514
      %1029 = vmatmul.mubr.bf16.gmra.mrb[0].mxu0 %v513
      %v1030 = vpop.f32.mrb[0].mxu0
      %v1031 = vadd.f32 %v870, %v1030
      %v1032 = vpop.f32.mrb[0].mxu0
      %v1033 = vpop.f32.mrb[0].mxu0
      %v1034 = vadd.f32 %v873, %v1033
      %v1035 = vpop.f32.mrb[0].mxu0
      %1036 = vmatprep.mubr.bf16.mxu0 %v518
      %1037 = vmatmul.mubr.bf16.gmra.mrb[0].mxu0 %v517
      %v1038 = vpop.f32.mrb[0].mxu0
      %v1039 = vadd.f32 %v878, %v1038
      %v1040 = vpop.f32.mrb[0].mxu0
      %v1041 = vpop.f32.mrb[0].mxu0
      %v1042 = vadd.f32 %v881, %v1041
      %v1043 = vpop.f32.mrb[0].mxu0
      %1044 = vmatprep.mubr.bf16.mxu0 %v522
      %1045 = vmatmul.mubr.bf16.gmra.mrb[0].mxu0 %v521
      %v1046 = vpop.f32.mrb[0].mxu0
      %v1047 = vadd.f32 %v886, %v1046
      %v1048 = vpop.f32.mrb[0].mxu0
      %v1049 = vpop.f32.mrb[0].mxu0
      %v1050 = vadd.f32 %v889, %v1049
      %v1051 = vpop.f32.mrb[0].mxu0
      %1052 = vmatprep.mubr.bf16.mxu0 %v526
      %1053 = vmatmul.mubr.bf16.gmra.mrb[0].mxu0 %v525
      %v1054 = vpop.f32.mrb[0].mxu0
      %v1055 = vadd.f32 %v894, %v1054
      %v1056 = vpop.f32.mrb[0].mxu0
      %v1057 = vpop.f32.mrb[0].mxu0
      %v1058 = vadd.f32 %v897, %v1057
      %v1059 = vpop.f32.mrb[0].mxu0
      %1060 = vmatprep.mubr.bf16.mxu0 %v530
      %1061 = vmatmul.mubr.bf16.gmra.mrb[0].mxu0 %v529
      %v1062 = vpop.f32.mrb[0].mxu0
      %v1063 = vadd.f32 %v902, %v1062
      %v1064 = vpop.f32.mrb[0].mxu0
      %v1065 = vpop.f32.mrb[0].mxu0
      %v1066 = vadd.f32 %v905, %v1065
      %v1067 = vpop.f32.mrb[0].mxu0
      %1068 = vmatprep.mubr.bf16.mxu0 %v534
      %1069 = vmatmul.mubr.bf16.gmra.mrb[0].mxu0 %v533
      %v1070 = vpop.f32.mrb[0].mxu0
      %v1071 = vadd.f32 %v910, %v1070
      %v1072 = vpop.f32.mrb[0].mxu0
      %v1073 = vpop.f32.mrb[0].mxu0
      %v1074 = vadd.f32 %v913, %v1073
      %v1075 = vpop.f32.mrb[0].mxu0
      %1076 = vmatprep.mubr.bf16.mxu0 %v538
      %1077 = vmatmul.mubr.bf16.gmra.mrb[0].mxu0 %v537
      %v1078 = vpop.f32.mrb[0].mxu0
      %v1079 = vadd.f32 %v918, %v1078
      %v1080 = vpop.f32.mrb[0].mxu0
      %v1081 = vpop.f32.mrb[0].mxu0
      %v1082 = vadd.f32 %v921, %v1081
      %v1083 = vpop.f32.mrb[0].mxu0
      %1084 = vmatprep.mubr.bf16.mxu0 %v542
      %1085 = vmatmul.mubr.bf16.gmra.mrb[0].mxu0 %v541
      %v1086 = vpop.f32.mrb[0].mxu0
      %v1087 = vadd.f32 %v926, %v1086
      %v1088 = vpop.f32.mrb[0].mxu0
      %v1089 = vpop.f32.mrb[0].mxu0
      %v1090 = vadd.f32 %v929, %v1089
      %v1091 = vpop.f32.mrb[0].mxu0
      %1092 = vmatprep.mubr.bf16.mxu0 %v546
      %1093 = vmatmul.mubr.bf16.gmra.mrb[0].mxu0 %v545
      %v1094 = vpop.f32.mrb[0].mxu0
      %v1095 = vadd.f32 %v934, %v1094
      %v1096 = vpop.f32.mrb[0].mxu0
      %v1097 = vpop.f32.mrb[0].mxu0
      %v1098 = vadd.f32 %v937, %v1097
      %v1099 = vpop.f32.mrb[0].mxu0
      %1100 = vmatprep.mubr.bf16.mxu0 %v550
      %1101 = vmatmul.mubr.bf16.gmra.mrb[0].mxu0 %v549
      %v1102 = vpop.f32.mrb[0].mxu0
      %v1103 = vadd.f32 %v942, %v1102
      %v1104 = vpop.f32.mrb[0].mxu0
      %v1105 = vpop.f32.mrb[0].mxu0
      %v1106 = vadd.f32 %v945, %v1105
      %v1107 = vpop.f32.mrb[0].mxu0
      %1108 = vmatprep.mubr.bf16.mxu0 %v554
      %1109 = vmatmul.mubr.bf16.gmra.mrb[0].mxu0 %v553
      %v1110 = vpop.f32.mrb[0].mxu0
      %v1111 = vadd.f32 %v950, %v1110
      %v1112 = vpop.f32.mrb[0].mxu0
      %v1113 = vpop.f32.mrb[0].mxu0
      %v1114 = vadd.f32 %v953, %v1113
      %v1115 = vpop.f32.mrb[0].mxu0
      %1116 = vmatprep.mubr.bf16.mxu0 %v558
      %1117 = vmatmul.mubr.bf16.gmra.mrb[0].mxu0 %v557
      %v1118 = vpop.f32.mrb[0].mxu0
      %v1119 = vadd.f32 %v958, %v1118
      %v1120 = vpop.f32.mrb[0].mxu0
      %v1121 = vpop.f32.mrb[0].mxu0
      %v1122 = vadd.f32 %v961, %v1121
      %v1123 = vpop.f32.mrb[0].mxu0
      %1124 = vmatprep.mubr.bf16.mxu0 %v562
      %1125 = vmatmul.mubr.bf16.gmra.mrb[0].mxu0 %v561
      %v1126 = vpop.f32.mrb[0].mxu0
      %v1127 = vadd.f32 %v966, %v1126
      %v1128 = vpop.f32.mrb[0].mxu0
      %v1129 = vpop.f32.mrb[0].mxu0
      %v1130 = vadd.f32 %v969, %v1129
      %v1131 = vpop.f32.mrb[0].mxu0
      %1132 = vmatprep.mubr.bf16.mxu0 %v566
      %1133 = vmatmul.mubr.bf16.gmra.mrb[0].mxu0 %v565
      %v1134 = vpop.f32.mrb[0].mxu0
      %v1135 = vadd.f32 %v974, %v1134
      %v1136 = vpop.f32.mrb[0].mxu0
      %v1137 = vpop.f32.mrb[0].mxu0
      %v1138 = vadd.f32 %v977, %v1137
      %v1139 = vpop.f32.mrb[0].mxu0
      %1140 = vmatprep.mubr.bf16.mxu0 %v570
      %1141 = vmatmul.mubr.bf16.gmra.mrb[0].mxu0 %v569
      %v1142 = vpop.f32.mrb[0].mxu0
      %v1143 = vadd.f32 %v982, %v1142
      %v1144 = vpop.f32.mrb[0].mxu0
      %v1145 = vpop.f32.mrb[0].mxu0
      %v1146 = vadd.f32 %v985, %v1145
      %v1147 = vpop.f32.mrb[0].mxu0
      %1148 = vdwg.mxu0
      %v1149 = vxor.u32 %v1023, 2147483648
      %v1150 = vxor.u32 %v1026, 2147483648
      %v1151 = vxor.u32 %v1031, 2147483648
      %v1152 = vxor.u32 %v1034, 2147483648
      %v1153 = vxor.u32 %v1039, 2147483648
      %v1154 = vxor.u32 %v1042, 2147483648
      %v1155 = vxor.u32 %v1047, 2147483648
      %v1156 = vxor.u32 %v1050, 2147483648
      %v1157 = vxor.u32 %v1055, 2147483648
      %v1158 = vxor.u32 %v1058, 2147483648
      %v1159 = vxor.u32 %v1063, 2147483648
      %v1160 = vxor.u32 %v1066, 2147483648
      %v1161 = vxor.u32 %v1071, 2147483648
      %v1162 = vxor.u32 %v1074, 2147483648
      %v1163 = vxor.u32 %v1079, 2147483648
      %v1164 = vxor.u32 %v1082, 2147483648
      %v1165 = vxor.u32 %v1087, 2147483648
      %v1166 = vxor.u32 %v1090, 2147483648
      %v1167 = vxor.u32 %v1095, 2147483648
      %v1168 = vxor.u32 %v1098, 2147483648
      %v1169 = vxor.u32 %v1103, 2147483648
      %v1170 = vxor.u32 %v1106, 2147483648
      %v1171 = vxor.u32 %v1111, 2147483648
      %v1172 = vxor.u32 %v1114, 2147483648
      %v1173 = vxor.u32 %v1119, 2147483648
      %v1174 = vxor.u32 %v1122, 2147483648
      %v1175 = vxor.u32 %v1127, 2147483648
      %v1176 = vxor.u32 %v1130, 2147483648
      %v1177 = vxor.u32 %v1135, 2147483648
      %v1178 = vxor.u32 %v1138, 2147483648
      %v1179 = vxor.u32 %v1143, 2147483648
      %v1180 = vxor.u32 %v1146, 2147483648
      %v1181 = vmul.f32 %v1149, 1.442695
      %v1182 = vpow.pop %v1181
      %v1183 = vmul.f32 %v1150, 1.442695
      %v1184 = vpow.pop %v1183
      %v1185 = vmul.f32 %v1151, 1.442695
      %v1186 = vpow.pop %v1185
      %v1187 = vmul.f32 %v1152, 1.442695
      %v1188 = vpow.pop %v1187
      %v1189 = vmul.f32 %v1153, 1.442695
      %v1190 = vpow.pop %v1189
      %v1191 = vmul.f32 %v1154, 1.442695
      %v1192 = vpow.pop %v1191
      %v1193 = vmul.f32 %v1155, 1.442695
      %v1194 = vpow.pop %v1193
      %v1195 = vmul.f32 %v1156, 1.442695
      %v1196 = vpow.pop %v1195
      %v1197 = vmul.f32 %v1157, 1.442695
      %v1198 = vpow.pop %v1197
      %v1199 = vmul.f32 %v1158, 1.442695
      %v1200 = vpow.pop %v1199
      %v1201 = vmul.f32 %v1159, 1.442695
      %v1202 = vpow.pop %v1201
      %v1203 = vmul.f32 %v1160, 1.442695
      %v1204 = vpow.pop %v1203
      %v1205 = vmul.f32 %v1161, 1.442695
      %v1206 = vpow.pop %v1205
      %v1207 = vmul.f32 %v1162, 1.442695
      %v1208 = vpow.pop %v1207
      %v1209 = vmul.f32 %v1163, 1.442695
      %v1210 = vpow.pop %v1209
      %v1211 = vmul.f32 %v1164, 1.442695
      %v1212 = vpow.pop %v1211
      %v1213 = vmul.f32 %v1165, 1.442695
      %v1214 = vpow.pop %v1213
      %v1215 = vmul.f32 %v1166, 1.442695
      %v1216 = vpow.pop %v1215
      %v1217 = vmul.f32 %v1167, 1.442695
      %v1218 = vpow.pop %v1217
      %v1219 = vmul.f32 %v1168, 1.442695
      %v1220 = vpow.pop %v1219
      %v1221 = vmul.f32 %v1169, 1.442695
      %v1222 = vpow.pop %v1221
      %v1223 = vmul.f32 %v1170, 1.442695
      %v1224 = vpow.pop %v1223
      %v1225 = vmul.f32 %v1171, 1.442695
      %v1226 = vpow.pop %v1225
      %v1227 = vmul.f32 %v1172, 1.442695
      %v1228 = vpow.pop %v1227
      %v1229 = vmul.f32 %v1173, 1.442695
      %v1230 = vpow.pop %v1229
      %v1231 = vmul.f32 %v1174, 1.442695
      %v1232 = vpow.pop %v1231
      %v1233 = vmul.f32 %v1175, 1.442695
      %v1234 = vpow.pop %v1233
      %v1235 = vmul.f32 %v1176, 1.442695
      %v1236 = vpow.pop %v1235
      %v1237 = vmul.f32 %v1177, 1.442695
      %v1238 = vpow.pop %v1237
      %v1239 = vmul.f32 %v1178, 1.442695
      %v1240 = vpow.pop %v1239
      %v1241 = vmul.f32 %v1179, 1.442695
      %v1242 = vpow.pop %v1241
      %v1243 = vmul.f32 %v1180, 1.442695
      %v1244 = vpow.pop %v1243
      %v1245 = vadd.f32 %v1182, 1.0
      %v1246 = vadd.f32 %v1184, 1.0
      %v1247 = vadd.f32 %v1186, 1.0
      %v1248 = vadd.f32 %v1188, 1.0
      %v1249 = vadd.f32 %v1190, 1.0
      %v1250 = vadd.f32 %v1192, 1.0
      %v1251 = vadd.f32 %v1194, 1.0
      %v1252 = vadd.f32 %v1196, 1.0
      %v1253 = vadd.f32 %v1198, 1.0
      %v1254 = vadd.f32 %v1200, 1.0
      %v1255 = vadd.f32 %v1202, 1.0
      %v1256 = vadd.f32 %v1204, 1.0
      %v1257 = vadd.f32 %v1206, 1.0
      %v1258 = vadd.f32 %v1208, 1.0
      %v1259 = vadd.f32 %v1210, 1.0
      %v1260 = vadd.f32 %v1212, 1.0
      %v1261 = vadd.f32 %v1214, 1.0
      %v1262 = vadd.f32 %v1216, 1.0
      %v1263 = vadd.f32 %v1218, 1.0
      %v1264 = vadd.f32 %v1220, 1.0
      %v1265 = vadd.f32 %v1222, 1.0
      %v1266 = vadd.f32 %v1224, 1.0
      %v1267 = vadd.f32 %v1226, 1.0
      %v1268 = vadd.f32 %v1228, 1.0
      %v1269 = vadd.f32 %v1230, 1.0
      %v1270 = vadd.f32 %v1232, 1.0
      %v1271 = vadd.f32 %v1234, 1.0
      %v1272 = vadd.f32 %v1236, 1.0
      %v1273 = vadd.f32 %v1238, 1.0
      %v1274 = vadd.f32 %v1240, 1.0
      %v1275 = vadd.f32 %v1242, 1.0
      %v1276 = vadd.f32 %v1244, 1.0
      %v1277 = vrcp.pop %v1245
      %v1278 = vmul.f32 1.0, %v1277
      %v1279 = vrcp.pop %v1246
      %v1280 = vmul.f32 1.0, %v1279
      %v1281 = vrcp.pop %v1247
      %v1282 = vmul.f32 1.0, %v1281
      %v1283 = vrcp.pop %v1248
      %v1284 = vmul.f32 1.0, %v1283
      %v1285 = vrcp.pop %v1249
      %v1286 = vmul.f32 1.0, %v1285
      %v1287 = vrcp.pop %v1250
      %v1288 = vmul.f32 1.0, %v1287
      %v1289 = vrcp.pop %v1251
      %v1290 = vmul.f32 1.0, %v1289
      %v1291 = vrcp.pop %v1252
      %v1292 = vmul.f32 1.0, %v1291
      %v1293 = vrcp.pop %v1253
      %v1294 = vmul.f32 1.0, %v1293
      %v1295 = vrcp.pop %v1254
      %v1296 = vmul.f32 1.0, %v1295
      %v1297 = vrcp.pop %v1255
      %v1298 = vmul.f32 1.0, %v1297
      %v1299 = vrcp.pop %v1256
      %v1300 = vmul.f32 1.0, %v1299
      %v1301 = vrcp.pop %v1257
      %v1302 = vmul.f32 1.0, %v1301
      %v1303 = vrcp.pop %v1258
      %v1304 = vmul.f32 1.0, %v1303
      %v1305 = vrcp.pop %v1259
      %v1306 = vmul.f32 1.0, %v1305
      %v1307 = vrcp.pop %v1260
      %v1308 = vmul.f32 1.0, %v1307
      %v1309 = vrcp.pop %v1261
      %v1310 = vmul.f32 1.0, %v1309
      %v1311 = vrcp.pop %v1262
      %v1312 = vmul.f32 1.0, %v1311
      %v1313 = vrcp.pop %v1263
      %v1314 = vmul.f32 1.0, %v1313
      %v1315 = vrcp.pop %v1264
      %v1316 = vmul.f32 1.0, %v1315
      %v1317 = vrcp.pop %v1265
      %v1318 = vmul.f32 1.0, %v1317
      %v1319 = vrcp.pop %v1266
      %v1320 = vmul.f32 1.0, %v1319
      %v1321 = vrcp.pop %v1267
      %v1322 = vmul.f32 1.0, %v1321
      %v1323 = vrcp.pop %v1268
      %v1324 = vmul.f32 1.0, %v1323
      %v1325 = vrcp.pop %v1269
      %v1326 = vmul.f32 1.0, %v1325
      %v1327 = vrcp.pop %v1270
      %v1328 = vmul.f32 1.0, %v1327
      %v1329 = vrcp.pop %v1271
      %v1330 = vmul.f32 1.0, %v1329
      %v1331 = vrcp.pop %v1272
      %v1332 = vmul.f32 1.0, %v1331
      %v1333 = vrcp.pop %v1273
      %v1334 = vmul.f32 1.0, %v1333
      %v1335 = vrcp.pop %v1274
      %v1336 = vmul.f32 1.0, %v1335
      %v1337 = vrcp.pop %v1275
      %v1338 = vmul.f32 1.0, %v1337
      %v1339 = vrcp.pop %v1276
      %v1340 = vmul.f32 1.0, %v1339
      %vm1341 = vcmask 7168
      %1342 = vst.msk [vmem:[%s177] sm:$0xff] %vm1341, %v1278
      %1343 = vst.msk [vmem:[%s177 + $0x8] sm:$0xff] %vm1341, %v1280
      %1344 = vst.msk [vmem:[%s177 + $0x10] sm:$0xff] %vm1341, %v1282
      %1345 = vst.msk [vmem:[%s177 + $0x18] sm:$0xff] %vm1341, %v1284
      %1346 = vst.msk [vmem:[%s177 + $0x20] sm:$0xff] %vm1341, %v1286
      %1347 = vst.msk [vmem:[%s177 + $0x28] sm:$0xff] %vm1341, %v1288
      %1348 = vst.msk [vmem:[%s177 + $0x30] sm:$0xff] %vm1341, %v1290
      %1349 = vst.msk [vmem:[%s177 + $0x38] sm:$0xff] %vm1341, %v1292
      %1350 = vst.msk [vmem:[%s177 + $0x40] sm:$0xff] %vm1341, %v1294
      %1351 = vst.msk [vmem:[%s177 + $0x48] sm:$0xff] %vm1341, %v1296
      %1352 = vst.msk [vmem:[%s177 + $0x50] sm:$0xff] %vm1341, %v1298
      %1353 = vst.msk [vmem:[%s177 + $0x58] sm:$0xff] %vm1341, %v1300
      %1354 = vst.msk [vmem:[%s177 + $0x60] sm:$0xff] %vm1341, %v1302
      %1355 = vst.msk [vmem:[%s177 + $0x68] sm:$0xff] %vm1341, %v1304
      %1356 = vst.msk [vmem:[%s177 + $0x70] sm:$0xff] %vm1341, %v1306
      %1357 = vst.msk [vmem:[%s177 + $0x78] sm:$0xff] %vm1341, %v1308
      %1358 = vst.msk [vmem:[%s177 + $0x80] sm:$0xff] %vm1341, %v1310
      %1359 = vst.msk [vmem:[%s177 + $0x88] sm:$0xff] %vm1341, %v1312
      %1360 = vst.msk [vmem:[%s177 + $0x90] sm:$0xff] %vm1341, %v1314
      %1361 = vst.msk [vmem:[%s177 + $0x98] sm:$0xff] %vm1341, %v1316
      %1362 = vst.msk [vmem:[%s177 + $0xa0] sm:$0xff] %vm1341, %v1318
      %1363 = vst.msk [vmem:[%s177 + $0xa8] sm:$0xff] %vm1341, %v1320
      %1364 = vst.msk [vmem:[%s177 + $0xb0] sm:$0xff] %vm1341, %v1322
      %1365 = vst.msk [vmem:[%s177 + $0xb8] sm:$0xff] %vm1341, %v1324
      %1366 = vst.msk [vmem:[%s177 + $0xc0] sm:$0xff] %vm1341, %v1326
      %1367 = vst.msk [vmem:[%s177 + $0xc8] sm:$0xff] %vm1341, %v1328
      %1368 = vst.msk [vmem:[%s177 + $0xd0] sm:$0xff] %vm1341, %v1330
      %1369 = vst.msk [vmem:[%s177 + $0xd8] sm:$0xff] %vm1341, %v1332
      %1370 = vst.msk [vmem:[%s177 + $0xe0] sm:$0xff] %vm1341, %v1334
      %1371 = vst.msk [vmem:[%s177 + $0xe8] sm:$0xff] %vm1341, %v1336
      %1372 = vst.msk [vmem:[%s177 + $0xf0] sm:$0xff] %vm1341, %v1338
      %1373 = vst.msk [vmem:[%s177 + $0xf8] sm:$0xff] %vm1341, %v1340
      %s1374 = smul.u32 32, %s16
      %p1375 = scmp.lt.s32.totalorder %s1374, 255
      %s1376 = scalar_select %p1375, %s1374, 255
      %s1377 = smul.addr %s1376, 8
      %s1378 = scalar_lea.vmem %s3, %s1377
      // Predicated region
      $region33: #{vae_forward.13} parent=31 // pred_check
        %p1379 = pneg %p102
      $region34: #{vae_forward.13} parent=31 // pred_check_branch
        %1381 = sbr.rel (%p1379) target = $region36
      $region35: #{vae_forward.13} parent=31 // pred_region
        %s1382 = smul.u32 32, %s16
      $region36: #{vae_forward.13} parent=31 // pred_fallthru
        _
    $region32: #{vae_forward.13} parent=5 // pred_fallthru
      _
    %p1383 = scmp.le.s32.totalorder 2, %s11
    // Predicated region
    $region37: #{vae_forward.13} parent=5 // pred_check
      %p1384 = pneg %p1383
    $region38: #{vae_forward.13} parent=5 // pred_check_branch
      %1386 = sbr.rel (%p1384) target = $region40
    $region39: #{vae_forward.13} parent=5 // pred_region
      %s1387 = ssub.s32 %s11, 2
      // Predicated region
      $region41: #{vae_forward.13} parent=39 // pred_check
        %p1388 = pneg %p108
      $region42: #{vae_forward.13} parent=39 // pred_check_branch
        %1390 = sbr.rel (%p1388) target = $region44
      $region43: #{vae_forward.13} parent=39 // pred_region
        %s1391 = smul.u32 32, %s17
        %p1392 = scmp.lt.s32.totalorder %s1391, 255
        %s1393 = scalar_select %p1392, %s1391, 255
        %s1394 = smul.addr %s1393, 8
        %s1395 = scalar_lea.vmem %s3, %s1394
      $region44: #{vae_forward.13} parent=39 // pred_fallthru
        _
    $region40: #{vae_forward.13} parent=5 // pred_fallthru
      _
  $region6: #{vae_forward.13} parent=0 // loop_footer
    %s15 = sadd.s32 1, %s11
  $region7: #{vae_forward.13} parent=0 // loop_footer_branch
    %10 = sbr.rel target = $region3
  $region8: #{vae_forward.13} parent=0 // loop_exit
    _

</llo_original>
